<compile_context>
chip_gen: v7x
topology: tpu7x:2x2x1
jax: 0.10.0
libtpu: 0.0.40
codegen_flags: <defaults>
</compile_context>

<pallas_src>
import functools

import jax
import jax.numpy as jnp
from jax.experimental import pallas as pl
from jax.experimental.pallas import tpu as pltpu


# ----------------------------------------------------------------------------
# Fused Pallas kernel
# ----------------------------------------------------------------------------
def _gnn_kernel(x_ref, arel_ref, asum_ref, deg_ref, pool_ref,
                we_ref, be_ref,
                wrel_ref, wroot_ref, brg_ref,
                wml_ref, bml_ref, wmr_ref,
                w1_ref, b1_ref, w2_ref, b2_ref,
                o_ref, *, depth, num_rel, num_deg):
    f32 = jnp.float32
    bf16 = jnp.bfloat16

    deg = deg_ref[...]            # (N, D1) f32 one-hot of clamped in-degree (VPU mask)
    asum = asum_ref[...]          # (N, N)  bf16 unnormalized adjacency

    # ---- node embedding (bf16 operands, f32 accumulation) --------------------
    h = jnp.dot(x_ref[...].astype(bf16), we_ref[...],
                preferred_element_type=f32) + be_ref[...]

    # ---- [Identity/ReLU -> RGCNConv -> ReLU -> MFConv] x depth ---------------
    for l in range(depth):
        if l > 0:                 # block-leading ReLU (Identity for block 0)
            h = jnp.maximum(h, 0.0)
        hb = h.astype(bf16)

        # RGCNConv: mean-normalized per-relation adjacency matmuls, then one
        # stacked-K weight matmul (N, R*H) @ (R*H, H) plus the root term.
        agg_cat = jnp.concatenate(
            [jnp.dot(arel_ref[r], hb, preferred_element_type=f32)
             for r in range(num_rel)], axis=-1).astype(bf16)          # (N, R*H)
        out = (jnp.dot(hb, wroot_ref[l], preferred_element_type=f32)
               + jnp.dot(agg_cat, wrel_ref[l], preferred_element_type=f32)
               + brg_ref[l])
        h = jnp.maximum(out, 0.0)                                     # in-block ReLU
        hb = h.astype(bf16)

        # MFConv: sum-aggregate neighbors, per-(clamped)-degree weights fused
        # into two stacked-K matmuls + one tiny degree-bias matmul.
        hsum = jnp.dot(asum, hb, preferred_element_type=f32)          # (N, H)
        hsum_cat = jnp.concatenate(
            [deg[:, d:d + 1] * hsum for d in range(num_deg)], axis=-1).astype(bf16)
        hself_cat = jnp.concatenate(
            [deg[:, d:d + 1] * h for d in range(num_deg)], axis=-1).astype(bf16)
        h = (jnp.dot(hsum_cat, wml_ref[l], preferred_element_type=f32)
             + jnp.dot(hself_cat, wmr_ref[l], preferred_element_type=f32)
             + jnp.dot(deg, bml_ref[l], preferred_element_type=f32))  # per-deg bias

    # ---- global_add_pool + readout MLP (lane-padded output) -----------------
    pooled = jnp.dot(pool_ref[...], h.astype(bf16), preferred_element_type=f32)
    z = jnp.maximum(jnp.dot(pooled.astype(bf16), w1_ref[...],
                            preferred_element_type=f32) + b1_ref[...], 0.0)
    o_ref[...] = jnp.dot(z.astype(bf16), w2_ref[...],
                         preferred_element_type=f32) + b2_ref[...]


# ----------------------------------------------------------------------------
# Parameters (stacked per-block / per-relation / per-degree, bf16 weights)
# ----------------------------------------------------------------------------
def _uniform(key, shape, fan_in):
    lim = 1.0 / jnp.sqrt(jnp.float32(fan_in))
    return jax.random.uniform(key, shape, jnp.float32, -lim, lim)


def init_params(key, n_node_features, n_edge_features, n_hidden, depth,
                max_degree=10, out_pad=128):
    R, H, D1 = n_edge_features, n_hidden, max_degree + 1
    bf16 = jnp.bfloat16
    ks = iter(jax.random.split(key, 12))
    p = {}
    p["w_embed"] = _uniform(next(ks), (n_node_features, H), n_node_features).astype(bf16)
    p["b_embed"] = _uniform(next(ks), (1, H), n_node_features)
    # RGCNConv: per-relation weights stacked along K -> (depth, R*H, H); root weight.
    p["w_rel"] = _uniform(next(ks), (depth, R * H, H), H).astype(bf16)
    p["w_root"] = _uniform(next(ks), (depth, H, H), H).astype(bf16)
    p["b_rgcn"] = jnp.zeros((depth, 1, H), jnp.float32)
    # MFConv: per-degree weights (0..max_degree) stacked along K; biases stacked (D1, H).
    p["w_mf_l"] = _uniform(next(ks), (depth, D1 * H, H), H).astype(bf16)
    p["b_mf_l"] = _uniform(next(ks), (depth, D1, H), H)          # f32 (exact bias path)
    p["w_mf_r"] = _uniform(next(ks), (depth, D1 * H, H), H).astype(bf16)
    # readout MLP; final Linear(H, 1) padded to `out_pad` lanes (col 0 is real)
    p["w1"] = _uniform(next(ks), (H, H), H).astype(bf16)
    p["b1"] = _uniform(next(ks), (1, H), H)
    w2 = _uniform(next(ks), (H, 1), H)
    b2 = _uniform(next(ks), (1, 1), H)
    p["w2"] = jnp.zeros((H, out_pad), jnp.float32).at[:, :1].set(w2).astype(bf16)
    p["b2"] = jnp.zeros((1, out_pad), jnp.float32).at[:, :1].set(b2)
    return p


# ----------------------------------------------------------------------------
# Forward (single fused pallas_call)
# ----------------------------------------------------------------------------
def gnn_forward(params, x, edge_index, edge_type, batch_idx, num_graphs,
                n_edge_features, depth, max_degree=10):
    f32, bf16 = jnp.float32, jnp.bfloat16
    N = x.shape[0]
    R = n_edge_features
    D1 = max_degree + 1
    H = params["w1"].shape[0]
    P = params["w2"].shape[1]
    B_pad = -(-num_graphs // 8) * 8                 # sublane-pad pooled batch
    N_pad = -(-N // 128) * 128                      # lane-dense node axis

    src, dst = edge_index[0], edge_index[1]

    # --- graph structure as dense adjacency (one-time, plain-JAX glue) -------
    # per-relation mean-normalized adjacency (RGCNConv aggr='mean'), bf16 operand
    a_rel = jnp.zeros((R, N_pad, N_pad), f32).at[edge_type, dst, src].add(1.0)
    cnt = a_rel.sum(axis=2, keepdims=True)
    a_rel = jnp.where(cnt > 0, a_rel / jnp.maximum(cnt, 1.0), 0.0).astype(bf16)

    # unnormalized adjacency (MFConv sum aggregation); small integer counts are
    # exact in bf16.
    a_sum_f = jnp.zeros((N_pad, N_pad), f32).at[dst, src].add(1.0)
    a_sum = a_sum_f.astype(bf16)

    # in-degree (over edge_index[1], PyG flow='source_to_target') clamped to
    # max_degree -> MFConv per-degree weight mask. Kept f32: it is a VPU mask
    # (v5e has no bf16 VPU path) and is only (N, D1).
    deg = jnp.minimum(a_sum_f.sum(axis=1), max_degree).astype(jnp.int32)
    deg_oh = jax.nn.one_hot(deg, D1, dtype=f32)

    # global_add_pool matrix; padded node columns map out-of-range -> all-zero
    batch_pad = jnp.full((N_pad,), B_pad, jnp.int32).at[:N].set(batch_idx)
    pool_oh = jax.nn.one_hot(batch_pad, B_pad, dtype=bf16).T          # (B_pad, N_pad)

    x_pad = jnp.zeros((N_pad, x.shape[1]), f32).at[:N].set(x)

    args = (x_pad, a_rel, a_sum, deg_oh, pool_oh,
            params["w_embed"], params["b_embed"],
            params["w_rel"], params["w_root"], params["b_rgcn"],
            params["w_mf_l"], params["b_mf_l"], params["w_mf_r"],
            params["w1"], params["b1"], params["w2"], params["b2"])

    # rough cost hint for XLA scheduling
    flops = 2 * N_pad * x.shape[1] * H
    per_block = (R * 2 * N_pad * N_pad * H          # per-relation adjacency matmuls
                 + 2 * N_pad * (R * H) * H          # stacked relation weights
                 + 2 * N_pad * H * H                # root term
                 + 2 * N_pad * N_pad * H            # MFConv sum-aggregation
                 + 2 * 2 * N_pad * (D1 * H) * H     # stacked per-degree weights
                 + 2 * N_pad * D1 * H)              # degree-bias dot
    flops += depth * per_block
    flops += 2 * B_pad * N_pad * H + 2 * B_pad * H * H + 2 * B_pad * H * P

    out_bytes = B_pad * P * 4
    resident = sum(int(a.size) * a.dtype.itemsize for a in args) + out_bytes
    temporaries = 6 * N_pad * D1 * H * 4            # cat buffers / conv temps (f32)
    vmem_limit = int(min(64 * 2 ** 20, max(32 * 2 ** 20, 2 * resident + temporaries)))

    kernel = functools.partial(_gnn_kernel, depth=depth, num_rel=R, num_deg=D1)
    vmem = pl.BlockSpec(memory_space=pltpu.MemorySpace.VMEM)

    out = pl.pallas_call(
        kernel,
        out_shape=jax.ShapeDtypeStruct((B_pad, P), jnp.float32),
        in_specs=[vmem] * len(args),
        out_specs=vmem,
        compiler_params=pltpu.CompilerParams(vmem_limit_bytes=vmem_limit),
        cost_estimate=pl.CostEstimate(flops=int(flops), transcendentals=0,
                                      bytes_accessed=int(resident)),
    )(*args)

    # slice away the row / lane padding: (num_graphs, 1) like Linear(hidden, 1)
    return out[:num_graphs, :1]


# ----------------------------------------------------------------------------
# Demo
# ----------------------------------------------------------------------------
if __name__ == "__main__":
    n_node_features, n_edge_features = 6, 4        # n_edge_features == num_relations
    n_hidden, num_blocks, max_degree = 128, 2, 10  # lane-dense hidden
    num_graphs, n_per_graph, e_per_graph = 2, 16, 32
    N = num_graphs * n_per_graph

    key = jax.random.PRNGKey(0)
    kx, ks, kd, kt, kp = jax.random.split(key, 5)

    x = jax.random.normal(kx, (N, n_node_features), jnp.float32)

    # edges kept within each graph (PyG convention: row0 = source j, row1 = target i)
    src0 = jax.random.randint(ks, (e_per_graph,), 0, n_per_graph)
    dst0 = jax.random.randint(kd, (e_per_graph,), 0, n_per_graph)
    src = jnp.concatenate([src0, src0 + n_per_graph])
    dst = jnp.concatenate([dst0, dst0 + n_per_graph])
    edge_index = jnp.stack([src, dst]).astype(jnp.int32)               # (2, E)

    # edge_attr as integer relation type per edge (what RGCNConv consumes)
    edge_attr = jax.random.randint(kt, (2 * e_per_graph,), 0, n_edge_features)

    batch_idx = jnp.repeat(jnp.arange(num_graphs, dtype=jnp.int32), n_per_graph)

    params = init_params(kp, n_node_features, n_edge_features, n_hidden,
                         num_blocks, max_degree=max_degree)

    out = gnn_forward(params, x, edge_index, edge_attr, batch_idx, num_graphs,
                      n_edge_features, num_blocks, max_degree=max_degree)
    out = jax.block_until_ready(out)
    assert out.shape == (num_graphs, 1)
    assert bool(jnp.all(jnp.isfinite(out)))
    print("KERNEL_OK")
</pallas_src>

<mosaic_0001>
module attributes {stable_mosaic.version = 11 : i64} {
  func.func @_gnn_kernel(%arg0: memref<128x6xf32, #tpu.memory_space<vmem>>, %arg1: memref<4x128x128xbf16, #tpu.memory_space<vmem>>, %arg2: memref<128x128xbf16, #tpu.memory_space<vmem>>, %arg3: memref<128x11xf32, #tpu.memory_space<vmem>>, %arg4: memref<8x128xbf16, #tpu.memory_space<vmem>>, %arg5: memref<6x128xbf16, #tpu.memory_space<vmem>>, %arg6: memref<1x128xf32, #tpu.memory_space<vmem>>, %arg7: memref<2x512x128xbf16, #tpu.memory_space<vmem>>, %arg8: memref<2x128x128xbf16, #tpu.memory_space<vmem>>, %arg9: memref<2x1x128xf32, #tpu.memory_space<vmem>>, %arg10: memref<2x1408x128xbf16, #tpu.memory_space<vmem>>, %arg11: memref<2x11x128xf32, #tpu.memory_space<vmem>>, %arg12: memref<2x1408x128xbf16, #tpu.memory_space<vmem>>, %arg13: memref<128x128xbf16, #tpu.memory_space<vmem>>, %arg14: memref<1x128xf32, #tpu.memory_space<vmem>>, %arg15: memref<128x128xbf16, #tpu.memory_space<vmem>>, %arg16: memref<1x128xf32, #tpu.memory_space<vmem>>, %arg17: memref<8x128xf32, #tpu.memory_space<vmem>>) attributes {dimension_semantics = [], scalar_prefetch = 0 : i64, scratch_operands = 0 : i64, tpu.core_type = #tpu.core_type<tc>} {
    %c0 = arith.constant 0 : index
    %c0_0 = arith.constant 0 : index
    %0 = vector.load %arg3[%c0, %c0_0] : memref<128x11xf32, #tpu.memory_space<vmem>>, vector<128x11xf32>
    %c0_1 = arith.constant 0 : index
    %c0_2 = arith.constant 0 : index
    %1 = vector.load %arg2[%c0_1, %c0_2] : memref<128x128xbf16, #tpu.memory_space<vmem>>, vector<128x128xbf16>
    %c0_3 = arith.constant 0 : index
    %c0_4 = arith.constant 0 : index
    %2 = vector.load %arg0[%c0_3, %c0_4] : memref<128x6xf32, #tpu.memory_space<vmem>>, vector<128x6xf32>
    %3 = arith.truncf %2 : vector<128x6xf32> to vector<128x6xbf16>
    %c0_5 = arith.constant 0 : index
    %c0_6 = arith.constant 0 : index
    %4 = vector.load %arg5[%c0_5, %c0_6] : memref<6x128xbf16, #tpu.memory_space<vmem>>, vector<6x128xbf16>
    %cst = arith.constant dense<0.000000e+00> : vector<128x128xf32>
    %5 = tpu.matmul %3, %4, %cst {dimension_numbers = #tpu.dot_dimension_numbers<[1], [0], [0], [1], [0, 0, 1, 1], [], []>} : vector<128x6xbf16>, vector<6x128xbf16>, vector<128x128xf32> -> vector<128x128xf32>
    %c0_7 = arith.constant 0 : index
    %c0_8 = arith.constant 0 : index
    %6 = vector.load %arg6[%c0_7, %c0_8] : memref<1x128xf32, #tpu.memory_space<vmem>>, vector<1x128xf32>
    %7 = vector.broadcast %6 : vector<1x128xf32> to vector<128x128xf32>
    %8 = arith.addf %5, %7 : vector<128x128xf32>
    %9 = arith.truncf %8 : vector<128x128xf32> to vector<128x128xbf16>
    %c0_9 = arith.constant 0 : index
    %c0_10 = arith.constant 0 : index
    %c0_11 = arith.constant 0 : index
    %10 = vector.load %arg1[%c0_9, %c0_10, %c0_11] : memref<4x128x128xbf16, #tpu.memory_space<vmem>>, vector<1x128x128xbf16>
    %11 = vector.shape_cast %10 : vector<1x128x128xbf16> to vector<128x128xbf16>
    %cst_12 = arith.constant dense<0.000000e+00> : vector<128x128xf32>
    %12 = tpu.matmul %11, %9, %cst_12 {dimension_numbers = #tpu.dot_dimension_numbers<[1], [0], [0], [1], [0, 0, 1, 1], [], []>} : vector<128x128xbf16>, vector<128x128xbf16>, vector<128x128xf32> -> vector<128x128xf32>
    %c1 = arith.constant 1 : index
    %c0_13 = arith.constant 0 : index
    %c0_14 = arith.constant 0 : index
    %13 = vector.load %arg1[%c1, %c0_13, %c0_14] : memref<4x128x128xbf16, #tpu.memory_space<vmem>>, vector<1x128x128xbf16>
    %14 = vector.shape_cast %13 : vector<1x128x128xbf16> to vector<128x128xbf16>
    %cst_15 = arith.constant dense<0.000000e+00> : vector<128x128xf32>
    %15 = tpu.matmul %14, %9, %cst_15 {dimension_numbers = #tpu.dot_dimension_numbers<[1], [0], [0], [1], [0, 0, 1, 1], [], []>} : vector<128x128xbf16>, vector<128x128xbf16>, vector<128x128xf32> -> vector<128x128xf32>
    %c2 = arith.constant 2 : index
    %c0_16 = arith.constant 0 : index
    %c0_17 = arith.constant 0 : index
    %16 = vector.load %arg1[%c2, %c0_16, %c0_17] : memref<4x128x128xbf16, #tpu.memory_space<vmem>>, vector<1x128x128xbf16>
    %17 = vector.shape_cast %16 : vector<1x128x128xbf16> to vector<128x128xbf16>
    %cst_18 = arith.constant dense<0.000000e+00> : vector<128x128xf32>
    %18 = tpu.matmul %17, %9, %cst_18 {dimension_numbers = #tpu.dot_dimension_numbers<[1], [0], [0], [1], [0, 0, 1, 1], [], []>} : vector<128x128xbf16>, vector<128x128xbf16>, vector<128x128xf32> -> vector<128x128xf32>
    %c3 = arith.constant 3 : index
    %c0_19 = arith.constant 0 : index
    %c0_20 = arith.constant 0 : index
    %19 = vector.load %arg1[%c3, %c0_19, %c0_20] : memref<4x128x128xbf16, #tpu.memory_space<vmem>>, vector<1x128x128xbf16>
    %20 = vector.shape_cast %19 : vector<1x128x128xbf16> to vector<128x128xbf16>
    %cst_21 = arith.constant dense<0.000000e+00> : vector<128x128xf32>
    %21 = tpu.matmul %20, %9, %cst_21 {dimension_numbers = #tpu.dot_dimension_numbers<[1], [0], [0], [1], [0, 0, 1, 1], [], []>} : vector<128x128xbf16>, vector<128x128xbf16>, vector<128x128xf32> -> vector<128x128xf32>
    %22 = tpu.concatenate %12, %15, %18, %21 in 1 : vector<128x128xf32>, vector<128x128xf32>, vector<128x128xf32>, vector<128x128xf32> -> vector<128x512xf32>
    %23 = arith.truncf %22 : vector<128x512xf32> to vector<128x512xbf16>
    %c0_22 = arith.constant 0 : index
    %c0_23 = arith.constant 0 : index
    %c0_24 = arith.constant 0 : index
    %24 = vector.load %arg8[%c0_22, %c0_23, %c0_24] : memref<2x128x128xbf16, #tpu.memory_space<vmem>>, vector<1x128x128xbf16>
    %25 = vector.shape_cast %24 : vector<1x128x128xbf16> to vector<128x128xbf16>
    %cst_25 = arith.constant dense<0.000000e+00> : vector<128x128xf32>
    %26 = tpu.matmul %9, %25, %cst_25 {dimension_numbers = #tpu.dot_dimension_numbers<[1], [0], [0], [1], [0, 0, 1, 1], [], []>} : vector<128x128xbf16>, vector<128x128xbf16>, vector<128x128xf32> -> vector<128x128xf32>
    %c0_26 = arith.constant 0 : index
    %c0_27 = arith.constant 0 : index
    %c0_28 = arith.constant 0 : index
    %27 = vector.load %arg7[%c0_26, %c0_27, %c0_28] : memref<2x512x128xbf16, #tpu.memory_space<vmem>>, vector<1x512x128xbf16>
    %28 = vector.shape_cast %27 : vector<1x512x128xbf16> to vector<512x128xbf16>
    %cst_29 = arith.constant dense<0.000000e+00> : vector<128x128xf32>
    %29 = tpu.matmul %23, %28, %cst_29 {dimension_numbers = #tpu.dot_dimension_numbers<[1], [0], [0], [1], [0, 0, 1, 1], [], []>} : vector<128x512xbf16>, vector<512x128xbf16>, vector<128x128xf32> -> vector<128x128xf32>
    %30 = arith.addf %26, %29 : vector<128x128xf32>
    %c0_30 = arith.constant 0 : index
    %c0_31 = arith.constant 0 : index
    %c0_32 = arith.constant 0 : index
    %31 = vector.load %arg9[%c0_30, %c0_31, %c0_32] : memref<2x1x128xf32, #tpu.memory_space<vmem>>, vector<1x1x128xf32>
    %32 = vector.shape_cast %31 : vector<1x1x128xf32> to vector<1x128xf32>
    %33 = vector.broadcast %32 : vector<1x128xf32> to vector<128x128xf32>
    %34 = arith.addf %30, %33 : vector<128x128xf32>
    %cst_33 = arith.constant 0.000000e+00 : f32
    %35 = vector.broadcast %cst_33 : f32 to vector<128x128xf32>
    %36 = arith.maximumf %34, %35 : vector<128x128xf32>
    %37 = arith.truncf %36 : vector<128x128xf32> to vector<128x128xbf16>
    %cst_34 = arith.constant dense<0.000000e+00> : vector<128x128xf32>
    %38 = tpu.matmul %1, %37, %cst_34 {dimension_numbers = #tpu.dot_dimension_numbers<[1], [0], [0], [1], [0, 0, 1, 1], [], []>} : vector<128x128xbf16>, vector<128x128xbf16>, vector<128x128xf32> -> vector<128x128xf32>
    %39 = vector.extract_strided_slice %0 {offsets = [0, 0], sizes = [128, 1], strides = [1, 1]} : vector<128x11xf32> to vector<128x1xf32>
    %40 = vector.broadcast %39 : vector<128x1xf32> to vector<128x128xf32>
    %41 = arith.mulf %40, %38 : vector<128x128xf32>
    %42 = vector.extract_strided_slice %0 {offsets = [0, 1], sizes = [128, 1], strides = [1, 1]} : vector<128x11xf32> to vector<128x1xf32>
    %43 = vector.broadcast %42 : vector<128x1xf32> to vector<128x128xf32>
    %44 = arith.mulf %43, %38 : vector<128x128xf32>
    %45 = vector.extract_strided_slice %0 {offsets = [0, 2], sizes = [128, 1], strides = [1, 1]} : vector<128x11xf32> to vector<128x1xf32>
    %46 = vector.broadcast %45 : vector<128x1xf32> to vector<128x128xf32>
    %47 = arith.mulf %46, %38 : vector<128x128xf32>
    %48 = vector.extract_strided_slice %0 {offsets = [0, 3], sizes = [128, 1], strides = [1, 1]} : vector<128x11xf32> to vector<128x1xf32>
    %49 = vector.broadcast %48 : vector<128x1xf32> to vector<128x128xf32>
    %50 = arith.mulf %49, %38 : vector<128x128xf32>
    %51 = vector.extract_strided_slice %0 {offsets = [0, 4], sizes = [128, 1], strides = [1, 1]} : vector<128x11xf32> to vector<128x1xf32>
    %52 = vector.broadcast %51 : vector<128x1xf32> to vector<128x128xf32>
    %53 = arith.mulf %52, %38 : vector<128x128xf32>
    %54 = vector.extract_strided_slice %0 {offsets = [0, 5], sizes = [128, 1], strides = [1, 1]} : vector<128x11xf32> to vector<128x1xf32>
    %55 = vector.broadcast %54 : vector<128x1xf32> to vector<128x128xf32>
    %56 = arith.mulf %55, %38 : vector<128x128xf32>
    %57 = vector.extract_strided_slice %0 {offsets = [0, 6], sizes = [128, 1], strides = [1, 1]} : vector<128x11xf32> to vector<128x1xf32>
    %58 = vector.broadcast %57 : vector<128x1xf32> to vector<128x128xf32>
    %59 = arith.mulf %58, %38 : vector<128x128xf32>
    %60 = vector.extract_strided_slice %0 {offsets = [0, 7], sizes = [128, 1], strides = [1, 1]} : vector<128x11xf32> to vector<128x1xf32>
    %61 = vector.broadcast %60 : vector<128x1xf32> to vector<128x128xf32>
    %62 = arith.mulf %61, %38 : vector<128x128xf32>
    %63 = vector.extract_strided_slice %0 {offsets = [0, 8], sizes = [128, 1], strides = [1, 1]} : vector<128x11xf32> to vector<128x1xf32>
    %64 = vector.broadcast %63 : vector<128x1xf32> to vector<128x128xf32>
    %65 = arith.mulf %64, %38 : vector<128x128xf32>
    %66 = vector.extract_strided_slice %0 {offsets = [0, 9], sizes = [128, 1], strides = [1, 1]} : vector<128x11xf32> to vector<128x1xf32>
    %67 = vector.broadcast %66 : vector<128x1xf32> to vector<128x128xf32>
    %68 = arith.mulf %67, %38 : vector<128x128xf32>
    %69 = vector.extract_strided_slice %0 {offsets = [0, 10], sizes = [128, 1], strides = [1, 1]} : vector<128x11xf32> to vector<128x1xf32>
    %70 = vector.broadcast %69 : vector<128x1xf32> to vector<128x128xf32>
    %71 = arith.mulf %70, %38 : vector<128x128xf32>
    %72 = tpu.concatenate %41, %44, %47, %50, %53, %56, %59, %62, %65, %68, %71 in 1 : vector<128x128xf32>, vector<128x128xf32>, vector<128x128xf32>, vector<128x128xf32>, vector<128x128xf32>, vector<128x128xf32>, vector<128x128xf32>, vector<128x128xf32>, vector<128x128xf32>, vector<128x128xf32>, vector<128x128xf32> -> vector<128x1408xf32>
    %73 = arith.truncf %72 : vector<128x1408xf32> to vector<128x1408xbf16>
    %74 = vector.extract_strided_slice %0 {offsets = [0, 0], sizes = [128, 1], strides = [1, 1]} : vector<128x11xf32> to vector<128x1xf32>
    %75 = vector.broadcast %74 : vector<128x1xf32> to vector<128x128xf32>
    %76 = arith.mulf %75, %36 : vector<128x128xf32>
    %77 = vector.extract_strided_slice %0 {offsets = [0, 1], sizes = [128, 1], strides = [1, 1]} : vector<128x11xf32> to vector<128x1xf32>
    %78 = vector.broadcast %77 : vector<128x1xf32> to vector<128x128xf32>
    %79 = arith.mulf %78, %36 : vector<128x128xf32>
    %80 = vector.extract_strided_slice %0 {offsets = [0, 2], sizes = [128, 1], strides = [1, 1]} : vector<128x11xf32> to vector<128x1xf32>
    %81 = vector.broadcast %80 : vector<128x1xf32> to vector<128x128xf32>
    %82 = arith.mulf %81, %36 : vector<128x128xf32>
    %83 = vector.extract_strided_slice %0 {offsets = [0, 3], sizes = [128, 1], strides = [1, 1]} : vector<128x11xf32> to vector<128x1xf32>
    %84 = vector.broadcast %83 : vector<128x1xf32> to vector<128x128xf32>
    %85 = arith.mulf %84, %36 : vector<128x128xf32>
    %86 = vector.extract_strided_slice %0 {offsets = [0, 4], sizes = [128, 1], strides = [1, 1]} : vector<128x11xf32> to vector<128x1xf32>
    %87 = vector.broadcast %86 : vector<128x1xf32> to vector<128x128xf32>
    %88 = arith.mulf %87, %36 : vector<128x128xf32>
    %89 = vector.extract_strided_slice %0 {offsets = [0, 5], sizes = [128, 1], strides = [1, 1]} : vector<128x11xf32> to vector<128x1xf32>
    %90 = vector.broadcast %89 : vector<128x1xf32> to vector<128x128xf32>
    %91 = arith.mulf %90, %36 : vector<128x128xf32>
    %92 = vector.extract_strided_slice %0 {offsets = [0, 6], sizes = [128, 1], strides = [1, 1]} : vector<128x11xf32> to vector<128x1xf32>
    %93 = vector.broadcast %92 : vector<128x1xf32> to vector<128x128xf32>
    %94 = arith.mulf %93, %36 : vector<128x128xf32>
    %95 = vector.extract_strided_slice %0 {offsets = [0, 7], sizes = [128, 1], strides = [1, 1]} : vector<128x11xf32> to vector<128x1xf32>
    %96 = vector.broadcast %95 : vector<128x1xf32> to vector<128x128xf32>
    %97 = arith.mulf %96, %36 : vector<128x128xf32>
    %98 = vector.extract_strided_slice %0 {offsets = [0, 8], sizes = [128, 1], strides = [1, 1]} : vector<128x11xf32> to vector<128x1xf32>
    %99 = vector.broadcast %98 : vector<128x1xf32> to vector<128x128xf32>
    %100 = arith.mulf %99, %36 : vector<128x128xf32>
    %101 = vector.extract_strided_slice %0 {offsets = [0, 9], sizes = [128, 1], strides = [1, 1]} : vector<128x11xf32> to vector<128x1xf32>
    %102 = vector.broadcast %101 : vector<128x1xf32> to vector<128x128xf32>
    %103 = arith.mulf %102, %36 : vector<128x128xf32>
    %104 = vector.extract_strided_slice %0 {offsets = [0, 10], sizes = [128, 1], strides = [1, 1]} : vector<128x11xf32> to vector<128x1xf32>
    %105 = vector.broadcast %104 : vector<128x1xf32> to vector<128x128xf32>
    %106 = arith.mulf %105, %36 : vector<128x128xf32>
    %107 = tpu.concatenate %76, %79, %82, %85, %88, %91, %94, %97, %100, %103, %106 in 1 : vector<128x128xf32>, vector<128x128xf32>, vector<128x128xf32>, vector<128x128xf32>, vector<128x128xf32>, vector<128x128xf32>, vector<128x128xf32>, vector<128x128xf32>, vector<128x128xf32>, vector<128x128xf32>, vector<128x128xf32> -> vector<128x1408xf32>
    %108 = arith.truncf %107 : vector<128x1408xf32> to vector<128x1408xbf16>
    %c0_35 = arith.constant 0 : index
    %c0_36 = arith.constant 0 : index
    %c0_37 = arith.constant 0 : index
    %109 = vector.load %arg10[%c0_35, %c0_36, %c0_37] : memref<2x1408x128xbf16, #tpu.memory_space<vmem>>, vector<1x1408x128xbf16>
    %110 = vector.shape_cast %109 : vector<1x1408x128xbf16> to vector<1408x128xbf16>
    %cst_38 = arith.constant dense<0.000000e+00> : vector<128x128xf32>
    %111 = tpu.matmul %73, %110, %cst_38 {dimension_numbers = #tpu.dot_dimension_numbers<[1], [0], [0], [1], [0, 0, 1, 1], [], []>} : vector<128x1408xbf16>, vector<1408x128xbf16>, vector<128x128xf32> -> vector<128x128xf32>
    %c0_39 = arith.constant 0 : index
    %c0_40 = arith.constant 0 : index
    %c0_41 = arith.constant 0 : index
    %112 = vector.load %arg12[%c0_39, %c0_40, %c0_41] : memref<2x1408x128xbf16, #tpu.memory_space<vmem>>, vector<1x1408x128xbf16>
    %113 = vector.shape_cast %112 : vector<1x1408x128xbf16> to vector<1408x128xbf16>
    %cst_42 = arith.constant dense<0.000000e+00> : vector<128x128xf32>
    %114 = tpu.matmul %108, %113, %cst_42 {dimension_numbers = #tpu.dot_dimension_numbers<[1], [0], [0], [1], [0, 0, 1, 1], [], []>} : vector<128x1408xbf16>, vector<1408x128xbf16>, vector<128x128xf32> -> vector<128x128xf32>
    %115 = arith.addf %111, %114 : vector<128x128xf32>
    %c0_43 = arith.constant 0 : index
    %c0_44 = arith.constant 0 : index
    %c0_45 = arith.constant 0 : index
    %116 = vector.load %arg11[%c0_43, %c0_44, %c0_45] : memref<2x11x128xf32, #tpu.memory_space<vmem>>, vector<1x11x128xf32>
    %117 = vector.shape_cast %116 : vector<1x11x128xf32> to vector<11x128xf32>
    %cst_46 = arith.constant dense<0.000000e+00> : vector<128x128xf32>
    %118 = tpu.matmul %0, %117, %cst_46 {dimension_numbers = #tpu.dot_dimension_numbers<[1], [0], [0], [1], [0, 0, 1, 1], [], []>} : vector<128x11xf32>, vector<11x128xf32>, vector<128x128xf32> -> vector<128x128xf32>
    %119 = arith.addf %115, %118 : vector<128x128xf32>
    %cst_47 = arith.constant 0.000000e+00 : f32
    %120 = vector.broadcast %cst_47 : f32 to vector<128x128xf32>
    %121 = arith.maximumf %119, %120 : vector<128x128xf32>
    %122 = arith.truncf %121 : vector<128x128xf32> to vector<128x128xbf16>
    %c0_48 = arith.constant 0 : index
    %c0_49 = arith.constant 0 : index
    %c0_50 = arith.constant 0 : index
    %123 = vector.load %arg1[%c0_48, %c0_49, %c0_50] : memref<4x128x128xbf16, #tpu.memory_space<vmem>>, vector<1x128x128xbf16>
    %124 = vector.shape_cast %123 : vector<1x128x128xbf16> to vector<128x128xbf16>
    %cst_51 = arith.constant dense<0.000000e+00> : vector<128x128xf32>
    %125 = tpu.matmul %124, %122, %cst_51 {dimension_numbers = #tpu.dot_dimension_numbers<[1], [0], [0], [1], [0, 0, 1, 1], [], []>} : vector<128x128xbf16>, vector<128x128xbf16>, vector<128x128xf32> -> vector<128x128xf32>
    %c1_52 = arith.constant 1 : index
    %c0_53 = arith.constant 0 : index
    %c0_54 = arith.constant 0 : index
    %126 = vector.load %arg1[%c1_52, %c0_53, %c0_54] : memref<4x128x128xbf16, #tpu.memory_space<vmem>>, vector<1x128x128xbf16>
    %127 = vector.shape_cast %126 : vector<1x128x128xbf16> to vector<128x128xbf16>
    %cst_55 = arith.constant dense<0.000000e+00> : vector<128x128xf32>
    %128 = tpu.matmul %127, %122, %cst_55 {dimension_numbers = #tpu.dot_dimension_numbers<[1], [0], [0], [1], [0, 0, 1, 1], [], []>} : vector<128x128xbf16>, vector<128x128xbf16>, vector<128x128xf32> -> vector<128x128xf32>
    %c2_56 = arith.constant 2 : index
    %c0_57 = arith.constant 0 : index
    %c0_58 = arith.constant 0 : index
    %129 = vector.load %arg1[%c2_56, %c0_57, %c0_58] : memref<4x128x128xbf16, #tpu.memory_space<vmem>>, vector<1x128x128xbf16>
    %130 = vector.shape_cast %129 : vector<1x128x128xbf16> to vector<128x128xbf16>
    %cst_59 = arith.constant dense<0.000000e+00> : vector<128x128xf32>
    %131 = tpu.matmul %130, %122, %cst_59 {dimension_numbers = #tpu.dot_dimension_numbers<[1], [0], [0], [1], [0, 0, 1, 1], [], []>} : vector<128x128xbf16>, vector<128x128xbf16>, vector<128x128xf32> -> vector<128x128xf32>
    %c3_60 = arith.constant 3 : index
    %c0_61 = arith.constant 0 : index
    %c0_62 = arith.constant 0 : index
    %132 = vector.load %arg1[%c3_60, %c0_61, %c0_62] : memref<4x128x128xbf16, #tpu.memory_space<vmem>>, vector<1x128x128xbf16>
    %133 = vector.shape_cast %132 : vector<1x128x128xbf16> to vector<128x128xbf16>
    %cst_63 = arith.constant dense<0.000000e+00> : vector<128x128xf32>
    %134 = tpu.matmul %133, %122, %cst_63 {dimension_numbers = #tpu.dot_dimension_numbers<[1], [0], [0], [1], [0, 0, 1, 1], [], []>} : vector<128x128xbf16>, vector<128x128xbf16>, vector<128x128xf32> -> vector<128x128xf32>
    %135 = tpu.concatenate %125, %128, %131, %134 in 1 : vector<128x128xf32>, vector<128x128xf32>, vector<128x128xf32>, vector<128x128xf32> -> vector<128x512xf32>
    %136 = arith.truncf %135 : vector<128x512xf32> to vector<128x512xbf16>
    %c1_64 = arith.constant 1 : index
    %c0_65 = arith.constant 0 : index
    %c0_66 = arith.constant 0 : index
    %137 = vector.load %arg8[%c1_64, %c0_65, %c0_66] : memref<2x128x128xbf16, #tpu.memory_space<vmem>>, vector<1x128x128xbf16>
    %138 = vector.shape_cast %137 : vector<1x128x128xbf16> to vector<128x128xbf16>
    %cst_67 = arith.constant dense<0.000000e+00> : vector<128x128xf32>
    %139 = tpu.matmul %122, %138, %cst_67 {dimension_numbers = #tpu.dot_dimension_numbers<[1], [0], [0], [1], [0, 0, 1, 1], [], []>} : vector<128x128xbf16>, vector<128x128xbf16>, vector<128x128xf32> -> vector<128x128xf32>
    %c1_68 = arith.constant 1 : index
    %c0_69 = arith.constant 0 : index
    %c0_70 = arith.constant 0 : index
    %140 = vector.load %arg7[%c1_68, %c0_69, %c0_70] : memref<2x512x128xbf16, #tpu.memory_space<vmem>>, vector<1x512x128xbf16>
    %141 = vector.shape_cast %140 : vector<1x512x128xbf16> to vector<512x128xbf16>
    %cst_71 = arith.constant dense<0.000000e+00> : vector<128x128xf32>
    %142 = tpu.matmul %136, %141, %cst_71 {dimension_numbers = #tpu.dot_dimension_numbers<[1], [0], [0], [1], [0, 0, 1, 1], [], []>} : vector<128x512xbf16>, vector<512x128xbf16>, vector<128x128xf32> -> vector<128x128xf32>
    %143 = arith.addf %139, %142 : vector<128x128xf32>
    %c1_72 = arith.constant 1 : index
    %c0_73 = arith.constant 0 : index
    %c0_74 = arith.constant 0 : index
    %144 = vector.load %arg9[%c1_72, %c0_73, %c0_74] : memref<2x1x128xf32, #tpu.memory_space<vmem>>, vector<1x1x128xf32>
    %145 = vector.shape_cast %144 : vector<1x1x128xf32> to vector<1x128xf32>
    %146 = vector.broadcast %145 : vector<1x128xf32> to vector<128x128xf32>
    %147 = arith.addf %143, %146 : vector<128x128xf32>
    %cst_75 = arith.constant 0.000000e+00 : f32
    %148 = vector.broadcast %cst_75 : f32 to vector<128x128xf32>
    %149 = arith.maximumf %147, %148 : vector<128x128xf32>
    %150 = arith.truncf %149 : vector<128x128xf32> to vector<128x128xbf16>
    %cst_76 = arith.constant dense<0.000000e+00> : vector<128x128xf32>
    %151 = tpu.matmul %1, %150, %cst_76 {dimension_numbers = #tpu.dot_dimension_numbers<[1], [0], [0], [1], [0, 0, 1, 1], [], []>} : vector<128x128xbf16>, vector<128x128xbf16>, vector<128x128xf32> -> vector<128x128xf32>
    %152 = vector.extract_strided_slice %0 {offsets = [0, 0], sizes = [128, 1], strides = [1, 1]} : vector<128x11xf32> to vector<128x1xf32>
    %153 = vector.broadcast %152 : vector<128x1xf32> to vector<128x128xf32>
    %154 = arith.mulf %153, %151 : vector<128x128xf32>
    %155 = vector.extract_strided_slice %0 {offsets = [0, 1], sizes = [128, 1], strides = [1, 1]} : vector<128x11xf32> to vector<128x1xf32>
    %156 = vector.broadcast %155 : vector<128x1xf32> to vector<128x128xf32>
    %157 = arith.mulf %156, %151 : vector<128x128xf32>
    %158 = vector.extract_strided_slice %0 {offsets = [0, 2], sizes = [128, 1], strides = [1, 1]} : vector<128x11xf32> to vector<128x1xf32>
    %159 = vector.broadcast %158 : vector<128x1xf32> to vector<128x128xf32>
    %160 = arith.mulf %159, %151 : vector<128x128xf32>
    %161 = vector.extract_strided_slice %0 {offsets = [0, 3], sizes = [128, 1], strides = [1, 1]} : vector<128x11xf32> to vector<128x1xf32>
    %162 = vector.broadcast %161 : vector<128x1xf32> to vector<128x128xf32>
    %163 = arith.mulf %162, %151 : vector<128x128xf32>
    %164 = vector.extract_strided_slice %0 {offsets = [0, 4], sizes = [128, 1], strides = [1, 1]} : vector<128x11xf32> to vector<128x1xf32>
    %165 = vector.broadcast %164 : vector<128x1xf32> to vector<128x128xf32>
    %166 = arith.mulf %165, %151 : vector<128x128xf32>
    %167 = vector.extract_strided_slice %0 {offsets = [0, 5], sizes = [128, 1], strides = [1, 1]} : vector<128x11xf32> to vector<128x1xf32>
    %168 = vector.broadcast %167 : vector<128x1xf32> to vector<128x128xf32>
    %169 = arith.mulf %168, %151 : vector<128x128xf32>
    %170 = vector.extract_strided_slice %0 {offsets = [0, 6], sizes = [128, 1], strides = [1, 1]} : vector<128x11xf32> to vector<128x1xf32>
    %171 = vector.broadcast %170 : vector<128x1xf32> to vector<128x128xf32>
    %172 = arith.mulf %171, %151 : vector<128x128xf32>
    %173 = vector.extract_strided_slice %0 {offsets = [0, 7], sizes = [128, 1], strides = [1, 1]} : vector<128x11xf32> to vector<128x1xf32>
    %174 = vector.broadcast %173 : vector<128x1xf32> to vector<128x128xf32>
    %175 = arith.mulf %174, %151 : vector<128x128xf32>
    %176 = vector.extract_strided_slice %0 {offsets = [0, 8], sizes = [128, 1], strides = [1, 1]} : vector<128x11xf32> to vector<128x1xf32>
    %177 = vector.broadcast %176 : vector<128x1xf32> to vector<128x128xf32>
    %178 = arith.mulf %177, %151 : vector<128x128xf32>
    %179 = vector.extract_strided_slice %0 {offsets = [0, 9], sizes = [128, 1], strides = [1, 1]} : vector<128x11xf32> to vector<128x1xf32>
    %180 = vector.broadcast %179 : vector<128x1xf32> to vector<128x128xf32>
    %181 = arith.mulf %180, %151 : vector<128x128xf32>
    %182 = vector.extract_strided_slice %0 {offsets = [0, 10], sizes = [128, 1], strides = [1, 1]} : vector<128x11xf32> to vector<128x1xf32>
    %183 = vector.broadcast %182 : vector<128x1xf32> to vector<128x128xf32>
    %184 = arith.mulf %183, %151 : vector<128x128xf32>
    %185 = tpu.concatenate %154, %157, %160, %163, %166, %169, %172, %175, %178, %181, %184 in 1 : vector<128x128xf32>, vector<128x128xf32>, vector<128x128xf32>, vector<128x128xf32>, vector<128x128xf32>, vector<128x128xf32>, vector<128x128xf32>, vector<128x128xf32>, vector<128x128xf32>, vector<128x128xf32>, vector<128x128xf32> -> vector<128x1408xf32>
    %186 = arith.truncf %185 : vector<128x1408xf32> to vector<128x1408xbf16>
    %187 = vector.extract_strided_slice %0 {offsets = [0, 0], sizes = [128, 1], strides = [1, 1]} : vector<128x11xf32> to vector<128x1xf32>
    %188 = vector.broadcast %187 : vector<128x1xf32> to vector<128x128xf32>
    %189 = arith.mulf %188, %149 : vector<128x128xf32>
    %190 = vector.extract_strided_slice %0 {offsets = [0, 1], sizes = [128, 1], strides = [1, 1]} : vector<128x11xf32> to vector<128x1xf32>
    %191 = vector.broadcast %190 : vector<128x1xf32> to vector<128x128xf32>
    %192 = arith.mulf %191, %149 : vector<128x128xf32>
    %193 = vector.extract_strided_slice %0 {offsets = [0, 2], sizes = [128, 1], strides = [1, 1]} : vector<128x11xf32> to vector<128x1xf32>
    %194 = vector.broadcast %193 : vector<128x1xf32> to vector<128x128xf32>
    %195 = arith.mulf %194, %149 : vector<128x128xf32>
    %196 = vector.extract_strided_slice %0 {offsets = [0, 3], sizes = [128, 1], strides = [1, 1]} : vector<128x11xf32> to vector<128x1xf32>
    %197 = vector.broadcast %196 : vector<128x1xf32> to vector<128x128xf32>
    %198 = arith.mulf %197, %149 : vector<128x128xf32>
    %199 = vector.extract_strided_slice %0 {offsets = [0, 4], sizes = [128, 1], strides = [1, 1]} : vector<128x11xf32> to vector<128x1xf32>
    %200 = vector.broadcast %199 : vector<128x1xf32> to vector<128x128xf32>
    %201 = arith.mulf %200, %149 : vector<128x128xf32>
    %202 = vector.extract_strided_slice %0 {offsets = [0, 5], sizes = [128, 1], strides = [1, 1]} : vector<128x11xf32> to vector<128x1xf32>
    %203 = vector.broadcast %202 : vector<128x1xf32> to vector<128x128xf32>
    %204 = arith.mulf %203, %149 : vector<128x128xf32>
    %205 = vector.extract_strided_slice %0 {offsets = [0, 6], sizes = [128, 1], strides = [1, 1]} : vector<128x11xf32> to vector<128x1xf32>
    %206 = vector.broadcast %205 : vector<128x1xf32> to vector<128x128xf32>
    %207 = arith.mulf %206, %149 : vector<128x128xf32>
    %208 = vector.extract_strided_slice %0 {offsets = [0, 7], sizes = [128, 1], strides = [1, 1]} : vector<128x11xf32> to vector<128x1xf32>
    %209 = vector.broadcast %208 : vector<128x1xf32> to vector<128x128xf32>
    %210 = arith.mulf %209, %149 : vector<128x128xf32>
    %211 = vector.extract_strided_slice %0 {offsets = [0, 8], sizes = [128, 1], strides = [1, 1]} : vector<128x11xf32> to vector<128x1xf32>
    %212 = vector.broadcast %211 : vector<128x1xf32> to vector<128x128xf32>
    %213 = arith.mulf %212, %149 : vector<128x128xf32>
    %214 = vector.extract_strided_slice %0 {offsets = [0, 9], sizes = [128, 1], strides = [1, 1]} : vector<128x11xf32> to vector<128x1xf32>
    %215 = vector.broadcast %214 : vector<128x1xf32> to vector<128x128xf32>
    %216 = arith.mulf %215, %149 : vector<128x128xf32>
    %217 = vector.extract_strided_slice %0 {offsets = [0, 10], sizes = [128, 1], strides = [1, 1]} : vector<128x11xf32> to vector<128x1xf32>
    %218 = vector.broadcast %217 : vector<128x1xf32> to vector<128x128xf32>
    %219 = arith.mulf %218, %149 : vector<128x128xf32>
    %220 = tpu.concatenate %189, %192, %195, %198, %201, %204, %207, %210, %213, %216, %219 in 1 : vector<128x128xf32>, vector<128x128xf32>, vector<128x128xf32>, vector<128x128xf32>, vector<128x128xf32>, vector<128x128xf32>, vector<128x128xf32>, vector<128x128xf32>, vector<128x128xf32>, vector<128x128xf32>, vector<128x128xf32> -> vector<128x1408xf32>
    %221 = arith.truncf %220 : vector<128x1408xf32> to vector<128x1408xbf16>
    %c1_77 = arith.constant 1 : index
    %c0_78 = arith.constant 0 : index
    %c0_79 = arith.constant 0 : index
    %222 = vector.load %arg10[%c1_77, %c0_78, %c0_79] : memref<2x1408x128xbf16, #tpu.memory_space<vmem>>, vector<1x1408x128xbf16>
    %223 = vector.shape_cast %222 : vector<1x1408x128xbf16> to vector<1408x128xbf16>
    %cst_80 = arith.constant dense<0.000000e+00> : vector<128x128xf32>
    %224 = tpu.matmul %186, %223, %cst_80 {dimension_numbers = #tpu.dot_dimension_numbers<[1], [0], [0], [1], [0, 0, 1, 1], [], []>} : vector<128x1408xbf16>, vector<1408x128xbf16>, vector<128x128xf32> -> vector<128x128xf32>
    %c1_81 = arith.constant 1 : index
    %c0_82 = arith.constant 0 : index
    %c0_83 = arith.constant 0 : index
    %225 = vector.load %arg12[%c1_81, %c0_82, %c0_83] : memref<2x1408x128xbf16, #tpu.memory_space<vmem>>, vector<1x1408x128xbf16>
    %226 = vector.shape_cast %225 : vector<1x1408x128xbf16> to vector<1408x128xbf16>
    %cst_84 = arith.constant dense<0.000000e+00> : vector<128x128xf32>
    %227 = tpu.matmul %221, %226, %cst_84 {dimension_numbers = #tpu.dot_dimension_numbers<[1], [0], [0], [1], [0, 0, 1, 1], [], []>} : vector<128x1408xbf16>, vector<1408x128xbf16>, vector<128x128xf32> -> vector<128x128xf32>
    %228 = arith.addf %224, %227 : vector<128x128xf32>
    %c1_85 = arith.constant 1 : index
    %c0_86 = arith.constant 0 : index
    %c0_87 = arith.constant 0 : index
    %229 = vector.load %arg11[%c1_85, %c0_86, %c0_87] : memref<2x11x128xf32, #tpu.memory_space<vmem>>, vector<1x11x128xf32>
    %230 = vector.shape_cast %229 : vector<1x11x128xf32> to vector<11x128xf32>
    %cst_88 = arith.constant dense<0.000000e+00> : vector<128x128xf32>
    %231 = tpu.matmul %0, %230, %cst_88 {dimension_numbers = #tpu.dot_dimension_numbers<[1], [0], [0], [1], [0, 0, 1, 1], [], []>} : vector<128x11xf32>, vector<11x128xf32>, vector<128x128xf32> -> vector<128x128xf32>
    %232 = arith.addf %228, %231 : vector<128x128xf32>
    %c0_89 = arith.constant 0 : index
    %c0_90 = arith.constant 0 : index
    %233 = vector.load %arg4[%c0_89, %c0_90] : memref<8x128xbf16, #tpu.memory_space<vmem>>, vector<8x128xbf16>
    %234 = arith.truncf %232 : vector<128x128xf32> to vector<128x128xbf16>
    %cst_91 = arith.constant dense<0.000000e+00> : vector<8x128xf32>
    %235 = tpu.matmul %233, %234, %cst_91 {dimension_numbers = #tpu.dot_dimension_numbers<[1], [0], [0], [1], [0, 0, 1, 1], [], []>} : vector<8x128xbf16>, vector<128x128xbf16>, vector<8x128xf32> -> vector<8x128xf32>
    %236 = arith.truncf %235 : vector<8x128xf32> to vector<8x128xbf16>
    %c0_92 = arith.constant 0 : index
    %c0_93 = arith.constant 0 : index
    %237 = vector.load %arg13[%c0_92, %c0_93] : memref<128x128xbf16, #tpu.memory_space<vmem>>, vector<128x128xbf16>
    %cst_94 = arith.constant dense<0.000000e+00> : vector<8x128xf32>
    %238 = tpu.matmul %236, %237, %cst_94 {dimension_numbers = #tpu.dot_dimension_numbers<[1], [0], [0], [1], [0, 0, 1, 1], [], []>} : vector<8x128xbf16>, vector<128x128xbf16>, vector<8x128xf32> -> vector<8x128xf32>
    %c0_95 = arith.constant 0 : index
    %c0_96 = arith.constant 0 : index
    %239 = vector.load %arg14[%c0_95, %c0_96] : memref<1x128xf32, #tpu.memory_space<vmem>>, vector<1x128xf32>
    %240 = vector.broadcast %239 : vector<1x128xf32> to vector<8x128xf32>
    %241 = arith.addf %238, %240 : vector<8x128xf32>
    %cst_97 = arith.constant 0.000000e+00 : f32
    %242 = vector.broadcast %cst_97 : f32 to vector<8x128xf32>
    %243 = arith.maximumf %241, %242 : vector<8x128xf32>
    %244 = arith.truncf %243 : vector<8x128xf32> to vector<8x128xbf16>
    %c0_98 = arith.constant 0 : index
    %c0_99 = arith.constant 0 : index
    %245 = vector.load %arg15[%c0_98, %c0_99] : memref<128x128xbf16, #tpu.memory_space<vmem>>, vector<128x128xbf16>
    %cst_100 = arith.constant dense<0.000000e+00> : vector<8x128xf32>
    %246 = tpu.matmul %244, %245, %cst_100 {dimension_numbers = #tpu.dot_dimension_numbers<[1], [0], [0], [1], [0, 0, 1, 1], [], []>} : vector<8x128xbf16>, vector<128x128xbf16>, vector<8x128xf32> -> vector<8x128xf32>
    %c0_101 = arith.constant 0 : index
    %c0_102 = arith.constant 0 : index
    %247 = vector.load %arg16[%c0_101, %c0_102] : memref<1x128xf32, #tpu.memory_space<vmem>>, vector<1x128xf32>
    %248 = vector.broadcast %247 : vector<1x128xf32> to vector<8x128xf32>
    %249 = arith.addf %246, %248 : vector<8x128xf32>
    %c0_103 = arith.constant 0 : index
    %c0_104 = arith.constant 0 : index
    %250 = vector.load %arg17[%c0_103, %c0_104] : memref<8x128xf32, #tpu.memory_space<vmem>>, vector<8x128xf32>
    tpu.vector_store %arg17[%c0_103, %c0_104], %249 {strides = array<i32>} : memref<8x128xf32, #tpu.memory_space<vmem>>, vector<8x128xf32>,
    return
  }
}

</mosaic_0001>

<llo_original>
// kernel: tpu_custom_call.1
$region0: #{tpu_custom_call.1}
  #allocation0 [shape = 'u32[]', space=smem, size = 0x4, offset = 0x4, fixed_abs, tag = 'smem constant byte address 0x4 - core index']
  #allocation1 [shape = 'u32[144,128]{1,0:T(1,128)}', space=vmem, size = 0x12000, scoped, tag = 'internal scratch']
  %s0 = inlined_call_operand.vmem [shape: f32[128,6], index: 0, kind: input, shape index: {}]
  %s1 = inlined_call_operand.vmem [shape: bf16[4,128,128], index: 1, kind: input, shape index: {}]
  %s2 = inlined_call_operand.vmem [shape: bf16[128,128], index: 2, kind: input, shape index: {}]
  %s3 = inlined_call_operand.vmem [shape: f32[128,11], index: 3, kind: input, shape index: {}]
  %s4 = inlined_call_operand.hbm [shape: bf16[8,128], index: 4, kind: input, shape index: {}]
  %s5 = inlined_call_operand.hbm [shape: bf16[6,128], index: 5, kind: input, shape index: {}]
  %s6 = inlined_call_operand.hbm [shape: f32[1,128], index: 6, kind: input, shape index: {}]
  %s7 = inlined_call_operand.hbm [shape: bf16[2,512,128], index: 7, kind: input, shape index: {}]
  %s8 = inlined_call_operand.hbm [shape: bf16[2,128,128], index: 8, kind: input, shape index: {}]
  %s9 = inlined_call_operand.vmem [shape: f32[2,1,128], index: 9, kind: input, shape index: {}]
  %s10 = inlined_call_operand.hbm [shape: bf16[2,1408,128], index: 10, kind: input, shape index: {}]
  %s11 = inlined_call_operand.vmem [shape: f32[2,11,128], index: 11, kind: input, shape index: {}]
  %s12 = inlined_call_operand.hbm [shape: bf16[2,1408,128], index: 12, kind: input, shape index: {}]
  %s13 = inlined_call_operand.hbm [shape: bf16[128,128], index: 13, kind: input, shape index: {}]
  %s14 = inlined_call_operand.hbm [shape: f32[1,128], index: 14, kind: input, shape index: {}]
  %s15 = inlined_call_operand.vmem [shape: bf16[128,128], index: 15, kind: input, shape index: {}]
  %s16 = inlined_call_operand.vmem [shape: f32[1,128], index: 16, kind: input, shape index: {}]
  %s17 = inlined_call_operand.hbm [shape: f32[8,128], index: 17, kind: output, shape index: {}]
  %s18 = sld [smem:[#allocation0]]
  $region114: #{tpu_custom_call.1} parent=0
    _
  %s20 = ssub.s32 1, %s18
  %s21 = scalar_select 0, %s20, %s18
  $region1: #{tpu_custom_call.1} parent=0
    #allocation2 [shape = 'u8[2048]{0}', space=vmem, size = 0x800, scoped, tag = 'input window, operand 4, single buffered']
    #allocation3 [shape = 's32[1]{0}', space=sflag, size = 0x4, scoped, tag = 'scoped memory for tpu_custom_call.1']
    #allocation4 [shape = 's32[1]{0}', space=sflag, size = 0x4, scoped, tag = 'scoped memory for tpu_custom_call.1']
    #allocation5 [shape = 'u8[2048]{0}', space=vmem, size = 0x800, scoped, tag = 'input window, operand 5, single buffered']
    #allocation6 [shape = 's32[1]{0}', space=sflag, size = 0x4, scoped, tag = 'scoped memory for tpu_custom_call.1']
    #allocation7 [shape = 'u8[512]{0}', space=vmem, size = 0x400, scoped, tag = 'input window, operand 6, single buffered']
    #allocation8 [shape = 'u8[262144]{0}', space=vmem, size = 0x40000, scoped, tag = 'input window, operand 7, single buffered']
    #allocation9 [shape = 's32[1]{0}', space=sflag, size = 0x4, scoped, tag = 'scoped memory for tpu_custom_call.1']
    #allocation10 [shape = 'u8[65536]{0}', space=vmem, size = 0x10000, scoped, tag = 'input window, operand 8, single buffered']
    #allocation11 [shape = 'u8[720896]{0}', space=vmem, size = 0xb0000, scoped, tag = 'input window, operand 10, single buffered']
    #allocation12 [shape = 's32[1]{0}', space=sflag, size = 0x4, scoped, tag = 'scoped memory for tpu_custom_call.1']
    #allocation13 [shape = 'u8[720896]{0}', space=vmem, size = 0xb0000, scoped, tag = 'input window, operand 12, single buffered']
    #allocation14 [shape = 'u8[32768]{0}', space=vmem, size = 0x8000, scoped, tag = 'input window, operand 13, single buffered']
    #allocation15 [shape = 's32[1]{0}', space=sflag, size = 0x4, scoped, tag = 'scoped memory for tpu_custom_call.1']
    #allocation16 [shape = 'u8[512]{0}', space=vmem, size = 0x400, scoped, tag = 'input window, operand 14, single buffered']
    #allocation17 [shape = 'u8[4096]{0}', space=vmem, size = 0x1000, scoped, tag = 'output window, operand 0, single buffered']
    %22 = vsyncpa [#allocation3], 0
    %23 = vsyncpa [#allocation6], 0
    %24 = vsyncpa [#allocation9], 0
    %25 = vsyncpa [#allocation12], 0
    %26 = vsyncpa [#allocation15], 0
    %27 = vsyncpa [#allocation4], 0
    // Predicated region
    $region2: #{tpu_custom_call.1} parent=1 // pred_check
      _
    $region3: #{tpu_custom_call.1} parent=1 // pred_check_branch
      %29 = sbr.rel (0) target = $region5
    $region4: #{tpu_custom_call.1} parent=1 // pred_region
      _
    $region5: #{tpu_custom_call.1} parent=1 // pred_fallthru
      _
    // Predicated region
    $region6: #{tpu_custom_call.1} parent=1 // pred_check
      _
    $region7: #{tpu_custom_call.1} parent=1 // pred_check_branch
      %31 = sbr.rel (0) target = $region9
    $region8: #{tpu_custom_call.1} parent=1 // pred_region
      _
    $region9: #{tpu_custom_call.1} parent=1 // pred_fallthru
      _
    // Predicated region
    $region10: #{tpu_custom_call.1} parent=1 // pred_check
      _
    $region11: #{tpu_custom_call.1} parent=1 // pred_check_branch
      %33 = sbr.rel (0) target = $region13
    $region12: #{tpu_custom_call.1} parent=1 // pred_region
      _
    $region13: #{tpu_custom_call.1} parent=1 // pred_fallthru
      _
    // Predicated region
    $region14: #{tpu_custom_call.1} parent=1 // pred_check
      _
    $region15: #{tpu_custom_call.1} parent=1 // pred_check_branch
      %35 = sbr.rel (0) target = $region17
    $region16: #{tpu_custom_call.1} parent=1 // pred_region
      _
    $region17: #{tpu_custom_call.1} parent=1 // pred_fallthru
      _
    // Predicated region
    $region18: #{tpu_custom_call.1} parent=1 // pred_check
      _
    $region19: #{tpu_custom_call.1} parent=1 // pred_check_branch
      %37 = sbr.rel (0) target = $region21
    $region20: #{tpu_custom_call.1} parent=1 // pred_region
      %s39 = ssub.s32 64, 64
      %40 = vsyncadd [#allocation3], %s39
      %s42 = sshll.u32 [#allocation2], 4
      %s43 = int_to_ptr.vmem [resolvable:$true] %s42
      %45 = dma.hbm_to_vmem [thread:$0]  %s4, 64, %s43, [#allocation3]
    $region21: #{tpu_custom_call.1} parent=1 // pred_fallthru
      _
    // Predicated region
    $region22: #{tpu_custom_call.1} parent=1 // pred_check
      _
    $region23: #{tpu_custom_call.1} parent=1 // pred_check_branch
      %47 = sbr.rel (0) target = $region25
    $region24: #{tpu_custom_call.1} parent=1 // pred_region
      %s49 = ssub.s32 64, 64
      %50 = vsyncadd [#allocation6], %s49
      %s52 = sshll.u32 [#allocation5], 4
      %s53 = int_to_ptr.vmem [resolvable:$true] %s52
      %55 = dma.hbm_to_vmem [thread:$0]  %s5, 64, %s53, [#allocation6]
    $region25: #{tpu_custom_call.1} parent=1 // pred_fallthru
      _
    // Predicated region
    $region26: #{tpu_custom_call.1} parent=1 // pred_check
      _
    $region27: #{tpu_custom_call.1} parent=1 // pred_check_branch
      %57 = sbr.rel (0) target = $region29
    $region28: #{tpu_custom_call.1} parent=1 // pred_region
      %s59 = ssub.s32 16, 16
      %60 = vsyncadd [#allocation6], %s59
      %s62 = sshll.u32 [#allocation7], 4
      %s63 = int_to_ptr.vmem [resolvable:$true] %s62
      %65 = dma.hbm_to_vmem [thread:$0]  %s6, 16, %s63, [#allocation6]
    $region29: #{tpu_custom_call.1} parent=1 // pred_fallthru
      _
    // Predicated region
    $region30: #{tpu_custom_call.1} parent=1 // pred_check
      _
    $region31: #{tpu_custom_call.1} parent=1 // pred_check_branch
      %67 = sbr.rel (0) target = $region33
    $region32: #{tpu_custom_call.1} parent=1 // pred_region
      %s69 = ssub.s32 8192, 8192
      %70 = vsyncadd [#allocation9], %s69
      %s71 = sshll.u32 [#allocation8], 4
      %s72 = int_to_ptr.vmem [resolvable:$true] %s71
      %77 = dma.hbm_to_vmem [thread:$0]  %s7, 8192, %s72, [#allocation9], 64, 64, 4
    $region33: #{tpu_custom_call.1} parent=1 // pred_fallthru
      _
    // Predicated region
    $region34: #{tpu_custom_call.1} parent=1 // pred_check
      _
    $region35: #{tpu_custom_call.1} parent=1 // pred_check_branch
      %79 = sbr.rel (0) target = $region37
    $region36: #{tpu_custom_call.1} parent=1 // pred_region
      %s81 = ssub.s32 2048, 2048
      %82 = vsyncadd [#allocation9], %s81
      %s83 = sshll.u32 [#allocation10], 4
      %s84 = int_to_ptr.vmem [resolvable:$true] %s83
      %89 = dma.hbm_to_vmem [thread:$0]  %s8, 2048, %s84, [#allocation9], 64, 64, 4
    $region37: #{tpu_custom_call.1} parent=1 // pred_fallthru
      _
    // Predicated region
    $region38: #{tpu_custom_call.1} parent=1 // pred_check
      _
    $region39: #{tpu_custom_call.1} parent=1 // pred_check_branch
      %91 = sbr.rel (0) target = $region41
    $region40: #{tpu_custom_call.1} parent=1 // pred_region
      _
    $region41: #{tpu_custom_call.1} parent=1 // pred_fallthru
      _
    // Predicated region
    $region42: #{tpu_custom_call.1} parent=1 // pred_check
      _
    $region43: #{tpu_custom_call.1} parent=1 // pred_check_branch
      %93 = sbr.rel (0) target = $region45
    $region44: #{tpu_custom_call.1} parent=1 // pred_region
      %s95 = ssub.s32 22528, 22528
      %96 = vsyncadd [#allocation12], %s95
      %s97 = sshll.u32 [#allocation11], 4
      %s98 = int_to_ptr.vmem [resolvable:$true] %s97
      %103 = dma.hbm_to_vmem [thread:$0]  %s10, 22528, %s98, [#allocation12], 64, 64, 4
    $region45: #{tpu_custom_call.1} parent=1 // pred_fallthru
      _
    // Predicated region
    $region46: #{tpu_custom_call.1} parent=1 // pred_check
      _
    $region47: #{tpu_custom_call.1} parent=1 // pred_check_branch
      %105 = sbr.rel (0) target = $region49
    $region48: #{tpu_custom_call.1} parent=1 // pred_region
      _
    $region49: #{tpu_custom_call.1} parent=1 // pred_fallthru
      _
    // Predicated region
    $region50: #{tpu_custom_call.1} parent=1 // pred_check
      _
    $region51: #{tpu_custom_call.1} parent=1 // pred_check_branch
      %107 = sbr.rel (0) target = $region53
    $region52: #{tpu_custom_call.1} parent=1 // pred_region
      %s109 = ssub.s32 22528, 22528
      %110 = vsyncadd [#allocation12], %s109
      %s111 = sshll.u32 [#allocation13], 4
      %s112 = int_to_ptr.vmem [resolvable:$true] %s111
      %117 = dma.hbm_to_vmem [thread:$0]  %s12, 22528, %s112, [#allocation12], 64, 64, 4
    $region53: #{tpu_custom_call.1} parent=1 // pred_fallthru
      _
    // Predicated region
    $region54: #{tpu_custom_call.1} parent=1 // pred_check
      _
    $region55: #{tpu_custom_call.1} parent=1 // pred_check_branch
      %119 = sbr.rel (0) target = $region57
    $region56: #{tpu_custom_call.1} parent=1 // pred_region
      %s121 = ssub.s32 1024, 1024
      %122 = vsyncadd [#allocation15], %s121
      %s123 = sshll.u32 [#allocation14], 4
      %s124 = int_to_ptr.vmem [resolvable:$true] %s123
      %129 = dma.hbm_to_vmem [thread:$0]  %s13, 1024, %s124, [#allocation15], 64, 64, 4
    $region57: #{tpu_custom_call.1} parent=1 // pred_fallthru
      _
    // Predicated region
    $region58: #{tpu_custom_call.1} parent=1 // pred_check
      _
    $region59: #{tpu_custom_call.1} parent=1 // pred_check_branch
      %131 = sbr.rel (0) target = $region61
    $region60: #{tpu_custom_call.1} parent=1 // pred_region
      %s133 = ssub.s32 16, 16
      %134 = vsyncadd [#allocation15], %s133
      %s136 = sshll.u32 [#allocation16], 4
      %s137 = int_to_ptr.vmem [resolvable:$true] %s136
      %139 = dma.hbm_to_vmem [thread:$0]  %s14, 16, %s137, [#allocation15]
    $region61: #{tpu_custom_call.1} parent=1 // pred_fallthru
      _
    // Predicated region
    $region62: #{tpu_custom_call.1} parent=1 // pred_check
      _
    $region63: #{tpu_custom_call.1} parent=1 // pred_check_branch
      %141 = sbr.rel (0) target = $region65
    $region64: #{tpu_custom_call.1} parent=1 // pred_region
      _
    $region65: #{tpu_custom_call.1} parent=1 // pred_fallthru
      _
    // Predicated region
    $region66: #{tpu_custom_call.1} parent=1 // pred_check
      _
    $region67: #{tpu_custom_call.1} parent=1 // pred_check_branch
      %143 = sbr.rel (0) target = $region69
    $region68: #{tpu_custom_call.1} parent=1 // pred_region
      _
    $region69: #{tpu_custom_call.1} parent=1 // pred_fallthru
      _
    // Predicated region
    $region70: #{tpu_custom_call.1} parent=1 // pred_check
      _
    $region71: #{tpu_custom_call.1} parent=1 // pred_check_branch
      %145 = sbr.rel (0) target = $region73
    $region72: #{tpu_custom_call.1} parent=1 // pred_region
      %146 = dma.done [#allocation3], 64
    $region73: #{tpu_custom_call.1} parent=1 // pred_fallthru
      _
    // Predicated region
    $region74: #{tpu_custom_call.1} parent=1 // pred_check
      _
    $region75: #{tpu_custom_call.1} parent=1 // pred_check_branch
      %148 = sbr.rel (0) target = $region77
    $region76: #{tpu_custom_call.1} parent=1 // pred_region
      %149 = dma.done [#allocation6], 64
    $region77: #{tpu_custom_call.1} parent=1 // pred_fallthru
      _
    // Predicated region
    $region78: #{tpu_custom_call.1} parent=1 // pred_check
      _
    $region79: #{tpu_custom_call.1} parent=1 // pred_check_branch
      %151 = sbr.rel (0) target = $region81
    $region80: #{tpu_custom_call.1} parent=1 // pred_region
      %152 = dma.done [#allocation6], 16
    $region81: #{tpu_custom_call.1} parent=1 // pred_fallthru
      _
    // Predicated region
    $region82: #{tpu_custom_call.1} parent=1 // pred_check
      _
    $region83: #{tpu_custom_call.1} parent=1 // pred_check_branch
      %154 = sbr.rel (0) target = $region85
    $region84: #{tpu_custom_call.1} parent=1 // pred_region
      %155 = dma.done [#allocation9], 8192
    $region85: #{tpu_custom_call.1} parent=1 // pred_fallthru
      _
    // Predicated region
    $region86: #{tpu_custom_call.1} parent=1 // pred_check
      _
    $region87: #{tpu_custom_call.1} parent=1 // pred_check_branch
      %157 = sbr.rel (0) target = $region89
    $region88: #{tpu_custom_call.1} parent=1 // pred_region
      %158 = dma.done [#allocation9], 2048
    $region89: #{tpu_custom_call.1} parent=1 // pred_fallthru
      _
    // Predicated region
    $region90: #{tpu_custom_call.1} parent=1 // pred_check
      _
    $region91: #{tpu_custom_call.1} parent=1 // pred_check_branch
      %160 = sbr.rel (0) target = $region93
    $region92: #{tpu_custom_call.1} parent=1 // pred_region
      %161 = dma.done [#allocation12], 22528
    $region93: #{tpu_custom_call.1} parent=1 // pred_fallthru
      _
    // Predicated region
    $region94: #{tpu_custom_call.1} parent=1 // pred_check
      _
    $region95: #{tpu_custom_call.1} parent=1 // pred_check_branch
      %163 = sbr.rel (0) target = $region97
    $region96: #{tpu_custom_call.1} parent=1 // pred_region
      %164 = dma.done [#allocation12], 22528
    $region97: #{tpu_custom_call.1} parent=1 // pred_fallthru
      _
    // Predicated region
    $region98: #{tpu_custom_call.1} parent=1 // pred_check
      _
    $region99: #{tpu_custom_call.1} parent=1 // pred_check_branch
      %166 = sbr.rel (0) target = $region101
    $region100: #{tpu_custom_call.1} parent=1 // pred_region
      %167 = dma.done [#allocation15], 1024
    $region101: #{tpu_custom_call.1} parent=1 // pred_fallthru
      _
    // Predicated region
    $region102: #{tpu_custom_call.1} parent=1 // pred_check
      _
    $region103: #{tpu_custom_call.1} parent=1 // pred_check_branch
      %169 = sbr.rel (0) target = $region105
    $region104: #{tpu_custom_call.1} parent=1 // pred_region
      %170 = dma.done [#allocation15], 16
    $region105: #{tpu_custom_call.1} parent=1 // pred_fallthru
      _
    %v172 = vld [vmem:[%s3] sm:$0xff]
    %v173 = vld [vmem:[%s3 + $0x8] sm:$0xff]
    %v174 = vld [vmem:[%s3 + $0x10] sm:$0xff]
    %v175 = vld [vmem:[%s3 + $0x18] sm:$0xff]
    %v176 = vld [vmem:[%s3 + $0x20] sm:$0xff]
    %v177 = vld [vmem:[%s3 + $0x28] sm:$0xff]
    %v178 = vld [vmem:[%s3 + $0x30] sm:$0xff]
    %v179 = vld [vmem:[%s3 + $0x38] sm:$0xff]
    %v180 = vld [vmem:[%s3 + $0x40] sm:$0xff]
    %v181 = vld [vmem:[%s3 + $0x48] sm:$0xff]
    %v182 = vld [vmem:[%s3 + $0x50] sm:$0xff]
    %v183 = vld [vmem:[%s3 + $0x58] sm:$0xff]
    %v184 = vld [vmem:[%s3 + $0x60] sm:$0xff]
    %v185 = vld [vmem:[%s3 + $0x68] sm:$0xff]
    %v186 = vld [vmem:[%s3 + $0x70] sm:$0xff]
    %v187 = vld [vmem:[%s3 + $0x78] sm:$0xff]
    %v188 = vld [vmem:[%s2] sm:$0xf]
    %v189 = vld [vmem:[%s2 + $0x4] sm:$0xf]
    %v190 = vld [vmem:[%s2 + $0x8] sm:$0xf]
    %v191 = vld [vmem:[%s2 + $0xc] sm:$0xf]
    %v192 = vld [vmem:[%s2 + $0x10] sm:$0xf]
    %v193 = vld [vmem:[%s2 + $0x14] sm:$0xf]
    %v194 = vld [vmem:[%s2 + $0x18] sm:$0xf]
    %v195 = vld [vmem:[%s2 + $0x1c] sm:$0xf]
    %v196 = vld [vmem:[%s2 + $0x20] sm:$0xf]
    %v197 = vld [vmem:[%s2 + $0x24] sm:$0xf]
    %v198 = vld [vmem:[%s2 + $0x28] sm:$0xf]
    %v199 = vld [vmem:[%s2 + $0x2c] sm:$0xf]
    %v200 = vld [vmem:[%s2 + $0x30] sm:$0xf]
    %v201 = vld [vmem:[%s2 + $0x34] sm:$0xf]
    %v202 = vld [vmem:[%s2 + $0x38] sm:$0xf]
    %v203 = vld [vmem:[%s2 + $0x3c] sm:$0xf]
    %v204 = vld [vmem:[%s0] sm:$0xff]
    %v205 = vld [vmem:[%s0 + $0x8] sm:$0xff]
    %v206 = vld [vmem:[%s0 + $0x10] sm:$0xff]
    %v207 = vld [vmem:[%s0 + $0x18] sm:$0xff]
    %v208 = vld [vmem:[%s0 + $0x20] sm:$0xff]
    %v209 = vld [vmem:[%s0 + $0x28] sm:$0xff]
    %v210 = vld [vmem:[%s0 + $0x30] sm:$0xff]
    %v211 = vld [vmem:[%s0 + $0x38] sm:$0xff]
    %v212 = vld [vmem:[%s0 + $0x40] sm:$0xff]
    %v213 = vld [vmem:[%s0 + $0x48] sm:$0xff]
    %v214 = vld [vmem:[%s0 + $0x50] sm:$0xff]
    %v215 = vld [vmem:[%s0 + $0x58] sm:$0xff]
    %v216 = vld [vmem:[%s0 + $0x60] sm:$0xff]
    %v217 = vld [vmem:[%s0 + $0x68] sm:$0xff]
    %v218 = vld [vmem:[%s0 + $0x70] sm:$0xff]
    %v219 = vld [vmem:[%s0 + $0x78] sm:$0xff]
    %v220 = vpack.c.bf16 %v205, %v204
    %v221 = vpack.c.bf16 %v207, %v206
    %v222 = vpack.c.bf16 %v209, %v208
    %v223 = vpack.c.bf16 %v211, %v210
    %v224 = vpack.c.bf16 %v213, %v212
    %v225 = vpack.c.bf16 %v215, %v214
    %v226 = vpack.c.bf16 %v217, %v216
    %v227 = vpack.c.bf16 %v219, %v218
    %v228 = vld [vmem:[#allocation5] sm:$0x7]
    %v229 = vld [vmem:[#allocation7] sm:$0x1]
    %v231 = vlaneseq
    %v232 = vshrl.u32 %v231, 7
    %v233 = vsub.s32 0, %v232
    %v234 = vrot.slane %v229, %v233
    %vm236 = vcmask 48128
    %v238 = vsel %vm236, %v220, 0
    %v241 = vsel %vm236, %v221, 0
    %v244 = vsel %vm236, %v222, 0
    %v247 = vsel %vm236, %v223, 0
    %v250 = vsel %vm236, %v224, 0
    %v253 = vsel %vm236, %v225, 0
    %v256 = vsel %vm236, %v226, 0
    %v259 = vsel %vm236, %v227, 0
    %vm261 = vcmask 1042432
    %v263 = vsel %vm261, %v228, 0
    %265 = vmatprep.subr.bf16.mxu0 0
    %266 = vmatpush1.bf16.msra.mxu0 %v263
    %267 = vmatprep.subr.bf16.mxu0 0
    %268 = vmatpush1.bf16.msra.mxu0 0
    %269 = vmatprep.subr.bf16.mxu0 0
    %270 = vmatpush1.bf16.msra.mxu0 0
    %271 = vmatprep.subr.bf16.mxu0 0
    %272 = vmatpush1.bf16.msra.mxu0 0
    %273 = vmatprep.subr.bf16.mxu0 0
    %274 = vmatpush1.bf16.msra.mxu0 0
    %275 = vmatprep.subr.bf16.mxu0 0
    %276 = vmatpush1.bf16.msra.mxu0 0
    %277 = vmatprep.subr.bf16.mxu0 0
    %278 = vmatpush1.bf16.msra.mxu0 0
    %279 = vmatprep.subr.bf16.mxu0 0
    %280 = vmatpush1.bf16.msra.mxu0 0
    %281 = vmatprep.subr.bf16.mxu0 0
    %282 = vmatpush1.bf16.msra.mxu0 0
    %283 = vmatprep.subr.bf16.mxu0 0
    %284 = vmatpush1.bf16.msra.mxu0 0
    %285 = vmatprep.subr.bf16.mxu0 0
    %286 = vmatpush1.bf16.msra.mxu0 0
    %287 = vmatprep.subr.bf16.mxu0 0
    %288 = vmatpush1.bf16.msra.mxu0 0
    %289 = vmatprep.subr.bf16.mxu0 0
    %290 = vmatpush1.bf16.msra.mxu0 0
    %291 = vmatprep.subr.bf16.mxu0 0
    %292 = vmatpush1.bf16.msra.mxu0 0
    %293 = vmatprep.subr.bf16.mxu0 0
    %294 = vmatpush1.bf16.msra.mxu0 0
    %295 = vmatprep.subr.bf16.mxu0 0
    %296 = vmatpush1.bf16.msra.mxu0 0
    %297 = vmatprep.mubr.bf16.mxu0 0
    %298 = vmatmul.mubr.bf16.gmra.mrb[0].mxu0 %v238
    %v299 = vpop.f32.mrb[0].mxu0
    %v300 = vadd.f32 %v234, %v299
    %v301 = vpop.f32.mrb[0].mxu0
    %v302 = vpop.f32.mrb[0].mxu0
    %v303 = vadd.f32 %v234, %v302
    %v304 = vpop.f32.mrb[0].mxu0
    %305 = vmatprep.mubr.bf16.mxu0 0
    %306 = vmatmul.mubr.bf16.gmra.mrb[0].mxu0 %v241
    %v307 = vpop.f32.mrb[0].mxu0
    %v308 = vadd.f32 %v234, %v307
    %v309 = vpop.f32.mrb[0].mxu0
    %v310 = vpop.f32.mrb[0].mxu0
    %v311 = vadd.f32 %v234, %v310
    %v312 = vpop.f32.mrb[0].mxu0
    %313 = vmatprep.mubr.bf16.mxu0 0
    %314 = vmatmul.mubr.bf16.gmra.mrb[0].mxu0 %v244
    %v315 = vpop.f32.mrb[0].mxu0
    %v316 = vadd.f32 %v234, %v315
    %v317 = vpop.f32.mrb[0].mxu0
    %v318 = vpop.f32.mrb[0].mxu0
    %v319 = vadd.f32 %v234, %v318
    %v320 = vpop.f32.mrb[0].mxu0
    %321 = vmatprep.mubr.bf16.mxu0 0
    %322 = vmatmul.mubr.bf16.gmra.mrb[0].mxu0 %v247
    %v323 = vpop.f32.mrb[0].mxu0
    %v324 = vadd.f32 %v234, %v323
    %v325 = vpop.f32.mrb[0].mxu0
    %v326 = vpop.f32.mrb[0].mxu0
    %v327 = vadd.f32 %v234, %v326
    %v328 = vpop.f32.mrb[0].mxu0
    %329 = vmatprep.mubr.bf16.mxu0 0
    %330 = vmatmul.mubr.bf16.gmra.mrb[0].mxu0 %v250
    %v331 = vpop.f32.mrb[0].mxu0
    %v332 = vadd.f32 %v234, %v331
    %v333 = vpop.f32.mrb[0].mxu0
    %v334 = vpop.f32.mrb[0].mxu0
    %v335 = vadd.f32 %v234, %v334
    %v336 = vpop.f32.mrb[0].mxu0
    %337 = vmatprep.mubr.bf16.mxu0 0
    %338 = vmatmul.mubr.bf16.gmra.mrb[0].mxu0 %v253
    %v339 = vpop.f32.mrb[0].mxu0
    %v340 = vadd.f32 %v234, %v339
    %v341 = vpop.f32.mrb[0].mxu0
    %v342 = vpop.f32.mrb[0].mxu0
    %v343 = vadd.f32 %v234, %v342
    %v344 = vpop.f32.mrb[0].mxu0
    %345 = vmatprep.mubr.bf16.mxu0 0
    %346 = vmatmul.mubr.bf16.gmra.mrb[0].mxu0 %v256
    %v347 = vpop.f32.mrb[0].mxu0
    %v348 = vadd.f32 %v234, %v347
    %v349 = vpop.f32.mrb[0].mxu0
    %v350 = vpop.f32.mrb[0].mxu0
    %v351 = vadd.f32 %v234, %v350
    %v352 = vpop.f32.mrb[0].mxu0
    %353 = vmatprep.mubr.bf16.mxu0 0
    %354 = vmatmul.mubr.bf16.gmra.mrb[0].mxu0 %v259
    %v355 = vpop.f32.mrb[0].mxu0
    %v356 = vadd.f32 %v234, %v355
    %v357 = vpop.f32.mrb[0].mxu0
    %v358 = vpop.f32.mrb[0].mxu0
    %v359 = vadd.f32 %v234, %v358
    %v360 = vpop.f32.mrb[0].mxu0
    %361 = vdwg.mxu0
    %v362 = vpack.c.bf16 %v303, %v300
    %v363 = vpack.c.bf16 %v311, %v308
    %v364 = vpack.c.bf16 %v319, %v316
    %v365 = vpack.c.bf16 %v327, %v324
    %v366 = vpack.c.bf16 %v335, %v332
    %v367 = vpack.c.bf16 %v343, %v340
    %v368 = vpack.c.bf16 %v351, %v348
    %v369 = vpack.c.bf16 %v359, %v356
    %v370 = vld [vmem:[%s1] sm:$0xf]
    %v371 = vld [vmem:[%s1 + $0x4] sm:$0xf]
    %v372 = vld [vmem:[%s1 + $0x8] sm:$0xf]
    %v373 = vld [vmem:[%s1 + $0xc] sm:$0xf]
    %v374 = vld [vmem:[%s1 + $0x10] sm:$0xf]
    %v375 = vld [vmem:[%s1 + $0x14] sm:$0xf]
    %v376 = vld [vmem:[%s1 + $0x18] sm:$0xf]
    %v377 = vld [vmem:[%s1 + $0x1c] sm:$0xf]
    %v378 = vld [vmem:[%s1 + $0x20] sm:$0xf]
    %v379 = vld [vmem:[%s1 + $0x24] sm:$0xf]
    %v380 = vld [vmem:[%s1 + $0x28] sm:$0xf]
    %v381 = vld [vmem:[%s1 + $0x2c] sm:$0xf]
    %v382 = vld [vmem:[%s1 + $0x30] sm:$0xf]
    %v383 = vld [vmem:[%s1 + $0x34] sm:$0xf]
    %v384 = vld [vmem:[%s1 + $0x38] sm:$0xf]
    %v385 = vld [vmem:[%s1 + $0x3c] sm:$0xf]
    %v402 = vunpack.c.l.b16 %v370
    %v403 = vunpack.c.l.b16 %v371
    %v404 = vunpack.c.l.b16 %v372
    %v405 = vunpack.c.l.b16 %v373
    %v406 = vunpack.c.l.b16 %v374
    %v407 = vunpack.c.l.b16 %v375
    %v408 = vunpack.c.l.b16 %v376
    %v409 = vunpack.c.l.b16 %v377
    %v410 = vunpack.c.l.b16 %v378
    %v411 = vunpack.c.l.b16 %v379
    %v412 = vunpack.c.l.b16 %v380
    %v413 = vunpack.c.l.b16 %v381
    %v414 = vunpack.c.l.b16 %v382
    %v415 = vunpack.c.l.b16 %v383
    %v416 = vunpack.c.l.b16 %v384
    %v417 = vunpack.c.l.b16 %v385
    %v418 = vpack.c.b16 %v403, %v402
    %v419 = vpack.c.b16 %v405, %v404
    %v420 = vpack.c.b16 %v407, %v406
    %v421 = vpack.c.b16 %v409, %v408
    %v422 = vpack.c.b16 %v411, %v410
    %v423 = vpack.c.b16 %v413, %v412
    %v424 = vpack.c.b16 %v415, %v414
    %v425 = vpack.c.b16 %v417, %v416
    %434 = vmatprep.subr.bf16.mxu0 0
    %435 = vmatpush1.bf16.msra.mxu0 %v362
    %436 = vmatprep.subr.bf16.mxu0 0
    %437 = vmatpush1.bf16.msra.mxu0 %v363
    %438 = vmatprep.subr.bf16.mxu0 0
    %439 = vmatpush1.bf16.msra.mxu0 %v364
    %440 = vmatprep.subr.bf16.mxu0 0
    %441 = vmatpush1.bf16.msra.mxu0 %v365
    %442 = vmatprep.subr.bf16.mxu0 0
    %443 = vmatpush1.bf16.msra.mxu0 %v366
    %444 = vmatprep.subr.bf16.mxu0 0
    %445 = vmatpush1.bf16.msra.mxu0 %v367
    %446 = vmatprep.subr.bf16.mxu0 0
    %447 = vmatpush1.bf16.msra.mxu0 %v368
    %448 = vmatprep.subr.bf16.mxu0 0
    %449 = vmatpush1.bf16.msra.mxu0 %v369
    %450 = vmatprep.subr.bf16.mxu0 0
    %451 = vmatpush1.bf16.msra.mxu0 0
    %452 = vmatprep.subr.bf16.mxu0 0
    %453 = vmatpush1.bf16.msra.mxu0 0
    %454 = vmatprep.subr.bf16.mxu0 0
    %455 = vmatpush1.bf16.msra.mxu0 0
    %456 = vmatprep.subr.bf16.mxu0 0
    %457 = vmatpush1.bf16.msra.mxu0 0
    %458 = vmatprep.subr.bf16.mxu0 0
    %459 = vmatpush1.bf16.msra.mxu0 0
    %460 = vmatprep.subr.bf16.mxu0 0
    %461 = vmatpush1.bf16.msra.mxu0 0
    %462 = vmatprep.subr.bf16.mxu0 0
    %463 = vmatpush1.bf16.msra.mxu0 0
    %464 = vmatprep.subr.bf16.mxu0 0
    %465 = vmatpush1.bf16.msra.mxu0 0
    %466 = vmatprep.mubr.bf16.mxu0 0
    %467 = vmatmul.mubr.bf16.gmra.mrb[0].mxu0 %v418
    %v468 = vpop.f32.mrb[0].mxu0
    %v469 = vadd.f32 0.0, %v468
    %v470 = vpop.f32.mrb[0].mxu0
    %v471 = vpop.f32.mrb[0].mxu0
    %v472 = vadd.f32 0.0, %v471
    %v473 = vpop.f32.mrb[0].mxu0
    %474 = vmatprep.mubr.bf16.mxu0 0
    %475 = vmatmul.mubr.bf16.gmra.mrb[0].mxu0 %v419
    %v476 = vpop.f32.mrb[0].mxu0
    %v477 = vadd.f32 0.0, %v476
    %v478 = vpop.f32.mrb[0].mxu0
    %v479 = vpop.f32.mrb[0].mxu0
    %v480 = vadd.f32 0.0, %v479
    %v481 = vpop.f32.mrb[0].mxu0
    %482 = vmatprep.mubr.bf16.mxu0 0
    %483 = vmatmul.mubr.bf16.gmra.mrb[0].mxu0 %v420
    %v484 = vpop.f32.mrb[0].mxu0
    %v485 = vadd.f32 0.0, %v484
    %v486 = vpop.f32.mrb[0].mxu0
    %v487 = vpop.f32.mrb[0].mxu0
    %v488 = vadd.f32 0.0, %v487
    %v489 = vpop.f32.mrb[0].mxu0
    %490 = vmatprep.mubr.bf16.mxu0 0
    %491 = vmatmul.mubr.bf16.gmra.mrb[0].mxu0 %v421
    %v492 = vpop.f32.mrb[0].mxu0
    %v493 = vadd.f32 0.0, %v492
    %v494 = vpop.f32.mrb[0].mxu0
    %v495 = vpop.f32.mrb[0].mxu0
    %v496 = vadd.f32 0.0, %v495
    %v497 = vpop.f32.mrb[0].mxu0
    %498 = vmatprep.mubr.bf16.mxu0 0
    %499 = vmatmul.mubr.bf16.gmra.mrb[0].mxu0 %v422
    %v500 = vpop.f32.mrb[0].mxu0
    %v501 = vadd.f32 0.0, %v500
    %v502 = vpop.f32.mrb[0].mxu0
    %v503 = vpop.f32.mrb[0].mxu0
    %v504 = vadd.f32 0.0, %v503
    %v505 = vpop.f32.mrb[0].mxu0
    %506 = vmatprep.mubr.bf16.mxu0 0
    %507 = vmatmul.mubr.bf16.gmra.mrb[0].mxu0 %v423
    %v508 = vpop.f32.mrb[0].mxu0
    %v509 = vadd.f32 0.0, %v508
    %v510 = vpop.f32.mrb[0].mxu0
    %v511 = vpop.f32.mrb[0].mxu0
    %v512 = vadd.f32 0.0, %v511
    %v513 = vpop.f32.mrb[0].mxu0
    %514 = vmatprep.mubr.bf16.mxu0 0
    %515 = vmatmul.mubr.bf16.gmra.mrb[0].mxu0 %v424
    %v516 = vpop.f32.mrb[0].mxu0
    %v517 = vadd.f32 0.0, %v516
    %v518 = vpop.f32.mrb[0].mxu0
    %v519 = vpop.f32.mrb[0].mxu0
    %v520 = vadd.f32 0.0, %v519
    %v521 = vpop.f32.mrb[0].mxu0
    %522 = vmatprep.mubr.bf16.mxu0 0
    %523 = vmatmul.mubr.bf16.gmra.mrb[0].mxu0 %v425
    %v524 = vpop.f32.mrb[0].mxu0
    %v525 = vadd.f32 0.0, %v524
    %v526 = vpop.f32.mrb[0].mxu0
    %v527 = vpop.f32.mrb[0].mxu0
    %v528 = vadd.f32 0.0, %v527
    %v529 = vpop.f32.mrb[0].mxu0
    %530 = vdwg.mxu0
    %s531 = scalar_lea.vmem %s1, 64
    %v532 = vld [vmem:[%s531] sm:$0xf]
    %v533 = vld [vmem:[%s531 + $0x4] sm:$0xf]
    %v534 = vld [vmem:[%s531 + $0x8] sm:$0xf]
    %v535 = vld [vmem:[%s531 + $0xc] sm:$0xf]
    %v536 = vld [vmem:[%s531 + $0x10] sm:$0xf]
    %v537 = vld [vmem:[%s531 + $0x14] sm:$0xf]
    %v538 = vld [vmem:[%s531 + $0x18] sm:$0xf]
    %v539 = vld [vmem:[%s531 + $0x1c] sm:$0xf]
    %v540 = vld [vmem:[%s531 + $0x20] sm:$0xf]
    %v541 = vld [vmem:[%s531 + $0x24] sm:$0xf]
    %v542 = vld [vmem:[%s531 + $0x28] sm:$0xf]
    %v543 = vld [vmem:[%s531 + $0x2c] sm:$0xf]
    %v544 = vld [vmem:[%s531 + $0x30] sm:$0xf]
    %v545 = vld [vmem:[%s531 + $0x34] sm:$0xf]
    %v546 = vld [vmem:[%s531 + $0x38] sm:$0xf]
    %v547 = vld [vmem:[%s531 + $0x3c] sm:$0xf]
    %v564 = vunpack.c.l.b16 %v532
    %v565 = vunpack.c.l.b16 %v533
    %v566 = vunpack.c.l.b16 %v534
    %v567 = vunpack.c.l.b16 %v535
    %v568 = vunpack.c.l.b16 %v536
    %v569 = vunpack.c.l.b16 %v537
    %v570 = vunpack.c.l.b16 %v538
    %v571 = vunpack.c.l.b16 %v539
    %v572 = vunpack.c.l.b16 %v540
    %v573 = vunpack.c.l.b16 %v541
    %v574 = vunpack.c.l.b16 %v542
    %v575 = vunpack.c.l.b16 %v543
    %v576 = vunpack.c.l.b16 %v544
    %v577 = vunpack.c.l.b16 %v545
    %v578 = vunpack.c.l.b16 %v546
    %v579 = vunpack.c.l.b16 %v547
    %v580 = vpack.c.b16 %v565, %v564
    %v581 = vpack.c.b16 %v567, %v566
    %v582 = vpack.c.b16 %v569, %v568
    %v583 = vpack.c.b16 %v571, %v570
    %v584 = vpack.c.b16 %v573, %v572
    %v585 = vpack.c.b16 %v575, %v574
    %v586 = vpack.c.b16 %v577, %v576
    %v587 = vpack.c.b16 %v579, %v578
    %596 = vmatprep.subr.bf16.mxu0 0
    %597 = vmatpush1.bf16.msra.mxu0 %v362
    %598 = vmatprep.subr.bf16.mxu0 0
    %599 = vmatpush1.bf16.msra.mxu0 %v363
    %600 = vmatprep.subr.bf16.mxu0 0
    %601 = vmatpush1.bf16.msra.mxu0 %v364
    %602 = vmatprep.subr.bf16.mxu0 0
    %603 = vmatpush1.bf16.msra.mxu0 %v365
    %604 = vmatprep.subr.bf16.mxu0 0
    %605 = vmatpush1.bf16.msra.mxu0 %v366
    %606 = vmatprep.subr.bf16.mxu0 0
    %607 = vmatpush1.bf16.msra.mxu0 %v367
    %608 = vmatprep.subr.bf16.mxu0 0
    %609 = vmatpush1.bf16.msra.mxu0 %v368
    %610 = vmatprep.subr.bf16.mxu0 0
    %611 = vmatpush1.bf16.msra.mxu0 %v369
    %612 = vmatprep.subr.bf16.mxu0 0
    %613 = vmatpush1.bf16.msra.mxu0 0
    %614 = vmatprep.subr.bf16.mxu0 0
    %615 = vmatpush1.bf16.msra.mxu0 0
    %616 = vmatprep.subr.bf16.mxu0 0
    %617 = vmatpush1.bf16.msra.mxu0 0
    %618 = vmatprep.subr.bf16.mxu0 0
    %619 = vmatpush1.bf16.msra.mxu0 0
    %620 = vmatprep.subr.bf16.mxu0 0
    %621 = vmatpush1.bf16.msra.mxu0 0
    %622 = vmatprep.subr.bf16.mxu0 0
    %623 = vmatpush1.bf16.msra.mxu0 0
    %624 = vmatprep.subr.bf16.mxu0 0
    %625 = vmatpush1.bf16.msra.mxu0 0
    %626 = vmatprep.subr.bf16.mxu0 0
    %627 = vmatpush1.bf16.msra.mxu0 0
    %628 = vmatprep.mubr.bf16.mxu0 0
    %629 = vmatmul.mubr.bf16.gmra.mrb[0].mxu0 %v580
    %v630 = vpop.f32.mrb[0].mxu0
    %v631 = vadd.f32 0.0, %v630
    %v632 = vpop.f32.mrb[0].mxu0
    %v633 = vpop.f32.mrb[0].mxu0
    %v634 = vadd.f32 0.0, %v633
    %v635 = vpop.f32.mrb[0].mxu0
    %636 = vmatprep.mubr.bf16.mxu0 0
    %637 = vmatmul.mubr.bf16.gmra.mrb[0].mxu0 %v581
    %v638 = vpop.f32.mrb[0].mxu0
    %v639 = vadd.f32 0.0, %v638
    %v640 = vpop.f32.mrb[0].mxu0
    %v641 = vpop.f32.mrb[0].mxu0
    %v642 = vadd.f32 0.0, %v641
    %v643 = vpop.f32.mrb[0].mxu0
    %644 = vmatprep.mubr.bf16.mxu0 0
    %645 = vmatmul.mubr.bf16.gmra.mrb[0].mxu0 %v582
    %v646 = vpop.f32.mrb[0].mxu0
    %v647 = vadd.f32 0.0, %v646
    %v648 = vpop.f32.mrb[0].mxu0
    %v649 = vpop.f32.mrb[0].mxu0
    %v650 = vadd.f32 0.0, %v649
    %v651 = vpop.f32.mrb[0].mxu0
    %652 = vmatprep.mubr.bf16.mxu0 0
    %653 = vmatmul.mubr.bf16.gmra.mrb[0].mxu0 %v583
    %v654 = vpop.f32.mrb[0].mxu0
    %v655 = vadd.f32 0.0, %v654
    %v656 = vpop.f32.mrb[0].mxu0
    %v657 = vpop.f32.mrb[0].mxu0
    %v658 = vadd.f32 0.0, %v657
    %v659 = vpop.f32.mrb[0].mxu0
    %660 = vmatprep.mubr.bf16.mxu0 0
    %661 = vmatmul.mubr.bf16.gmra.mrb[0].mxu0 %v584
    %v662 = vpop.f32.mrb[0].mxu0
    %v663 = vadd.f32 0.0, %v662
    %v664 = vpop.f32.mrb[0].mxu0
    %v665 = vpop.f32.mrb[0].mxu0
    %v666 = vadd.f32 0.0, %v665
    %v667 = vpop.f32.mrb[0].mxu0
    %668 = vmatprep.mubr.bf16.mxu0 0
    %669 = vmatmul.mubr.bf16.gmra.mrb[0].mxu0 %v585
    %v670 = vpop.f32.mrb[0].mxu0
    %v671 = vadd.f32 0.0, %v670
    %v672 = vpop.f32.mrb[0].mxu0
    %v673 = vpop.f32.mrb[0].mxu0
    %v674 = vadd.f32 0.0, %v673
    %v675 = vpop.f32.mrb[0].mxu0
    %676 = vmatprep.mubr.bf16.mxu0 0
    %677 = vmatmul.mubr.bf16.gmra.mrb[0].mxu0 %v586
    %v678 = vpop.f32.mrb[0].mxu0
    %v679 = vadd.f32 0.0, %v678
    %v680 = vpop.f32.mrb[0].mxu0
    %v681 = vpop.f32.mrb[0].mxu0
    %v682 = vadd.f32 0.0, %v681
    %v683 = vpop.f32.mrb[0].mxu0
    %684 = vmatprep.mubr.bf16.mxu0 0
    %685 = vmatmul.mubr.bf16.gmra.mrb[0].mxu0 %v587
    %v686 = vpop.f32.mrb[0].mxu0
    %v687 = vadd.f32 0.0, %v686
    %v688 = vpop.f32.mrb[0].mxu0
    %v689 = vpop.f32.mrb[0].mxu0
    %v690 = vadd.f32 0.0, %v689
    %v691 = vpop.f32.mrb[0].mxu0
    %692 = vdwg.mxu0
    %s693 = scalar_lea.vmem %s1, 128
    %v694 = vld [vmem:[%s693] sm:$0xf]
    %v695 = vld [vmem:[%s693 + $0x4] sm:$0xf]
    %v696 = vld [vmem:[%s693 + $0x8] sm:$0xf]
    %v697 = vld [vmem:[%s693 + $0xc] sm:$0xf]
    %v698 = vld [vmem:[%s693 + $0x10] sm:$0xf]
    %v699 = vld [vmem:[%s693 + $0x14] sm:$0xf]
    %v700 = vld [vmem:[%s693 + $0x18] sm:$0xf]
    %v701 = vld [vmem:[%s693 + $0x1c] sm:$0xf]
    %v702 = vld [vmem:[%s693 + $0x20] sm:$0xf]
    %v703 = vld [vmem:[%s693 + $0x24] sm:$0xf]
    %v704 = vld [vmem:[%s693 + $0x28] sm:$0xf]
    %v705 = vld [vmem:[%s693 + $0x2c] sm:$0xf]
    %v706 = vld [vmem:[%s693 + $0x30] sm:$0xf]
    %v707 = vld [vmem:[%s693 + $0x34] sm:$0xf]
    %v708 = vld [vmem:[%s693 + $0x38] sm:$0xf]
    %v709 = vld [vmem:[%s693 + $0x3c] sm:$0xf]
    %v726 = vunpack.c.l.b16 %v694
    %v727 = vunpack.c.l.b16 %v695
    %v728 = vunpack.c.l.b16 %v696
    %v729 = vunpack.c.l.b16 %v697
    %v730 = vunpack.c.l.b16 %v698
    %v731 = vunpack.c.l.b16 %v699
    %v732 = vunpack.c.l.b16 %v700
    %v733 = vunpack.c.l.b16 %v701
    %v734 = vunpack.c.l.b16 %v702
    %v735 = vunpack.c.l.b16 %v703
    %v736 = vunpack.c.l.b16 %v704
    %v737 = vunpack.c.l.b16 %v705
    %v738 = vunpack.c.l.b16 %v706
    %v739 = vunpack.c.l.b16 %v707
    %v740 = vunpack.c.l.b16 %v708
    %v741 = vunpack.c.l.b16 %v709
    %v742 = vpack.c.b16 %v727, %v726
    %v743 = vpack.c.b16 %v729, %v728
    %v744 = vpack.c.b16 %v731, %v730
    %v745 = vpack.c.b16 %v733, %v732
    %v746 = vpack.c.b16 %v735, %v734
    %v747 = vpack.c.b16 %v737, %v736
    %v748 = vpack.c.b16 %v739, %v738
    %v749 = vpack.c.b16 %v741, %v740
    %758 = vmatprep.subr.bf16.mxu0 0
    %759 = vmatpush1.bf16.msra.mxu0 %v362
    %760 = vmatprep.subr.bf16.mxu0 0
    %761 = vmatpush1.bf16.msra.mxu0 %v363
    %762 = vmatprep.subr.bf16.mxu0 0
    %763 = vmatpush1.bf16.msra.mxu0 %v364
    %764 = vmatprep.subr.bf16.mxu0 0
    %765 = vmatpush1.bf16.msra.mxu0 %v365
    %766 = vmatprep.subr.bf16.mxu0 0
    %767 = vmatpush1.bf16.msra.mxu0 %v366
    %768 = vmatprep.subr.bf16.mxu0 0
    %769 = vmatpush1.bf16.msra.mxu0 %v367
    %770 = vmatprep.subr.bf16.mxu0 0
    %771 = vmatpush1.bf16.msra.mxu0 %v368
    %772 = vmatprep.subr.bf16.mxu0 0
    %773 = vmatpush1.bf16.msra.mxu0 %v369
    %774 = vmatprep.subr.bf16.mxu0 0
    %775 = vmatpush1.bf16.msra.mxu0 0
    %776 = vmatprep.subr.bf16.mxu0 0
    %777 = vmatpush1.bf16.msra.mxu0 0
    %778 = vmatprep.subr.bf16.mxu0 0
    %779 = vmatpush1.bf16.msra.mxu0 0
    %780 = vmatprep.subr.bf16.mxu0 0
    %781 = vmatpush1.bf16.msra.mxu0 0
    %782 = vmatprep.subr.bf16.mxu0 0
    %783 = vmatpush1.bf16.msra.mxu0 0
    %784 = vmatprep.subr.bf16.mxu0 0
    %785 = vmatpush1.bf16.msra.mxu0 0
    %786 = vmatprep.subr.bf16.mxu0 0
    %787 = vmatpush1.bf16.msra.mxu0 0
    %788 = vmatprep.subr.bf16.mxu0 0
    %789 = vmatpush1.bf16.msra.mxu0 0
    %790 = vmatprep.mubr.bf16.mxu0 0
    %791 = vmatmul.mubr.bf16.gmra.mrb[0].mxu0 %v742
    %v792 = vpop.f32.mrb[0].mxu0
    %v793 = vadd.f32 0.0, %v792
    %v794 = vpop.f32.mrb[0].mxu0
    %v795 = vpop.f32.mrb[0].mxu0
    %v796 = vadd.f32 0.0, %v795
    %v797 = vpop.f32.mrb[0].mxu0
    %798 = vmatprep.mubr.bf16.mxu0 0
    %799 = vmatmul.mubr.bf16.gmra.mrb[0].mxu0 %v743
    %v800 = vpop.f32.mrb[0].mxu0
    %v801 = vadd.f32 0.0, %v800
    %v802 = vpop.f32.mrb[0].mxu0
    %v803 = vpop.f32.mrb[0].mxu0
    %v804 = vadd.f32 0.0, %v803
    %v805 = vpop.f32.mrb[0].mxu0
    %806 = vmatprep.mubr.bf16.mxu0 0
    %807 = vmatmul.mubr.bf16.gmra.mrb[0].mxu0 %v744
    %v808 = vpop.f32.mrb[0].mxu0
    %v809 = vadd.f32 0.0, %v808
    %v810 = vpop.f32.mrb[0].mxu0
    %v811 = vpop.f32.mrb[0].mxu0
    %v812 = vadd.f32 0.0, %v811
    %v813 = vpop.f32.mrb[0].mxu0
    %814 = vmatprep.mubr.bf16.mxu0 0
    %815 = vmatmul.mubr.bf16.gmra.mrb[0].mxu0 %v745
    %v816 = vpop.f32.mrb[0].mxu0
    %v817 = vadd.f32 0.0, %v816
    %v818 = vpop.f32.mrb[0].mxu0
    %v819 = vpop.f32.mrb[0].mxu0
    %v820 = vadd.f32 0.0, %v819
    %v821 = vpop.f32.mrb[0].mxu0
    %822 = vmatprep.mubr.bf16.mxu0 0
    %823 = vmatmul.mubr.bf16.gmra.mrb[0].mxu0 %v746
    %v824 = vpop.f32.mrb[0].mxu0
    %v825 = vadd.f32 0.0, %v824
    %v826 = vpop.f32.mrb[0].mxu0
    %v827 = vpop.f32.mrb[0].mxu0
    %v828 = vadd.f32 0.0, %v827
    %v829 = vpop.f32.mrb[0].mxu0
    %830 = vmatprep.mubr.bf16.mxu0 0
    %831 = vmatmul.mubr.bf16.gmra.mrb[0].mxu0 %v747
    %v832 = vpop.f32.mrb[0].mxu0
    %v833 = vadd.f32 0.0, %v832
    %v834 = vpop.f32.mrb[0].mxu0
    %v835 = vpop.f32.mrb[0].mxu0
    %v836 = vadd.f32 0.0, %v835
    %v837 = vpop.f32.mrb[0].mxu0
    %838 = vmatprep.mubr.bf16.mxu0 0
    %839 = vmatmul.mubr.bf16.gmra.mrb[0].mxu0 %v748
    %v840 = vpop.f32.mrb[0].mxu0
    %v841 = vadd.f32 0.0, %v840
    %v842 = vpop.f32.mrb[0].mxu0
    %v843 = vpop.f32.mrb[0].mxu0
    %v844 = vadd.f32 0.0, %v843
    %v845 = vpop.f32.mrb[0].mxu0
    %846 = vmatprep.mubr.bf16.mxu0 0
    %847 = vmatmul.mubr.bf16.gmra.mrb[0].mxu0 %v749
    %v848 = vpop.f32.mrb[0].mxu0
    %v849 = vadd.f32 0.0, %v848
    %v850 = vpop.f32.mrb[0].mxu0
    %v851 = vpop.f32.mrb[0].mxu0
    %v852 = vadd.f32 0.0, %v851
    %v853 = vpop.f32.mrb[0].mxu0
    %854 = vdwg.mxu0
    %s855 = scalar_lea.vmem %s1, 192
    %v856 = vld [vmem:[%s855] sm:$0xf]
    %v857 = vld [vmem:[%s855 + $0x4] sm:$0xf]
    %v858 = vld [vmem:[%s855 + $0x8] sm:$0xf]
    %v859 = vld [vmem:[%s855 + $0xc] sm:$0xf]
    %v860 = vld [vmem:[%s855 + $0x10] sm:$0xf]
    %v861 = vld [vmem:[%s855 + $0x14] sm:$0xf]
    %v862 = vld [vmem:[%s855 + $0x18] sm:$0xf]
    %v863 = vld [vmem:[%s855 + $0x1c] sm:$0xf]
    %v864 = vld [vmem:[%s855 + $0x20] sm:$0xf]
    %v865 = vld [vmem:[%s855 + $0x24] sm:$0xf]
    %v866 = vld [vmem:[%s855 + $0x28] sm:$0xf]
    %v867 = vld [vmem:[%s855 + $0x2c] sm:$0xf]
    %v868 = vld [vmem:[%s855 + $0x30] sm:$0xf]
    %v869 = vld [vmem:[%s855 + $0x34] sm:$0xf]
    %v870 = vld [vmem:[%s855 + $0x38] sm:$0xf]
    %v871 = vld [vmem:[%s855 + $0x3c] sm:$0xf]
    %v888 = vunpack.c.l.b16 %v856
    %v889 = vunpack.c.l.b16 %v857
    %v890 = vunpack.c.l.b16 %v858
    %v891 = vunpack.c.l.b16 %v859
    %v892 = vunpack.c.l.b16 %v860
    %v893 = vunpack.c.l.b16 %v861
    %v894 = vunpack.c.l.b16 %v862
    %v895 = vunpack.c.l.b16 %v863
    %v896 = vunpack.c.l.b16 %v864
    %v897 = vunpack.c.l.b16 %v865
    %v898 = vunpack.c.l.b16 %v866
    %v899 = vunpack.c.l.b16 %v867
    %v900 = vunpack.c.l.b16 %v868
    %v901 = vunpack.c.l.b16 %v869
    %v902 = vunpack.c.l.b16 %v870
    %v903 = vunpack.c.l.b16 %v871
    %v904 = vpack.c.b16 %v889, %v888
    %v905 = vpack.c.b16 %v891, %v890
    %v906 = vpack.c.b16 %v893, %v892
    %v907 = vpack.c.b16 %v895, %v894
    %v908 = vpack.c.b16 %v897, %v896
    %v909 = vpack.c.b16 %v899, %v898
    %v910 = vpack.c.b16 %v901, %v900
    %v911 = vpack.c.b16 %v903, %v902
    %920 = vmatprep.subr.bf16.mxu0 0
    %921 = vmatpush1.bf16.msra.mxu0 %v362
    %922 = vmatprep.subr.bf16.mxu0 0
    %923 = vmatpush1.bf16.msra.mxu0 %v363
    %924 = vmatprep.subr.bf16.mxu0 0
    %925 = vmatpush1.bf16.msra.mxu0 %v364
    %926 = vmatprep.subr.bf16.mxu0 0
    %927 = vmatpush1.bf16.msra.mxu0 %v365
    %928 = vmatprep.subr.bf16.mxu0 0
    %929 = vmatpush1.bf16.msra.mxu0 %v366
    %930 = vmatprep.subr.bf16.mxu0 0
    %931 = vmatpush1.bf16.msra.mxu0 %v367
    %932 = vmatprep.subr.bf16.mxu0 0
    %933 = vmatpush1.bf16.msra.mxu0 %v368
    %934 = vmatprep.subr.bf16.mxu0 0
    %935 = vmatpush1.bf16.msra.mxu0 %v369
    %936 = vmatprep.subr.bf16.mxu0 0
    %937 = vmatpush1.bf16.msra.mxu0 0
    %938 = vmatprep.subr.bf16.mxu0 0
    %939 = vmatpush1.bf16.msra.mxu0 0
    %940 = vmatprep.subr.bf16.mxu0 0
    %941 = vmatpush1.bf16.msra.mxu0 0
    %942 = vmatprep.subr.bf16.mxu0 0
    %943 = vmatpush1.bf16.msra.mxu0 0
    %944 = vmatprep.subr.bf16.mxu0 0
    %945 = vmatpush1.bf16.msra.mxu0 0
    %946 = vmatprep.subr.bf16.mxu0 0
    %947 = vmatpush1.bf16.msra.mxu0 0
    %948 = vmatprep.subr.bf16.mxu0 0
    %949 = vmatpush1.bf16.msra.mxu0 0
    %950 = vmatprep.subr.bf16.mxu0 0
    %951 = vmatpush1.bf16.msra.mxu0 0
    %952 = vmatprep.mubr.bf16.mxu0 0
    %953 = vmatmul.mubr.bf16.gmra.mrb[0].mxu0 %v904
    %v954 = vpop.f32.mrb[0].mxu0
    %v955 = vadd.f32 0.0, %v954
    %v956 = vpop.f32.mrb[0].mxu0
    %v957 = vpop.f32.mrb[0].mxu0
    %v958 = vadd.f32 0.0, %v957
    %v959 = vpop.f32.mrb[0].mxu0
    %960 = vmatprep.mubr.bf16.mxu0 0
    %961 = vmatmul.mubr.bf16.gmra.mrb[0].mxu0 %v905
    %v962 = vpop.f32.mrb[0].mxu0
    %v963 = vadd.f32 0.0, %v962
    %v964 = vpop.f32.mrb[0].mxu0
    %v965 = vpop.f32.mrb[0].mxu0
    %v966 = vadd.f32 0.0, %v965
    %v967 = vpop.f32.mrb[0].mxu0
    %968 = vmatprep.mubr.bf16.mxu0 0
    %969 = vmatmul.mubr.bf16.gmra.mrb[0].mxu0 %v906
    %v970 = vpop.f32.mrb[0].mxu0
    %v971 = vadd.f32 0.0, %v970
    %v972 = vpop.f32.mrb[0].mxu0
    %v973 = vpop.f32.mrb[0].mxu0
    %v974 = vadd.f32 0.0, %v973
    %v975 = vpop.f32.mrb[0].mxu0
    %976 = vmatprep.mubr.bf16.mxu0 0
    %977 = vmatmul.mubr.bf16.gmra.mrb[0].mxu0 %v907
    %v978 = vpop.f32.mrb[0].mxu0
    %v979 = vadd.f32 0.0, %v978
    %v980 = vpop.f32.mrb[0].mxu0
    %v981 = vpop.f32.mrb[0].mxu0
    %v982 = vadd.f32 0.0, %v981
    %v983 = vpop.f32.mrb[0].mxu0
    %984 = vmatprep.mubr.bf16.mxu0 0
    %985 = vmatmul.mubr.bf16.gmra.mrb[0].mxu0 %v908
    %v986 = vpop.f32.mrb[0].mxu0
    %v987 = vadd.f32 0.0, %v986
    %v988 = vpop.f32.mrb[0].mxu0
    %v989 = vpop.f32.mrb[0].mxu0
    %v990 = vadd.f32 0.0, %v989
    %v991 = vpop.f32.mrb[0].mxu0
    %992 = vmatprep.mubr.bf16.mxu0 0
    %993 = vmatmul.mubr.bf16.gmra.mrb[0].mxu0 %v909
    %v994 = vpop.f32.mrb[0].mxu0
    %v995 = vadd.f32 0.0, %v994
    %v996 = vpop.f32.mrb[0].mxu0
    %v997 = vpop.f32.mrb[0].mxu0
    %v998 = vadd.f32 0.0, %v997
    %v999 = vpop.f32.mrb[0].mxu0
    %1000 = vmatprep.mubr.bf16.mxu0 0
    %1001 = vmatmul.mubr.bf16.gmra.mrb[0].mxu0 %v910
    %v1002 = vpop.f32.mrb[0].mxu0
    %v1003 = vadd.f32 0.0, %v1002
    %v1004 = vpop.f32.mrb[0].mxu0
    %v1005 = vpop.f32.mrb[0].mxu0
    %v1006 = vadd.f32 0.0, %v1005
    %v1007 = vpop.f32.mrb[0].mxu0
    %1008 = vmatprep.mubr.bf16.mxu0 0
    %1009 = vmatmul.mubr.bf16.gmra.mrb[0].mxu0 %v911
    %v1010 = vpop.f32.mrb[0].mxu0
    %v1011 = vadd.f32 0.0, %v1010
    %v1012 = vpop.f32.mrb[0].mxu0
    %v1013 = vpop.f32.mrb[0].mxu0
    %v1014 = vadd.f32 0.0, %v1013
    %v1015 = vpop.f32.mrb[0].mxu0
    %1016 = vdwg.mxu0
    %v1017 = vpack.c.bf16 %v472, %v469
    %v1018 = vpack.c.bf16 %v634, %v631
    %v1019 = vpack.c.bf16 %v796, %v793
    %v1020 = vpack.c.bf16 %v958, %v955
    %v1021 = vpack.c.bf16 %v480, %v477
    %v1022 = vpack.c.bf16 %v642, %v639
    %v1023 = vpack.c.bf16 %v804, %v801
    %v1024 = vpack.c.bf16 %v966, %v963
    %v1025 = vpack.c.bf16 %v488, %v485
    %v1026 = vpack.c.bf16 %v650, %v647
    %v1027 = vpack.c.bf16 %v812, %v809
    %v1028 = vpack.c.bf16 %v974, %v971
    %v1029 = vpack.c.bf16 %v496, %v493
    %v1030 = vpack.c.bf16 %v658, %v655
    %v1031 = vpack.c.bf16 %v820, %v817
    %v1032 = vpack.c.bf16 %v982, %v979
    %v1033 = vpack.c.bf16 %v504, %v501
    %v1034 = vpack.c.bf16 %v666, %v663
    %v1035 = vpack.c.bf16 %v828, %v825
    %v1036 = vpack.c.bf16 %v990, %v987
    %v1037 = vpack.c.bf16 %v512, %v509
    %v1038 = vpack.c.bf16 %v674, %v671
    %v1039 = vpack.c.bf16 %v836, %v833
    %v1040 = vpack.c.bf16 %v998, %v995
    %v1041 = vpack.c.bf16 %v520, %v517
    %v1042 = vpack.c.bf16 %v682, %v679
    %v1043 = vpack.c.bf16 %v844, %v841
    %v1044 = vpack.c.bf16 %v1006, %v1003
    %v1045 = vpack.c.bf16 %v528, %v525
    %v1046 = vpack.c.bf16 %v690, %v687
    %v1047 = vpack.c.bf16 %v852, %v849
    %v1048 = vpack.c.bf16 %v1014, %v1011
    %v1049 = vld [vmem:[#allocation10] sm:$0xf]
    %v1050 = vld [vmem:[#allocation10 + $0x4] sm:$0xf]
    %v1051 = vld [vmem:[#allocation10 + $0x8] sm:$0xf]
    %v1052 = vld [vmem:[#allocation10 + $0xc] sm:$0xf]
    %v1053 = vld [vmem:[#allocation10 + $0x10] sm:$0xf]
    %v1054 = vld [vmem:[#allocation10 + $0x14] sm:$0xf]
    %v1055 = vld [vmem:[#allocation10 + $0x18] sm:$0xf]
    %v1056 = vld [vmem:[#allocation10 + $0x1c] sm:$0xf]
    %v1057 = vld [vmem:[#allocation10 + $0x20] sm:$0xf]
    %v1058 = vld [vmem:[#allocation10 + $0x24] sm:$0xf]
    %v1059 = vld [vmem:[#allocation10 + $0x28] sm:$0xf]
    %v1060 = vld [vmem:[#allocation10 + $0x2c] sm:$0xf]
    %v1061 = vld [vmem:[#allocation10 + $0x30] sm:$0xf]
    %v1062 = vld [vmem:[#allocation10 + $0x34] sm:$0xf]
    %v1063 = vld [vmem:[#allocation10 + $0x38] sm:$0xf]
    %v1064 = vld [vmem:[#allocation10 + $0x3c] sm:$0xf]
    %v1065 = vld [vmem:[#allocation8] sm:$0xf]
    %v1066 = vld [vmem:[#allocation8 + $0x4] sm:$0xf]
    %v1067 = vld [vmem:[#allocation8 + $0x8] sm:$0xf]
    %v1068 = vld [vmem:[#allocation8 + $0xc] sm:$0xf]
    %v1069 = vld [vmem:[#allocation8 + $0x10] sm:$0xf]
    %v1070 = vld [vmem:[#allocation8 + $0x14] sm:$0xf]
    %v1071 = vld [vmem:[#allocation8 + $0x18] sm:$0xf]
    %v1072 = vld [vmem:[#allocation8 + $0x1c] sm:$0xf]
    %v1073 = vld [vmem:[#allocation8 + $0x20] sm:$0xf]
    %v1074 = vld [vmem:[#allocation8 + $0x24] sm:$0xf]
    %v1075 = vld [vmem:[#allocation8 + $0x28] sm:$0xf]
    %v1076 = vld [vmem:[#allocation8 + $0x2c] sm:$0xf]
    %v1077 = vld [vmem:[#allocation8 + $0x30] sm:$0xf]
    %v1078 = vld [vmem:[#allocation8 + $0x34] sm:$0xf]
    %v1079 = vld [vmem:[#allocation8 + $0x38] sm:$0xf]
    %v1080 = vld [vmem:[#allocation8 + $0x3c] sm:$0xf]
    %v1081 = vld [vmem:[#allocation8 + $0x40] sm:$0xf]
    %v1082 = vld [vmem:[#allocation8 + $0x44] sm:$0xf]
    %v1083 = vld [vmem:[#allocation8 + $0x48] sm:$0xf]
    %v1084 = vld [vmem:[#allocation8 + $0x4c] sm:$0xf]
    %v1085 = vld [vmem:[#allocation8 + $0x50] sm:$0xf]
    %v1086 = vld [vmem:[#allocation8 + $0x54] sm:$0xf]
    %v1087 = vld [vmem:[#allocation8 + $0x58] sm:$0xf]
    %v1088 = vld [vmem:[#allocation8 + $0x5c] sm:$0xf]
    %v1089 = vld [vmem:[#allocation8 + $0x60] sm:$0xf]
    %v1090 = vld [vmem:[#allocation8 + $0x64] sm:$0xf]
    %v1091 = vld [vmem:[#allocation8 + $0x68] sm:$0xf]
    %v1092 = vld [vmem:[#allocation8 + $0x6c] sm:$0xf]
    %v1093 = vld [vmem:[#allocation8 + $0x70] sm:$0xf]
    %v1094 = vld [vmem:[#allocation8 + $0x74] sm:$0xf]
    %v1095 = vld [vmem:[#allocation8 + $0x78] sm:$0xf]
    %v1096 = vld [vmem:[#allocation8 + $0x7c] sm:$0xf]
    %v1097 = vld [vmem:[#allocation8 + $0x80] sm:$0xf]
    %v1098 = vld [vmem:[#allocation8 + $0x84] sm:$0xf]
    %v1099 = vld [vmem:[#allocation8 + $0x88] sm:$0xf]
    %v1100 = vld [vmem:[#allocation8 + $0x8c] sm:$0xf]
    %v1101 = vld [vmem:[#allocation8 + $0x90] sm:$0xf]
    %v1102 = vld [vmem:[#allocation8 + $0x94] sm:$0xf]
    %v1103 = vld [vmem:[#allocation8 + $0x98] sm:$0xf]
    %v1104 = vld [vmem:[#allocation8 + $0x9c] sm:$0xf]
    %v1105 = vld [vmem:[#allocation8 + $0xa0] sm:$0xf]
    %v1106 = vld [vmem:[#allocation8 + $0xa4] sm:$0xf]
    %v1107 = vld [vmem:[#allocation8 + $0xa8] sm:$0xf]
    %v1108 = vld [vmem:[#allocation8 + $0xac] sm:$0xf]
    %v1109 = vld [vmem:[#allocation8 + $0xb0] sm:$0xf]
    %v1110 = vld [vmem:[#allocation8 + $0xb4] sm:$0xf]
    %v1111 = vld [vmem:[#allocation8 + $0xb8] sm:$0xf]
    %v1112 = vld [vmem:[#allocation8 + $0xbc] sm:$0xf]
    %v1113 = vld [vmem:[#allocation8 + $0xc0] sm:$0xf]
    %v1114 = vld [vmem:[#allocation8 + $0xc4] sm:$0xf]
    %v1115 = vld [vmem:[#allocation8 + $0xc8] sm:$0xf]
    %v1116 = vld [vmem:[#allocation8 + $0xcc] sm:$0xf]
    %v1117 = vld [vmem:[#allocation8 + $0xd0] sm:$0xf]
    %v1118 = vld [vmem:[#allocation8 + $0xd4] sm:$0xf]
    %v1119 = vld [vmem:[#allocation8 + $0xd8] sm:$0xf]
    %v1120 = vld [vmem:[#allocation8 + $0xdc] sm:$0xf]
    %v1121 = vld [vmem:[#allocation8 + $0xe0] sm:$0xf]
    %v1122 = vld [vmem:[#allocation8 + $0xe4] sm:$0xf]
    %v1123 = vld [vmem:[#allocation8 + $0xe8] sm:$0xf]
    %v1124 = vld [vmem:[#allocation8 + $0xec] sm:$0xf]
    %v1125 = vld [vmem:[#allocation8 + $0xf0] sm:$0xf]
    %v1126 = vld [vmem:[#allocation8 + $0xf4] sm:$0xf]
    %v1127 = vld [vmem:[#allocation8 + $0xf8] sm:$0xf]
    %v1128 = vld [vmem:[#allocation8 + $0xfc] sm:$0xf]
    %v1193 = vunpack.c.l.b16 %v1065
    %v1194 = vunpack.c.l.b16 %v1066
    %v1195 = vunpack.c.l.b16 %v1067
    %v1196 = vunpack.c.l.b16 %v1068
    %v1197 = vunpack.c.l.b16 %v1069
    %v1198 = vunpack.c.l.b16 %v1070
    %v1199 = vunpack.c.l.b16 %v1071
    %v1200 = vunpack.c.l.b16 %v1072
    %v1201 = vunpack.c.l.b16 %v1073
    %v1202 = vunpack.c.l.b16 %v1074
    %v1203 = vunpack.c.l.b16 %v1075
    %v1204 = vunpack.c.l.b16 %v1076
    %v1205 = vunpack.c.l.b16 %v1077
    %v1206 = vunpack.c.l.b16 %v1078
    %v1207 = vunpack.c.l.b16 %v1079
    %v1208 = vunpack.c.l.b16 %v1080
    %v1209 = vunpack.c.l.b16 %v1081
    %v1210 = vunpack.c.l.b16 %v1082
    %v1211 = vunpack.c.l.b16 %v1083
    %v1212 = vunpack.c.l.b16 %v1084
    %v1213 = vunpack.c.l.b16 %v1085
    %v1214 = vunpack.c.l.b16 %v1086
    %v1215 = vunpack.c.l.b16 %v1087
    %v1216 = vunpack.c.l.b16 %v1088
    %v1217 = vunpack.c.l.b16 %v1089
    %v1218 = vunpack.c.l.b16 %v1090
    %v1219 = vunpack.c.l.b16 %v1091
    %v1220 = vunpack.c.l.b16 %v1092
    %v1221 = vunpack.c.l.b16 %v1093
    %v1222 = vunpack.c.l.b16 %v1094
    %v1223 = vunpack.c.l.b16 %v1095
    %v1224 = vunpack.c.l.b16 %v1096
    %v1225 = vunpack.c.l.b16 %v1097
    %v1226 = vunpack.c.l.b16 %v1098
    %v1227 = vunpack.c.l.b16 %v1099
    %v1228 = vunpack.c.l.b16 %v1100
    %v1229 = vunpack.c.l.b16 %v1101
    %v1230 = vunpack.c.l.b16 %v1102
    %v1231 = vunpack.c.l.b16 %v1103
    %v1232 = vunpack.c.l.b16 %v1104
    %v1233 = vunpack.c.l.b16 %v1105
    %v1234 = vunpack.c.l.b16 %v1106
    %v1235 = vunpack.c.l.b16 %v1107
    %v1236 = vunpack.c.l.b16 %v1108
    %v1237 = vunpack.c.l.b16 %v1109
    %v1238 = vunpack.c.l.b16 %v1110
    %v1239 = vunpack.c.l.b16 %v1111
    %v1240 = vunpack.c.l.b16 %v1112
    %v1241 = vunpack.c.l.b16 %v1113
    %v1242 = vunpack.c.l.b16 %v1114
    %v1243 = vunpack.c.l.b16 %v1115
    %v1244 = vunpack.c.l.b16 %v1116
    %v1245 = vunpack.c.l.b16 %v1117
    %v1246 = vunpack.c.l.b16 %v1118
    %v1247 = vunpack.c.l.b16 %v1119
    %v1248 = vunpack.c.l.b16 %v1120
    %v1249 = vunpack.c.l.b16 %v1121
    %v1250 = vunpack.c.l.b16 %v1122
    %v1251 = vunpack.c.l.b16 %v1123
    %v1252 = vunpack.c.l.b16 %v1124
    %v1253 = vunpack.c.l.b16 %v1125
    %v1254 = vunpack.c.l.b16 %v1126
    %v1255 = vunpack.c.l.b16 %v1127
    %v1256 = vunpack.c.l.b16 %v1128
    %v1257 = vpack.c.b16 %v1194, %v1193
    %v1258 = vpack.c.b16 %v1196, %v1195
    %v1259 = vpack.c.b16 %v1198, %v1197
    %v1260 = vpack.c.b16 %v1200, %v1199
    %v1261 = vpack.c.b16 %v1202, %v1201
    %v1262 = vpack.c.b16 %v1204, %v1203
    %v1263 = vpack.c.b16 %v1206, %v1205
    %v1264 = vpack.c.b16 %v1208, %v1207
    %v1265 = vpack.c.b16 %v1210, %v1209
    %v1266 = vpack.c.b16 %v1212, %v1211
    %v1267 = vpack.c.b16 %v1214, %v1213
    %v1268 = vpack.c.b16 %v1216, %v1215
    %v1269 = vpack.c.b16 %v1218, %v1217
    %v1270 = vpack.c.b16 %v1220, %v1219
    %v1271 = vpack.c.b16 %v1222, %v1221
    %v1272 = vpack.c.b16 %v1224, %v1223
    %v1273 = vpack.c.b16 %v1226, %v1225
    %v1274 = vpack.c.b16 %v1228, %v1227
    %v1275 = vpack.c.b16 %v1230, %v1229
    %v1276 = vpack.c.b16 %v1232, %v1231
    %v1277 = vpack.c.b16 %v1234, %v1233
    %v1278 = vpack.c.b16 %v1236, %v1235
    %v1279 = vpack.c.b16 %v1238, %v1237
    %v1280 = vpack.c.b16 %v1240, %v1239
    %v1281 = vpack.c.b16 %v1242, %v1241
    %v1282 = vpack.c.b16 %v1244, %v1243
    %v1283 = vpack.c.b16 %v1246, %v1245
    %v1284 = vpack.c.b16 %v1248, %v1247
    %v1285 = vpack.c.b16 %v1250, %v1249
    %v1286 = vpack.c.b16 %v1252, %v1251
    %v1287 = vpack.c.b16 %v1254, %v1253
    %v1288 = vpack.c.b16 %v1256, %v1255
    %1321 = vmatprep.subr.bf16.mxu0 0
    %1322 = vmatpush1.bf16.msra.mxu0 %v1257
    %1323 = vmatprep.subr.bf16.mxu0 0
    %1324 = vmatpush1.bf16.msra.mxu0 %v1258
    %1325 = vmatprep.subr.bf16.mxu0 0
    %1326 = vmatpush1.bf16.msra.mxu0 %v1259
    %1327 = vmatprep.subr.bf16.mxu0 0
    %1328 = vmatpush1.bf16.msra.mxu0 %v1260
    %1329 = vmatprep.subr.bf16.mxu0 0
    %1330 = vmatpush1.bf16.msra.mxu0 %v1261
    %1331 = vmatprep.subr.bf16.mxu0 0
    %1332 = vmatpush1.bf16.msra.mxu0 %v1262
    %1333 = vmatprep.subr.bf16.mxu0 0
    %1334 = vmatpush1.bf16.msra.mxu0 %v1263
    %1335 = vmatprep.subr.bf16.mxu0 0
    %1336 = vmatpush1.bf16.msra.mxu0 %v1264
    %1337 = vmatprep.subr.bf16.mxu0 0
    %1338 = vmatpush1.bf16.msra.mxu0 %v1265
    %1339 = vmatprep.subr.bf16.mxu0 0
    %1340 = vmatpush1.bf16.msra.mxu0 %v1266
    %1341 = vmatprep.subr.bf16.mxu0 0
    %1342 = vmatpush1.bf16.msra.mxu0 %v1267
    %1343 = vmatprep.subr.bf16.mxu0 0
    %1344 = vmatpush1.bf16.msra.mxu0 %v1268
    %1345 = vmatprep.subr.bf16.mxu0 0
    %1346 = vmatpush1.bf16.msra.mxu0 %v1269
    %1347 = vmatprep.subr.bf16.mxu0 0
    %1348 = vmatpush1.bf16.msra.mxu0 %v1270
    %1349 = vmatprep.subr.bf16.mxu0 0
    %1350 = vmatpush1.bf16.msra.mxu0 %v1271
    %1351 = vmatprep.subr.bf16.mxu0 0
    %1352 = vmatpush1.bf16.msra.mxu0 %v1272
    %1353 = vmatprep.mubr.bf16.mxu0 %v1018
    %1354 = vmatmul.mubr.bf16.gmra.mrb[0].mxu0 %v1017
    %v1355 = vpop.f32.mrb[0].mxu0
    %v1356 = vadd.f32 0.0, %v1355
    %v1357 = vpop.f32.mrb[0].mxu0
    %v1358 = vpop.f32.mrb[0].mxu0
    %v1359 = vadd.f32 0.0, %v1358
    %v1360 = vpop.f32.mrb[0].mxu0
    %1361 = vmatprep.mubr.bf16.mxu0 %v1022
    %1362 = vmatmul.mubr.bf16.gmra.mrb[0].mxu0 %v1021
    %v1363 = vpop.f32.mrb[0].mxu0
    %v1364 = vadd.f32 0.0, %v1363
    %v1365 = vpop.f32.mrb[0].mxu0
    %v1366 = vpop.f32.mrb[0].mxu0
    %v1367 = vadd.f32 0.0, %v1366
    %v1368 = vpop.f32.mrb[0].mxu0
    %1369 = vmatprep.mubr.bf16.mxu0 %v1026
    %1370 = vmatmul.mubr.bf16.gmra.mrb[0].mxu0 %v1025
    %v1371 = vpop.f32.mrb[0].mxu0
    %v1372 = vadd.f32 0.0, %v1371
    %v1373 = vpop.f32.mrb[0].mxu0
    %v1374 = vpop.f32.mrb[0].mxu0
    %v1375 = vadd.f32 0.0, %v1374
    %v1376 = vpop.f32.mrb[0].mxu0
    %1377 = vmatprep.mubr.bf16.mxu0 %v1030
    %1378 = vmatmul.mubr.bf16.gmra.mrb[0].mxu0 %v1029
    %v1379 = vpop.f32.mrb[0].mxu0
    %v1380 = vadd.f32 0.0, %v1379
    %v1381 = vpop.f32.mrb[0].mxu0
    %v1382 = vpop.f32.mrb[0].mxu0
    %v1383 = vadd.f32 0.0, %v1382
    %v1384 = vpop.f32.mrb[0].mxu0
    %1385 = vmatprep.mubr.bf16.mxu0 %v1034
    %1386 = vmatmul.mubr.bf16.gmra.mrb[0].mxu0 %v1033
    %v1387 = vpop.f32.mrb[0].mxu0
    %v1388 = vadd.f32 0.0, %v1387
    %v1389 = vpop.f32.mrb[0].mxu0
    %v1390 = vpop.f32.mrb[0].mxu0
    %v1391 = vadd.f32 0.0, %v1390
    %v1392 = vpop.f32.mrb[0].mxu0
    %1393 = vmatprep.mubr.bf16.mxu0 %v1038
    %1394 = vmatmul.mubr.bf16.gmra.mrb[0].mxu0 %v1037
    %v1395 = vpop.f32.mrb[0].mxu0
    %v1396 = vadd.f32 0.0, %v1395
    %v1397 = vpop.f32.mrb[0].mxu0
    %v1398 = vpop.f32.mrb[0].mxu0
    %v1399 = vadd.f32 0.0, %v1398
    %v1400 = vpop.f32.mrb[0].mxu0
    %1401 = vmatprep.mubr.bf16.mxu0 %v1042
    %1402 = vmatmul.mubr.bf16.gmra.mrb[0].mxu0 %v1041
    %v1403 = vpop.f32.mrb[0].mxu0
    %v1404 = vadd.f32 0.0, %v1403
    %v1405 = vpop.f32.mrb[0].mxu0
    %v1406 = vpop.f32.mrb[0].mxu0
    %v1407 = vadd.f32 0.0, %v1406
    %v1408 = vpop.f32.mrb[0].mxu0
    %1409 = vmatprep.mubr.bf16.mxu0 %v1046
    %1410 = vmatmul.mubr.bf16.gmra.mrb[0].mxu0 %v1045
    %v1411 = vpop.f32.mrb[0].mxu0
    %v1412 = vadd.f32 0.0, %v1411
    %v1413 = vpop.f32.mrb[0].mxu0
    %v1414 = vpop.f32.mrb[0].mxu0
    %v1415 = vadd.f32 0.0, %v1414
    %v1416 = vpop.f32.mrb[0].mxu0
    %1417 = vdwg.mxu0
    %1418 = vmatprep.subr.bf16.mxu0 0
    %1419 = vmatpush1.bf16.msra.mxu0 %v1273
    %1420 = vmatprep.subr.bf16.mxu0 0
    %1421 = vmatpush1.bf16.msra.mxu0 %v1274
    %1422 = vmatprep.subr.bf16.mxu0 0
    %1423 = vmatpush1.bf16.msra.mxu0 %v1275
    %1424 = vmatprep.subr.bf16.mxu0 0
    %1425 = vmatpush1.bf16.msra.mxu0 %v1276
    %1426 = vmatprep.subr.bf16.mxu0 0
    %1427 = vmatpush1.bf16.msra.mxu0 %v1277
    %1428 = vmatprep.subr.bf16.mxu0 0
    %1429 = vmatpush1.bf16.msra.mxu0 %v1278
    %1430 = vmatprep.subr.bf16.mxu0 0
    %1431 = vmatpush1.bf16.msra.mxu0 %v1279
    %1432 = vmatprep.subr.bf16.mxu0 0
    %1433 = vmatpush1.bf16.msra.mxu0 %v1280
    %1434 = vmatprep.subr.bf16.mxu0 0
    %1435 = vmatpush1.bf16.msra.mxu0 %v1281
    %1436 = vmatprep.subr.bf16.mxu0 0
    %1437 = vmatpush1.bf16.msra.mxu0 %v1282
    %1438 = vmatprep.subr.bf16.mxu0 0
    %1439 = vmatpush1.bf16.msra.mxu0 %v1283
    %1440 = vmatprep.subr.bf16.mxu0 0
    %1441 = vmatpush1.bf16.msra.mxu0 %v1284
    %1442 = vmatprep.subr.bf16.mxu0 0
    %1443 = vmatpush1.bf16.msra.mxu0 %v1285
    %1444 = vmatprep.subr.bf16.mxu0 0
    %1445 = vmatpush1.bf16.msra.mxu0 %v1286
    %1446 = vmatprep.subr.bf16.mxu0 0
    %1447 = vmatpush1.bf16.msra.mxu0 %v1287
    %1448 = vmatprep.subr.bf16.mxu0 0
    %1449 = vmatpush1.bf16.msra.mxu0 %v1288
    %1450 = vmatprep.mubr.bf16.mxu0 %v1020
    %1451 = vmatmul.mubr.bf16.gmra.mrb[0].mxu0 %v1019
    %v1452 = vpop.f32.mrb[0].mxu0
    %v1453 = vadd.f32 %v1356, %v1452
    %v1454 = vpop.f32.mrb[0].mxu0
    %v1455 = vpop.f32.mrb[0].mxu0
    %v1456 = vadd.f32 %v1359, %v1455
    %v1457 = vpop.f32.mrb[0].mxu0
    %1458 = vmatprep.mubr.bf16.mxu0 %v1024
    %1459 = vmatmul.mubr.bf16.gmra.mrb[0].mxu0 %v1023
    %v1460 = vpop.f32.mrb[0].mxu0
    %v1461 = vadd.f32 %v1364, %v1460
    %v1462 = vpop.f32.mrb[0].mxu0
    %v1463 = vpop.f32.mrb[0].mxu0
    %v1464 = vadd.f32 %v1367, %v1463
    %v1465 = vpop.f32.mrb[0].mxu0
    %1466 = vmatprep.mubr.bf16.mxu0 %v1028
    %1467 = vmatmul.mubr.bf16.gmra.mrb[0].mxu0 %v1027
    %v1468 = vpop.f32.mrb[0].mxu0
    %v1469 = vadd.f32 %v1372, %v1468
    %v1470 = vpop.f32.mrb[0].mxu0
    %v1471 = vpop.f32.mrb[0].mxu0
    %v1472 = vadd.f32 %v1375, %v1471
    %v1473 = vpop.f32.mrb[0].mxu0
    %1474 = vmatprep.mubr.bf16.mxu0 %v1032
    %1475 = vmatmul.mubr.bf16.gmra.mrb[0].mxu0 %v1031
    %v1476 = vpop.f32.mrb[0].mxu0
    %v1477 = vadd.f32 %v1380, %v1476
    %v1478 = vpop.f32.mrb[0].mxu0
    %v1479 = vpop.f32.mrb[0].mxu0
    %v1480 = vadd.f32 %v1383, %v1479
    %v1481 = vpop.f32.mrb[0].mxu0
    %1482 = vmatprep.mubr.bf16.mxu0 %v1036
    %1483 = vmatmul.mubr.bf16.gmra.mrb[0].mxu0 %v1035
    %v1484 = vpop.f32.mrb[0].mxu0
    %v1485 = vadd.f32 %v1388, %v1484
    %v1486 = vpop.f32.mrb[0].mxu0
    %v1487 = vpop.f32.mrb[0].mxu0
    %v1488 = vadd.f32 %v1391, %v1487
    %v1489 = vpop.f32.mrb[0].mxu0
    %1490 = vmatprep.mubr.bf16.mxu0 %v1040
    %1491 = vmatmul.mubr.bf16.gmra.mrb[0].mxu0 %v1039
    %v1492 = vpop.f32.mrb[0].mxu0
    %v1493 = vadd.f32 %v1396, %v1492
    %v1494 = vpop.f32.mrb[0].mxu0
    %v1495 = vpop.f32.mrb[0].mxu0
    %v1496 = vadd.f32 %v1399, %v1495
    %v1497 = vpop.f32.mrb[0].mxu0
    %1498 = vmatprep.mubr.bf16.mxu0 %v1044
    %1499 = vmatmul.mubr.bf16.gmra.mrb[0].mxu0 %v1043
    %v1500 = vpop.f32.mrb[0].mxu0
    %v1501 = vadd.f32 %v1404, %v1500
    %v1502 = vpop.f32.mrb[0].mxu0
    %v1503 = vpop.f32.mrb[0].mxu0
    %v1504 = vadd.f32 %v1407, %v1503
    %v1505 = vpop.f32.mrb[0].mxu0
    %1506 = vmatprep.mubr.bf16.mxu0 %v1048
    %1507 = vmatmul.mubr.bf16.gmra.mrb[0].mxu0 %v1047
    %v1508 = vpop.f32.mrb[0].mxu0
    %v1509 = vadd.f32 %v1412, %v1508
    %v1510 = vpop.f32.mrb[0].mxu0
    %v1511 = vpop.f32.mrb[0].mxu0
    %v1512 = vadd.f32 %v1415, %v1511
    %v1513 = vpop.f32.mrb[0].mxu0
    %1514 = vdwg.mxu0
    %v1531 = vunpack.c.l.b16 %v1049
    %v1532 = vunpack.c.l.b16 %v1050
    %v1533 = vunpack.c.l.b16 %v1051
    %v1534 = vunpack.c.l.b16 %v1052
    %v1535 = vunpack.c.l.b16 %v1053
    %v1536 = vunpack.c.l.b16 %v1054
    %v1537 = vunpack.c.l.b16 %v1055
    %v1538 = vunpack.c.l.b16 %v1056
    %v1539 = vunpack.c.l.b16 %v1057
    %v1540 = vunpack.c.l.b16 %v1058
    %v1541 = vunpack.c.l.b16 %v1059
    %v1542 = vunpack.c.l.b16 %v1060
    %v1543 = vunpack.c.l.b16 %v1061
    %v1544 = vunpack.c.l.b16 %v1062
    %v1545 = vunpack.c.l.b16 %v1063
    %v1546 = vunpack.c.l.b16 %v1064
    %v1547 = vpack.c.b16 %v1532, %v1531
    %v1548 = vpack.c.b16 %v1534, %v1533
    %v1549 = vpack.c.b16 %v1536, %v1535
    %v1550 = vpack.c.b16 %v1538, %v1537
    %v1551 = vpack.c.b16 %v1540, %v1539
    %v1552 = vpack.c.b16 %v1542, %v1541
    %v1553 = vpack.c.b16 %v1544, %v1543
    %v1554 = vpack.c.b16 %v1546, %v1545
    %1563 = vmatprep.subr.bf16.mxu0 0
    %1564 = vmatpush1.bf16.msra.mxu0 %v1547
    %1565 = vmatprep.subr.bf16.mxu0 0
    %1566 = vmatpush1.bf16.msra.mxu0 %v1548
    %1567 = vmatprep.subr.bf16.mxu0 0
    %1568 = vmatpush1.bf16.msra.mxu0 %v1549
    %1569 = vmatprep.subr.bf16.mxu0 0
    %1570 = vmatpush1.bf16.msra.mxu0 %v1550
    %1571 = vmatprep.subr.bf16.mxu0 0
    %1572 = vmatpush1.bf16.msra.mxu0 %v1551
    %1573 = vmatprep.subr.bf16.mxu0 0
    %1574 = vmatpush1.bf16.msra.mxu0 %v1552
    %1575 = vmatprep.subr.bf16.mxu0 0
    %1576 = vmatpush1.bf16.msra.mxu0 %v1553
    %1577 = vmatprep.subr.bf16.mxu0 0
    %1578 = vmatpush1.bf16.msra.mxu0 %v1554
    %1579 = vmatprep.subr.bf16.mxu0 0
    %1580 = vmatpush1.bf16.msra.mxu0 0
    %1581 = vmatprep.subr.bf16.mxu0 0
    %1582 = vmatpush1.bf16.msra.mxu0 0
    %1583 = vmatprep.subr.bf16.mxu0 0
    %1584 = vmatpush1.bf16.msra.mxu0 0
    %1585 = vmatprep.subr.bf16.mxu0 0
    %1586 = vmatpush1.bf16.msra.mxu0 0
    %1587 = vmatprep.subr.bf16.mxu0 0
    %1588 = vmatpush1.bf16.msra.mxu0 0
    %1589 = vmatprep.subr.bf16.mxu0 0
    %1590 = vmatpush1.bf16.msra.mxu0 0
    %1591 = vmatprep.subr.bf16.mxu0 0
    %1592 = vmatpush1.bf16.msra.mxu0 0
    %1593 = vmatprep.subr.bf16.mxu0 0
    %1594 = vmatpush1.bf16.msra.mxu0 0
    %1595 = vmatprep.mubr.bf16.mxu0 0
    %1596 = vmatmul.mubr.bf16.gmra.mrb[0].mxu0 %v362
    %v1597 = vpop.f32.mrb[0].mxu0
    %v1598 = vadd.f32 %v1453, %v1597
    %v1599 = vpop.f32.mrb[0].mxu0
    %v1600 = vpop.f32.mrb[0].mxu0
    %v1601 = vadd.f32 %v1456, %v1600
    %v1602 = vpop.f32.mrb[0].mxu0
    %1603 = vmatprep.mubr.bf16.mxu0 0
    %1604 = vmatmul.mubr.bf16.gmra.mrb[0].mxu0 %v363
    %v1605 = vpop.f32.mrb[0].mxu0
    %v1606 = vadd.f32 %v1461, %v1605
    %v1607 = vpop.f32.mrb[0].mxu0
    %v1608 = vpop.f32.mrb[0].mxu0
    %v1609 = vadd.f32 %v1464, %v1608
    %v1610 = vpop.f32.mrb[0].mxu0
    %1611 = vmatprep.mubr.bf16.mxu0 0
    %1612 = vmatmul.mubr.bf16.gmra.mrb[0].mxu0 %v364
    %v1613 = vpop.f32.mrb[0].mxu0
    %v1614 = vadd.f32 %v1469, %v1613
    %v1615 = vpop.f32.mrb[0].mxu0
    %v1616 = vpop.f32.mrb[0].mxu0
    %v1617 = vadd.f32 %v1472, %v1616
    %v1618 = vpop.f32.mrb[0].mxu0
    %1619 = vmatprep.mubr.bf16.mxu0 0
    %1620 = vmatmul.mubr.bf16.gmra.mrb[0].mxu0 %v365
    %v1621 = vpop.f32.mrb[0].mxu0
    %v1622 = vadd.f32 %v1477, %v1621
    %v1623 = vpop.f32.mrb[0].mxu0
    %v1624 = vpop.f32.mrb[0].mxu0
    %v1625 = vadd.f32 %v1480, %v1624
    %v1626 = vpop.f32.mrb[0].mxu0
    %1627 = vmatprep.mubr.bf16.mxu0 0
    %1628 = vmatmul.mubr.bf16.gmra.mrb[0].mxu0 %v366
    %v1629 = vpop.f32.mrb[0].mxu0
    %v1630 = vadd.f32 %v1485, %v1629
    %v1631 = vpop.f32.mrb[0].mxu0
    %v1632 = vpop.f32.mrb[0].mxu0
    %v1633 = vadd.f32 %v1488, %v1632
    %v1634 = vpop.f32.mrb[0].mxu0
    %1635 = vmatprep.mubr.bf16.mxu0 0
    %1636 = vmatmul.mubr.bf16.gmra.mrb[0].mxu0 %v367
    %v1637 = vpop.f32.mrb[0].mxu0
    %v1638 = vadd.f32 %v1493, %v1637
    %v1639 = vpop.f32.mrb[0].mxu0
    %v1640 = vpop.f32.mrb[0].mxu0
    %v1641 = vadd.f32 %v1496, %v1640
    %v1642 = vpop.f32.mrb[0].mxu0
    %1643 = vmatprep.mubr.bf16.mxu0 0
    %1644 = vmatmul.mubr.bf16.gmra.mrb[0].mxu0 %v368
    %v1645 = vpop.f32.mrb[0].mxu0
    %v1646 = vadd.f32 %v1501, %v1645
    %v1647 = vpop.f32.mrb[0].mxu0
    %v1648 = vpop.f32.mrb[0].mxu0
    %v1649 = vadd.f32 %v1504, %v1648
    %v1650 = vpop.f32.mrb[0].mxu0
    %1651 = vmatprep.mubr.bf16.mxu0 0
    %1652 = vmatmul.mubr.bf16.gmra.mrb[0].mxu0 %v369
    %v1653 = vpop.f32.mrb[0].mxu0
    %v1654 = vadd.f32 %v1509, %v1653
    %v1655 = vpop.f32.mrb[0].mxu0
    %v1656 = vpop.f32.mrb[0].mxu0
    %v1657 = vadd.f32 %v1512, %v1656
    %v1658 = vpop.f32.mrb[0].mxu0
    %1659 = vdwg.mxu0
    %v1660 = vld [vmem:[%s9] sm:$0x1]
    %v1662 = vlaneseq
    %v1663 = vshrl.u32 %v1662, 7
    %v1664 = vsub.s32 0, %v1663
    %v1665 = vrot.slane %v1660, %v1664
    %v1667 = vadd.f32 %v1598, %v1665
    %v1668 = vadd.f32 %v1601, %v1665
    %v1669 = vadd.f32 %v1606, %v1665
    %v1670 = vadd.f32 %v1609, %v1665
    %v1671 = vadd.f32 %v1614, %v1665
    %v1672 = vadd.f32 %v1617, %v1665
    %v1673 = vadd.f32 %v1622, %v1665
    %v1674 = vadd.f32 %v1625, %v1665
    %v1675 = vadd.f32 %v1630, %v1665
    %v1676 = vadd.f32 %v1633, %v1665
    %v1677 = vadd.f32 %v1638, %v1665
    %v1678 = vadd.f32 %v1641, %v1665
    %v1679 = vadd.f32 %v1646, %v1665
    %v1680 = vadd.f32 %v1649, %v1665
    %v1681 = vadd.f32 %v1654, %v1665
    %v1682 = vadd.f32 %v1657, %v1665
    %v1683 = vmax.f32 %v1667, 0.0
    %v1684 = vmax.f32 %v1668, 0.0
    %v1685 = vmax.f32 %v1669, 0.0
    %v1686 = vmax.f32 %v1670, 0.0
    %v1687 = vmax.f32 %v1671, 0.0
    %v1688 = vmax.f32 %v1672, 0.0
    %v1689 = vmax.f32 %v1673, 0.0
    %v1690 = vmax.f32 %v1674, 0.0
    %v1691 = vmax.f32 %v1675, 0.0
    %v1692 = vmax.f32 %v1676, 0.0
    %v1693 = vmax.f32 %v1677, 0.0
    %v1694 = vmax.f32 %v1678, 0.0
    %v1695 = vmax.f32 %v1679, 0.0
    %v1696 = vmax.f32 %v1680, 0.0
    %v1697 = vmax.f32 %v1681, 0.0
    %v1698 = vmax.f32 %v1682, 0.0
    %v1699 = vpack.c.bf16 %v1684, %v1683
    %v1700 = vpack.c.bf16 %v1686, %v1685
    %v1701 = vpack.c.bf16 %v1688, %v1687
    %v1702 = vpack.c.bf16 %v1690, %v1689
    %v1703 = vpack.c.bf16 %v1692, %v1691
    %v1704 = vpack.c.bf16 %v1694, %v1693
    %v1705 = vpack.c.bf16 %v1696, %v1695
    %v1706 = vpack.c.bf16 %v1698, %v1697
    %v1723 = vunpack.c.l.b16 %v188
    %v1724 = vunpack.c.l.b16 %v189
    %v1725 = vunpack.c.l.b16 %v190
    %v1726 = vunpack.c.l.b16 %v191
    %v1727 = vunpack.c.l.b16 %v192
    %v1728 = vunpack.c.l.b16 %v193
    %v1729 = vunpack.c.l.b16 %v194
    %v1730 = vunpack.c.l.b16 %v195
    %v1731 = vunpack.c.l.b16 %v196
    %v1732 = vunpack.c.l.b16 %v197
    %v1733 = vunpack.c.l.b16 %v198
    %v1734 = vunpack.c.l.b16 %v199
    %v1735 = vunpack.c.l.b16 %v200
    %v1736 = vunpack.c.l.b16 %v201
    %v1737 = vunpack.c.l.b16 %v202
    %v1738 = vunpack.c.l.b16 %v203
    %v1739 = vpack.c.b16 %v1724, %v1723
    %v1740 = vpack.c.b16 %v1726, %v1725
    %v1741 = vpack.c.b16 %v1728, %v1727
    %v1742 = vpack.c.b16 %v1730, %v1729
    %v1743 = vpack.c.b16 %v1732, %v1731
    %v1744 = vpack.c.b16 %v1734, %v1733
    %v1745 = vpack.c.b16 %v1736, %v1735
    %v1746 = vpack.c.b16 %v1738, %v1737
    %1755 = vmatprep.subr.bf16.mxu0 0
    %1756 = vmatpush1.bf16.msra.mxu0 %v1699
    %1757 = vmatprep.subr.bf16.mxu0 0
    %1758 = vmatpush1.bf16.msra.mxu0 %v1700
    %1759 = vmatprep.subr.bf16.mxu0 0
    %1760 = vmatpush1.bf16.msra.mxu0 %v1701
    %1761 = vmatprep.subr.bf16.mxu0 0
    %1762 = vmatpush1.bf16.msra.mxu0 %v1702
    %1763 = vmatprep.subr.bf16.mxu0 0
    %1764 = vmatpush1.bf16.msra.mxu0 %v1703
    %1765 = vmatprep.subr.bf16.mxu0 0
    %1766 = vmatpush1.bf16.msra.mxu0 %v1704
    %1767 = vmatprep.subr.bf16.mxu0 0
    %1768 = vmatpush1.bf16.msra.mxu0 %v1705
    %1769 = vmatprep.subr.bf16.mxu0 0
    %1770 = vmatpush1.bf16.msra.mxu0 %v1706
    %1771 = vmatprep.subr.bf16.mxu0 0
    %1772 = vmatpush1.bf16.msra.mxu0 0
    %1773 = vmatprep.subr.bf16.mxu0 0
    %1774 = vmatpush1.bf16.msra.mxu0 0
    %1775 = vmatprep.subr.bf16.mxu0 0
    %1776 = vmatpush1.bf16.msra.mxu0 0
    %1777 = vmatprep.subr.bf16.mxu0 0
    %1778 = vmatpush1.bf16.msra.mxu0 0
    %1779 = vmatprep.subr.bf16.mxu0 0
    %1780 = vmatpush1.bf16.msra.mxu0 0
    %1781 = vmatprep.subr.bf16.mxu0 0
    %1782 = vmatpush1.bf16.msra.mxu0 0
    %1783 = vmatprep.subr.bf16.mxu0 0
    %1784 = vmatpush1.bf16.msra.mxu0 0
    %1785 = vmatprep.subr.bf16.mxu0 0
    %1786 = vmatpush1.bf16.msra.mxu0 0
    %1787 = vmatprep.mubr.bf16.mxu0 0
    %1788 = vmatmul.mubr.bf16.gmra.mrb[0].mxu0 %v1739
    %v1789 = vpop.f32.mrb[0].mxu0
    %v1790 = vadd.f32 0.0, %v1789
    %v1791 = vpop.f32.mrb[0].mxu0
    %v1792 = vpop.f32.mrb[0].mxu0
    %v1793 = vadd.f32 0.0, %v1792
    %v1794 = vpop.f32.mrb[0].mxu0
    %1795 = vmatprep.mubr.bf16.mxu0 0
    %1796 = vmatmul.mubr.bf16.gmra.mrb[0].mxu0 %v1740
    %v1797 = vpop.f32.mrb[0].mxu0
    %v1798 = vadd.f32 0.0, %v1797
    %v1799 = vpop.f32.mrb[0].mxu0
    %v1800 = vpop.f32.mrb[0].mxu0
    %v1801 = vadd.f32 0.0, %v1800
    %v1802 = vpop.f32.mrb[0].mxu0
    %1803 = vmatprep.mubr.bf16.mxu0 0
    %1804 = vmatmul.mubr.bf16.gmra.mrb[0].mxu0 %v1741
    %v1805 = vpop.f32.mrb[0].mxu0
    %v1806 = vadd.f32 0.0, %v1805
    %v1807 = vpop.f32.mrb[0].mxu0
    %v1808 = vpop.f32.mrb[0].mxu0
    %v1809 = vadd.f32 0.0, %v1808
    %v1810 = vpop.f32.mrb[0].mxu0
    %1811 = vmatprep.mubr.bf16.mxu0 0
    %1812 = vmatmul.mubr.bf16.gmra.mrb[0].mxu0 %v1742
    %v1813 = vpop.f32.mrb[0].mxu0
    %v1814 = vadd.f32 0.0, %v1813
    %v1815 = vpop.f32.mrb[0].mxu0
    %v1816 = vpop.f32.mrb[0].mxu0
    %v1817 = vadd.f32 0.0, %v1816
    %v1818 = vpop.f32.mrb[0].mxu0
    %1819 = vmatprep.mubr.bf16.mxu0 0
    %1820 = vmatmul.mubr.bf16.gmra.mrb[0].mxu0 %v1743
    %v1821 = vpop.f32.mrb[0].mxu0
    %v1822 = vadd.f32 0.0, %v1821
    %v1823 = vpop.f32.mrb[0].mxu0
    %v1824 = vpop.f32.mrb[0].mxu0
    %v1825 = vadd.f32 0.0, %v1824
    %v1826 = vpop.f32.mrb[0].mxu0
    %1827 = vmatprep.mubr.bf16.mxu0 0
    %1828 = vmatmul.mubr.bf16.gmra.mrb[0].mxu0 %v1744
    %v1829 = vpop.f32.mrb[0].mxu0
    %v1830 = vadd.f32 0.0, %v1829
    %v1831 = vpop.f32.mrb[0].mxu0
    %v1832 = vpop.f32.mrb[0].mxu0
    %v1833 = vadd.f32 0.0, %v1832
    %v1834 = vpop.f32.mrb[0].mxu0
    %1835 = vmatprep.mubr.bf16.mxu0 0
    %1836 = vmatmul.mubr.bf16.gmra.mrb[0].mxu0 %v1745
    %v1837 = vpop.f32.mrb[0].mxu0
    %v1838 = vadd.f32 0.0, %v1837
    %v1839 = vpop.f32.mrb[0].mxu0
    %v1840 = vpop.f32.mrb[0].mxu0
    %v1841 = vadd.f32 0.0, %v1840
    %v1842 = vpop.f32.mrb[0].mxu0
    %1843 = vmatprep.mubr.bf16.mxu0 0
    %1844 = vmatmul.mubr.bf16.gmra.mrb[0].mxu0 %v1746
    %v1845 = vpop.f32.mrb[0].mxu0
    %v1846 = vadd.f32 0.0, %v1845
    %v1847 = vpop.f32.mrb[0].mxu0
    %v1848 = vpop.f32.mrb[0].mxu0
    %v1849 = vadd.f32 0.0, %v1848
    %v1850 = vpop.f32.mrb[0].mxu0
    %1851 = vdwg.mxu0
    %1853 = vset.pattern.permute.xlu0 0
    %1854 = vperm.xlu0 %1853, %v172
    %v1855 = vpop.permute.xlu0 %1854
    %1858 = vset.pattern.permute.xlu0 0
    %1859 = vperm.xlu0 %1858, %v173
    %v1860 = vpop.permute.xlu0 %1859
    %1863 = vset.pattern.permute.xlu0 0
    %1864 = vperm.xlu0 %1863, %v174
    %v1865 = vpop.permute.xlu0 %1864
    %1868 = vset.pattern.permute.xlu0 0
    %1869 = vperm.xlu0 %1868, %v175
    %v1870 = vpop.permute.xlu0 %1869
    %1873 = vset.pattern.permute.xlu0 0
    %1874 = vperm.xlu0 %1873, %v176
    %v1875 = vpop.permute.xlu0 %1874
    %1878 = vset.pattern.permute.xlu0 0
    %1879 = vperm.xlu0 %1878, %v177
    %v1880 = vpop.permute.xlu0 %1879
    %1883 = vset.pattern.permute.xlu0 0
    %1884 = vperm.xlu0 %1883, %v178
    %v1885 = vpop.permute.xlu0 %1884
    %1888 = vset.pattern.permute.xlu0 0
    %1889 = vperm.xlu0 %1888, %v179
    %v1890 = vpop.permute.xlu0 %1889
    %1893 = vset.pattern.permute.xlu0 0
    %1894 = vperm.xlu0 %1893, %v180
    %v1895 = vpop.permute.xlu0 %1894
    %1898 = vset.pattern.permute.xlu0 0
    %1899 = vperm.xlu0 %1898, %v181
    %v1900 = vpop.permute.xlu0 %1899
    %1903 = vset.pattern.permute.xlu0 0
    %1904 = vperm.xlu0 %1903, %v182
    %v1905 = vpop.permute.xlu0 %1904
    %1908 = vset.pattern.permute.xlu0 0
    %1909 = vperm.xlu0 %1908, %v183
    %v1910 = vpop.permute.xlu0 %1909
    %1913 = vset.pattern.permute.xlu0 0
    %1914 = vperm.xlu0 %1913, %v184
    %v1915 = vpop.permute.xlu0 %1914
    %1918 = vset.pattern.permute.xlu0 0
    %1919 = vperm.xlu0 %1918, %v185
    %v1920 = vpop.permute.xlu0 %1919
    %1923 = vset.pattern.permute.xlu0 0
    %1924 = vperm.xlu0 %1923, %v186
    %v1925 = vpop.permute.xlu0 %1924
    %1928 = vset.pattern.permute.xlu0 0
    %1929 = vperm.xlu0 %1928, %v187
    %v1930 = vpop.permute.xlu0 %1929
    %v1932 = vmul.f32 %v1855, %v1790
    %v1933 = vmul.f32 %v1860, %v1793
    %v1934 = vmul.f32 %v1865, %v1798
    %v1935 = vmul.f32 %v1870, %v1801
    %v1936 = vmul.f32 %v1875, %v1806
    %v1937 = vmul.f32 %v1880, %v1809
    %v1938 = vmul.f32 %v1885, %v1814
    %v1939 = vmul.f32 %v1890, %v1817
    %v1940 = vmul.f32 %v1895, %v1822
    %v1941 = vmul.f32 %v1900, %v1825
    %v1942 = vmul.f32 %v1905, %v1830
    %v1943 = vmul.f32 %v1910, %v1833
    %v1944 = vmul.f32 %v1915, %v1838
    %v1945 = vmul.f32 %v1920, %v1841
    %v1946 = vmul.f32 %v1925, %v1846
    %v1947 = vmul.f32 %v1930, %v1849
    %1948 = vset.pattern.permute.xlu0 1
    %1949 = vperm.xlu0 %1948, %v172
    %v1950 = vpop.permute.xlu0 %1949
    %1952 = vset.pattern.permute.xlu0 1
    %1953 = vperm.xlu0 %1952, %v173
    %v1954 = vpop.permute.xlu0 %1953
    %1956 = vset.pattern.permute.xlu0 1
    %1957 = vperm.xlu0 %1956, %v174
    %v1958 = vpop.permute.xlu0 %1957
    %1960 = vset.pattern.permute.xlu0 1
    %1961 = vperm.xlu0 %1960, %v175
    %v1962 = vpop.permute.xlu0 %1961
    %1964 = vset.pattern.permute.xlu0 1
    %1965 = vperm.xlu0 %1964, %v176
    %v1966 = vpop.permute.xlu0 %1965
    %1968 = vset.pattern.permute.xlu0 1
    %1969 = vperm.xlu0 %1968, %v177
    %v1970 = vpop.permute.xlu0 %1969
    %1972 = vset.pattern.permute.xlu0 1
    %1973 = vperm.xlu0 %1972, %v178
    %v1974 = vpop.permute.xlu0 %1973
    %1976 = vset.pattern.permute.xlu0 1
    %1977 = vperm.xlu0 %1976, %v179
    %v1978 = vpop.permute.xlu0 %1977
    %1980 = vset.pattern.permute.xlu0 1
    %1981 = vperm.xlu0 %1980, %v180
    %v1982 = vpop.permute.xlu0 %1981
    %1984 = vset.pattern.permute.xlu0 1
    %1985 = vperm.xlu0 %1984, %v181
    %v1986 = vpop.permute.xlu0 %1985
    %1988 = vset.pattern.permute.xlu0 1
    %1989 = vperm.xlu0 %1988, %v182
    %v1990 = vpop.permute.xlu0 %1989
    %1992 = vset.pattern.permute.xlu0 1
    %1993 = vperm.xlu0 %1992, %v183
    %v1994 = vpop.permute.xlu0 %1993
    %1996 = vset.pattern.permute.xlu0 1
    %1997 = vperm.xlu0 %1996, %v184
    %v1998 = vpop.permute.xlu0 %1997
    %2000 = vset.pattern.permute.xlu0 1
    %2001 = vperm.xlu0 %2000, %v185
    %v2002 = vpop.permute.xlu0 %2001
    %2004 = vset.pattern.permute.xlu0 1
    %2005 = vperm.xlu0 %2004, %v186
    %v2006 = vpop.permute.xlu0 %2005
    %2008 = vset.pattern.permute.xlu0 1
    %2009 = vperm.xlu0 %2008, %v187
    %v2010 = vpop.permute.xlu0 %2009
    %v2012 = vmul.f32 %v1950, %v1790
    %v2013 = vmul.f32 %v1954, %v1793
    %v2014 = vmul.f32 %v1958, %v1798
    %v2015 = vmul.f32 %v1962, %v1801
    %v2016 = vmul.f32 %v1966, %v1806
    %v2017 = vmul.f32 %v1970, %v1809
    %v2018 = vmul.f32 %v1974, %v1814
    %v2019 = vmul.f32 %v1978, %v1817
    %v2020 = vmul.f32 %v1982, %v1822
    %v2021 = vmul.f32 %v1986, %v1825
    %v2022 = vmul.f32 %v1990, %v1830
    %v2023 = vmul.f32 %v1994, %v1833
    %v2024 = vmul.f32 %v1998, %v1838
    %v2025 = vmul.f32 %v2002, %v1841
    %v2026 = vmul.f32 %v2006, %v1846
    %v2027 = vmul.f32 %v2010, %v1849
    %2028 = vset.pattern.permute.xlu0 2
    %2029 = vperm.xlu0 %2028, %v172
    %v2030 = vpop.permute.xlu0 %2029
    %2032 = vset.pattern.permute.xlu0 2
    %2033 = vperm.xlu0 %2032, %v173
    %v2034 = vpop.permute.xlu0 %2033
    %2036 = vset.pattern.permute.xlu0 2
    %2037 = vperm.xlu0 %2036, %v174
    %v2038 = vpop.permute.xlu0 %2037
    %2040 = vset.pattern.permute.xlu0 2
    %2041 = vperm.xlu0 %2040, %v175
    %v2042 = vpop.permute.xlu0 %2041
    %2044 = vset.pattern.permute.xlu0 2
    %2045 = vperm.xlu0 %2044, %v176
    %v2046 = vpop.permute.xlu0 %2045
    %2048 = vset.pattern.permute.xlu0 2
    %2049 = vperm.xlu0 %2048, %v177
    %v2050 = vpop.permute.xlu0 %2049
    %2052 = vset.pattern.permute.xlu0 2
    %2053 = vperm.xlu0 %2052, %v178
    %v2054 = vpop.permute.xlu0 %2053
    %2056 = vset.pattern.permute.xlu0 2
    %2057 = vperm.xlu0 %2056, %v179
    %v2058 = vpop.permute.xlu0 %2057
    %2060 = vset.pattern.permute.xlu0 2
    %2061 = vperm.xlu0 %2060, %v180
    %v2062 = vpop.permute.xlu0 %2061
    %2064 = vset.pattern.permute.xlu0 2
    %2065 = vperm.xlu0 %2064, %v181
    %v2066 = vpop.permute.xlu0 %2065
    %2068 = vset.pattern.permute.xlu0 2
    %2069 = vperm.xlu0 %2068, %v182
    %v2070 = vpop.permute.xlu0 %2069
    %2072 = vset.pattern.permute.xlu0 2
    %2073 = vperm.xlu0 %2072, %v183
    %v2074 = vpop.permute.xlu0 %2073
    %2076 = vset.pattern.permute.xlu0 2
    %2077 = vperm.xlu0 %2076, %v184
    %v2078 = vpop.permute.xlu0 %2077
    %2080 = vset.pattern.permute.xlu0 2
    %2081 = vperm.xlu0 %2080, %v185
    %v2082 = vpop.permute.xlu0 %2081
    %2084 = vset.pattern.permute.xlu0 2
    %2085 = vperm.xlu0 %2084, %v186
    %v2086 = vpop.permute.xlu0 %2085
    %2088 = vset.pattern.permute.xlu0 2
    %2089 = vperm.xlu0 %2088, %v187
    %v2090 = vpop.permute.xlu0 %2089
    %v2092 = vmul.f32 %v2030, %v1790
    %v2093 = vmul.f32 %v2034, %v1793
    %v2094 = vmul.f32 %v2038, %v1798
    %v2095 = vmul.f32 %v2042, %v1801
    %v2096 = vmul.f32 %v2046, %v1806
    %v2097 = vmul.f32 %v2050, %v1809
    %v2098 = vmul.f32 %v2054, %v1814
    %v2099 = vmul.f32 %v2058, %v1817
    %v2100 = vmul.f32 %v2062, %v1822
    %v2101 = vmul.f32 %v2066, %v1825
    %v2102 = vmul.f32 %v2070, %v1830
    %v2103 = vmul.f32 %v2074, %v1833
    %v2104 = vmul.f32 %v2078, %v1838
    %v2105 = vmul.f32 %v2082, %v1841
    %v2106 = vmul.f32 %v2086, %v1846
    %v2107 = vmul.f32 %v2090, %v1849
    %2108 = vset.pattern.permute.xlu0 3
    %2109 = vperm.xlu0 %2108, %v172
    %v2110 = vpop.permute.xlu0 %2109
    %2112 = vset.pattern.permute.xlu0 3
    %2113 = vperm.xlu0 %2112, %v173
    %v2114 = vpop.permute.xlu0 %2113
    %2116 = vset.pattern.permute.xlu0 3
    %2117 = vperm.xlu0 %2116, %v174
    %v2118 = vpop.permute.xlu0 %2117
    %2120 = vset.pattern.permute.xlu0 3
    %2121 = vperm.xlu0 %2120, %v175
    %v2122 = vpop.permute.xlu0 %2121
    %2124 = vset.pattern.permute.xlu0 3
    %2125 = vperm.xlu0 %2124, %v176
    %v2126 = vpop.permute.xlu0 %2125
    %2128 = vset.pattern.permute.xlu0 3
    %2129 = vperm.xlu0 %2128, %v177
    %v2130 = vpop.permute.xlu0 %2129
    %2132 = vset.pattern.permute.xlu0 3
    %2133 = vperm.xlu0 %2132, %v178
    %v2134 = vpop.permute.xlu0 %2133
    %2136 = vset.pattern.permute.xlu0 3
    %2137 = vperm.xlu0 %2136, %v179
    %v2138 = vpop.permute.xlu0 %2137
    %2140 = vset.pattern.permute.xlu0 3
    %2141 = vperm.xlu0 %2140, %v180
    %v2142 = vpop.permute.xlu0 %2141
    %2144 = vset.pattern.permute.xlu0 3
    %2145 = vperm.xlu0 %2144, %v181
    %v2146 = vpop.permute.xlu0 %2145
    %2148 = vset.pattern.permute.xlu0 3
    %2149 = vperm.xlu0 %2148, %v182
    %v2150 = vpop.permute.xlu0 %2149
    %2152 = vset.pattern.permute.xlu0 3
    %2153 = vperm.xlu0 %2152, %v183
    %v2154 = vpop.permute.xlu0 %2153
    %2156 = vset.pattern.permute.xlu0 3
    %2157 = vperm.xlu0 %2156, %v184
    %v2158 = vpop.permute.xlu0 %2157
    %2160 = vset.pattern.permute.xlu0 3
    %2161 = vperm.xlu0 %2160, %v185
    %v2162 = vpop.permute.xlu0 %2161
    %2164 = vset.pattern.permute.xlu0 3
    %2165 = vperm.xlu0 %2164, %v186
    %v2166 = vpop.permute.xlu0 %2165
    %2168 = vset.pattern.permute.xlu0 3
    %2169 = vperm.xlu0 %2168, %v187
    %v2170 = vpop.permute.xlu0 %2169
    %v2172 = vmul.f32 %v2110, %v1790
    %v2173 = vmul.f32 %v2114, %v1793
    %v2174 = vmul.f32 %v2118, %v1798
    %v2175 = vmul.f32 %v2122, %v1801
    %v2176 = vmul.f32 %v2126, %v1806
    %v2177 = vmul.f32 %v2130, %v1809
    %v2178 = vmul.f32 %v2134, %v1814
    %v2179 = vmul.f32 %v2138, %v1817
    %v2180 = vmul.f32 %v2142, %v1822
    %v2181 = vmul.f32 %v2146, %v1825
    %v2182 = vmul.f32 %v2150, %v1830
    %v2183 = vmul.f32 %v2154, %v1833
    %v2184 = vmul.f32 %v2158, %v1838
    %v2185 = vmul.f32 %v2162, %v1841
    %v2186 = vmul.f32 %v2166, %v1846
    %v2187 = vmul.f32 %v2170, %v1849
    %2188 = vset.pattern.permute.xlu0 4
    %2189 = vperm.xlu0 %2188, %v172
    %v2190 = vpop.permute.xlu0 %2189
    %2192 = vset.pattern.permute.xlu0 4
    %2193 = vperm.xlu0 %2192, %v173
    %v2194 = vpop.permute.xlu0 %2193
    %2196 = vset.pattern.permute.xlu0 4
    %2197 = vperm.xlu0 %2196, %v174
    %v2198 = vpop.permute.xlu0 %2197
    %2200 = vset.pattern.permute.xlu0 4
    %2201 = vperm.xlu0 %2200, %v175
    %v2202 = vpop.permute.xlu0 %2201
    %2204 = vset.pattern.permute.xlu0 4
    %2205 = vperm.xlu0 %2204, %v176
    %v2206 = vpop.permute.xlu0 %2205
    %2208 = vset.pattern.permute.xlu0 4
    %2209 = vperm.xlu0 %2208, %v177
    %v2210 = vpop.permute.xlu0 %2209
    %2212 = vset.pattern.permute.xlu0 4
    %2213 = vperm.xlu0 %2212, %v178
    %v2214 = vpop.permute.xlu0 %2213
    %2216 = vset.pattern.permute.xlu0 4
    %2217 = vperm.xlu0 %2216, %v179
    %v2218 = vpop.permute.xlu0 %2217
    %2220 = vset.pattern.permute.xlu0 4
    %2221 = vperm.xlu0 %2220, %v180
    %v2222 = vpop.permute.xlu0 %2221
    %2224 = vset.pattern.permute.xlu0 4
    %2225 = vperm.xlu0 %2224, %v181
    %v2226 = vpop.permute.xlu0 %2225
    %2228 = vset.pattern.permute.xlu0 4
    %2229 = vperm.xlu0 %2228, %v182
    %v2230 = vpop.permute.xlu0 %2229
    %2232 = vset.pattern.permute.xlu0 4
    %2233 = vperm.xlu0 %2232, %v183
    %v2234 = vpop.permute.xlu0 %2233
    %2236 = vset.pattern.permute.xlu0 4
    %2237 = vperm.xlu0 %2236, %v184
    %v2238 = vpop.permute.xlu0 %2237
    %2240 = vset.pattern.permute.xlu0 4
    %2241 = vperm.xlu0 %2240, %v185
    %v2242 = vpop.permute.xlu0 %2241
    %2244 = vset.pattern.permute.xlu0 4
    %2245 = vperm.xlu0 %2244, %v186
    %v2246 = vpop.permute.xlu0 %2245
    %2248 = vset.pattern.permute.xlu0 4
    %2249 = vperm.xlu0 %2248, %v187
    %v2250 = vpop.permute.xlu0 %2249
    %v2252 = vmul.f32 %v2190, %v1790
    %v2253 = vmul.f32 %v2194, %v1793
    %v2254 = vmul.f32 %v2198, %v1798
    %v2255 = vmul.f32 %v2202, %v1801
    %v2256 = vmul.f32 %v2206, %v1806
    %v2257 = vmul.f32 %v2210, %v1809
    %v2258 = vmul.f32 %v2214, %v1814
    %v2259 = vmul.f32 %v2218, %v1817
    %v2260 = vmul.f32 %v2222, %v1822
    %v2261 = vmul.f32 %v2226, %v1825
    %v2262 = vmul.f32 %v2230, %v1830
    %v2263 = vmul.f32 %v2234, %v1833
    %v2264 = vmul.f32 %v2238, %v1838
    %v2265 = vmul.f32 %v2242, %v1841
    %v2266 = vmul.f32 %v2246, %v1846
    %v2267 = vmul.f32 %v2250, %v1849
    %2268 = vset.pattern.permute.xlu0 5
    %2269 = vperm.xlu0 %2268, %v172
    %v2270 = vpop.permute.xlu0 %2269
    %2272 = vset.pattern.permute.xlu0 5
    %2273 = vperm.xlu0 %2272, %v173
    %v2274 = vpop.permute.xlu0 %2273
    %2276 = vset.pattern.permute.xlu0 5
    %2277 = vperm.xlu0 %2276, %v174
    %v2278 = vpop.permute.xlu0 %2277
    %2280 = vset.pattern.permute.xlu0 5
    %2281 = vperm.xlu0 %2280, %v175
    %v2282 = vpop.permute.xlu0 %2281
    %2284 = vset.pattern.permute.xlu0 5
    %2285 = vperm.xlu0 %2284, %v176
    %v2286 = vpop.permute.xlu0 %2285
    %2288 = vset.pattern.permute.xlu0 5
    %2289 = vperm.xlu0 %2288, %v177
    %v2290 = vpop.permute.xlu0 %2289
    %2292 = vset.pattern.permute.xlu0 5
    %2293 = vperm.xlu0 %2292, %v178
    %v2294 = vpop.permute.xlu0 %2293
    %2296 = vset.pattern.permute.xlu0 5
    %2297 = vperm.xlu0 %2296, %v179
    %v2298 = vpop.permute.xlu0 %2297
    %2300 = vset.pattern.permute.xlu0 5
    %2301 = vperm.xlu0 %2300, %v180
    %v2302 = vpop.permute.xlu0 %2301
    %2304 = vset.pattern.permute.xlu0 5
    %2305 = vperm.xlu0 %2304, %v181
    %v2306 = vpop.permute.xlu0 %2305
    %2308 = vset.pattern.permute.xlu0 5
    %2309 = vperm.xlu0 %2308, %v182
    %v2310 = vpop.permute.xlu0 %2309
    %2312 = vset.pattern.permute.xlu0 5
    %2313 = vperm.xlu0 %2312, %v183
    %v2314 = vpop.permute.xlu0 %2313
    %2316 = vset.pattern.permute.xlu0 5
    %2317 = vperm.xlu0 %2316, %v184
    %v2318 = vpop.permute.xlu0 %2317
    %2320 = vset.pattern.permute.xlu0 5
    %2321 = vperm.xlu0 %2320, %v185
    %v2322 = vpop.permute.xlu0 %2321
    %2324 = vset.pattern.permute.xlu0 5
    %2325 = vperm.xlu0 %2324, %v186
    %v2326 = vpop.permute.xlu0 %2325
    %2328 = vset.pattern.permute.xlu0 5
    %2329 = vperm.xlu0 %2328, %v187
    %v2330 = vpop.permute.xlu0 %2329
    %v2332 = vmul.f32 %v2270, %v1790
    %v2333 = vmul.f32 %v2274, %v1793
    %v2334 = vmul.f32 %v2278, %v1798
    %v2335 = vmul.f32 %v2282, %v1801
    %v2336 = vmul.f32 %v2286, %v1806
    %v2337 = vmul.f32 %v2290, %v1809
    %v2338 = vmul.f32 %v2294, %v1814
    %v2339 = vmul.f32 %v2298, %v1817
    %v2340 = vmul.f32 %v2302, %v1822
    %v2341 = vmul.f32 %v2306, %v1825
    %v2342 = vmul.f32 %v2310, %v1830
    %v2343 = vmul.f32 %v2314, %v1833
    %v2344 = vmul.f32 %v2318, %v1838
    %v2345 = vmul.f32 %v2322, %v1841
    %v2346 = vmul.f32 %v2326, %v1846
    %v2347 = vmul.f32 %v2330, %v1849
    %2348 = vset.pattern.permute.xlu0 6
    %2349 = vperm.xlu0 %2348, %v172
    %v2350 = vpop.permute.xlu0 %2349
    %2352 = vset.pattern.permute.xlu0 6
    %2353 = vperm.xlu0 %2352, %v173
    %v2354 = vpop.permute.xlu0 %2353
    %2356 = vset.pattern.permute.xlu0 6
    %2357 = vperm.xlu0 %2356, %v174
    %v2358 = vpop.permute.xlu0 %2357
    %2360 = vset.pattern.permute.xlu0 6
    %2361 = vperm.xlu0 %2360, %v175
    %v2362 = vpop.permute.xlu0 %2361
    %2364 = vset.pattern.permute.xlu0 6
    %2365 = vperm.xlu0 %2364, %v176
    %v2366 = vpop.permute.xlu0 %2365
    %2368 = vset.pattern.permute.xlu0 6
    %2369 = vperm.xlu0 %2368, %v177
    %v2370 = vpop.permute.xlu0 %2369
    %2372 = vset.pattern.permute.xlu0 6
    %2373 = vperm.xlu0 %2372, %v178
    %v2374 = vpop.permute.xlu0 %2373
    %2376 = vset.pattern.permute.xlu0 6
    %2377 = vperm.xlu0 %2376, %v179
    %v2378 = vpop.permute.xlu0 %2377
    %2380 = vset.pattern.permute.xlu0 6
    %2381 = vperm.xlu0 %2380, %v180
    %v2382 = vpop.permute.xlu0 %2381
    %2384 = vset.pattern.permute.xlu0 6
    %2385 = vperm.xlu0 %2384, %v181
    %v2386 = vpop.permute.xlu0 %2385
    %2388 = vset.pattern.permute.xlu0 6
    %2389 = vperm.xlu0 %2388, %v182
    %v2390 = vpop.permute.xlu0 %2389
    %2392 = vset.pattern.permute.xlu0 6
    %2393 = vperm.xlu0 %2392, %v183
    %v2394 = vpop.permute.xlu0 %2393
    %2396 = vset.pattern.permute.xlu0 6
    %2397 = vperm.xlu0 %2396, %v184
    %v2398 = vpop.permute.xlu0 %2397
    %2400 = vset.pattern.permute.xlu0 6
    %2401 = vperm.xlu0 %2400, %v185
    %v2402 = vpop.permute.xlu0 %2401
    %2404 = vset.pattern.permute.xlu0 6
    %2405 = vperm.xlu0 %2404, %v186
    %v2406 = vpop.permute.xlu0 %2405
    %2408 = vset.pattern.permute.xlu0 6
    %2409 = vperm.xlu0 %2408, %v187
    %v2410 = vpop.permute.xlu0 %2409
    %v2412 = vmul.f32 %v2350, %v1790
    %v2413 = vmul.f32 %v2354, %v1793
    %v2414 = vmul.f32 %v2358, %v1798
    %v2415 = vmul.f32 %v2362, %v1801
    %v2416 = vmul.f32 %v2366, %v1806
    %v2417 = vmul.f32 %v2370, %v1809
    %v2418 = vmul.f32 %v2374, %v1814
    %v2419 = vmul.f32 %v2378, %v1817
    %v2420 = vmul.f32 %v2382, %v1822
    %v2421 = vmul.f32 %v2386, %v1825
    %v2422 = vmul.f32 %v2390, %v1830
    %v2423 = vmul.f32 %v2394, %v1833
    %v2424 = vmul.f32 %v2398, %v1838
    %v2425 = vmul.f32 %v2402, %v1841
    %v2426 = vmul.f32 %v2406, %v1846
    %v2427 = vmul.f32 %v2410, %v1849
    %2428 = vset.pattern.permute.xlu0 7
    %2429 = vperm.xlu0 %2428, %v172
    %v2430 = vpop.permute.xlu0 %2429
    %2432 = vset.pattern.permute.xlu0 7
    %2433 = vperm.xlu0 %2432, %v173
    %v2434 = vpop.permute.xlu0 %2433
    %2436 = vset.pattern.permute.xlu0 7
    %2437 = vperm.xlu0 %2436, %v174
    %v2438 = vpop.permute.xlu0 %2437
    %2440 = vset.pattern.permute.xlu0 7
    %2441 = vperm.xlu0 %2440, %v175
    %v2442 = vpop.permute.xlu0 %2441
    %2444 = vset.pattern.permute.xlu0 7
    %2445 = vperm.xlu0 %2444, %v176
    %v2446 = vpop.permute.xlu0 %2445
    %2448 = vset.pattern.permute.xlu0 7
    %2449 = vperm.xlu0 %2448, %v177
    %v2450 = vpop.permute.xlu0 %2449
    %2452 = vset.pattern.permute.xlu0 7
    %2453 = vperm.xlu0 %2452, %v178
    %v2454 = vpop.permute.xlu0 %2453
    %2456 = vset.pattern.permute.xlu0 7
    %2457 = vperm.xlu0 %2456, %v179
    %v2458 = vpop.permute.xlu0 %2457
    %2460 = vset.pattern.permute.xlu0 7
    %2461 = vperm.xlu0 %2460, %v180
    %v2462 = vpop.permute.xlu0 %2461
    %2464 = vset.pattern.permute.xlu0 7
    %2465 = vperm.xlu0 %2464, %v181
    %v2466 = vpop.permute.xlu0 %2465
    %2468 = vset.pattern.permute.xlu0 7
    %2469 = vperm.xlu0 %2468, %v182
    %v2470 = vpop.permute.xlu0 %2469
    %2472 = vset.pattern.permute.xlu0 7
    %2473 = vperm.xlu0 %2472, %v183
    %v2474 = vpop.permute.xlu0 %2473
    %2476 = vset.pattern.permute.xlu0 7
    %2477 = vperm.xlu0 %2476, %v184
    %v2478 = vpop.permute.xlu0 %2477
    %2480 = vset.pattern.permute.xlu0 7
    %2481 = vperm.xlu0 %2480, %v185
    %v2482 = vpop.permute.xlu0 %2481
    %2484 = vset.pattern.permute.xlu0 7
    %2485 = vperm.xlu0 %2484, %v186
    %v2486 = vpop.permute.xlu0 %2485
    %2488 = vset.pattern.permute.xlu0 7
    %2489 = vperm.xlu0 %2488, %v187
    %v2490 = vpop.permute.xlu0 %2489
    %v2492 = vmul.f32 %v2430, %v1790
    %v2493 = vmul.f32 %v2434, %v1793
    %v2494 = vmul.f32 %v2438, %v1798
    %v2495 = vmul.f32 %v2442, %v1801
    %v2496 = vmul.f32 %v2446, %v1806
    %v2497 = vmul.f32 %v2450, %v1809
    %v2498 = vmul.f32 %v2454, %v1814
    %v2499 = vmul.f32 %v2458, %v1817
    %v2500 = vmul.f32 %v2462, %v1822
    %v2501 = vmul.f32 %v2466, %v1825
    %v2502 = vmul.f32 %v2470, %v1830
    %v2503 = vmul.f32 %v2474, %v1833
    %v2504 = vmul.f32 %v2478, %v1838
    %v2505 = vmul.f32 %v2482, %v1841
    %v2506 = vmul.f32 %v2486, %v1846
    %v2507 = vmul.f32 %v2490, %v1849
    %2508 = vset.pattern.permute.xlu0 8
    %2509 = vperm.xlu0 %2508, %v172
    %v2510 = vpop.permute.xlu0 %2509
    %2512 = vset.pattern.permute.xlu0 8
    %2513 = vperm.xlu0 %2512, %v173
    %v2514 = vpop.permute.xlu0 %2513
    %2516 = vset.pattern.permute.xlu0 8
    %2517 = vperm.xlu0 %2516, %v174
    %v2518 = vpop.permute.xlu0 %2517
    %2520 = vset.pattern.permute.xlu0 8
    %2521 = vperm.xlu0 %2520, %v175
    %v2522 = vpop.permute.xlu0 %2521
    %2524 = vset.pattern.permute.xlu0 8
    %2525 = vperm.xlu0 %2524, %v176
    %v2526 = vpop.permute.xlu0 %2525
    %2528 = vset.pattern.permute.xlu0 8
    %2529 = vperm.xlu0 %2528, %v177
    %v2530 = vpop.permute.xlu0 %2529
    %2532 = vset.pattern.permute.xlu0 8
    %2533 = vperm.xlu0 %2532, %v178
    %v2534 = vpop.permute.xlu0 %2533
    %2536 = vset.pattern.permute.xlu0 8
    %2537 = vperm.xlu0 %2536, %v179
    %v2538 = vpop.permute.xlu0 %2537
    %2540 = vset.pattern.permute.xlu0 8
    %2541 = vperm.xlu0 %2540, %v180
    %v2542 = vpop.permute.xlu0 %2541
    %2544 = vset.pattern.permute.xlu0 8
    %2545 = vperm.xlu0 %2544, %v181
    %v2546 = vpop.permute.xlu0 %2545
    %2548 = vset.pattern.permute.xlu0 8
    %2549 = vperm.xlu0 %2548, %v182
    %v2550 = vpop.permute.xlu0 %2549
    %2552 = vset.pattern.permute.xlu0 8
    %2553 = vperm.xlu0 %2552, %v183
    %v2554 = vpop.permute.xlu0 %2553
    %2556 = vset.pattern.permute.xlu0 8
    %2557 = vperm.xlu0 %2556, %v184
    %v2558 = vpop.permute.xlu0 %2557
    %2560 = vset.pattern.permute.xlu0 8
    %2561 = vperm.xlu0 %2560, %v185
    %v2562 = vpop.permute.xlu0 %2561
    %2564 = vset.pattern.permute.xlu0 8
    %2565 = vperm.xlu0 %2564, %v186
    %v2566 = vpop.permute.xlu0 %2565
    %2568 = vset.pattern.permute.xlu0 8
    %2569 = vperm.xlu0 %2568, %v187
    %v2570 = vpop.permute.xlu0 %2569
    %v2572 = vmul.f32 %v2510, %v1790
    %v2573 = vmul.f32 %v2514, %v1793
    %v2574 = vmul.f32 %v2518, %v1798
    %v2575 = vmul.f32 %v2522, %v1801
    %v2576 = vmul.f32 %v2526, %v1806
    %v2577 = vmul.f32 %v2530, %v1809
    %v2578 = vmul.f32 %v2534, %v1814
    %v2579 = vmul.f32 %v2538, %v1817
    %v2580 = vmul.f32 %v2542, %v1822
    %v2581 = vmul.f32 %v2546, %v1825
    %v2582 = vmul.f32 %v2550, %v1830
    %v2583 = vmul.f32 %v2554, %v1833
    %v2584 = vmul.f32 %v2558, %v1838
    %v2585 = vmul.f32 %v2562, %v1841
    %v2586 = vmul.f32 %v2566, %v1846
    %v2587 = vmul.f32 %v2570, %v1849
    %2588 = vset.pattern.permute.xlu0 9
    %2589 = vperm.xlu0 %2588, %v172
    %v2590 = vpop.permute.xlu0 %2589
    %2592 = vset.pattern.permute.xlu0 9
    %2593 = vperm.xlu0 %2592, %v173
    %v2594 = vpop.permute.xlu0 %2593
    %2596 = vset.pattern.permute.xlu0 9
    %2597 = vperm.xlu0 %2596, %v174
    %v2598 = vpop.permute.xlu0 %2597
    %2600 = vset.pattern.permute.xlu0 9
    %2601 = vperm.xlu0 %2600, %v175
    %v2602 = vpop.permute.xlu0 %2601
    %2604 = vset.pattern.permute.xlu0 9
    %2605 = vperm.xlu0 %2604, %v176
    %v2606 = vpop.permute.xlu0 %2605
    %2608 = vset.pattern.permute.xlu0 9
    %2609 = vperm.xlu0 %2608, %v177
    %v2610 = vpop.permute.xlu0 %2609
    %2612 = vset.pattern.permute.xlu0 9
    %2613 = vperm.xlu0 %2612, %v178
    %v2614 = vpop.permute.xlu0 %2613
    %2616 = vset.pattern.permute.xlu0 9
    %2617 = vperm.xlu0 %2616, %v179
    %v2618 = vpop.permute.xlu0 %2617
    %2620 = vset.pattern.permute.xlu0 9
    %2621 = vperm.xlu0 %2620, %v180
    %v2622 = vpop.permute.xlu0 %2621
    %2624 = vset.pattern.permute.xlu0 9
    %2625 = vperm.xlu0 %2624, %v181
    %v2626 = vpop.permute.xlu0 %2625
    %2628 = vset.pattern.permute.xlu0 9
    %2629 = vperm.xlu0 %2628, %v182
    %v2630 = vpop.permute.xlu0 %2629
    %2632 = vset.pattern.permute.xlu0 9
    %2633 = vperm.xlu0 %2632, %v183
    %v2634 = vpop.permute.xlu0 %2633
    %2636 = vset.pattern.permute.xlu0 9
    %2637 = vperm.xlu0 %2636, %v184
    %v2638 = vpop.permute.xlu0 %2637
    %2640 = vset.pattern.permute.xlu0 9
    %2641 = vperm.xlu0 %2640, %v185
    %v2642 = vpop.permute.xlu0 %2641
    %2644 = vset.pattern.permute.xlu0 9
    %2645 = vperm.xlu0 %2644, %v186
    %v2646 = vpop.permute.xlu0 %2645
    %2648 = vset.pattern.permute.xlu0 9
    %2649 = vperm.xlu0 %2648, %v187
    %v2650 = vpop.permute.xlu0 %2649
    %v2652 = vmul.f32 %v2590, %v1790
    %v2653 = vmul.f32 %v2594, %v1793
    %v2654 = vmul.f32 %v2598, %v1798
    %v2655 = vmul.f32 %v2602, %v1801
    %v2656 = vmul.f32 %v2606, %v1806
    %v2657 = vmul.f32 %v2610, %v1809
    %v2658 = vmul.f32 %v2614, %v1814
    %v2659 = vmul.f32 %v2618, %v1817
    %v2660 = vmul.f32 %v2622, %v1822
    %v2661 = vmul.f32 %v2626, %v1825
    %v2662 = vmul.f32 %v2630, %v1830
    %v2663 = vmul.f32 %v2634, %v1833
    %v2664 = vmul.f32 %v2638, %v1838
    %v2665 = vmul.f32 %v2642, %v1841
    %v2666 = vmul.f32 %v2646, %v1846
    %v2667 = vmul.f32 %v2650, %v1849
    %2668 = vset.pattern.permute.xlu0 10
    %2669 = vperm.xlu0 %2668, %v172
    %v2670 = vpop.permute.xlu0 %2669
    %2672 = vset.pattern.permute.xlu0 10
    %2673 = vperm.xlu0 %2672, %v173
    %v2674 = vpop.permute.xlu0 %2673
    %2676 = vset.pattern.permute.xlu0 10
    %2677 = vperm.xlu0 %2676, %v174
    %v2678 = vpop.permute.xlu0 %2677
    %2680 = vset.pattern.permute.xlu0 10
    %2681 = vperm.xlu0 %2680, %v175
    %v2682 = vpop.permute.xlu0 %2681
    %2684 = vset.pattern.permute.xlu0 10
    %2685 = vperm.xlu0 %2684, %v176
    %v2686 = vpop.permute.xlu0 %2685
    %2688 = vset.pattern.permute.xlu0 10
    %2689 = vperm.xlu0 %2688, %v177
    %v2690 = vpop.permute.xlu0 %2689
    %2692 = vset.pattern.permute.xlu0 10
    %2693 = vperm.xlu0 %2692, %v178
    %v2694 = vpop.permute.xlu0 %2693
    %2696 = vset.pattern.permute.xlu0 10
    %2697 = vperm.xlu0 %2696, %v179
    %v2698 = vpop.permute.xlu0 %2697
    %2700 = vset.pattern.permute.xlu0 10
    %2701 = vperm.xlu0 %2700, %v180
    %v2702 = vpop.permute.xlu0 %2701
    %2704 = vset.pattern.permute.xlu0 10
    %2705 = vperm.xlu0 %2704, %v181
    %v2706 = vpop.permute.xlu0 %2705
    %2708 = vset.pattern.permute.xlu0 10
    %2709 = vperm.xlu0 %2708, %v182
    %v2710 = vpop.permute.xlu0 %2709
    %2712 = vset.pattern.permute.xlu0 10
    %2713 = vperm.xlu0 %2712, %v183
    %v2714 = vpop.permute.xlu0 %2713
    %2716 = vset.pattern.permute.xlu0 10
    %2717 = vperm.xlu0 %2716, %v184
    %v2718 = vpop.permute.xlu0 %2717
    %2720 = vset.pattern.permute.xlu0 10
    %2721 = vperm.xlu0 %2720, %v185
    %v2722 = vpop.permute.xlu0 %2721
    %2724 = vset.pattern.permute.xlu0 10
    %2725 = vperm.xlu0 %2724, %v186
    %v2726 = vpop.permute.xlu0 %2725
    %2728 = vset.pattern.permute.xlu0 10
    %2729 = vperm.xlu0 %2728, %v187
    %v2730 = vpop.permute.xlu0 %2729
    %v2732 = vmul.f32 %v2670, %v1790
    %v2733 = vmul.f32 %v2674, %v1793
    %v2734 = vmul.f32 %v2678, %v1798
    %v2735 = vmul.f32 %v2682, %v1801
    %v2736 = vmul.f32 %v2686, %v1806
    %v2737 = vmul.f32 %v2690, %v1809
    %v2738 = vmul.f32 %v2694, %v1814
    %v2739 = vmul.f32 %v2698, %v1817
    %v2740 = vmul.f32 %v2702, %v1822
    %v2741 = vmul.f32 %v2706, %v1825
    %v2742 = vmul.f32 %v2710, %v1830
    %v2743 = vmul.f32 %v2714, %v1833
    %v2744 = vmul.f32 %v2718, %v1838
    %v2745 = vmul.f32 %v2722, %v1841
    %v2746 = vmul.f32 %v2726, %v1846
    %v2747 = vmul.f32 %v2730, %v1849
    %v2748 = vpack.c.bf16 %v1933, %v1932
    %v2749 = vpack.c.bf16 %v2013, %v2012
    %v2750 = vpack.c.bf16 %v2093, %v2092
    %v2751 = vpack.c.bf16 %v2173, %v2172
    %v2752 = vpack.c.bf16 %v2253, %v2252
    %v2753 = vpack.c.bf16 %v2333, %v2332
    %v2754 = vpack.c.bf16 %v2413, %v2412
    %v2755 = vpack.c.bf16 %v2493, %v2492
    %v2756 = vpack.c.bf16 %v2573, %v2572
    %v2757 = vpack.c.bf16 %v2653, %v2652
    %v2758 = vpack.c.bf16 %v2733, %v2732
    %v2759 = vpack.c.bf16 %v1935, %v1934
    %v2760 = vpack.c.bf16 %v2015, %v2014
    %v2761 = vpack.c.bf16 %v2095, %v2094
    %v2762 = vpack.c.bf16 %v2175, %v2174
    %v2763 = vpack.c.bf16 %v2255, %v2254
    %v2764 = vpack.c.bf16 %v2335, %v2334
    %v2765 = vpack.c.bf16 %v2415, %v2414
    %v2766 = vpack.c.bf16 %v2495, %v2494
    %v2767 = vpack.c.bf16 %v2575, %v2574
    %v2768 = vpack.c.bf16 %v2655, %v2654
    %v2769 = vpack.c.bf16 %v2735, %v2734
    %v2770 = vpack.c.bf16 %v1937, %v1936
    %v2771 = vpack.c.bf16 %v2017, %v2016
    %v2772 = vpack.c.bf16 %v2097, %v2096
    %v2773 = vpack.c.bf16 %v2177, %v2176
    %v2774 = vpack.c.bf16 %v2257, %v2256
    %v2775 = vpack.c.bf16 %v2337, %v2336
    %v2776 = vpack.c.bf16 %v2417, %v2416
    %v2777 = vpack.c.bf16 %v2497, %v2496
    %v2778 = vpack.c.bf16 %v2577, %v2576
    %v2779 = vpack.c.bf16 %v2657, %v2656
    %v2780 = vpack.c.bf16 %v2737, %v2736
    %v2781 = vpack.c.bf16 %v1939, %v1938
    %v2782 = vpack.c.bf16 %v2019, %v2018
    %v2783 = vpack.c.bf16 %v2099, %v2098
    %v2784 = vpack.c.bf16 %v2179, %v2178
    %v2785 = vpack.c.bf16 %v2259, %v2258
    %v2786 = vpack.c.bf16 %v2339, %v2338
    %v2787 = vpack.c.bf16 %v2419, %v2418
    %v2788 = vpack.c.bf16 %v2499, %v2498
    %v2789 = vpack.c.bf16 %v2579, %v2578
    %v2790 = vpack.c.bf16 %v2659, %v2658
    %v2791 = vpack.c.bf16 %v2739, %v2738
    %v2792 = vpack.c.bf16 %v1941, %v1940
    %v2793 = vpack.c.bf16 %v2021, %v2020
    %v2794 = vpack.c.bf16 %v2101, %v2100
    %v2795 = vpack.c.bf16 %v2181, %v2180
    %v2796 = vpack.c.bf16 %v2261, %v2260
    %v2797 = vpack.c.bf16 %v2341, %v2340
    %v2798 = vpack.c.bf16 %v2421, %v2420
    %v2799 = vpack.c.bf16 %v2501, %v2500
    %v2800 = vpack.c.bf16 %v2581, %v2580
    %v2801 = vpack.c.bf16 %v2661, %v2660
    %v2802 = vpack.c.bf16 %v2741, %v2740
    %v2803 = vpack.c.bf16 %v1943, %v1942
    %v2804 = vpack.c.bf16 %v2023, %v2022
    %v2805 = vpack.c.bf16 %v2103, %v2102
    %v2806 = vpack.c.bf16 %v2183, %v2182
    %v2807 = vpack.c.bf16 %v2263, %v2262
    %v2808 = vpack.c.bf16 %v2343, %v2342
    %v2809 = vpack.c.bf16 %v2423, %v2422
    %v2810 = vpack.c.bf16 %v2503, %v2502
    %v2811 = vpack.c.bf16 %v2583, %v2582
    %v2812 = vpack.c.bf16 %v2663, %v2662
    %v2813 = vpack.c.bf16 %v2743, %v2742
    %v2814 = vpack.c.bf16 %v1945, %v1944
    %v2815 = vpack.c.bf16 %v2025, %v2024
    %v2816 = vpack.c.bf16 %v2105, %v2104
    %v2817 = vpack.c.bf16 %v2185, %v2184
    %v2818 = vpack.c.bf16 %v2265, %v2264
    %v2819 = vpack.c.bf16 %v2345, %v2344
    %v2820 = vpack.c.bf16 %v2425, %v2424
    %v2821 = vpack.c.bf16 %v2505, %v2504
    %v2822 = vpack.c.bf16 %v2585, %v2584
    %v2823 = vpack.c.bf16 %v2665, %v2664
    %v2824 = vpack.c.bf16 %v2745, %v2744
    %v2825 = vpack.c.bf16 %v1947, %v1946
    %v2826 = vpack.c.bf16 %v2027, %v2026
    %v2827 = vpack.c.bf16 %v2107, %v2106
    %v2828 = vpack.c.bf16 %v2187, %v2186
    %v2829 = vpack.c.bf16 %v2267, %v2266
    %v2830 = vpack.c.bf16 %v2347, %v2346
    %v2831 = vpack.c.bf16 %v2427, %v2426
    %v2832 = vpack.c.bf16 %v2507, %v2506
    %v2833 = vpack.c.bf16 %v2587, %v2586
    %v2834 = vpack.c.bf16 %v2667, %v2666
    %v2835 = vpack.c.bf16 %v2747, %v2746
    %v2836 = vmul.f32 %v1855, %v1683
    %v2837 = vmul.f32 %v1860, %v1684
    %v2838 = vmul.f32 %v1865, %v1685
    %v2839 = vmul.f32 %v1870, %v1686
    %v2840 = vmul.f32 %v1875, %v1687
    %v2841 = vmul.f32 %v1880, %v1688
    %v2842 = vmul.f32 %v1885, %v1689
    %v2843 = vmul.f32 %v1890, %v1690
    %v2844 = vmul.f32 %v1895, %v1691
    %v2845 = vmul.f32 %v1900, %v1692
    %v2846 = vmul.f32 %v1905, %v1693
    %v2847 = vmul.f32 %v1910, %v1694
    %v2848 = vmul.f32 %v1915, %v1695
    %v2849 = vmul.f32 %v1920, %v1696
    %v2850 = vmul.f32 %v1925, %v1697
    %v2851 = vmul.f32 %v1930, %v1698
    %v2852 = vmul.f32 %v1950, %v1683
    %v2853 = vmul.f32 %v1954, %v1684
    %v2854 = vmul.f32 %v1958, %v1685
    %v2855 = vmul.f32 %v1962, %v1686
    %v2856 = vmul.f32 %v1966, %v1687
    %v2857 = vmul.f32 %v1970, %v1688
    %v2858 = vmul.f32 %v1974, %v1689
    %v2859 = vmul.f32 %v1978, %v1690
    %v2860 = vmul.f32 %v1982, %v1691
    %v2861 = vmul.f32 %v1986, %v1692
    %v2862 = vmul.f32 %v1990, %v1693
    %v2863 = vmul.f32 %v1994, %v1694
    %v2864 = vmul.f32 %v1998, %v1695
    %v2865 = vmul.f32 %v2002, %v1696
    %v2866 = vmul.f32 %v2006, %v1697
    %v2867 = vmul.f32 %v2010, %v1698
    %v2868 = vmul.f32 %v2030, %v1683
    %v2869 = vmul.f32 %v2034, %v1684
    %v2870 = vmul.f32 %v2038, %v1685
    %v2871 = vmul.f32 %v2042, %v1686
    %v2872 = vmul.f32 %v2046, %v1687
    %v2873 = vmul.f32 %v2050, %v1688
    %v2874 = vmul.f32 %v2054, %v1689
    %v2875 = vmul.f32 %v2058, %v1690
    %v2876 = vmul.f32 %v2062, %v1691
    %v2877 = vmul.f32 %v2066, %v1692
    %v2878 = vmul.f32 %v2070, %v1693
    %v2879 = vmul.f32 %v2074, %v1694
    %v2880 = vmul.f32 %v2078, %v1695
    %v2881 = vmul.f32 %v2082, %v1696
    %v2882 = vmul.f32 %v2086, %v1697
    %v2883 = vmul.f32 %v2090, %v1698
    %v2884 = vmul.f32 %v2110, %v1683
    %v2885 = vmul.f32 %v2114, %v1684
    %v2886 = vmul.f32 %v2118, %v1685
    %v2887 = vmul.f32 %v2122, %v1686
    %v2888 = vmul.f32 %v2126, %v1687
    %v2889 = vmul.f32 %v2130, %v1688
    %v2890 = vmul.f32 %v2134, %v1689
    %v2891 = vmul.f32 %v2138, %v1690
    %v2892 = vmul.f32 %v2142, %v1691
    %v2893 = vmul.f32 %v2146, %v1692
    %v2894 = vmul.f32 %v2150, %v1693
    %v2895 = vmul.f32 %v2154, %v1694
    %v2896 = vmul.f32 %v2158, %v1695
    %v2897 = vmul.f32 %v2162, %v1696
    %v2898 = vmul.f32 %v2166, %v1697
    %v2899 = vmul.f32 %v2170, %v1698
    %v2900 = vmul.f32 %v2190, %v1683
    %v2901 = vmul.f32 %v2194, %v1684
    %v2902 = vmul.f32 %v2198, %v1685
    %v2903 = vmul.f32 %v2202, %v1686
    %v2904 = vmul.f32 %v2206, %v1687
    %v2905 = vmul.f32 %v2210, %v1688
    %v2906 = vmul.f32 %v2214, %v1689
    %v2907 = vmul.f32 %v2218, %v1690
    %v2908 = vmul.f32 %v2222, %v1691
    %v2909 = vmul.f32 %v2226, %v1692
    %v2910 = vmul.f32 %v2230, %v1693
    %v2911 = vmul.f32 %v2234, %v1694
    %v2912 = vmul.f32 %v2238, %v1695
    %v2913 = vmul.f32 %v2242, %v1696
    %v2914 = vmul.f32 %v2246, %v1697
    %v2915 = vmul.f32 %v2250, %v1698
    %v2916 = vmul.f32 %v2270, %v1683
    %v2917 = vmul.f32 %v2274, %v1684
    %v2918 = vmul.f32 %v2278, %v1685
    %v2919 = vmul.f32 %v2282, %v1686
    %v2920 = vmul.f32 %v2286, %v1687
    %v2921 = vmul.f32 %v2290, %v1688
    %v2922 = vmul.f32 %v2294, %v1689
    %v2923 = vmul.f32 %v2298, %v1690
    %v2924 = vmul.f32 %v2302, %v1691
    %v2925 = vmul.f32 %v2306, %v1692
    %v2926 = vmul.f32 %v2310, %v1693
    %v2927 = vmul.f32 %v2314, %v1694
    %v2928 = vmul.f32 %v2318, %v1695
    %v2929 = vmul.f32 %v2322, %v1696
    %v2930 = vmul.f32 %v2326, %v1697
    %v2931 = vmul.f32 %v2330, %v1698
    %v2932 = vmul.f32 %v2350, %v1683
    %v2933 = vmul.f32 %v2354, %v1684
    %v2934 = vmul.f32 %v2358, %v1685
    %v2935 = vmul.f32 %v2362, %v1686
    %v2936 = vmul.f32 %v2366, %v1687
    %v2937 = vmul.f32 %v2370, %v1688
    %v2938 = vmul.f32 %v2374, %v1689
    %v2939 = vmul.f32 %v2378, %v1690
    %v2940 = vmul.f32 %v2382, %v1691
    %v2941 = vmul.f32 %v2386, %v1692
    %v2942 = vmul.f32 %v2390, %v1693
    %v2943 = vmul.f32 %v2394, %v1694
    %v2944 = vmul.f32 %v2398, %v1695
    %v2945 = vmul.f32 %v2402, %v1696
    %v2946 = vmul.f32 %v2406, %v1697
    %v2947 = vmul.f32 %v2410, %v1698
    %v2948 = vmul.f32 %v2430, %v1683
    %v2949 = vmul.f32 %v2434, %v1684
    %v2950 = vmul.f32 %v2438, %v1685
    %v2951 = vmul.f32 %v2442, %v1686
    %v2952 = vmul.f32 %v2446, %v1687
    %v2953 = vmul.f32 %v2450, %v1688
    %v2954 = vmul.f32 %v2454, %v1689
    %v2955 = vmul.f32 %v2458, %v1690
    %v2956 = vmul.f32 %v2462, %v1691
    %v2957 = vmul.f32 %v2466, %v1692
    %v2958 = vmul.f32 %v2470, %v1693
    %v2959 = vmul.f32 %v2474, %v1694
    %v2960 = vmul.f32 %v2478, %v1695
    %v2961 = vmul.f32 %v2482, %v1696
    %v2962 = vmul.f32 %v2486, %v1697
    %v2963 = vmul.f32 %v2490, %v1698
    %v2964 = vmul.f32 %v2510, %v1683
    %v2965 = vmul.f32 %v2514, %v1684
    %v2966 = vmul.f32 %v2518, %v1685
    %v2967 = vmul.f32 %v2522, %v1686
    %v2968 = vmul.f32 %v2526, %v1687
    %v2969 = vmul.f32 %v2530, %v1688
    %v2970 = vmul.f32 %v2534, %v1689
    %v2971 = vmul.f32 %v2538, %v1690
    %v2972 = vmul.f32 %v2542, %v1691
    %v2973 = vmul.f32 %v2546, %v1692
    %v2974 = vmul.f32 %v2550, %v1693
    %v2975 = vmul.f32 %v2554, %v1694
    %v2976 = vmul.f32 %v2558, %v1695
    %v2977 = vmul.f32 %v2562, %v1696
    %v2978 = vmul.f32 %v2566, %v1697
    %v2979 = vmul.f32 %v2570, %v1698
    %v2980 = vmul.f32 %v2590, %v1683
    %v2981 = vmul.f32 %v2594, %v1684
    %v2982 = vmul.f32 %v2598, %v1685
    %v2983 = vmul.f32 %v2602, %v1686
    %v2984 = vmul.f32 %v2606, %v1687
    %v2985 = vmul.f32 %v2610, %v1688
    %v2986 = vmul.f32 %v2614, %v1689
    %v2987 = vmul.f32 %v2618, %v1690
    %v2988 = vmul.f32 %v2622, %v1691
    %v2989 = vmul.f32 %v2626, %v1692
    %v2990 = vmul.f32 %v2630, %v1693
    %v2991 = vmul.f32 %v2634, %v1694
    %v2992 = vmul.f32 %v2638, %v1695
    %v2993 = vmul.f32 %v2642, %v1696
    %v2994 = vmul.f32 %v2646, %v1697
    %v2995 = vmul.f32 %v2650, %v1698
    %v2996 = vmul.f32 %v2670, %v1683
    %v2997 = vmul.f32 %v2674, %v1684
    %v2998 = vmul.f32 %v2678, %v1685
    %v2999 = vmul.f32 %v2682, %v1686
    %v3000 = vmul.f32 %v2686, %v1687
    %v3001 = vmul.f32 %v2690, %v1688
    %v3002 = vmul.f32 %v2694, %v1689
    %v3003 = vmul.f32 %v2698, %v1690
    %v3004 = vmul.f32 %v2702, %v1691
    %v3005 = vmul.f32 %v2706, %v1692
    %v3006 = vmul.f32 %v2710, %v1693
    %v3007 = vmul.f32 %v2714, %v1694
    %v3008 = vmul.f32 %v2718, %v1695
    %v3009 = vmul.f32 %v2722, %v1696
    %v3010 = vmul.f32 %v2726, %v1697
    %v3011 = vmul.f32 %v2730, %v1698
    %v3012 = vpack.c.bf16 %v2837, %v2836
    %v3013 = vpack.c.bf16 %v2853, %v2852
    %v3014 = vpack.c.bf16 %v2869, %v2868
    %v3015 = vpack.c.bf16 %v2885, %v2884
    %v3016 = vpack.c.bf16 %v2901, %v2900
    %v3017 = vpack.c.bf16 %v2917, %v2916
    %v3018 = vpack.c.bf16 %v2933, %v2932
    %v3019 = vpack.c.bf16 %v2949, %v2948
    %v3020 = vpack.c.bf16 %v2965, %v2964
    %v3021 = vpack.c.bf16 %v2981, %v2980
    %v3022 = vpack.c.bf16 %v2997, %v2996
    %v3023 = vpack.c.bf16 %v2839, %v2838
    %v3024 = vpack.c.bf16 %v2855, %v2854
    %v3025 = vpack.c.bf16 %v2871, %v2870
    %v3026 = vpack.c.bf16 %v2887, %v2886
    %v3027 = vpack.c.bf16 %v2903, %v2902
    %v3028 = vpack.c.bf16 %v2919, %v2918
    %v3029 = vpack.c.bf16 %v2935, %v2934
    %v3030 = vpack.c.bf16 %v2951, %v2950
    %v3031 = vpack.c.bf16 %v2967, %v2966
    %v3032 = vpack.c.bf16 %v2983, %v2982
    %v3033 = vpack.c.bf16 %v2999, %v2998
    %v3034 = vpack.c.bf16 %v2841, %v2840
    %v3035 = vpack.c.bf16 %v2857, %v2856
    %v3036 = vpack.c.bf16 %v2873, %v2872
    %v3037 = vpack.c.bf16 %v2889, %v2888
    %v3038 = vpack.c.bf16 %v2905, %v2904
    %v3039 = vpack.c.bf16 %v2921, %v2920
    %v3040 = vpack.c.bf16 %v2937, %v2936
    %v3041 = vpack.c.bf16 %v2953, %v2952
    %v3042 = vpack.c.bf16 %v2969, %v2968
    %v3043 = vpack.c.bf16 %v2985, %v2984
    %v3044 = vpack.c.bf16 %v3001, %v3000
    %v3045 = vpack.c.bf16 %v2843, %v2842
    %v3046 = vpack.c.bf16 %v2859, %v2858
    %v3047 = vpack.c.bf16 %v2875, %v2874
    %v3048 = vpack.c.bf16 %v2891, %v2890
    %v3049 = vpack.c.bf16 %v2907, %v2906
    %v3050 = vpack.c.bf16 %v2923, %v2922
    %v3051 = vpack.c.bf16 %v2939, %v2938
    %v3052 = vpack.c.bf16 %v2955, %v2954
    %v3053 = vpack.c.bf16 %v2971, %v2970
    %v3054 = vpack.c.bf16 %v2987, %v2986
    %v3055 = vpack.c.bf16 %v3003, %v3002
    %v3056 = vpack.c.bf16 %v2845, %v2844
    %v3057 = vpack.c.bf16 %v2861, %v2860
    %v3058 = vpack.c.bf16 %v2877, %v2876
    %v3059 = vpack.c.bf16 %v2893, %v2892
    %v3060 = vpack.c.bf16 %v2909, %v2908
    %v3061 = vpack.c.bf16 %v2925, %v2924
    %v3062 = vpack.c.bf16 %v2941, %v2940
    %v3063 = vpack.c.bf16 %v2957, %v2956
    %v3064 = vpack.c.bf16 %v2973, %v2972
    %v3065 = vpack.c.bf16 %v2989, %v2988
    %v3066 = vpack.c.bf16 %v3005, %v3004
    %v3067 = vpack.c.bf16 %v2847, %v2846
    %v3068 = vpack.c.bf16 %v2863, %v2862
    %v3069 = vpack.c.bf16 %v2879, %v2878
    %v3070 = vpack.c.bf16 %v2895, %v2894
    %v3071 = vpack.c.bf16 %v2911, %v2910
    %v3072 = vpack.c.bf16 %v2927, %v2926
    %v3073 = vpack.c.bf16 %v2943, %v2942
    %v3074 = vpack.c.bf16 %v2959, %v2958
    %v3075 = vpack.c.bf16 %v2975, %v2974
    %v3076 = vpack.c.bf16 %v2991, %v2990
    %v3077 = vpack.c.bf16 %v3007, %v3006
    %v3078 = vpack.c.bf16 %v2849, %v2848
    %v3079 = vpack.c.bf16 %v2865, %v2864
    %v3080 = vpack.c.bf16 %v2881, %v2880
    %v3081 = vpack.c.bf16 %v2897, %v2896
    %v3082 = vpack.c.bf16 %v2913, %v2912
    %v3083 = vpack.c.bf16 %v2929, %v2928
    %v3084 = vpack.c.bf16 %v2945, %v2944
    %v3085 = vpack.c.bf16 %v2961, %v2960
    %v3086 = vpack.c.bf16 %v2977, %v2976
    %v3087 = vpack.c.bf16 %v2993, %v2992
    %v3088 = vpack.c.bf16 %v3009, %v3008
    %v3089 = vpack.c.bf16 %v2851, %v2850
    %v3090 = vpack.c.bf16 %v2867, %v2866
    %v3091 = vpack.c.bf16 %v2883, %v2882
    %v3092 = vpack.c.bf16 %v2899, %v2898
    %v3093 = vpack.c.bf16 %v2915, %v2914
    %v3094 = vpack.c.bf16 %v2931, %v2930
    %v3095 = vpack.c.bf16 %v2947, %v2946
    %v3096 = vpack.c.bf16 %v2963, %v2962
    %v3097 = vpack.c.bf16 %v2979, %v2978
    %v3098 = vpack.c.bf16 %v2995, %v2994
    %v3099 = vpack.c.bf16 %v3011, %v3010
    %v3100 = vld [vmem:[#allocation11] sm:$0xf]
    %v3101 = vld [vmem:[#allocation11 + $0x4] sm:$0xf]
    %v3102 = vld [vmem:[#allocation11 + $0x8] sm:$0xf]
    %v3103 = vld [vmem:[#allocation11 + $0xc] sm:$0xf]
    %v3104 = vld [vmem:[#allocation11 + $0x10] sm:$0xf]
    %v3105 = vld [vmem:[#allocation11 + $0x14] sm:$0xf]
    %v3106 = vld [vmem:[#allocation11 + $0x18] sm:$0xf]
    %v3107 = vld [vmem:[#allocation11 + $0x1c] sm:$0xf]
    %v3108 = vld [vmem:[#allocation11 + $0x20] sm:$0xf]
    %v3109 = vld [vmem:[#allocation11 + $0x24] sm:$0xf]
    %v3110 = vld [vmem:[#allocation11 + $0x28] sm:$0xf]
    %v3111 = vld [vmem:[#allocation11 + $0x2c] sm:$0xf]
    %v3112 = vld [vmem:[#allocation11 + $0x30] sm:$0xf]
    %v3113 = vld [vmem:[#allocation11 + $0x34] sm:$0xf]
    %v3114 = vld [vmem:[#allocation11 + $0x38] sm:$0xf]
    %v3115 = vld [vmem:[#allocation11 + $0x3c] sm:$0xf]
    %v3116 = vld [vmem:[#allocation11 + $0x40] sm:$0xf]
    %v3117 = vld [vmem:[#allocation11 + $0x44] sm:$0xf]
    %v3118 = vld [vmem:[#allocation11 + $0x48] sm:$0xf]
    %v3119 = vld [vmem:[#allocation11 + $0x4c] sm:$0xf]
    %v3120 = vld [vmem:[#allocation11 + $0x50] sm:$0xf]
    %v3121 = vld [vmem:[#allocation11 + $0x54] sm:$0xf]
    %v3122 = vld [vmem:[#allocation11 + $0x58] sm:$0xf]
    %v3123 = vld [vmem:[#allocation11 + $0x5c] sm:$0xf]
    %v3124 = vld [vmem:[#allocation11 + $0x60] sm:$0xf]
    %v3125 = vld [vmem:[#allocation11 + $0x64] sm:$0xf]
    %v3126 = vld [vmem:[#allocation11 + $0x68] sm:$0xf]
    %v3127 = vld [vmem:[#allocation11 + $0x6c] sm:$0xf]
    %v3128 = vld [vmem:[#allocation11 + $0x70] sm:$0xf]
    %v3129 = vld [vmem:[#allocation11 + $0x74] sm:$0xf]
    %v3130 = vld [vmem:[#allocation11 + $0x78] sm:$0xf]
    %v3131 = vld [vmem:[#allocation11 + $0x7c] sm:$0xf]
    %v3132 = vld [vmem:[#allocation11 + $0x80] sm:$0xf]
    %v3133 = vld [vmem:[#allocation11 + $0x84] sm:$0xf]
    %v3134 = vld [vmem:[#allocation11 + $0x88] sm:$0xf]
    %v3135 = vld [vmem:[#allocation11 + $0x8c] sm:$0xf]
    %v3136 = vld [vmem:[#allocation11 + $0x90] sm:$0xf]
    %v3137 = vld [vmem:[#allocation11 + $0x94] sm:$0xf]
    %v3138 = vld [vmem:[#allocation11 + $0x98] sm:$0xf]
    %v3139 = vld [vmem:[#allocation11 + $0x9c] sm:$0xf]
    %v3140 = vld [vmem:[#allocation11 + $0xa0] sm:$0xf]
    %v3141 = vld [vmem:[#allocation11 + $0xa4] sm:$0xf]
    %v3142 = vld [vmem:[#allocation11 + $0xa8] sm:$0xf]
    %v3143 = vld [vmem:[#allocation11 + $0xac] sm:$0xf]
    %v3144 = vld [vmem:[#allocation11 + $0xb0] sm:$0xf]
    %v3145 = vld [vmem:[#allocation11 + $0xb4] sm:$0xf]
    %v3146 = vld [vmem:[#allocation11 + $0xb8] sm:$0xf]
    %v3147 = vld [vmem:[#allocation11 + $0xbc] sm:$0xf]
    %v3148 = vld [vmem:[#allocation11 + $0xc0] sm:$0xf]
    %v3149 = vld [vmem:[#allocation11 + $0xc4] sm:$0xf]
    %v3150 = vld [vmem:[#allocation11 + $0xc8] sm:$0xf]
    %v3151 = vld [vmem:[#allocation11 + $0xcc] sm:$0xf]
    %v3152 = vld [vmem:[#allocation11 + $0xd0] sm:$0xf]
    %v3153 = vld [vmem:[#allocation11 + $0xd4] sm:$0xf]
    %v3154 = vld [vmem:[#allocation11 + $0xd8] sm:$0xf]
    %v3155 = vld [vmem:[#allocation11 + $0xdc] sm:$0xf]
    %v3156 = vld [vmem:[#allocation11 + $0xe0] sm:$0xf]
    %v3157 = vld [vmem:[#allocation11 + $0xe4] sm:$0xf]
    %v3158 = vld [vmem:[#allocation11 + $0xe8] sm:$0xf]
    %v3159 = vld [vmem:[#allocation11 + $0xec] sm:$0xf]
    %v3160 = vld [vmem:[#allocation11 + $0xf0] sm:$0xf]
    %v3161 = vld [vmem:[#allocation11 + $0xf4] sm:$0xf]
    %v3162 = vld [vmem:[#allocation11 + $0xf8] sm:$0xf]
    %v3163 = vld [vmem:[#allocation11 + $0xfc] sm:$0xf]
    %v3164 = vld [vmem:[#allocation11 + $0x100] sm:$0xf]
    %v3165 = vld [vmem:[#allocation11 + $0x104] sm:$0xf]
    %v3166 = vld [vmem:[#allocation11 + $0x108] sm:$0xf]
    %v3167 = vld [vmem:[#allocation11 + $0x10c] sm:$0xf]
    %v3168 = vld [vmem:[#allocation11 + $0x110] sm:$0xf]
    %v3169 = vld [vmem:[#allocation11 + $0x114] sm:$0xf]
    %v3170 = vld [vmem:[#allocation11 + $0x118] sm:$0xf]
    %v3171 = vld [vmem:[#allocation11 + $0x11c] sm:$0xf]
    %v3172 = vld [vmem:[#allocation11 + $0x120] sm:$0xf]
    %v3173 = vld [vmem:[#allocation11 + $0x124] sm:$0xf]
    %v3174 = vld [vmem:[#allocation11 + $0x128] sm:$0xf]
    %v3175 = vld [vmem:[#allocation11 + $0x12c] sm:$0xf]
    %v3176 = vld [vmem:[#allocation11 + $0x130] sm:$0xf]
    %v3177 = vld [vmem:[#allocation11 + $0x134] sm:$0xf]
    %v3178 = vld [vmem:[#allocation11 + $0x138] sm:$0xf]
    %v3179 = vld [vmem:[#allocation11 + $0x13c] sm:$0xf]
    %v3180 = vld [vmem:[#allocation11 + $0x140] sm:$0xf]
    %v3181 = vld [vmem:[#allocation11 + $0x144] sm:$0xf]
    %v3182 = vld [vmem:[#allocation11 + $0x148] sm:$0xf]
    %v3183 = vld [vmem:[#allocation11 + $0x14c] sm:$0xf]
    %v3184 = vld [vmem:[#allocation11 + $0x150] sm:$0xf]
    %v3185 = vld [vmem:[#allocation11 + $0x154] sm:$0xf]
    %v3186 = vld [vmem:[#allocation11 + $0x158] sm:$0xf]
    %v3187 = vld [vmem:[#allocation11 + $0x15c] sm:$0xf]
    %v3188 = vld [vmem:[#allocation11 + $0x160] sm:$0xf]
    %v3189 = vld [vmem:[#allocation11 + $0x164] sm:$0xf]
    %v3190 = vld [vmem:[#allocation11 + $0x168] sm:$0xf]
    %v3191 = vld [vmem:[#allocation11 + $0x16c] sm:$0xf]
    %v3192 = vld [vmem:[#allocation11 + $0x170] sm:$0xf]
    %v3193 = vld [vmem:[#allocation11 + $0x174] sm:$0xf]
    %v3194 = vld [vmem:[#allocation11 + $0x178] sm:$0xf]
    %v3195 = vld [vmem:[#allocation11 + $0x17c] sm:$0xf]
    %v3196 = vld [vmem:[#allocation11 + $0x180] sm:$0xf]
    %v3197 = vld [vmem:[#allocation11 + $0x184] sm:$0xf]
    %v3198 = vld [vmem:[#allocation11 + $0x188] sm:$0xf]
    %v3199 = vld [vmem:[#allocation11 + $0x18c] sm:$0xf]
    %v3200 = vld [vmem:[#allocation11 + $0x190] sm:$0xf]
    %v3201 = vld [vmem:[#allocation11 + $0x194] sm:$0xf]
    %v3202 = vld [vmem:[#allocation11 + $0x198] sm:$0xf]
    %v3203 = vld [vmem:[#allocation11 + $0x19c] sm:$0xf]
    %v3204 = vld [vmem:[#allocation11 + $0x1a0] sm:$0xf]
    %v3205 = vld [vmem:[#allocation11 + $0x1a4] sm:$0xf]
    %v3206 = vld [vmem:[#allocation11 + $0x1a8] sm:$0xf]
    %v3207 = vld [vmem:[#allocation11 + $0x1ac] sm:$0xf]
    %v3208 = vld [vmem:[#allocation11 + $0x1b0] sm:$0xf]
    %v3209 = vld [vmem:[#allocation11 + $0x1b4] sm:$0xf]
    %v3210 = vld [vmem:[#allocation11 + $0x1b8] sm:$0xf]
    %v3211 = vld [vmem:[#allocation11 + $0x1bc] sm:$0xf]
    %v3212 = vld [vmem:[#allocation11 + $0x1c0] sm:$0xf]
    %v3213 = vld [vmem:[#allocation11 + $0x1c4] sm:$0xf]
    %v3214 = vld [vmem:[#allocation11 + $0x1c8] sm:$0xf]
    %v3215 = vld [vmem:[#allocation11 + $0x1cc] sm:$0xf]
    %v3216 = vld [vmem:[#allocation11 + $0x1d0] sm:$0xf]
    %v3217 = vld [vmem:[#allocation11 + $0x1d4] sm:$0xf]
    %v3218 = vld [vmem:[#allocation11 + $0x1d8] sm:$0xf]
    %v3219 = vld [vmem:[#allocation11 + $0x1dc] sm:$0xf]
    %v3220 = vld [vmem:[#allocation11 + $0x1e0] sm:$0xf]
    %v3221 = vld [vmem:[#allocation11 + $0x1e4] sm:$0xf]
    %v3222 = vld [vmem:[#allocation11 + $0x1e8] sm:$0xf]
    %v3223 = vld [vmem:[#allocation11 + $0x1ec] sm:$0xf]
    %v3224 = vld [vmem:[#allocation11 + $0x1f0] sm:$0xf]
    %v3225 = vld [vmem:[#allocation11 + $0x1f4] sm:$0xf]
    %v3226 = vld [vmem:[#allocation11 + $0x1f8] sm:$0xf]
    %v3227 = vld [vmem:[#allocation11 + $0x1fc] sm:$0xf]
    %v3228 = vld [vmem:[#allocation11 + $0x200] sm:$0xf]
    %v3229 = vld [vmem:[#allocation11 + $0x204] sm:$0xf]
    %v3230 = vld [vmem:[#allocation11 + $0x208] sm:$0xf]
    %v3231 = vld [vmem:[#allocation11 + $0x20c] sm:$0xf]
    %v3232 = vld [vmem:[#allocation11 + $0x210] sm:$0xf]
    %v3233 = vld [vmem:[#allocation11 + $0x214] sm:$0xf]
    %v3234 = vld [vmem:[#allocation11 + $0x218] sm:$0xf]
    %v3235 = vld [vmem:[#allocation11 + $0x21c] sm:$0xf]
    %v3236 = vld [vmem:[#allocation11 + $0x220] sm:$0xf]
    %v3237 = vld [vmem:[#allocation11 + $0x224] sm:$0xf]
    %v3238 = vld [vmem:[#allocation11 + $0x228] sm:$0xf]
    %v3239 = vld [vmem:[#allocation11 + $0x22c] sm:$0xf]
    %v3240 = vld [vmem:[#allocation11 + $0x230] sm:$0xf]
    %v3241 = vld [vmem:[#allocation11 + $0x234] sm:$0xf]
    %v3242 = vld [vmem:[#allocation11 + $0x238] sm:$0xf]
    %v3243 = vld [vmem:[#allocation11 + $0x23c] sm:$0xf]
    %v3244 = vld [vmem:[#allocation11 + $0x240] sm:$0xf]
    %v3245 = vld [vmem:[#allocation11 + $0x244] sm:$0xf]
    %v3246 = vld [vmem:[#allocation11 + $0x248] sm:$0xf]
    %v3247 = vld [vmem:[#allocation11 + $0x24c] sm:$0xf]
    %v3248 = vld [vmem:[#allocation11 + $0x250] sm:$0xf]
    %v3249 = vld [vmem:[#allocation11 + $0x254] sm:$0xf]
    %v3250 = vld [vmem:[#allocation11 + $0x258] sm:$0xf]
    %v3251 = vld [vmem:[#allocation11 + $0x25c] sm:$0xf]
    %v3252 = vld [vmem:[#allocation11 + $0x260] sm:$0xf]
    %v3253 = vld [vmem:[#allocation11 + $0x264] sm:$0xf]
    %v3254 = vld [vmem:[#allocation11 + $0x268] sm:$0xf]
    %v3255 = vld [vmem:[#allocation11 + $0x26c] sm:$0xf]
    %v3256 = vld [vmem:[#allocation11 + $0x270] sm:$0xf]
    %v3257 = vld [vmem:[#allocation11 + $0x274] sm:$0xf]
    %v3258 = vld [vmem:[#allocation11 + $0x278] sm:$0xf]
    %v3259 = vld [vmem:[#allocation11 + $0x27c] sm:$0xf]
    %v3260 = vld [vmem:[#allocation11 + $0x280] sm:$0xf]
    %v3261 = vld [vmem:[#allocation11 + $0x284] sm:$0xf]
    %v3262 = vld [vmem:[#allocation11 + $0x288] sm:$0xf]
    %v3263 = vld [vmem:[#allocation11 + $0x28c] sm:$0xf]
    %v3264 = vld [vmem:[#allocation11 + $0x290] sm:$0xf]
    %v3265 = vld [vmem:[#allocation11 + $0x294] sm:$0xf]
    %v3266 = vld [vmem:[#allocation11 + $0x298] sm:$0xf]
    %v3267 = vld [vmem:[#allocation11 + $0x29c] sm:$0xf]
    %v3268 = vld [vmem:[#allocation11 + $0x2a0] sm:$0xf]
    %v3269 = vld [vmem:[#allocation11 + $0x2a4] sm:$0xf]
    %v3270 = vld [vmem:[#allocation11 + $0x2a8] sm:$0xf]
    %v3271 = vld [vmem:[#allocation11 + $0x2ac] sm:$0xf]
    %v3272 = vld [vmem:[#allocation11 + $0x2b0] sm:$0xf]
    %v3273 = vld [vmem:[#allocation11 + $0x2b4] sm:$0xf]
    %v3274 = vld [vmem:[#allocation11 + $0x2b8] sm:$0xf]
    %v3275 = vld [vmem:[#allocation11 + $0x2bc] sm:$0xf]
    %v3276 = vld [vmem:[#allocation13] sm:$0xf]
    %v3277 = vld [vmem:[#allocation13 + $0x4] sm:$0xf]
    %v3278 = vld [vmem:[#allocation13 + $0x8] sm:$0xf]
    %v3279 = vld [vmem:[#allocation13 + $0xc] sm:$0xf]
    %v3280 = vld [vmem:[#allocation13 + $0x10] sm:$0xf]
    %v3281 = vld [vmem:[#allocation13 + $0x14] sm:$0xf]
    %v3282 = vld [vmem:[#allocation13 + $0x18] sm:$0xf]
    %v3283 = vld [vmem:[#allocation13 + $0x1c] sm:$0xf]
    %v3284 = vld [vmem:[#allocation13 + $0x20] sm:$0xf]
    %v3285 = vld [vmem:[#allocation13 + $0x24] sm:$0xf]
    %v3286 = vld [vmem:[#allocation13 + $0x28] sm:$0xf]
    %v3287 = vld [vmem:[#allocation13 + $0x2c] sm:$0xf]
    %v3288 = vld [vmem:[#allocation13 + $0x30] sm:$0xf]
    %v3289 = vld [vmem:[#allocation13 + $0x34] sm:$0xf]
    %v3290 = vld [vmem:[#allocation13 + $0x38] sm:$0xf]
    %v3291 = vld [vmem:[#allocation13 + $0x3c] sm:$0xf]
    %v3292 = vld [vmem:[#allocation13 + $0x40] sm:$0xf]
    %v3293 = vld [vmem:[#allocation13 + $0x44] sm:$0xf]
    %v3294 = vld [vmem:[#allocation13 + $0x48] sm:$0xf]
    %v3295 = vld [vmem:[#allocation13 + $0x4c] sm:$0xf]
    %v3296 = vld [vmem:[#allocation13 + $0x50] sm:$0xf]
    %v3297 = vld [vmem:[#allocation13 + $0x54] sm:$0xf]
    %v3298 = vld [vmem:[#allocation13 + $0x58] sm:$0xf]
    %v3299 = vld [vmem:[#allocation13 + $0x5c] sm:$0xf]
    %v3300 = vld [vmem:[#allocation13 + $0x60] sm:$0xf]
    %v3301 = vld [vmem:[#allocation13 + $0x64] sm:$0xf]
    %v3302 = vld [vmem:[#allocation13 + $0x68] sm:$0xf]
    %v3303 = vld [vmem:[#allocation13 + $0x6c] sm:$0xf]
    %v3304 = vld [vmem:[#allocation13 + $0x70] sm:$0xf]
    %v3305 = vld [vmem:[#allocation13 + $0x74] sm:$0xf]
    %v3306 = vld [vmem:[#allocation13 + $0x78] sm:$0xf]
    %v3307 = vld [vmem:[#allocation13 + $0x7c] sm:$0xf]
    %v3308 = vld [vmem:[#allocation13 + $0x80] sm:$0xf]
    %v3309 = vld [vmem:[#allocation13 + $0x84] sm:$0xf]
    %v3310 = vld [vmem:[#allocation13 + $0x88] sm:$0xf]
    %v3311 = vld [vmem:[#allocation13 + $0x8c] sm:$0xf]
    %v3312 = vld [vmem:[#allocation13 + $0x90] sm:$0xf]
    %v3313 = vld [vmem:[#allocation13 + $0x94] sm:$0xf]
    %v3314 = vld [vmem:[#allocation13 + $0x98] sm:$0xf]
    %v3315 = vld [vmem:[#allocation13 + $0x9c] sm:$0xf]
    %v3316 = vld [vmem:[#allocation13 + $0xa0] sm:$0xf]
    %v3317 = vld [vmem:[#allocation13 + $0xa4] sm:$0xf]
    %v3318 = vld [vmem:[#allocation13 + $0xa8] sm:$0xf]
    %v3319 = vld [vmem:[#allocation13 + $0xac] sm:$0xf]
    %v3320 = vld [vmem:[#allocation13 + $0xb0] sm:$0xf]
    %v3321 = vld [vmem:[#allocation13 + $0xb4] sm:$0xf]
    %v3322 = vld [vmem:[#allocation13 + $0xb8] sm:$0xf]
    %v3323 = vld [vmem:[#allocation13 + $0xbc] sm:$0xf]
    %v3324 = vld [vmem:[#allocation13 + $0xc0] sm:$0xf]
    %v3325 = vld [vmem:[#allocation13 + $0xc4] sm:$0xf]
    %v3326 = vld [vmem:[#allocation13 + $0xc8] sm:$0xf]
    %v3327 = vld [vmem:[#allocation13 + $0xcc] sm:$0xf]
    %v3328 = vld [vmem:[#allocation13 + $0xd0] sm:$0xf]
    %v3329 = vld [vmem:[#allocation13 + $0xd4] sm:$0xf]
    %v3330 = vld [vmem:[#allocation13 + $0xd8] sm:$0xf]
    %v3331 = vld [vmem:[#allocation13 + $0xdc] sm:$0xf]
    %v3332 = vld [vmem:[#allocation13 + $0xe0] sm:$0xf]
    %v3333 = vld [vmem:[#allocation13 + $0xe4] sm:$0xf]
    %v3334 = vld [vmem:[#allocation13 + $0xe8] sm:$0xf]
    %v3335 = vld [vmem:[#allocation13 + $0xec] sm:$0xf]
    %v3336 = vld [vmem:[#allocation13 + $0xf0] sm:$0xf]
    %v3337 = vld [vmem:[#allocation13 + $0xf4] sm:$0xf]
    %v3338 = vld [vmem:[#allocation13 + $0xf8] sm:$0xf]
    %v3339 = vld [vmem:[#allocation13 + $0xfc] sm:$0xf]
    %v3340 = vld [vmem:[#allocation13 + $0x100] sm:$0xf]
    %v3341 = vld [vmem:[#allocation13 + $0x104] sm:$0xf]
    %v3342 = vld [vmem:[#allocation13 + $0x108] sm:$0xf]
    %v3343 = vld [vmem:[#allocation13 + $0x10c] sm:$0xf]
    %v3344 = vld [vmem:[#allocation13 + $0x110] sm:$0xf]
    %v3345 = vld [vmem:[#allocation13 + $0x114] sm:$0xf]
    %v3346 = vld [vmem:[#allocation13 + $0x118] sm:$0xf]
    %v3347 = vld [vmem:[#allocation13 + $0x11c] sm:$0xf]
    %v3348 = vld [vmem:[#allocation13 + $0x120] sm:$0xf]
    %v3349 = vld [vmem:[#allocation13 + $0x124] sm:$0xf]
    %v3350 = vld [vmem:[#allocation13 + $0x128] sm:$0xf]
    %v3351 = vld [vmem:[#allocation13 + $0x12c] sm:$0xf]
    %v3352 = vld [vmem:[#allocation13 + $0x130] sm:$0xf]
    %v3353 = vld [vmem:[#allocation13 + $0x134] sm:$0xf]
    %v3354 = vld [vmem:[#allocation13 + $0x138] sm:$0xf]
    %v3355 = vld [vmem:[#allocation13 + $0x13c] sm:$0xf]
    %v3356 = vld [vmem:[#allocation13 + $0x140] sm:$0xf]
    %v3357 = vld [vmem:[#allocation13 + $0x144] sm:$0xf]
    %v3358 = vld [vmem:[#allocation13 + $0x148] sm:$0xf]
    %v3359 = vld [vmem:[#allocation13 + $0x14c] sm:$0xf]
    %v3360 = vld [vmem:[#allocation13 + $0x150] sm:$0xf]
    %v3361 = vld [vmem:[#allocation13 + $0x154] sm:$0xf]
    %v3362 = vld [vmem:[#allocation13 + $0x158] sm:$0xf]
    %v3363 = vld [vmem:[#allocation13 + $0x15c] sm:$0xf]
    %v3364 = vld [vmem:[#allocation13 + $0x160] sm:$0xf]
    %v3365 = vld [vmem:[#allocation13 + $0x164] sm:$0xf]
    %v3366 = vld [vmem:[#allocation13 + $0x168] sm:$0xf]
    %v3367 = vld [vmem:[#allocation13 + $0x16c] sm:$0xf]
    %v3368 = vld [vmem:[#allocation13 + $0x170] sm:$0xf]
    %v3369 = vld [vmem:[#allocation13 + $0x174] sm:$0xf]
    %v3370 = vld [vmem:[#allocation13 + $0x178] sm:$0xf]
    %v3371 = vld [vmem:[#allocation13 + $0x17c] sm:$0xf]
    %v3372 = vld [vmem:[#allocation13 + $0x180] sm:$0xf]
    %v3373 = vld [vmem:[#allocation13 + $0x184] sm:$0xf]
    %v3374 = vld [vmem:[#allocation13 + $0x188] sm:$0xf]
    %v3375 = vld [vmem:[#allocation13 + $0x18c] sm:$0xf]
    %v3376 = vld [vmem:[#allocation13 + $0x190] sm:$0xf]
    %v3377 = vld [vmem:[#allocation13 + $0x194] sm:$0xf]
    %v3378 = vld [vmem:[#allocation13 + $0x198] sm:$0xf]
    %v3379 = vld [vmem:[#allocation13 + $0x19c] sm:$0xf]
    %v3380 = vld [vmem:[#allocation13 + $0x1a0] sm:$0xf]
    %v3381 = vld [vmem:[#allocation13 + $0x1a4] sm:$0xf]
    %v3382 = vld [vmem:[#allocation13 + $0x1a8] sm:$0xf]
    %v3383 = vld [vmem:[#allocation13 + $0x1ac] sm:$0xf]
    %v3384 = vld [vmem:[#allocation13 + $0x1b0] sm:$0xf]
    %v3385 = vld [vmem:[#allocation13 + $0x1b4] sm:$0xf]
    %v3386 = vld [vmem:[#allocation13 + $0x1b8] sm:$0xf]
    %v3387 = vld [vmem:[#allocation13 + $0x1bc] sm:$0xf]
    %v3388 = vld [vmem:[#allocation13 + $0x1c0] sm:$0xf]
    %v3389 = vld [vmem:[#allocation13 + $0x1c4] sm:$0xf]
    %v3390 = vld [vmem:[#allocation13 + $0x1c8] sm:$0xf]
    %v3391 = vld [vmem:[#allocation13 + $0x1cc] sm:$0xf]
    %v3392 = vld [vmem:[#allocation13 + $0x1d0] sm:$0xf]
    %v3393 = vld [vmem:[#allocation13 + $0x1d4] sm:$0xf]
    %v3394 = vld [vmem:[#allocation13 + $0x1d8] sm:$0xf]
    %v3395 = vld [vmem:[#allocation13 + $0x1dc] sm:$0xf]
    %v3396 = vld [vmem:[#allocation13 + $0x1e0] sm:$0xf]
    %v3397 = vld [vmem:[#allocation13 + $0x1e4] sm:$0xf]
    %v3398 = vld [vmem:[#allocation13 + $0x1e8] sm:$0xf]
    %v3399 = vld [vmem:[#allocation13 + $0x1ec] sm:$0xf]
    %v3400 = vld [vmem:[#allocation13 + $0x1f0] sm:$0xf]
    %v3401 = vld [vmem:[#allocation13 + $0x1f4] sm:$0xf]
    %v3402 = vld [vmem:[#allocation13 + $0x1f8] sm:$0xf]
    %v3403 = vld [vmem:[#allocation13 + $0x1fc] sm:$0xf]
    %v3404 = vld [vmem:[#allocation13 + $0x200] sm:$0xf]
    %v3405 = vld [vmem:[#allocation13 + $0x204] sm:$0xf]
    %v3406 = vld [vmem:[#allocation13 + $0x208] sm:$0xf]
    %v3407 = vld [vmem:[#allocation13 + $0x20c] sm:$0xf]
    %v3408 = vld [vmem:[#allocation13 + $0x210] sm:$0xf]
    %v3409 = vld [vmem:[#allocation13 + $0x214] sm:$0xf]
    %v3410 = vld [vmem:[#allocation13 + $0x218] sm:$0xf]
    %v3411 = vld [vmem:[#allocation13 + $0x21c] sm:$0xf]
    %v3412 = vld [vmem:[#allocation13 + $0x220] sm:$0xf]
    %v3413 = vld [vmem:[#allocation13 + $0x224] sm:$0xf]
    %v3414 = vld [vmem:[#allocation13 + $0x228] sm:$0xf]
    %v3415 = vld [vmem:[#allocation13 + $0x22c] sm:$0xf]
    %v3416 = vld [vmem:[#allocation13 + $0x230] sm:$0xf]
    %v3417 = vld [vmem:[#allocation13 + $0x234] sm:$0xf]
    %v3418 = vld [vmem:[#allocation13 + $0x238] sm:$0xf]
    %v3419 = vld [vmem:[#allocation13 + $0x23c] sm:$0xf]
    %v3420 = vld [vmem:[#allocation13 + $0x240] sm:$0xf]
    %v3421 = vld [vmem:[#allocation13 + $0x244] sm:$0xf]
    %v3422 = vld [vmem:[#allocation13 + $0x248] sm:$0xf]
    %v3423 = vld [vmem:[#allocation13 + $0x24c] sm:$0xf]
    %v3424 = vld [vmem:[#allocation13 + $0x250] sm:$0xf]
    %v3425 = vld [vmem:[#allocation13 + $0x254] sm:$0xf]
    %v3426 = vld [vmem:[#allocation13 + $0x258] sm:$0xf]
    %v3427 = vld [vmem:[#allocation13 + $0x25c] sm:$0xf]
    %v3428 = vld [vmem:[#allocation13 + $0x260] sm:$0xf]
    %v3429 = vld [vmem:[#allocation13 + $0x264] sm:$0xf]
    %v3430 = vld [vmem:[#allocation13 + $0x268] sm:$0xf]
    %v3431 = vld [vmem:[#allocation13 + $0x26c] sm:$0xf]
    %v3432 = vld [vmem:[#allocation13 + $0x270] sm:$0xf]
    %v3433 = vld [vmem:[#allocation13 + $0x274] sm:$0xf]
    %v3434 = vld [vmem:[#allocation13 + $0x278] sm:$0xf]
    %v3435 = vld [vmem:[#allocation13 + $0x27c] sm:$0xf]
    %v3436 = vld [vmem:[#allocation13 + $0x280] sm:$0xf]
    %v3437 = vld [vmem:[#allocation13 + $0x284] sm:$0xf]
    %v3438 = vld [vmem:[#allocation13 + $0x288] sm:$0xf]
    %v3439 = vld [vmem:[#allocation13 + $0x28c] sm:$0xf]
    %v3440 = vld [vmem:[#allocation13 + $0x290] sm:$0xf]
    %v3441 = vld [vmem:[#allocation13 + $0x294] sm:$0xf]
    %v3442 = vld [vmem:[#allocation13 + $0x298] sm:$0xf]
    %v3443 = vld [vmem:[#allocation13 + $0x29c] sm:$0xf]
    %v3444 = vld [vmem:[#allocation13 + $0x2a0] sm:$0xf]
    %v3445 = vld [vmem:[#allocation13 + $0x2a4] sm:$0xf]
    %v3446 = vld [vmem:[#allocation13 + $0x2a8] sm:$0xf]
    %v3447 = vld [vmem:[#allocation13 + $0x2ac] sm:$0xf]
    %v3448 = vld [vmem:[#allocation13 + $0x2b0] sm:$0xf]
    %v3449 = vld [vmem:[#allocation13 + $0x2b4] sm:$0xf]
    %v3450 = vld [vmem:[#allocation13 + $0x2b8] sm:$0xf]
    %v3451 = vld [vmem:[#allocation13 + $0x2bc] sm:$0xf]
    %v3628 = vunpack.c.l.b16 %v3276
    %v3629 = vunpack.c.l.b16 %v3277
    %v3630 = vunpack.c.l.b16 %v3278
    %v3631 = vunpack.c.l.b16 %v3279
    %v3632 = vunpack.c.l.b16 %v3280
    %v3633 = vunpack.c.l.b16 %v3281
    %v3634 = vunpack.c.l.b16 %v3282
    %v3635 = vunpack.c.l.b16 %v3283
    %v3636 = vunpack.c.l.b16 %v3284
    %v3637 = vunpack.c.l.b16 %v3285
    %v3638 = vunpack.c.l.b16 %v3286
    %v3639 = vunpack.c.l.b16 %v3287
    %v3640 = vunpack.c.l.b16 %v3288
    %v3641 = vunpack.c.l.b16 %v3289
    %v3642 = vunpack.c.l.b16 %v3290
    %v3643 = vunpack.c.l.b16 %v3291
    %v3644 = vunpack.c.l.b16 %v3292
    %v3645 = vunpack.c.l.b16 %v3293
    %v3646 = vunpack.c.l.b16 %v3294
    %v3647 = vunpack.c.l.b16 %v3295
    %v3648 = vunpack.c.l.b16 %v3296
    %v3649 = vunpack.c.l.b16 %v3297
    %v3650 = vunpack.c.l.b16 %v3298
    %v3651 = vunpack.c.l.b16 %v3299
    %v3652 = vunpack.c.l.b16 %v3300
    %v3653 = vunpack.c.l.b16 %v3301
    %v3654 = vunpack.c.l.b16 %v3302
    %v3655 = vunpack.c.l.b16 %v3303
    %v3656 = vunpack.c.l.b16 %v3304
    %v3657 = vunpack.c.l.b16 %v3305
    %v3658 = vunpack.c.l.b16 %v3306
    %v3659 = vunpack.c.l.b16 %v3307
    %v3660 = vunpack.c.l.b16 %v3308
    %v3661 = vunpack.c.l.b16 %v3309
    %v3662 = vunpack.c.l.b16 %v3310
    %v3663 = vunpack.c.l.b16 %v3311
    %v3664 = vunpack.c.l.b16 %v3312
    %v3665 = vunpack.c.l.b16 %v3313
    %v3666 = vunpack.c.l.b16 %v3314
    %v3667 = vunpack.c.l.b16 %v3315
    %v3668 = vunpack.c.l.b16 %v3316
    %v3669 = vunpack.c.l.b16 %v3317
    %v3670 = vunpack.c.l.b16 %v3318
    %v3671 = vunpack.c.l.b16 %v3319
    %v3672 = vunpack.c.l.b16 %v3320
    %v3673 = vunpack.c.l.b16 %v3321
    %v3674 = vunpack.c.l.b16 %v3322
    %v3675 = vunpack.c.l.b16 %v3323
    %v3676 = vunpack.c.l.b16 %v3324
    %v3677 = vunpack.c.l.b16 %v3325
    %v3678 = vunpack.c.l.b16 %v3326
    %v3679 = vunpack.c.l.b16 %v3327
    %v3680 = vunpack.c.l.b16 %v3328
    %v3681 = vunpack.c.l.b16 %v3329
    %v3682 = vunpack.c.l.b16 %v3330
    %v3683 = vunpack.c.l.b16 %v3331
    %v3684 = vunpack.c.l.b16 %v3332
    %v3685 = vunpack.c.l.b16 %v3333
    %v3686 = vunpack.c.l.b16 %v3334
    %v3687 = vunpack.c.l.b16 %v3335
    %v3688 = vunpack.c.l.b16 %v3336
    %v3689 = vunpack.c.l.b16 %v3337
    %v3690 = vunpack.c.l.b16 %v3338
    %v3691 = vunpack.c.l.b16 %v3339
    %v3692 = vunpack.c.l.b16 %v3340
    %v3693 = vunpack.c.l.b16 %v3341
    %v3694 = vunpack.c.l.b16 %v3342
    %v3695 = vunpack.c.l.b16 %v3343
    %v3696 = vunpack.c.l.b16 %v3344
    %v3697 = vunpack.c.l.b16 %v3345
    %v3698 = vunpack.c.l.b16 %v3346
    %v3699 = vunpack.c.l.b16 %v3347
    %v3700 = vunpack.c.l.b16 %v3348
    %v3701 = vunpack.c.l.b16 %v3349
    %v3702 = vunpack.c.l.b16 %v3350
    %v3703 = vunpack.c.l.b16 %v3351
    %v3704 = vunpack.c.l.b16 %v3352
    %v3705 = vunpack.c.l.b16 %v3353
    %v3706 = vunpack.c.l.b16 %v3354
    %v3707 = vunpack.c.l.b16 %v3355
    %v3708 = vunpack.c.l.b16 %v3356
    %v3709 = vunpack.c.l.b16 %v3357
    %v3710 = vunpack.c.l.b16 %v3358
    %v3711 = vunpack.c.l.b16 %v3359
    %v3712 = vunpack.c.l.b16 %v3360
    %v3713 = vunpack.c.l.b16 %v3361
    %v3714 = vunpack.c.l.b16 %v3362
    %v3715 = vunpack.c.l.b16 %v3363
    %v3716 = vunpack.c.l.b16 %v3364
    %v3717 = vunpack.c.l.b16 %v3365
    %v3718 = vunpack.c.l.b16 %v3366
    %v3719 = vunpack.c.l.b16 %v3367
    %v3720 = vunpack.c.l.b16 %v3368
    %v3721 = vunpack.c.l.b16 %v3369
    %v3722 = vunpack.c.l.b16 %v3370
    %v3723 = vunpack.c.l.b16 %v3371
    %v3724 = vunpack.c.l.b16 %v3372
    %v3725 = vunpack.c.l.b16 %v3373
    %v3726 = vunpack.c.l.b16 %v3374
    %v3727 = vunpack.c.l.b16 %v3375
    %v3728 = vunpack.c.l.b16 %v3376
    %v3729 = vunpack.c.l.b16 %v3377
    %v3730 = vunpack.c.l.b16 %v3378
    %v3731 = vunpack.c.l.b16 %v3379
    %v3732 = vunpack.c.l.b16 %v3380
    %v3733 = vunpack.c.l.b16 %v3381
    %v3734 = vunpack.c.l.b16 %v3382
    %v3735 = vunpack.c.l.b16 %v3383
    %v3736 = vunpack.c.l.b16 %v3384
    %v3737 = vunpack.c.l.b16 %v3385
    %v3738 = vunpack.c.l.b16 %v3386
    %v3739 = vunpack.c.l.b16 %v3387
    %v3740 = vunpack.c.l.b16 %v3388
    %v3741 = vunpack.c.l.b16 %v3389
    %v3742 = vunpack.c.l.b16 %v3390
    %v3743 = vunpack.c.l.b16 %v3391
    %v3744 = vunpack.c.l.b16 %v3392
    %v3745 = vunpack.c.l.b16 %v3393
    %v3746 = vunpack.c.l.b16 %v3394
    %v3747 = vunpack.c.l.b16 %v3395
    %v3748 = vunpack.c.l.b16 %v3396
    %v3749 = vunpack.c.l.b16 %v3397
    %v3750 = vunpack.c.l.b16 %v3398
    %v3751 = vunpack.c.l.b16 %v3399
    %v3752 = vunpack.c.l.b16 %v3400
    %v3753 = vunpack.c.l.b16 %v3401
    %v3754 = vunpack.c.l.b16 %v3402
    %v3755 = vunpack.c.l.b16 %v3403
    %v3756 = vunpack.c.l.b16 %v3404
    %v3757 = vunpack.c.l.b16 %v3405
    %v3758 = vunpack.c.l.b16 %v3406
    %v3759 = vunpack.c.l.b16 %v3407
    %v3760 = vunpack.c.l.b16 %v3408
    %v3761 = vunpack.c.l.b16 %v3409
    %v3762 = vunpack.c.l.b16 %v3410
    %v3763 = vunpack.c.l.b16 %v3411
    %v3764 = vunpack.c.l.b16 %v3412
    %v3765 = vunpack.c.l.b16 %v3413
    %v3766 = vunpack.c.l.b16 %v3414
    %v3767 = vunpack.c.l.b16 %v3415
    %v3768 = vunpack.c.l.b16 %v3416
    %v3769 = vunpack.c.l.b16 %v3417
    %v3770 = vunpack.c.l.b16 %v3418
    %v3771 = vunpack.c.l.b16 %v3419
    %v3772 = vunpack.c.l.b16 %v3420
    %v3773 = vunpack.c.l.b16 %v3421
    %v3774 = vunpack.c.l.b16 %v3422
    %v3775 = vunpack.c.l.b16 %v3423
    %v3776 = vunpack.c.l.b16 %v3424
    %v3777 = vunpack.c.l.b16 %v3425
    %v3778 = vunpack.c.l.b16 %v3426
    %v3779 = vunpack.c.l.b16 %v3427
    %v3780 = vunpack.c.l.b16 %v3428
    %v3781 = vunpack.c.l.b16 %v3429
    %v3782 = vunpack.c.l.b16 %v3430
    %v3783 = vunpack.c.l.b16 %v3431
    %v3784 = vunpack.c.l.b16 %v3432
    %v3785 = vunpack.c.l.b16 %v3433
    %v3786 = vunpack.c.l.b16 %v3434
    %v3787 = vunpack.c.l.b16 %v3435
    %v3788 = vunpack.c.l.b16 %v3436
    %v3789 = vunpack.c.l.b16 %v3437
    %v3790 = vunpack.c.l.b16 %v3438
    %v3791 = vunpack.c.l.b16 %v3439
    %v3792 = vunpack.c.l.b16 %v3440
    %v3793 = vunpack.c.l.b16 %v3441
    %v3794 = vunpack.c.l.b16 %v3442
    %v3795 = vunpack.c.l.b16 %v3443
    %v3796 = vunpack.c.l.b16 %v3444
    %v3797 = vunpack.c.l.b16 %v3445
    %v3798 = vunpack.c.l.b16 %v3446
    %v3799 = vunpack.c.l.b16 %v3447
    %v3800 = vunpack.c.l.b16 %v3448
    %v3801 = vunpack.c.l.b16 %v3449
    %v3802 = vunpack.c.l.b16 %v3450
    %v3803 = vunpack.c.l.b16 %v3451
    %v3804 = vpack.c.b16 %v3629, %v3628
    %v3805 = vpack.c.b16 %v3631, %v3630
    %v3806 = vpack.c.b16 %v3633, %v3632
    %v3807 = vpack.c.b16 %v3635, %v3634
    %v3808 = vpack.c.b16 %v3637, %v3636
    %v3809 = vpack.c.b16 %v3639, %v3638
    %v3810 = vpack.c.b16 %v3641, %v3640
    %v3811 = vpack.c.b16 %v3643, %v3642
    %v3812 = vpack.c.b16 %v3645, %v3644
    %v3813 = vpack.c.b16 %v3647, %v3646
    %v3814 = vpack.c.b16 %v3649, %v3648
    %v3815 = vpack.c.b16 %v3651, %v3650
    %v3816 = vpack.c.b16 %v3653, %v3652
    %v3817 = vpack.c.b16 %v3655, %v3654
    %v3818 = vpack.c.b16 %v3657, %v3656
    %v3819 = vpack.c.b16 %v3659, %v3658
    %v3820 = vpack.c.b16 %v3661, %v3660
    %v3821 = vpack.c.b16 %v3663, %v3662
    %v3822 = vpack.c.b16 %v3665, %v3664
    %v3823 = vpack.c.b16 %v3667, %v3666
    %v3824 = vpack.c.b16 %v3669, %v3668
    %v3825 = vpack.c.b16 %v3671, %v3670
    %v3826 = vpack.c.b16 %v3673, %v3672
    %v3827 = vpack.c.b16 %v3675, %v3674
    %v3828 = vpack.c.b16 %v3677, %v3676
    %v3829 = vpack.c.b16 %v3679, %v3678
    %v3830 = vpack.c.b16 %v3681, %v3680
    %v3831 = vpack.c.b16 %v3683, %v3682
    %v3832 = vpack.c.b16 %v3685, %v3684
    %v3833 = vpack.c.b16 %v3687, %v3686
    %v3834 = vpack.c.b16 %v3689, %v3688
    %v3835 = vpack.c.b16 %v3691, %v3690
    %v3836 = vpack.c.b16 %v3693, %v3692
    %v3837 = vpack.c.b16 %v3695, %v3694
    %v3838 = vpack.c.b16 %v3697, %v3696
    %v3839 = vpack.c.b16 %v3699, %v3698
    %v3840 = vpack.c.b16 %v3701, %v3700
    %v3841 = vpack.c.b16 %v3703, %v3702
    %v3842 = vpack.c.b16 %v3705, %v3704
    %v3843 = vpack.c.b16 %v3707, %v3706
    %v3844 = vpack.c.b16 %v3709, %v3708
    %v3845 = vpack.c.b16 %v3711, %v3710
    %v3846 = vpack.c.b16 %v3713, %v3712
    %v3847 = vpack.c.b16 %v3715, %v3714
    %v3848 = vpack.c.b16 %v3717, %v3716
    %v3849 = vpack.c.b16 %v3719, %v3718
    %v3850 = vpack.c.b16 %v3721, %v3720
    %v3851 = vpack.c.b16 %v3723, %v3722
    %v3852 = vpack.c.b16 %v3725, %v3724
    %v3853 = vpack.c.b16 %v3727, %v3726
    %v3854 = vpack.c.b16 %v3729, %v3728
    %v3855 = vpack.c.b16 %v3731, %v3730
    %v3856 = vpack.c.b16 %v3733, %v3732
    %v3857 = vpack.c.b16 %v3735, %v3734
    %v3858 = vpack.c.b16 %v3737, %v3736
    %v3859 = vpack.c.b16 %v3739, %v3738
    %v3860 = vpack.c.b16 %v3741, %v3740
    %v3861 = vpack.c.b16 %v3743, %v3742
    %v3862 = vpack.c.b16 %v3745, %v3744
    %v3863 = vpack.c.b16 %v3747, %v3746
    %v3864 = vpack.c.b16 %v3749, %v3748
    %v3865 = vpack.c.b16 %v3751, %v3750
    %v3866 = vpack.c.b16 %v3753, %v3752
    %v3867 = vpack.c.b16 %v3755, %v3754
    %v3868 = vpack.c.b16 %v3757, %v3756
    %v3869 = vpack.c.b16 %v3759, %v3758
    %v3870 = vpack.c.b16 %v3761, %v3760
    %v3871 = vpack.c.b16 %v3763, %v3762
    %v3872 = vpack.c.b16 %v3765, %v3764
    %v3873 = vpack.c.b16 %v3767, %v3766
    %v3874 = vpack.c.b16 %v3769, %v3768
    %v3875 = vpack.c.b16 %v3771, %v3770
    %v3876 = vpack.c.b16 %v3773, %v3772
    %v3877 = vpack.c.b16 %v3775, %v3774
    %v3878 = vpack.c.b16 %v3777, %v3776
    %v3879 = vpack.c.b16 %v3779, %v3778
    %v3880 = vpack.c.b16 %v3781, %v3780
    %v3881 = vpack.c.b16 %v3783, %v3782
    %v3882 = vpack.c.b16 %v3785, %v3784
    %v3883 = vpack.c.b16 %v3787, %v3786
    %v3884 = vpack.c.b16 %v3789, %v3788
    %v3885 = vpack.c.b16 %v3791, %v3790
    %v3886 = vpack.c.b16 %v3793, %v3792
    %v3887 = vpack.c.b16 %v3795, %v3794
    %v3888 = vpack.c.b16 %v3797, %v3796
    %v3889 = vpack.c.b16 %v3799, %v3798
    %v3890 = vpack.c.b16 %v3801, %v3800
    %v3891 = vpack.c.b16 %v3803, %v3802
    %3980 = vmatprep.subr.bf16.mxu0 0
    %3981 = vmatpush1.bf16.msra.mxu0 %v3804
    %3982 = vmatprep.subr.bf16.mxu0 0
    %3983 = vmatpush1.bf16.msra.mxu0 %v3805
    %3984 = vmatprep.subr.bf16.mxu0 0
    %3985 = vmatpush1.bf16.msra.mxu0 %v3806
    %3986 = vmatprep.subr.bf16.mxu0 0
    %3987 = vmatpush1.bf16.msra.mxu0 %v3807
    %3988 = vmatprep.subr.bf16.mxu0 0
    %3989 = vmatpush1.bf16.msra.mxu0 %v3808
    %3990 = vmatprep.subr.bf16.mxu0 0
    %3991 = vmatpush1.bf16.msra.mxu0 %v3809
    %3992 = vmatprep.subr.bf16.mxu0 0
    %3993 = vmatpush1.bf16.msra.mxu0 %v3810
    %3994 = vmatprep.subr.bf16.mxu0 0
    %3995 = vmatpush1.bf16.msra.mxu0 %v3811
    %3996 = vmatprep.subr.bf16.mxu0 0
    %3997 = vmatpush1.bf16.msra.mxu0 %v3812
    %3998 = vmatprep.subr.bf16.mxu0 0
    %3999 = vmatpush1.bf16.msra.mxu0 %v3813
    %4000 = vmatprep.subr.bf16.mxu0 0
    %4001 = vmatpush1.bf16.msra.mxu0 %v3814
    %4002 = vmatprep.subr.bf16.mxu0 0
    %4003 = vmatpush1.bf16.msra.mxu0 %v3815
    %4004 = vmatprep.subr.bf16.mxu0 0
    %4005 = vmatpush1.bf16.msra.mxu0 %v3816
    %4006 = vmatprep.subr.bf16.mxu0 0
    %4007 = vmatpush1.bf16.msra.mxu0 %v3817
    %4008 = vmatprep.subr.bf16.mxu0 0
    %4009 = vmatpush1.bf16.msra.mxu0 %v3818
    %4010 = vmatprep.subr.bf16.mxu0 0
    %4011 = vmatpush1.bf16.msra.mxu0 %v3819
    %4012 = vmatprep.mubr.bf16.mxu0 %v3013
    %4013 = vmatmul.mubr.bf16.gmra.mrb[0].mxu0 %v3012
    %v4014 = vpop.f32.mrb[0].mxu0
    %v4015 = vadd.f32 0.0, %v4014
    %v4016 = vpop.f32.mrb[0].mxu0
    %v4017 = vpop.f32.mrb[0].mxu0
    %v4018 = vadd.f32 0.0, %v4017
    %v4019 = vpop.f32.mrb[0].mxu0
    %4020 = vmatprep.mubr.bf16.mxu0 %v3024
    %4021 = vmatmul.mubr.bf16.gmra.mrb[0].mxu0 %v3023
    %v4022 = vpop.f32.mrb[0].mxu0
    %v4023 = vadd.f32 0.0, %v4022
    %v4024 = vpop.f32.mrb[0].mxu0
    %v4025 = vpop.f32.mrb[0].mxu0
    %v4026 = vadd.f32 0.0, %v4025
    %v4027 = vpop.f32.mrb[0].mxu0
    %4028 = vmatprep.mubr.bf16.mxu0 %v3035
    %4029 = vmatmul.mubr.bf16.gmra.mrb[0].mxu0 %v3034
    %v4030 = vpop.f32.mrb[0].mxu0
    %v4031 = vadd.f32 0.0, %v4030
    %v4032 = vpop.f32.mrb[0].mxu0
    %v4033 = vpop.f32.mrb[0].mxu0
    %v4034 = vadd.f32 0.0, %v4033
    %v4035 = vpop.f32.mrb[0].mxu0
    %4036 = vmatprep.mubr.bf16.mxu0 %v3046
    %4037 = vmatmul.mubr.bf16.gmra.mrb[0].mxu0 %v3045
    %v4038 = vpop.f32.mrb[0].mxu0
    %v4039 = vadd.f32 0.0, %v4038
    %v4040 = vpop.f32.mrb[0].mxu0
    %v4041 = vpop.f32.mrb[0].mxu0
    %v4042 = vadd.f32 0.0, %v4041
    %v4043 = vpop.f32.mrb[0].mxu0
    %4044 = vmatprep.mubr.bf16.mxu0 %v3057
    %4045 = vmatmul.mubr.bf16.gmra.mrb[0].mxu0 %v3056
    %v4046 = vpop.f32.mrb[0].mxu0
    %v4047 = vadd.f32 0.0, %v4046
    %v4048 = vpop.f32.mrb[0].mxu0
    %v4049 = vpop.f32.mrb[0].mxu0
    %v4050 = vadd.f32 0.0, %v4049
    %v4051 = vpop.f32.mrb[0].mxu0
    %4052 = vmatprep.mubr.bf16.mxu0 %v3068
    %4053 = vmatmul.mubr.bf16.gmra.mrb[0].mxu0 %v3067
    %v4054 = vpop.f32.mrb[0].mxu0
    %v4055 = vadd.f32 0.0, %v4054
    %v4056 = vpop.f32.mrb[0].mxu0
    %v4057 = vpop.f32.mrb[0].mxu0
    %v4058 = vadd.f32 0.0, %v4057
    %v4059 = vpop.f32.mrb[0].mxu0
    %4060 = vmatprep.mubr.bf16.mxu0 %v3079
    %4061 = vmatmul.mubr.bf16.gmra.mrb[0].mxu0 %v3078
    %v4062 = vpop.f32.mrb[0].mxu0
    %v4063 = vadd.f32 0.0, %v4062
    %v4064 = vpop.f32.mrb[0].mxu0
    %v4065 = vpop.f32.mrb[0].mxu0
    %v4066 = vadd.f32 0.0, %v4065
    %v4067 = vpop.f32.mrb[0].mxu0
    %4068 = vmatprep.mubr.bf16.mxu0 %v3090
    %4069 = vmatmul.mubr.bf16.gmra.mrb[0].mxu0 %v3089
    %v4070 = vpop.f32.mrb[0].mxu0
    %v4071 = vadd.f32 0.0, %v4070
    %v4072 = vpop.f32.mrb[0].mxu0
    %v4073 = vpop.f32.mrb[0].mxu0
    %v4074 = vadd.f32 0.0, %v4073
    %v4075 = vpop.f32.mrb[0].mxu0
    %4076 = vdwg.mxu0
    %4077 = vmatprep.subr.bf16.mxu0 0
    %4078 = vmatpush1.bf16.msra.mxu0 %v3820
    %4079 = vmatprep.subr.bf16.mxu0 0
    %4080 = vmatpush1.bf16.msra.mxu0 %v3821
    %4081 = vmatprep.subr.bf16.mxu0 0
    %4082 = vmatpush1.bf16.msra.mxu0 %v3822
    %4083 = vmatprep.subr.bf16.mxu0 0
    %4084 = vmatpush1.bf16.msra.mxu0 %v3823
    %4085 = vmatprep.subr.bf16.mxu0 0
    %4086 = vmatpush1.bf16.msra.mxu0 %v3824
    %4087 = vmatprep.subr.bf16.mxu0 0
    %4088 = vmatpush1.bf16.msra.mxu0 %v3825
    %4089 = vmatprep.subr.bf16.mxu0 0
    %4090 = vmatpush1.bf16.msra.mxu0 %v3826
    %4091 = vmatprep.subr.bf16.mxu0 0
    %4092 = vmatpush1.bf16.msra.mxu0 %v3827
    %4093 = vmatprep.subr.bf16.mxu0 0
    %4094 = vmatpush1.bf16.msra.mxu0 %v3828
    %4095 = vmatprep.subr.bf16.mxu0 0
    %4096 = vmatpush1.bf16.msra.mxu0 %v3829
    %4097 = vmatprep.subr.bf16.mxu0 0
    %4098 = vmatpush1.bf16.msra.mxu0 %v3830
    %4099 = vmatprep.subr.bf16.mxu0 0
    %4100 = vmatpush1.bf16.msra.mxu0 %v3831
    %4101 = vmatprep.subr.bf16.mxu0 0
    %4102 = vmatpush1.bf16.msra.mxu0 %v3832
    %4103 = vmatprep.subr.bf16.mxu0 0
    %4104 = vmatpush1.bf16.msra.mxu0 %v3833
    %4105 = vmatprep.subr.bf16.mxu0 0
    %4106 = vmatpush1.bf16.msra.mxu0 %v3834
    %4107 = vmatprep.subr.bf16.mxu0 0
    %4108 = vmatpush1.bf16.msra.mxu0 %v3835
    %4109 = vmatprep.mubr.bf16.mxu0 %v3015
    %4110 = vmatmul.mubr.bf16.gmra.mrb[0].mxu0 %v3014
    %v4111 = vpop.f32.mrb[0].mxu0
    %v4112 = vadd.f32 %v4015, %v4111
    %v4113 = vpop.f32.mrb[0].mxu0
    %v4114 = vpop.f32.mrb[0].mxu0
    %v4115 = vadd.f32 %v4018, %v4114
    %v4116 = vpop.f32.mrb[0].mxu0
    %4117 = vmatprep.mubr.bf16.mxu0 %v3026
    %4118 = vmatmul.mubr.bf16.gmra.mrb[0].mxu0 %v3025
    %v4119 = vpop.f32.mrb[0].mxu0
    %v4120 = vadd.f32 %v4023, %v4119
    %v4121 = vpop.f32.mrb[0].mxu0
    %v4122 = vpop.f32.mrb[0].mxu0
    %v4123 = vadd.f32 %v4026, %v4122
    %v4124 = vpop.f32.mrb[0].mxu0
    %4125 = vmatprep.mubr.bf16.mxu0 %v3037
    %4126 = vmatmul.mubr.bf16.gmra.mrb[0].mxu0 %v3036
    %v4127 = vpop.f32.mrb[0].mxu0
    %v4128 = vadd.f32 %v4031, %v4127
    %v4129 = vpop.f32.mrb[0].mxu0
    %v4130 = vpop.f32.mrb[0].mxu0
    %v4131 = vadd.f32 %v4034, %v4130
    %v4132 = vpop.f32.mrb[0].mxu0
    %4133 = vmatprep.mubr.bf16.mxu0 %v3048
    %4134 = vmatmul.mubr.bf16.gmra.mrb[0].mxu0 %v3047
    %v4135 = vpop.f32.mrb[0].mxu0
    %v4136 = vadd.f32 %v4039, %v4135
    %v4137 = vpop.f32.mrb[0].mxu0
    %v4138 = vpop.f32.mrb[0].mxu0
    %v4139 = vadd.f32 %v4042, %v4138
    %v4140 = vpop.f32.mrb[0].mxu0
    %4141 = vmatprep.mubr.bf16.mxu0 %v3059
    %4142 = vmatmul.mubr.bf16.gmra.mrb[0].mxu0 %v3058
    %v4143 = vpop.f32.mrb[0].mxu0
    %v4144 = vadd.f32 %v4047, %v4143
    %v4145 = vpop.f32.mrb[0].mxu0
    %v4146 = vpop.f32.mrb[0].mxu0
    %v4147 = vadd.f32 %v4050, %v4146
    %v4148 = vpop.f32.mrb[0].mxu0
    %4149 = vmatprep.mubr.bf16.mxu0 %v3070
    %4150 = vmatmul.mubr.bf16.gmra.mrb[0].mxu0 %v3069
    %v4151 = vpop.f32.mrb[0].mxu0
    %v4152 = vadd.f32 %v4055, %v4151
    %v4153 = vpop.f32.mrb[0].mxu0
    %v4154 = vpop.f32.mrb[0].mxu0
    %v4155 = vadd.f32 %v4058, %v4154
    %v4156 = vpop.f32.mrb[0].mxu0
    %4157 = vmatprep.mubr.bf16.mxu0 %v3081
    %4158 = vmatmul.mubr.bf16.gmra.mrb[0].mxu0 %v3080
    %v4159 = vpop.f32.mrb[0].mxu0
    %v4160 = vadd.f32 %v4063, %v4159
    %v4161 = vpop.f32.mrb[0].mxu0
    %v4162 = vpop.f32.mrb[0].mxu0
    %v4163 = vadd.f32 %v4066, %v4162
    %v4164 = vpop.f32.mrb[0].mxu0
    %4165 = vmatprep.mubr.bf16.mxu0 %v3092
    %4166 = vmatmul.mubr.bf16.gmra.mrb[0].mxu0 %v3091
    %v4167 = vpop.f32.mrb[0].mxu0
    %v4168 = vadd.f32 %v4071, %v4167
    %v4169 = vpop.f32.mrb[0].mxu0
    %v4170 = vpop.f32.mrb[0].mxu0
    %v4171 = vadd.f32 %v4074, %v4170
    %v4172 = vpop.f32.mrb[0].mxu0
    %4173 = vdwg.mxu0
    %4174 = vmatprep.subr.bf16.mxu0 0
    %4175 = vmatpush1.bf16.msra.mxu0 %v3836
    %4176 = vmatprep.subr.bf16.mxu0 0
    %4177 = vmatpush1.bf16.msra.mxu0 %v3837
    %4178 = vmatprep.subr.bf16.mxu0 0
    %4179 = vmatpush1.bf16.msra.mxu0 %v3838
    %4180 = vmatprep.subr.bf16.mxu0 0
    %4181 = vmatpush1.bf16.msra.mxu0 %v3839
    %4182 = vmatprep.subr.bf16.mxu0 0
    %4183 = vmatpush1.bf16.msra.mxu0 %v3840
    %4184 = vmatprep.subr.bf16.mxu0 0
    %4185 = vmatpush1.bf16.msra.mxu0 %v3841
    %4186 = vmatprep.subr.bf16.mxu0 0
    %4187 = vmatpush1.bf16.msra.mxu0 %v3842
    %4188 = vmatprep.subr.bf16.mxu0 0
    %4189 = vmatpush1.bf16.msra.mxu0 %v3843
    %4190 = vmatprep.subr.bf16.mxu0 0
    %4191 = vmatpush1.bf16.msra.mxu0 %v3844
    %4192 = vmatprep.subr.bf16.mxu0 0
    %4193 = vmatpush1.bf16.msra.mxu0 %v3845
    %4194 = vmatprep.subr.bf16.mxu0 0
    %4195 = vmatpush1.bf16.msra.mxu0 %v3846
    %4196 = vmatprep.subr.bf16.mxu0 0
    %4197 = vmatpush1.bf16.msra.mxu0 %v3847
    %4198 = vmatprep.subr.bf16.mxu0 0
    %4199 = vmatpush1.bf16.msra.mxu0 %v3848
    %4200 = vmatprep.subr.bf16.mxu0 0
    %4201 = vmatpush1.bf16.msra.mxu0 %v3849
    %4202 = vmatprep.subr.bf16.mxu0 0
    %4203 = vmatpush1.bf16.msra.mxu0 %v3850
    %4204 = vmatprep.subr.bf16.mxu0 0
    %4205 = vmatpush1.bf16.msra.mxu0 %v3851
    %4206 = vmatprep.mubr.bf16.mxu0 %v3017
    %4207 = vmatmul.mubr.bf16.gmra.mrb[0].mxu0 %v3016
    %v4208 = vpop.f32.mrb[0].mxu0
    %v4209 = vadd.f32 %v4112, %v4208
    %v4210 = vpop.f32.mrb[0].mxu0
    %v4211 = vpop.f32.mrb[0].mxu0
    %v4212 = vadd.f32 %v4115, %v4211
    %v4213 = vpop.f32.mrb[0].mxu0
    %4214 = vmatprep.mubr.bf16.mxu0 %v3028
    %4215 = vmatmul.mubr.bf16.gmra.mrb[0].mxu0 %v3027
    %v4216 = vpop.f32.mrb[0].mxu0
    %v4217 = vadd.f32 %v4120, %v4216
    %v4218 = vpop.f32.mrb[0].mxu0
    %v4219 = vpop.f32.mrb[0].mxu0
    %v4220 = vadd.f32 %v4123, %v4219
    %v4221 = vpop.f32.mrb[0].mxu0
    %4222 = vmatprep.mubr.bf16.mxu0 %v3039
    %4223 = vmatmul.mubr.bf16.gmra.mrb[0].mxu0 %v3038
    %v4224 = vpop.f32.mrb[0].mxu0
    %v4225 = vadd.f32 %v4128, %v4224
    %v4226 = vpop.f32.mrb[0].mxu0
    %v4227 = vpop.f32.mrb[0].mxu0
    %v4228 = vadd.f32 %v4131, %v4227
    %v4229 = vpop.f32.mrb[0].mxu0
    %4230 = vmatprep.mubr.bf16.mxu0 %v3050
    %4231 = vmatmul.mubr.bf16.gmra.mrb[0].mxu0 %v3049
    %v4232 = vpop.f32.mrb[0].mxu0
    %v4233 = vadd.f32 %v4136, %v4232
    %v4234 = vpop.f32.mrb[0].mxu0
    %v4235 = vpop.f32.mrb[0].mxu0
    %v4236 = vadd.f32 %v4139, %v4235
    %v4237 = vpop.f32.mrb[0].mxu0
    %4238 = vmatprep.mubr.bf16.mxu0 %v3061
    %4239 = vmatmul.mubr.bf16.gmra.mrb[0].mxu0 %v3060
    %v4240 = vpop.f32.mrb[0].mxu0
    %v4241 = vadd.f32 %v4144, %v4240
    %v4242 = vpop.f32.mrb[0].mxu0
    %v4243 = vpop.f32.mrb[0].mxu0
    %v4244 = vadd.f32 %v4147, %v4243
    %v4245 = vpop.f32.mrb[0].mxu0
    %4246 = vmatprep.mubr.bf16.mxu0 %v3072
    %4247 = vmatmul.mubr.bf16.gmra.mrb[0].mxu0 %v3071
    %v4248 = vpop.f32.mrb[0].mxu0
    %v4249 = vadd.f32 %v4152, %v4248
    %v4250 = vpop.f32.mrb[0].mxu0
    %v4251 = vpop.f32.mrb[0].mxu0
    %v4252 = vadd.f32 %v4155, %v4251
    %v4253 = vpop.f32.mrb[0].mxu0
    %4254 = vmatprep.mubr.bf16.mxu0 %v3083
    %4255 = vmatmul.mubr.bf16.gmra.mrb[0].mxu0 %v3082
    %v4256 = vpop.f32.mrb[0].mxu0
    %v4257 = vadd.f32 %v4160, %v4256
    %v4258 = vpop.f32.mrb[0].mxu0
    %v4259 = vpop.f32.mrb[0].mxu0
    %v4260 = vadd.f32 %v4163, %v4259
    %v4261 = vpop.f32.mrb[0].mxu0
    %4262 = vmatprep.mubr.bf16.mxu0 %v3094
    %4263 = vmatmul.mubr.bf16.gmra.mrb[0].mxu0 %v3093
    %v4264 = vpop.f32.mrb[0].mxu0
    %v4265 = vadd.f32 %v4168, %v4264
    %v4266 = vpop.f32.mrb[0].mxu0
    %v4267 = vpop.f32.mrb[0].mxu0
    %v4268 = vadd.f32 %v4171, %v4267
    %v4269 = vpop.f32.mrb[0].mxu0
    %4270 = vdwg.mxu0
    %4271 = vmatprep.subr.bf16.mxu0 0
    %4272 = vmatpush1.bf16.msra.mxu0 %v3852
    %4273 = vmatprep.subr.bf16.mxu0 0
    %4274 = vmatpush1.bf16.msra.mxu0 %v3853
    %4275 = vmatprep.subr.bf16.mxu0 0
    %4276 = vmatpush1.bf16.msra.mxu0 %v3854
    %4277 = vmatprep.subr.bf16.mxu0 0
    %4278 = vmatpush1.bf16.msra.mxu0 %v3855
    %4279 = vmatprep.subr.bf16.mxu0 0
    %4280 = vmatpush1.bf16.msra.mxu0 %v3856
    %4281 = vmatprep.subr.bf16.mxu0 0
    %4282 = vmatpush1.bf16.msra.mxu0 %v3857
    %4283 = vmatprep.subr.bf16.mxu0 0
    %4284 = vmatpush1.bf16.msra.mxu0 %v3858
    %4285 = vmatprep.subr.bf16.mxu0 0
    %4286 = vmatpush1.bf16.msra.mxu0 %v3859
    %4287 = vmatprep.subr.bf16.mxu0 0
    %4288 = vmatpush1.bf16.msra.mxu0 %v3860
    %4289 = vmatprep.subr.bf16.mxu0 0
    %4290 = vmatpush1.bf16.msra.mxu0 %v3861
    %4291 = vmatprep.subr.bf16.mxu0 0
    %4292 = vmatpush1.bf16.msra.mxu0 %v3862
    %4293 = vmatprep.subr.bf16.mxu0 0
    %4294 = vmatpush1.bf16.msra.mxu0 %v3863
    %4295 = vmatprep.subr.bf16.mxu0 0
    %4296 = vmatpush1.bf16.msra.mxu0 %v3864
    %4297 = vmatprep.subr.bf16.mxu0 0
    %4298 = vmatpush1.bf16.msra.mxu0 %v3865
    %4299 = vmatprep.subr.bf16.mxu0 0
    %4300 = vmatpush1.bf16.msra.mxu0 %v3866
    %4301 = vmatprep.subr.bf16.mxu0 0
    %4302 = vmatpush1.bf16.msra.mxu0 %v3867
    %4303 = vmatprep.mubr.bf16.mxu0 %v3019
    %4304 = vmatmul.mubr.bf16.gmra.mrb[0].mxu0 %v3018
    %v4305 = vpop.f32.mrb[0].mxu0
    %v4306 = vadd.f32 %v4209, %v4305
    %v4307 = vpop.f32.mrb[0].mxu0
    %v4308 = vpop.f32.mrb[0].mxu0
    %v4309 = vadd.f32 %v4212, %v4308
    %v4310 = vpop.f32.mrb[0].mxu0
    %4311 = vmatprep.mubr.bf16.mxu0 %v3030
    %4312 = vmatmul.mubr.bf16.gmra.mrb[0].mxu0 %v3029
    %v4313 = vpop.f32.mrb[0].mxu0
    %v4314 = vadd.f32 %v4217, %v4313
    %v4315 = vpop.f32.mrb[0].mxu0
    %v4316 = vpop.f32.mrb[0].mxu0
    %v4317 = vadd.f32 %v4220, %v4316
    %v4318 = vpop.f32.mrb[0].mxu0
    %4319 = vmatprep.mubr.bf16.mxu0 %v3041
    %4320 = vmatmul.mubr.bf16.gmra.mrb[0].mxu0 %v3040
    %v4321 = vpop.f32.mrb[0].mxu0
    %v4322 = vadd.f32 %v4225, %v4321
    %v4323 = vpop.f32.mrb[0].mxu0
    %v4324 = vpop.f32.mrb[0].mxu0
    %v4325 = vadd.f32 %v4228, %v4324
    %v4326 = vpop.f32.mrb[0].mxu0
    %4327 = vmatprep.mubr.bf16.mxu0 %v3052
    %4328 = vmatmul.mubr.bf16.gmra.mrb[0].mxu0 %v3051
    %v4329 = vpop.f32.mrb[0].mxu0
    %v4330 = vadd.f32 %v4233, %v4329
    %v4331 = vpop.f32.mrb[0].mxu0
    %v4332 = vpop.f32.mrb[0].mxu0
    %v4333 = vadd.f32 %v4236, %v4332
    %v4334 = vpop.f32.mrb[0].mxu0
    %4335 = vmatprep.mubr.bf16.mxu0 %v3063
    %4336 = vmatmul.mubr.bf16.gmra.mrb[0].mxu0 %v3062
    %v4337 = vpop.f32.mrb[0].mxu0
    %v4338 = vadd.f32 %v4241, %v4337
    %v4339 = vpop.f32.mrb[0].mxu0
    %v4340 = vpop.f32.mrb[0].mxu0
    %v4341 = vadd.f32 %v4244, %v4340
    %v4342 = vpop.f32.mrb[0].mxu0
    %4343 = vmatprep.mubr.bf16.mxu0 %v3074
    %4344 = vmatmul.mubr.bf16.gmra.mrb[0].mxu0 %v3073
    %v4345 = vpop.f32.mrb[0].mxu0
    %v4346 = vadd.f32 %v4249, %v4345
    %v4347 = vpop.f32.mrb[0].mxu0
    %v4348 = vpop.f32.mrb[0].mxu0
    %v4349 = vadd.f32 %v4252, %v4348
    %v4350 = vpop.f32.mrb[0].mxu0
    %4351 = vmatprep.mubr.bf16.mxu0 %v3085
    %4352 = vmatmul.mubr.bf16.gmra.mrb[0].mxu0 %v3084
    %v4353 = vpop.f32.mrb[0].mxu0
    %v4354 = vadd.f32 %v4257, %v4353
    %v4355 = vpop.f32.mrb[0].mxu0
    %v4356 = vpop.f32.mrb[0].mxu0
    %v4357 = vadd.f32 %v4260, %v4356
    %v4358 = vpop.f32.mrb[0].mxu0
    %4359 = vmatprep.mubr.bf16.mxu0 %v3096
    %4360 = vmatmul.mubr.bf16.gmra.mrb[0].mxu0 %v3095
    %v4361 = vpop.f32.mrb[0].mxu0
    %v4362 = vadd.f32 %v4265, %v4361
    %v4363 = vpop.f32.mrb[0].mxu0
    %v4364 = vpop.f32.mrb[0].mxu0
    %v4365 = vadd.f32 %v4268, %v4364
    %v4366 = vpop.f32.mrb[0].mxu0
    %4367 = vdwg.mxu0
    %4368 = vmatprep.subr.bf16.mxu0 0
    %4369 = vmatpush1.bf16.msra.mxu0 %v3868
    %4370 = vmatprep.subr.bf16.mxu0 0
    %4371 = vmatpush1.bf16.msra.mxu0 %v3869
    %4372 = vmatprep.subr.bf16.mxu0 0
    %4373 = vmatpush1.bf16.msra.mxu0 %v3870
    %4374 = vmatprep.subr.bf16.mxu0 0
    %4375 = vmatpush1.bf16.msra.mxu0 %v3871
    %4376 = vmatprep.subr.bf16.mxu0 0
    %4377 = vmatpush1.bf16.msra.mxu0 %v3872
    %4378 = vmatprep.subr.bf16.mxu0 0
    %4379 = vmatpush1.bf16.msra.mxu0 %v3873
    %4380 = vmatprep.subr.bf16.mxu0 0
    %4381 = vmatpush1.bf16.msra.mxu0 %v3874
    %4382 = vmatprep.subr.bf16.mxu0 0
    %4383 = vmatpush1.bf16.msra.mxu0 %v3875
    %4384 = vmatprep.subr.bf16.mxu0 0
    %4385 = vmatpush1.bf16.msra.mxu0 %v3876
    %4386 = vmatprep.subr.bf16.mxu0 0
    %4387 = vmatpush1.bf16.msra.mxu0 %v3877
    %4388 = vmatprep.subr.bf16.mxu0 0
    %4389 = vmatpush1.bf16.msra.mxu0 %v3878
    %4390 = vmatprep.subr.bf16.mxu0 0
    %4391 = vmatpush1.bf16.msra.mxu0 %v3879
    %4392 = vmatprep.subr.bf16.mxu0 0
    %4393 = vmatpush1.bf16.msra.mxu0 %v3880
    %4394 = vmatprep.subr.bf16.mxu0 0
    %4395 = vmatpush1.bf16.msra.mxu0 %v3881
    %4396 = vmatprep.subr.bf16.mxu0 0
    %4397 = vmatpush1.bf16.msra.mxu0 %v3882
    %4398 = vmatprep.subr.bf16.mxu0 0
    %4399 = vmatpush1.bf16.msra.mxu0 %v3883
    %4400 = vmatprep.mubr.bf16.mxu0 %v3021
    %4401 = vmatmul.mubr.bf16.gmra.mrb[0].mxu0 %v3020
    %v4402 = vpop.f32.mrb[0].mxu0
    %v4403 = vadd.f32 %v4306, %v4402
    %v4404 = vpop.f32.mrb[0].mxu0
    %v4405 = vpop.f32.mrb[0].mxu0
    %v4406 = vadd.f32 %v4309, %v4405
    %v4407 = vpop.f32.mrb[0].mxu0
    %4408 = vmatprep.mubr.bf16.mxu0 %v3032
    %4409 = vmatmul.mubr.bf16.gmra.mrb[0].mxu0 %v3031
    %v4410 = vpop.f32.mrb[0].mxu0
    %v4411 = vadd.f32 %v4314, %v4410
    %v4412 = vpop.f32.mrb[0].mxu0
    %v4413 = vpop.f32.mrb[0].mxu0
    %v4414 = vadd.f32 %v4317, %v4413
    %v4415 = vpop.f32.mrb[0].mxu0
    %4416 = vmatprep.mubr.bf16.mxu0 %v3043
    %4417 = vmatmul.mubr.bf16.gmra.mrb[0].mxu0 %v3042
    %v4418 = vpop.f32.mrb[0].mxu0
    %v4419 = vadd.f32 %v4322, %v4418
    %v4420 = vpop.f32.mrb[0].mxu0
    %v4421 = vpop.f32.mrb[0].mxu0
    %v4422 = vadd.f32 %v4325, %v4421
    %v4423 = vpop.f32.mrb[0].mxu0
    %4424 = vmatprep.mubr.bf16.mxu0 %v3054
    %4425 = vmatmul.mubr.bf16.gmra.mrb[0].mxu0 %v3053
    %v4426 = vpop.f32.mrb[0].mxu0
    %v4427 = vadd.f32 %v4330, %v4426
    %v4428 = vpop.f32.mrb[0].mxu0
    %v4429 = vpop.f32.mrb[0].mxu0
    %v4430 = vadd.f32 %v4333, %v4429
    %v4431 = vpop.f32.mrb[0].mxu0
    %4432 = vmatprep.mubr.bf16.mxu0 %v3065
    %4433 = vmatmul.mubr.bf16.gmra.mrb[0].mxu0 %v3064
    %v4434 = vpop.f32.mrb[0].mxu0
    %v4435 = vadd.f32 %v4338, %v4434
    %v4436 = vpop.f32.mrb[0].mxu0
    %v4437 = vpop.f32.mrb[0].mxu0
    %v4438 = vadd.f32 %v4341, %v4437
    %v4439 = vpop.f32.mrb[0].mxu0
    %4440 = vmatprep.mubr.bf16.mxu0 %v3076
    %4441 = vmatmul.mubr.bf16.gmra.mrb[0].mxu0 %v3075
    %v4442 = vpop.f32.mrb[0].mxu0
    %v4443 = vadd.f32 %v4346, %v4442
    %v4444 = vpop.f32.mrb[0].mxu0
    %v4445 = vpop.f32.mrb[0].mxu0
    %v4446 = vadd.f32 %v4349, %v4445
    %v4447 = vpop.f32.mrb[0].mxu0
    %4448 = vmatprep.mubr.bf16.mxu0 %v3087
    %4449 = vmatmul.mubr.bf16.gmra.mrb[0].mxu0 %v3086
    %v4450 = vpop.f32.mrb[0].mxu0
    %v4451 = vadd.f32 %v4354, %v4450
    %v4452 = vpop.f32.mrb[0].mxu0
    %v4453 = vpop.f32.mrb[0].mxu0
    %v4454 = vadd.f32 %v4357, %v4453
    %v4455 = vpop.f32.mrb[0].mxu0
    %4456 = vmatprep.mubr.bf16.mxu0 %v3098
    %4457 = vmatmul.mubr.bf16.gmra.mrb[0].mxu0 %v3097
    %v4458 = vpop.f32.mrb[0].mxu0
    %v4459 = vadd.f32 %v4362, %v4458
    %v4460 = vpop.f32.mrb[0].mxu0
    %v4461 = vpop.f32.mrb[0].mxu0
    %v4462 = vadd.f32 %v4365, %v4461
    %v4463 = vpop.f32.mrb[0].mxu0
    %4464 = vdwg.mxu0
    %4465 = vmatprep.subr.bf16.mxu0 0
    %4466 = vmatpush1.bf16.msra.mxu0 %v3884
    %4467 = vmatprep.subr.bf16.mxu0 0
    %4468 = vmatpush1.bf16.msra.mxu0 %v3885
    %4469 = vmatprep.subr.bf16.mxu0 0
    %4470 = vmatpush1.bf16.msra.mxu0 %v3886
    %4471 = vmatprep.subr.bf16.mxu0 0
    %4472 = vmatpush1.bf16.msra.mxu0 %v3887
    %4473 = vmatprep.subr.bf16.mxu0 0
    %4474 = vmatpush1.bf16.msra.mxu0 %v3888
    %4475 = vmatprep.subr.bf16.mxu0 0
    %4476 = vmatpush1.bf16.msra.mxu0 %v3889
    %4477 = vmatprep.subr.bf16.mxu0 0
    %4478 = vmatpush1.bf16.msra.mxu0 %v3890
    %4479 = vmatprep.subr.bf16.mxu0 0
    %4480 = vmatpush1.bf16.msra.mxu0 %v3891
    %4481 = vmatprep.subr.bf16.mxu0 0
    %4482 = vmatpush1.bf16.msra.mxu0 0
    %4483 = vmatprep.subr.bf16.mxu0 0
    %4484 = vmatpush1.bf16.msra.mxu0 0
    %4485 = vmatprep.subr.bf16.mxu0 0
    %4486 = vmatpush1.bf16.msra.mxu0 0
    %4487 = vmatprep.subr.bf16.mxu0 0
    %4488 = vmatpush1.bf16.msra.mxu0 0
    %4489 = vmatprep.subr.bf16.mxu0 0
    %4490 = vmatpush1.bf16.msra.mxu0 0
    %4491 = vmatprep.subr.bf16.mxu0 0
    %4492 = vmatpush1.bf16.msra.mxu0 0
    %4493 = vmatprep.subr.bf16.mxu0 0
    %4494 = vmatpush1.bf16.msra.mxu0 0
    %4495 = vmatprep.subr.bf16.mxu0 0
    %4496 = vmatpush1.bf16.msra.mxu0 0
    %4497 = vmatprep.mubr.bf16.mxu0 0
    %4498 = vmatmul.mubr.bf16.gmra.mrb[0].mxu0 %v3022
    %v4499 = vpop.f32.mrb[0].mxu0
    %v4500 = vadd.f32 %v4403, %v4499
    %v4501 = vpop.f32.mrb[0].mxu0
    %v4502 = vpop.f32.mrb[0].mxu0
    %v4503 = vadd.f32 %v4406, %v4502
    %v4504 = vpop.f32.mrb[0].mxu0
    %4505 = vmatprep.mubr.bf16.mxu0 0
    %4506 = vmatmul.mubr.bf16.gmra.mrb[0].mxu0 %v3033
    %v4507 = vpop.f32.mrb[0].mxu0
    %v4508 = vadd.f32 %v4411, %v4507
    %v4509 = vpop.f32.mrb[0].mxu0
    %v4510 = vpop.f32.mrb[0].mxu0
    %v4511 = vadd.f32 %v4414, %v4510
    %v4512 = vpop.f32.mrb[0].mxu0
    %4513 = vmatprep.mubr.bf16.mxu0 0
    %4514 = vmatmul.mubr.bf16.gmra.mrb[0].mxu0 %v3044
    %v4515 = vpop.f32.mrb[0].mxu0
    %v4516 = vadd.f32 %v4419, %v4515
    %v4517 = vpop.f32.mrb[0].mxu0
    %v4518 = vpop.f32.mrb[0].mxu0
    %v4519 = vadd.f32 %v4422, %v4518
    %v4520 = vpop.f32.mrb[0].mxu0
    %4521 = vmatprep.mubr.bf16.mxu0 0
    %4522 = vmatmul.mubr.bf16.gmra.mrb[0].mxu0 %v3055
    %v4523 = vpop.f32.mrb[0].mxu0
    %v4524 = vadd.f32 %v4427, %v4523
    %v4525 = vpop.f32.mrb[0].mxu0
    %v4526 = vpop.f32.mrb[0].mxu0
    %v4527 = vadd.f32 %v4430, %v4526
    %v4528 = vpop.f32.mrb[0].mxu0
    %4529 = vmatprep.mubr.bf16.mxu0 0
    %4530 = vmatmul.mubr.bf16.gmra.mrb[0].mxu0 %v3066
    %v4531 = vpop.f32.mrb[0].mxu0
    %v4532 = vadd.f32 %v4435, %v4531
    %v4533 = vpop.f32.mrb[0].mxu0
    %v4534 = vpop.f32.mrb[0].mxu0
    %v4535 = vadd.f32 %v4438, %v4534
    %v4536 = vpop.f32.mrb[0].mxu0
    %4537 = vmatprep.mubr.bf16.mxu0 0
    %4538 = vmatmul.mubr.bf16.gmra.mrb[0].mxu0 %v3077
    %v4539 = vpop.f32.mrb[0].mxu0
    %v4540 = vadd.f32 %v4443, %v4539
    %v4541 = vpop.f32.mrb[0].mxu0
    %v4542 = vpop.f32.mrb[0].mxu0
    %v4543 = vadd.f32 %v4446, %v4542
    %v4544 = vpop.f32.mrb[0].mxu0
    %4545 = vmatprep.mubr.bf16.mxu0 0
    %4546 = vmatmul.mubr.bf16.gmra.mrb[0].mxu0 %v3088
    %v4547 = vpop.f32.mrb[0].mxu0
    %v4548 = vadd.f32 %v4451, %v4547
    %v4549 = vpop.f32.mrb[0].mxu0
    %v4550 = vpop.f32.mrb[0].mxu0
    %v4551 = vadd.f32 %v4454, %v4550
    %v4552 = vpop.f32.mrb[0].mxu0
    %4553 = vmatprep.mubr.bf16.mxu0 0
    %4554 = vmatmul.mubr.bf16.gmra.mrb[0].mxu0 %v3099
    %v4555 = vpop.f32.mrb[0].mxu0
    %v4556 = vadd.f32 %v4459, %v4555
    %v4557 = vpop.f32.mrb[0].mxu0
    %v4558 = vpop.f32.mrb[0].mxu0
    %v4559 = vadd.f32 %v4462, %v4558
    %v4560 = vpop.f32.mrb[0].mxu0
    %4561 = vdwg.mxu0
    %v4738 = vunpack.c.l.b16 %v3100
    %v4739 = vunpack.c.l.b16 %v3101
    %v4740 = vunpack.c.l.b16 %v3102
    %v4741 = vunpack.c.l.b16 %v3103
    %v4742 = vunpack.c.l.b16 %v3104
    %v4743 = vunpack.c.l.b16 %v3105
    %v4744 = vunpack.c.l.b16 %v3106
    %v4745 = vunpack.c.l.b16 %v3107
    %v4746 = vunpack.c.l.b16 %v3108
    %v4747 = vunpack.c.l.b16 %v3109
    %v4748 = vunpack.c.l.b16 %v3110
    %v4749 = vunpack.c.l.b16 %v3111
    %v4750 = vunpack.c.l.b16 %v3112
    %v4751 = vunpack.c.l.b16 %v3113
    %v4752 = vunpack.c.l.b16 %v3114
    %v4753 = vunpack.c.l.b16 %v3115
    %v4754 = vunpack.c.l.b16 %v3116
    %v4755 = vunpack.c.l.b16 %v3117
    %v4756 = vunpack.c.l.b16 %v3118
    %v4757 = vunpack.c.l.b16 %v3119
    %v4758 = vunpack.c.l.b16 %v3120
    %v4759 = vunpack.c.l.b16 %v3121
    %v4760 = vunpack.c.l.b16 %v3122
    %v4761 = vunpack.c.l.b16 %v3123
    %v4762 = vunpack.c.l.b16 %v3124
    %v4763 = vunpack.c.l.b16 %v3125
    %v4764 = vunpack.c.l.b16 %v3126
    %v4765 = vunpack.c.l.b16 %v3127
    %v4766 = vunpack.c.l.b16 %v3128
    %v4767 = vunpack.c.l.b16 %v3129
    %v4768 = vunpack.c.l.b16 %v3130
    %v4769 = vunpack.c.l.b16 %v3131
    %v4770 = vunpack.c.l.b16 %v3132
    %v4771 = vunpack.c.l.b16 %v3133
    %v4772 = vunpack.c.l.b16 %v3134
    %v4773 = vunpack.c.l.b16 %v3135
    %v4774 = vunpack.c.l.b16 %v3136
    %v4775 = vunpack.c.l.b16 %v3137
    %v4776 = vunpack.c.l.b16 %v3138
    %v4777 = vunpack.c.l.b16 %v3139
    %v4778 = vunpack.c.l.b16 %v3140
    %v4779 = vunpack.c.l.b16 %v3141
    %v4780 = vunpack.c.l.b16 %v3142
    %v4781 = vunpack.c.l.b16 %v3143
    %v4782 = vunpack.c.l.b16 %v3144
    %v4783 = vunpack.c.l.b16 %v3145
    %v4784 = vunpack.c.l.b16 %v3146
    %v4785 = vunpack.c.l.b16 %v3147
    %v4786 = vunpack.c.l.b16 %v3148
    %v4787 = vunpack.c.l.b16 %v3149
    %v4788 = vunpack.c.l.b16 %v3150
    %v4789 = vunpack.c.l.b16 %v3151
    %v4790 = vunpack.c.l.b16 %v3152
    %v4791 = vunpack.c.l.b16 %v3153
    %v4792 = vunpack.c.l.b16 %v3154
    %v4793 = vunpack.c.l.b16 %v3155
    %v4794 = vunpack.c.l.b16 %v3156
    %v4795 = vunpack.c.l.b16 %v3157
    %v4796 = vunpack.c.l.b16 %v3158
    %v4797 = vunpack.c.l.b16 %v3159
    %v4798 = vunpack.c.l.b16 %v3160
    %v4799 = vunpack.c.l.b16 %v3161
    %v4800 = vunpack.c.l.b16 %v3162
    %v4801 = vunpack.c.l.b16 %v3163
    %v4802 = vunpack.c.l.b16 %v3164
    %v4803 = vunpack.c.l.b16 %v3165
    %v4804 = vunpack.c.l.b16 %v3166
    %v4805 = vunpack.c.l.b16 %v3167
    %v4806 = vunpack.c.l.b16 %v3168
    %v4807 = vunpack.c.l.b16 %v3169
    %v4808 = vunpack.c.l.b16 %v3170
    %v4809 = vunpack.c.l.b16 %v3171
    %v4810 = vunpack.c.l.b16 %v3172
    %v4811 = vunpack.c.l.b16 %v3173
    %v4812 = vunpack.c.l.b16 %v3174
    %v4813 = vunpack.c.l.b16 %v3175
    %v4814 = vunpack.c.l.b16 %v3176
    %v4815 = vunpack.c.l.b16 %v3177
    %v4816 = vunpack.c.l.b16 %v3178
    %v4817 = vunpack.c.l.b16 %v3179
    %v4818 = vunpack.c.l.b16 %v3180
    %v4819 = vunpack.c.l.b16 %v3181
    %v4820 = vunpack.c.l.b16 %v3182
    %v4821 = vunpack.c.l.b16 %v3183
    %v4822 = vunpack.c.l.b16 %v3184
    %v4823 = vunpack.c.l.b16 %v3185
    %v4824 = vunpack.c.l.b16 %v3186
    %v4825 = vunpack.c.l.b16 %v3187
    %v4826 = vunpack.c.l.b16 %v3188
    %v4827 = vunpack.c.l.b16 %v3189
    %v4828 = vunpack.c.l.b16 %v3190
    %v4829 = vunpack.c.l.b16 %v3191
    %v4830 = vunpack.c.l.b16 %v3192
    %v4831 = vunpack.c.l.b16 %v3193
    %v4832 = vunpack.c.l.b16 %v3194
    %v4833 = vunpack.c.l.b16 %v3195
    %v4834 = vunpack.c.l.b16 %v3196
    %v4835 = vunpack.c.l.b16 %v3197
    %v4836 = vunpack.c.l.b16 %v3198
    %v4837 = vunpack.c.l.b16 %v3199
    %v4838 = vunpack.c.l.b16 %v3200
    %v4839 = vunpack.c.l.b16 %v3201
    %v4840 = vunpack.c.l.b16 %v3202
    %v4841 = vunpack.c.l.b16 %v3203
    %v4842 = vunpack.c.l.b16 %v3204
    %v4843 = vunpack.c.l.b16 %v3205
    %v4844 = vunpack.c.l.b16 %v3206
    %v4845 = vunpack.c.l.b16 %v3207
    %v4846 = vunpack.c.l.b16 %v3208
    %v4847 = vunpack.c.l.b16 %v3209
    %v4848 = vunpack.c.l.b16 %v3210
    %v4849 = vunpack.c.l.b16 %v3211
    %v4850 = vunpack.c.l.b16 %v3212
    %v4851 = vunpack.c.l.b16 %v3213
    %v4852 = vunpack.c.l.b16 %v3214
    %v4853 = vunpack.c.l.b16 %v3215
    %v4854 = vunpack.c.l.b16 %v3216
    %v4855 = vunpack.c.l.b16 %v3217
    %v4856 = vunpack.c.l.b16 %v3218
    %v4857 = vunpack.c.l.b16 %v3219
    %v4858 = vunpack.c.l.b16 %v3220
    %v4859 = vunpack.c.l.b16 %v3221
    %v4860 = vunpack.c.l.b16 %v3222
    %v4861 = vunpack.c.l.b16 %v3223
    %v4862 = vunpack.c.l.b16 %v3224
    %v4863 = vunpack.c.l.b16 %v3225
    %v4864 = vunpack.c.l.b16 %v3226
    %v4865 = vunpack.c.l.b16 %v3227
    %v4866 = vunpack.c.l.b16 %v3228
    %v4867 = vunpack.c.l.b16 %v3229
    %v4868 = vunpack.c.l.b16 %v3230
    %v4869 = vunpack.c.l.b16 %v3231
    %v4870 = vunpack.c.l.b16 %v3232
    %v4871 = vunpack.c.l.b16 %v3233
    %v4872 = vunpack.c.l.b16 %v3234
    %v4873 = vunpack.c.l.b16 %v3235
    %v4874 = vunpack.c.l.b16 %v3236
    %v4875 = vunpack.c.l.b16 %v3237
    %v4876 = vunpack.c.l.b16 %v3238
    %v4877 = vunpack.c.l.b16 %v3239
    %v4878 = vunpack.c.l.b16 %v3240
    %v4879 = vunpack.c.l.b16 %v3241
    %v4880 = vunpack.c.l.b16 %v3242
    %v4881 = vunpack.c.l.b16 %v3243
    %v4882 = vunpack.c.l.b16 %v3244
    %v4883 = vunpack.c.l.b16 %v3245
    %v4884 = vunpack.c.l.b16 %v3246
    %v4885 = vunpack.c.l.b16 %v3247
    %v4886 = vunpack.c.l.b16 %v3248
    %v4887 = vunpack.c.l.b16 %v3249
    %v4888 = vunpack.c.l.b16 %v3250
    %v4889 = vunpack.c.l.b16 %v3251
    %v4890 = vunpack.c.l.b16 %v3252
    %v4891 = vunpack.c.l.b16 %v3253
    %v4892 = vunpack.c.l.b16 %v3254
    %v4893 = vunpack.c.l.b16 %v3255
    %v4894 = vunpack.c.l.b16 %v3256
    %v4895 = vunpack.c.l.b16 %v3257
    %v4896 = vunpack.c.l.b16 %v3258
    %v4897 = vunpack.c.l.b16 %v3259
    %v4898 = vunpack.c.l.b16 %v3260
    %v4899 = vunpack.c.l.b16 %v3261
    %v4900 = vunpack.c.l.b16 %v3262
    %v4901 = vunpack.c.l.b16 %v3263
    %v4902 = vunpack.c.l.b16 %v3264
    %v4903 = vunpack.c.l.b16 %v3265
    %v4904 = vunpack.c.l.b16 %v3266
    %v4905 = vunpack.c.l.b16 %v3267
    %v4906 = vunpack.c.l.b16 %v3268
    %v4907 = vunpack.c.l.b16 %v3269
    %v4908 = vunpack.c.l.b16 %v3270
    %v4909 = vunpack.c.l.b16 %v3271
    %v4910 = vunpack.c.l.b16 %v3272
    %v4911 = vunpack.c.l.b16 %v3273
    %v4912 = vunpack.c.l.b16 %v3274
    %v4913 = vunpack.c.l.b16 %v3275
    %v4914 = vpack.c.b16 %v4739, %v4738
    %v4915 = vpack.c.b16 %v4741, %v4740
    %v4916 = vpack.c.b16 %v4743, %v4742
    %v4917 = vpack.c.b16 %v4745, %v4744
    %v4918 = vpack.c.b16 %v4747, %v4746
    %v4919 = vpack.c.b16 %v4749, %v4748
    %v4920 = vpack.c.b16 %v4751, %v4750
    %v4921 = vpack.c.b16 %v4753, %v4752
    %v4922 = vpack.c.b16 %v4755, %v4754
    %v4923 = vpack.c.b16 %v4757, %v4756
    %v4924 = vpack.c.b16 %v4759, %v4758
    %v4925 = vpack.c.b16 %v4761, %v4760
    %v4926 = vpack.c.b16 %v4763, %v4762
    %v4927 = vpack.c.b16 %v4765, %v4764
    %v4928 = vpack.c.b16 %v4767, %v4766
    %v4929 = vpack.c.b16 %v4769, %v4768
    %v4930 = vpack.c.b16 %v4771, %v4770
    %v4931 = vpack.c.b16 %v4773, %v4772
    %v4932 = vpack.c.b16 %v4775, %v4774
    %v4933 = vpack.c.b16 %v4777, %v4776
    %v4934 = vpack.c.b16 %v4779, %v4778
    %v4935 = vpack.c.b16 %v4781, %v4780
    %v4936 = vpack.c.b16 %v4783, %v4782
    %v4937 = vpack.c.b16 %v4785, %v4784
    %v4938 = vpack.c.b16 %v4787, %v4786
    %v4939 = vpack.c.b16 %v4789, %v4788
    %v4940 = vpack.c.b16 %v4791, %v4790
    %v4941 = vpack.c.b16 %v4793, %v4792
    %v4942 = vpack.c.b16 %v4795, %v4794
    %v4943 = vpack.c.b16 %v4797, %v4796
    %v4944 = vpack.c.b16 %v4799, %v4798
    %v4945 = vpack.c.b16 %v4801, %v4800
    %v4946 = vpack.c.b16 %v4803, %v4802
    %v4947 = vpack.c.b16 %v4805, %v4804
    %v4948 = vpack.c.b16 %v4807, %v4806
    %v4949 = vpack.c.b16 %v4809, %v4808
    %v4950 = vpack.c.b16 %v4811, %v4810
    %v4951 = vpack.c.b16 %v4813, %v4812
    %v4952 = vpack.c.b16 %v4815, %v4814
    %v4953 = vpack.c.b16 %v4817, %v4816
    %v4954 = vpack.c.b16 %v4819, %v4818
    %v4955 = vpack.c.b16 %v4821, %v4820
    %v4956 = vpack.c.b16 %v4823, %v4822
    %v4957 = vpack.c.b16 %v4825, %v4824
    %v4958 = vpack.c.b16 %v4827, %v4826
    %v4959 = vpack.c.b16 %v4829, %v4828
    %v4960 = vpack.c.b16 %v4831, %v4830
    %v4961 = vpack.c.b16 %v4833, %v4832
    %v4962 = vpack.c.b16 %v4835, %v4834
    %v4963 = vpack.c.b16 %v4837, %v4836
    %v4964 = vpack.c.b16 %v4839, %v4838
    %v4965 = vpack.c.b16 %v4841, %v4840
    %v4966 = vpack.c.b16 %v4843, %v4842
    %v4967 = vpack.c.b16 %v4845, %v4844
    %v4968 = vpack.c.b16 %v4847, %v4846
    %v4969 = vpack.c.b16 %v4849, %v4848
    %v4970 = vpack.c.b16 %v4851, %v4850
    %v4971 = vpack.c.b16 %v4853, %v4852
    %v4972 = vpack.c.b16 %v4855, %v4854
    %v4973 = vpack.c.b16 %v4857, %v4856
    %v4974 = vpack.c.b16 %v4859, %v4858
    %v4975 = vpack.c.b16 %v4861, %v4860
    %v4976 = vpack.c.b16 %v4863, %v4862
    %v4977 = vpack.c.b16 %v4865, %v4864
    %v4978 = vpack.c.b16 %v4867, %v4866
    %v4979 = vpack.c.b16 %v4869, %v4868
    %v4980 = vpack.c.b16 %v4871, %v4870
    %v4981 = vpack.c.b16 %v4873, %v4872
    %v4982 = vpack.c.b16 %v4875, %v4874
    %v4983 = vpack.c.b16 %v4877, %v4876
    %v4984 = vpack.c.b16 %v4879, %v4878
    %v4985 = vpack.c.b16 %v4881, %v4880
    %v4986 = vpack.c.b16 %v4883, %v4882
    %v4987 = vpack.c.b16 %v4885, %v4884
    %v4988 = vpack.c.b16 %v4887, %v4886
    %v4989 = vpack.c.b16 %v4889, %v4888
    %v4990 = vpack.c.b16 %v4891, %v4890
    %v4991 = vpack.c.b16 %v4893, %v4892
    %v4992 = vpack.c.b16 %v4895, %v4894
    %v4993 = vpack.c.b16 %v4897, %v4896
    %v4994 = vpack.c.b16 %v4899, %v4898
    %v4995 = vpack.c.b16 %v4901, %v4900
    %v4996 = vpack.c.b16 %v4903, %v4902
    %v4997 = vpack.c.b16 %v4905, %v4904
    %v4998 = vpack.c.b16 %v4907, %v4906
    %v4999 = vpack.c.b16 %v4909, %v4908
    %v5000 = vpack.c.b16 %v4911, %v4910
    %v5001 = vpack.c.b16 %v4913, %v4912
    %5090 = vmatprep.subr.bf16.mxu0 0
    %5091 = vmatpush1.bf16.msra.mxu0 %v4914
    %5092 = vmatprep.subr.bf16.mxu0 0
    %5093 = vmatpush1.bf16.msra.mxu0 %v4915
    %5094 = vmatprep.subr.bf16.mxu0 0
    %5095 = vmatpush1.bf16.msra.mxu0 %v4916
    %5096 = vmatprep.subr.bf16.mxu0 0
    %5097 = vmatpush1.bf16.msra.mxu0 %v4917
    %5098 = vmatprep.subr.bf16.mxu0 0
    %5099 = vmatpush1.bf16.msra.mxu0 %v4918
    %5100 = vmatprep.subr.bf16.mxu0 0
    %5101 = vmatpush1.bf16.msra.mxu0 %v4919
    %5102 = vmatprep.subr.bf16.mxu0 0
    %5103 = vmatpush1.bf16.msra.mxu0 %v4920
    %5104 = vmatprep.subr.bf16.mxu0 0
    %5105 = vmatpush1.bf16.msra.mxu0 %v4921
    %5106 = vmatprep.subr.bf16.mxu0 0
    %5107 = vmatpush1.bf16.msra.mxu0 %v4922
    %5108 = vmatprep.subr.bf16.mxu0 0
    %5109 = vmatpush1.bf16.msra.mxu0 %v4923
    %5110 = vmatprep.subr.bf16.mxu0 0
    %5111 = vmatpush1.bf16.msra.mxu0 %v4924
    %5112 = vmatprep.subr.bf16.mxu0 0
    %5113 = vmatpush1.bf16.msra.mxu0 %v4925
    %5114 = vmatprep.subr.bf16.mxu0 0
    %5115 = vmatpush1.bf16.msra.mxu0 %v4926
    %5116 = vmatprep.subr.bf16.mxu0 0
    %5117 = vmatpush1.bf16.msra.mxu0 %v4927
    %5118 = vmatprep.subr.bf16.mxu0 0
    %5119 = vmatpush1.bf16.msra.mxu0 %v4928
    %5120 = vmatprep.subr.bf16.mxu0 0
    %5121 = vmatpush1.bf16.msra.mxu0 %v4929
    %5122 = vmatprep.mubr.bf16.mxu0 %v2749
    %5123 = vmatmul.mubr.bf16.gmra.mrb[0].mxu0 %v2748
    %v5124 = vpop.f32.mrb[0].mxu0
    %v5125 = vadd.f32 %v4500, %v5124
    %v5126 = vpop.f32.mrb[0].mxu0
    %v5127 = vpop.f32.mrb[0].mxu0
    %v5128 = vadd.f32 %v4503, %v5127
    %v5129 = vpop.f32.mrb[0].mxu0
    %5130 = vmatprep.mubr.bf16.mxu0 %v2760
    %5131 = vmatmul.mubr.bf16.gmra.mrb[0].mxu0 %v2759
    %v5132 = vpop.f32.mrb[0].mxu0
    %v5133 = vadd.f32 %v4508, %v5132
    %v5134 = vpop.f32.mrb[0].mxu0
    %v5135 = vpop.f32.mrb[0].mxu0
    %v5136 = vadd.f32 %v4511, %v5135
    %v5137 = vpop.f32.mrb[0].mxu0
    %5138 = vmatprep.mubr.bf16.mxu0 %v2771
    %5139 = vmatmul.mubr.bf16.gmra.mrb[0].mxu0 %v2770
    %v5140 = vpop.f32.mrb[0].mxu0
    %v5141 = vadd.f32 %v4516, %v5140
    %v5142 = vpop.f32.mrb[0].mxu0
    %v5143 = vpop.f32.mrb[0].mxu0
    %v5144 = vadd.f32 %v4519, %v5143
    %v5145 = vpop.f32.mrb[0].mxu0
    %5146 = vmatprep.mubr.bf16.mxu0 %v2782
    %5147 = vmatmul.mubr.bf16.gmra.mrb[0].mxu0 %v2781
    %v5148 = vpop.f32.mrb[0].mxu0
    %v5149 = vadd.f32 %v4524, %v5148
    %v5150 = vpop.f32.mrb[0].mxu0
    %v5151 = vpop.f32.mrb[0].mxu0
    %v5152 = vadd.f32 %v4527, %v5151
    %v5153 = vpop.f32.mrb[0].mxu0
    %5154 = vmatprep.mubr.bf16.mxu0 %v2793
    %5155 = vmatmul.mubr.bf16.gmra.mrb[0].mxu0 %v2792
    %v5156 = vpop.f32.mrb[0].mxu0
    %v5157 = vadd.f32 %v4532, %v5156
    %v5158 = vpop.f32.mrb[0].mxu0
    %v5159 = vpop.f32.mrb[0].mxu0
    %v5160 = vadd.f32 %v4535, %v5159
    %v5161 = vpop.f32.mrb[0].mxu0
    %5162 = vmatprep.mubr.bf16.mxu0 %v2804
    %5163 = vmatmul.mubr.bf16.gmra.mrb[0].mxu0 %v2803
    %v5164 = vpop.f32.mrb[0].mxu0
    %v5165 = vadd.f32 %v4540, %v5164
    %v5166 = vpop.f32.mrb[0].mxu0
    %v5167 = vpop.f32.mrb[0].mxu0
    %v5168 = vadd.f32 %v4543, %v5167
    %v5169 = vpop.f32.mrb[0].mxu0
    %5170 = vmatprep.mubr.bf16.mxu0 %v2815
    %5171 = vmatmul.mubr.bf16.gmra.mrb[0].mxu0 %v2814
    %v5172 = vpop.f32.mrb[0].mxu0
    %v5173 = vadd.f32 %v4548, %v5172
    %v5174 = vpop.f32.mrb[0].mxu0
    %v5175 = vpop.f32.mrb[0].mxu0
    %v5176 = vadd.f32 %v4551, %v5175
    %v5177 = vpop.f32.mrb[0].mxu0
    %5178 = vmatprep.mubr.bf16.mxu0 %v2826
    %5179 = vmatmul.mubr.bf16.gmra.mrb[0].mxu0 %v2825
    %v5180 = vpop.f32.mrb[0].mxu0
    %v5181 = vadd.f32 %v4556, %v5180
    %v5182 = vpop.f32.mrb[0].mxu0
    %v5183 = vpop.f32.mrb[0].mxu0
    %v5184 = vadd.f32 %v4559, %v5183
    %v5185 = vpop.f32.mrb[0].mxu0
    %5186 = vdwg.mxu0
    %5187 = vmatprep.subr.bf16.mxu0 0
    %5188 = vmatpush1.bf16.msra.mxu0 %v4930
    %5189 = vmatprep.subr.bf16.mxu0 0
    %5190 = vmatpush1.bf16.msra.mxu0 %v4931
    %5191 = vmatprep.subr.bf16.mxu0 0
    %5192 = vmatpush1.bf16.msra.mxu0 %v4932
    %5193 = vmatprep.subr.bf16.mxu0 0
    %5194 = vmatpush1.bf16.msra.mxu0 %v4933
    %5195 = vmatprep.subr.bf16.mxu0 0
    %5196 = vmatpush1.bf16.msra.mxu0 %v4934
    %5197 = vmatprep.subr.bf16.mxu0 0
    %5198 = vmatpush1.bf16.msra.mxu0 %v4935
    %5199 = vmatprep.subr.bf16.mxu0 0
    %5200 = vmatpush1.bf16.msra.mxu0 %v4936
    %5201 = vmatprep.subr.bf16.mxu0 0
    %5202 = vmatpush1.bf16.msra.mxu0 %v4937
    %5203 = vmatprep.subr.bf16.mxu0 0
    %5204 = vmatpush1.bf16.msra.mxu0 %v4938
    %5205 = vmatprep.subr.bf16.mxu0 0
    %5206 = vmatpush1.bf16.msra.mxu0 %v4939
    %5207 = vmatprep.subr.bf16.mxu0 0
    %5208 = vmatpush1.bf16.msra.mxu0 %v4940
    %5209 = vmatprep.subr.bf16.mxu0 0
    %5210 = vmatpush1.bf16.msra.mxu0 %v4941
    %5211 = vmatprep.subr.bf16.mxu0 0
    %5212 = vmatpush1.bf16.msra.mxu0 %v4942
    %5213 = vmatprep.subr.bf16.mxu0 0
    %5214 = vmatpush1.bf16.msra.mxu0 %v4943
    %5215 = vmatprep.subr.bf16.mxu0 0
    %5216 = vmatpush1.bf16.msra.mxu0 %v4944
    %5217 = vmatprep.subr.bf16.mxu0 0
    %5218 = vmatpush1.bf16.msra.mxu0 %v4945
    %5219 = vmatprep.mubr.bf16.mxu0 %v2751
    %5220 = vmatmul.mubr.bf16.gmra.mrb[0].mxu0 %v2750
    %v5221 = vpop.f32.mrb[0].mxu0
    %v5222 = vadd.f32 %v5125, %v5221
    %v5223 = vpop.f32.mrb[0].mxu0
    %v5224 = vpop.f32.mrb[0].mxu0
    %v5225 = vadd.f32 %v5128, %v5224
    %v5226 = vpop.f32.mrb[0].mxu0
    %5227 = vmatprep.mubr.bf16.mxu0 %v2762
    %5228 = vmatmul.mubr.bf16.gmra.mrb[0].mxu0 %v2761
    %v5229 = vpop.f32.mrb[0].mxu0
    %v5230 = vadd.f32 %v5133, %v5229
    %v5231 = vpop.f32.mrb[0].mxu0
    %v5232 = vpop.f32.mrb[0].mxu0
    %v5233 = vadd.f32 %v5136, %v5232
    %v5234 = vpop.f32.mrb[0].mxu0
    %5235 = vmatprep.mubr.bf16.mxu0 %v2773
    %5236 = vmatmul.mubr.bf16.gmra.mrb[0].mxu0 %v2772
    %v5237 = vpop.f32.mrb[0].mxu0
    %v5238 = vadd.f32 %v5141, %v5237
    %v5239 = vpop.f32.mrb[0].mxu0
    %v5240 = vpop.f32.mrb[0].mxu0
    %v5241 = vadd.f32 %v5144, %v5240
    %v5242 = vpop.f32.mrb[0].mxu0
    %5243 = vmatprep.mubr.bf16.mxu0 %v2784
    %5244 = vmatmul.mubr.bf16.gmra.mrb[0].mxu0 %v2783
    %v5245 = vpop.f32.mrb[0].mxu0
    %v5246 = vadd.f32 %v5149, %v5245
    %v5247 = vpop.f32.mrb[0].mxu0
    %v5248 = vpop.f32.mrb[0].mxu0
    %v5249 = vadd.f32 %v5152, %v5248
    %v5250 = vpop.f32.mrb[0].mxu0
    %5251 = vmatprep.mubr.bf16.mxu0 %v2795
    %5252 = vmatmul.mubr.bf16.gmra.mrb[0].mxu0 %v2794
    %v5253 = vpop.f32.mrb[0].mxu0
    %v5254 = vadd.f32 %v5157, %v5253
    %v5255 = vpop.f32.mrb[0].mxu0
    %v5256 = vpop.f32.mrb[0].mxu0
    %v5257 = vadd.f32 %v5160, %v5256
    %v5258 = vpop.f32.mrb[0].mxu0
    %5259 = vmatprep.mubr.bf16.mxu0 %v2806
    %5260 = vmatmul.mubr.bf16.gmra.mrb[0].mxu0 %v2805
    %v5261 = vpop.f32.mrb[0].mxu0
    %v5262 = vadd.f32 %v5165, %v5261
    %v5263 = vpop.f32.mrb[0].mxu0
    %v5264 = vpop.f32.mrb[0].mxu0
    %v5265 = vadd.f32 %v5168, %v5264
    %v5266 = vpop.f32.mrb[0].mxu0
    %5267 = vmatprep.mubr.bf16.mxu0 %v2817
    %5268 = vmatmul.mubr.bf16.gmra.mrb[0].mxu0 %v2816
    %v5269 = vpop.f32.mrb[0].mxu0
    %v5270 = vadd.f32 %v5173, %v5269
    %v5271 = vpop.f32.mrb[0].mxu0
    %v5272 = vpop.f32.mrb[0].mxu0
    %v5273 = vadd.f32 %v5176, %v5272
    %v5274 = vpop.f32.mrb[0].mxu0
    %5275 = vmatprep.mubr.bf16.mxu0 %v2828
    %5276 = vmatmul.mubr.bf16.gmra.mrb[0].mxu0 %v2827
    %v5277 = vpop.f32.mrb[0].mxu0
    %v5278 = vadd.f32 %v5181, %v5277
    %v5279 = vpop.f32.mrb[0].mxu0
    %v5280 = vpop.f32.mrb[0].mxu0
    %v5281 = vadd.f32 %v5184, %v5280
    %v5282 = vpop.f32.mrb[0].mxu0
    %5283 = vdwg.mxu0
    %5284 = vmatprep.subr.bf16.mxu0 0
    %5285 = vmatpush1.bf16.msra.mxu0 %v4946
    %5286 = vmatprep.subr.bf16.mxu0 0
    %5287 = vmatpush1.bf16.msra.mxu0 %v4947
    %5288 = vmatprep.subr.bf16.mxu0 0
    %5289 = vmatpush1.bf16.msra.mxu0 %v4948
    %5290 = vmatprep.subr.bf16.mxu0 0
    %5291 = vmatpush1.bf16.msra.mxu0 %v4949
    %5292 = vmatprep.subr.bf16.mxu0 0
    %5293 = vmatpush1.bf16.msra.mxu0 %v4950
    %5294 = vmatprep.subr.bf16.mxu0 0
    %5295 = vmatpush1.bf16.msra.mxu0 %v4951
    %5296 = vmatprep.subr.bf16.mxu0 0
    %5297 = vmatpush1.bf16.msra.mxu0 %v4952
    %5298 = vmatprep.subr.bf16.mxu0 0
    %5299 = vmatpush1.bf16.msra.mxu0 %v4953
    %5300 = vmatprep.subr.bf16.mxu0 0
    %5301 = vmatpush1.bf16.msra.mxu0 %v4954
    %5302 = vmatprep.subr.bf16.mxu0 0
    %5303 = vmatpush1.bf16.msra.mxu0 %v4955
    %5304 = vmatprep.subr.bf16.mxu0 0
    %5305 = vmatpush1.bf16.msra.mxu0 %v4956
    %5306 = vmatprep.subr.bf16.mxu0 0
    %5307 = vmatpush1.bf16.msra.mxu0 %v4957
    %5308 = vmatprep.subr.bf16.mxu0 0
    %5309 = vmatpush1.bf16.msra.mxu0 %v4958
    %5310 = vmatprep.subr.bf16.mxu0 0
    %5311 = vmatpush1.bf16.msra.mxu0 %v4959
    %5312 = vmatprep.subr.bf16.mxu0 0
    %5313 = vmatpush1.bf16.msra.mxu0 %v4960
    %5314 = vmatprep.subr.bf16.mxu0 0
    %5315 = vmatpush1.bf16.msra.mxu0 %v4961
    %5316 = vmatprep.mubr.bf16.mxu0 %v2753
    %5317 = vmatmul.mubr.bf16.gmra.mrb[0].mxu0 %v2752
    %v5318 = vpop.f32.mrb[0].mxu0
    %v5319 = vadd.f32 %v5222, %v5318
    %v5320 = vpop.f32.mrb[0].mxu0
    %v5321 = vpop.f32.mrb[0].mxu0
    %v5322 = vadd.f32 %v5225, %v5321
    %v5323 = vpop.f32.mrb[0].mxu0
    %5324 = vmatprep.mubr.bf16.mxu0 %v2764
    %5325 = vmatmul.mubr.bf16.gmra.mrb[0].mxu0 %v2763
    %v5326 = vpop.f32.mrb[0].mxu0
    %v5327 = vadd.f32 %v5230, %v5326
    %v5328 = vpop.f32.mrb[0].mxu0
    %v5329 = vpop.f32.mrb[0].mxu0
    %v5330 = vadd.f32 %v5233, %v5329
    %v5331 = vpop.f32.mrb[0].mxu0
    %5332 = vmatprep.mubr.bf16.mxu0 %v2775
    %5333 = vmatmul.mubr.bf16.gmra.mrb[0].mxu0 %v2774
    %v5334 = vpop.f32.mrb[0].mxu0
    %v5335 = vadd.f32 %v5238, %v5334
    %v5336 = vpop.f32.mrb[0].mxu0
    %v5337 = vpop.f32.mrb[0].mxu0
    %v5338 = vadd.f32 %v5241, %v5337
    %v5339 = vpop.f32.mrb[0].mxu0
    %5340 = vmatprep.mubr.bf16.mxu0 %v2786
    %5341 = vmatmul.mubr.bf16.gmra.mrb[0].mxu0 %v2785
    %v5342 = vpop.f32.mrb[0].mxu0
    %v5343 = vadd.f32 %v5246, %v5342
    %v5344 = vpop.f32.mrb[0].mxu0
    %v5345 = vpop.f32.mrb[0].mxu0
    %v5346 = vadd.f32 %v5249, %v5345
    %v5347 = vpop.f32.mrb[0].mxu0
    %5348 = vmatprep.mubr.bf16.mxu0 %v2797
    %5349 = vmatmul.mubr.bf16.gmra.mrb[0].mxu0 %v2796
    %v5350 = vpop.f32.mrb[0].mxu0
    %v5351 = vadd.f32 %v5254, %v5350
    %v5352 = vpop.f32.mrb[0].mxu0
    %v5353 = vpop.f32.mrb[0].mxu0
    %v5354 = vadd.f32 %v5257, %v5353
    %v5355 = vpop.f32.mrb[0].mxu0
    %5356 = vmatprep.mubr.bf16.mxu0 %v2808
    %5357 = vmatmul.mubr.bf16.gmra.mrb[0].mxu0 %v2807
    %v5358 = vpop.f32.mrb[0].mxu0
    %v5359 = vadd.f32 %v5262, %v5358
    %v5360 = vpop.f32.mrb[0].mxu0
    %v5361 = vpop.f32.mrb[0].mxu0
    %v5362 = vadd.f32 %v5265, %v5361
    %v5363 = vpop.f32.mrb[0].mxu0
    %5364 = vmatprep.mubr.bf16.mxu0 %v2819
    %5365 = vmatmul.mubr.bf16.gmra.mrb[0].mxu0 %v2818
    %v5366 = vpop.f32.mrb[0].mxu0
    %v5367 = vadd.f32 %v5270, %v5366
    %v5368 = vpop.f32.mrb[0].mxu0
    %v5369 = vpop.f32.mrb[0].mxu0
    %v5370 = vadd.f32 %v5273, %v5369
    %v5371 = vpop.f32.mrb[0].mxu0
    %5372 = vmatprep.mubr.bf16.mxu0 %v2830
    %5373 = vmatmul.mubr.bf16.gmra.mrb[0].mxu0 %v2829
    %v5374 = vpop.f32.mrb[0].mxu0
    %v5375 = vadd.f32 %v5278, %v5374
    %v5376 = vpop.f32.mrb[0].mxu0
    %v5377 = vpop.f32.mrb[0].mxu0
    %v5378 = vadd.f32 %v5281, %v5377
    %v5379 = vpop.f32.mrb[0].mxu0
    %5380 = vdwg.mxu0
    %5381 = vmatprep.subr.bf16.mxu0 0
    %5382 = vmatpush1.bf16.msra.mxu0 %v4962
    %5383 = vmatprep.subr.bf16.mxu0 0
    %5384 = vmatpush1.bf16.msra.mxu0 %v4963
    %5385 = vmatprep.subr.bf16.mxu0 0
    %5386 = vmatpush1.bf16.msra.mxu0 %v4964
    %5387 = vmatprep.subr.bf16.mxu0 0
    %5388 = vmatpush1.bf16.msra.mxu0 %v4965
    %5389 = vmatprep.subr.bf16.mxu0 0
    %5390 = vmatpush1.bf16.msra.mxu0 %v4966
    %5391 = vmatprep.subr.bf16.mxu0 0
    %5392 = vmatpush1.bf16.msra.mxu0 %v4967
    %5393 = vmatprep.subr.bf16.mxu0 0
    %5394 = vmatpush1.bf16.msra.mxu0 %v4968
    %5395 = vmatprep.subr.bf16.mxu0 0
    %5396 = vmatpush1.bf16.msra.mxu0 %v4969
    %5397 = vmatprep.subr.bf16.mxu0 0
    %5398 = vmatpush1.bf16.msra.mxu0 %v4970
    %5399 = vmatprep.subr.bf16.mxu0 0
    %5400 = vmatpush1.bf16.msra.mxu0 %v4971
    %5401 = vmatprep.subr.bf16.mxu0 0
    %5402 = vmatpush1.bf16.msra.mxu0 %v4972
    %5403 = vmatprep.subr.bf16.mxu0 0
    %5404 = vmatpush1.bf16.msra.mxu0 %v4973
    %5405 = vmatprep.subr.bf16.mxu0 0
    %5406 = vmatpush1.bf16.msra.mxu0 %v4974
    %5407 = vmatprep.subr.bf16.mxu0 0
    %5408 = vmatpush1.bf16.msra.mxu0 %v4975
    %5409 = vmatprep.subr.bf16.mxu0 0
    %5410 = vmatpush1.bf16.msra.mxu0 %v4976
    %5411 = vmatprep.subr.bf16.mxu0 0
    %5412 = vmatpush1.bf16.msra.mxu0 %v4977
    %5413 = vmatprep.mubr.bf16.mxu0 %v2755
    %5414 = vmatmul.mubr.bf16.gmra.mrb[0].mxu0 %v2754
    %v5415 = vpop.f32.mrb[0].mxu0
    %v5416 = vadd.f32 %v5319, %v5415
    %v5417 = vpop.f32.mrb[0].mxu0
    %v5418 = vpop.f32.mrb[0].mxu0
    %v5419 = vadd.f32 %v5322, %v5418
    %v5420 = vpop.f32.mrb[0].mxu0
    %5421 = vmatprep.mubr.bf16.mxu0 %v2766
    %5422 = vmatmul.mubr.bf16.gmra.mrb[0].mxu0 %v2765
    %v5423 = vpop.f32.mrb[0].mxu0
    %v5424 = vadd.f32 %v5327, %v5423
    %v5425 = vpop.f32.mrb[0].mxu0
    %v5426 = vpop.f32.mrb[0].mxu0
    %v5427 = vadd.f32 %v5330, %v5426
    %v5428 = vpop.f32.mrb[0].mxu0
    %5429 = vmatprep.mubr.bf16.mxu0 %v2777
    %5430 = vmatmul.mubr.bf16.gmra.mrb[0].mxu0 %v2776
    %v5431 = vpop.f32.mrb[0].mxu0
    %v5432 = vadd.f32 %v5335, %v5431
    %v5433 = vpop.f32.mrb[0].mxu0
    %v5434 = vpop.f32.mrb[0].mxu0
    %v5435 = vadd.f32 %v5338, %v5434
    %v5436 = vpop.f32.mrb[0].mxu0
    %5437 = vmatprep.mubr.bf16.mxu0 %v2788
    %5438 = vmatmul.mubr.bf16.gmra.mrb[0].mxu0 %v2787
    %v5439 = vpop.f32.mrb[0].mxu0
    %v5440 = vadd.f32 %v5343, %v5439
    %v5441 = vpop.f32.mrb[0].mxu0
    %v5442 = vpop.f32.mrb[0].mxu0
    %v5443 = vadd.f32 %v5346, %v5442
    %v5444 = vpop.f32.mrb[0].mxu0
    %5445 = vmatprep.mubr.bf16.mxu0 %v2799
    %5446 = vmatmul.mubr.bf16.gmra.mrb[0].mxu0 %v2798
    %v5447 = vpop.f32.mrb[0].mxu0
    %v5448 = vadd.f32 %v5351, %v5447
    %v5449 = vpop.f32.mrb[0].mxu0
    %v5450 = vpop.f32.mrb[0].mxu0
    %v5451 = vadd.f32 %v5354, %v5450
    %v5452 = vpop.f32.mrb[0].mxu0
    %5453 = vmatprep.mubr.bf16.mxu0 %v2810
    %5454 = vmatmul.mubr.bf16.gmra.mrb[0].mxu0 %v2809
    %v5455 = vpop.f32.mrb[0].mxu0
    %v5456 = vadd.f32 %v5359, %v5455
    %v5457 = vpop.f32.mrb[0].mxu0
    %v5458 = vpop.f32.mrb[0].mxu0
    %v5459 = vadd.f32 %v5362, %v5458
    %v5460 = vpop.f32.mrb[0].mxu0
    %5461 = vmatprep.mubr.bf16.mxu0 %v2821
    %5462 = vmatmul.mubr.bf16.gmra.mrb[0].mxu0 %v2820
    %v5463 = vpop.f32.mrb[0].mxu0
    %v5464 = vadd.f32 %v5367, %v5463
    %v5465 = vpop.f32.mrb[0].mxu0
    %v5466 = vpop.f32.mrb[0].mxu0
    %v5467 = vadd.f32 %v5370, %v5466
    %v5468 = vpop.f32.mrb[0].mxu0
    %5469 = vmatprep.mubr.bf16.mxu0 %v2832
    %5470 = vmatmul.mubr.bf16.gmra.mrb[0].mxu0 %v2831
    %v5471 = vpop.f32.mrb[0].mxu0
    %v5472 = vadd.f32 %v5375, %v5471
    %v5473 = vpop.f32.mrb[0].mxu0
    %v5474 = vpop.f32.mrb[0].mxu0
    %v5475 = vadd.f32 %v5378, %v5474
    %v5476 = vpop.f32.mrb[0].mxu0
    %5477 = vdwg.mxu0
    %5478 = vmatprep.subr.bf16.mxu0 0
    %5479 = vmatpush1.bf16.msra.mxu0 %v4978
    %5480 = vmatprep.subr.bf16.mxu0 0
    %5481 = vmatpush1.bf16.msra.mxu0 %v4979
    %5482 = vmatprep.subr.bf16.mxu0 0
    %5483 = vmatpush1.bf16.msra.mxu0 %v4980
    %5484 = vmatprep.subr.bf16.mxu0 0
    %5485 = vmatpush1.bf16.msra.mxu0 %v4981
    %5486 = vmatprep.subr.bf16.mxu0 0
    %5487 = vmatpush1.bf16.msra.mxu0 %v4982
    %5488 = vmatprep.subr.bf16.mxu0 0
    %5489 = vmatpush1.bf16.msra.mxu0 %v4983
    %5490 = vmatprep.subr.bf16.mxu0 0
    %5491 = vmatpush1.bf16.msra.mxu0 %v4984
    %5492 = vmatprep.subr.bf16.mxu0 0
    %5493 = vmatpush1.bf16.msra.mxu0 %v4985
    %5494 = vmatprep.subr.bf16.mxu0 0
    %5495 = vmatpush1.bf16.msra.mxu0 %v4986
    %5496 = vmatprep.subr.bf16.mxu0 0
    %5497 = vmatpush1.bf16.msra.mxu0 %v4987
    %5498 = vmatprep.subr.bf16.mxu0 0
    %5499 = vmatpush1.bf16.msra.mxu0 %v4988
    %5500 = vmatprep.subr.bf16.mxu0 0
    %5501 = vmatpush1.bf16.msra.mxu0 %v4989
    %5502 = vmatprep.subr.bf16.mxu0 0
    %5503 = vmatpush1.bf16.msra.mxu0 %v4990
    %5504 = vmatprep.subr.bf16.mxu0 0
    %5505 = vmatpush1.bf16.msra.mxu0 %v4991
    %5506 = vmatprep.subr.bf16.mxu0 0
    %5507 = vmatpush1.bf16.msra.mxu0 %v4992
    %5508 = vmatprep.subr.bf16.mxu0 0
    %5509 = vmatpush1.bf16.msra.mxu0 %v4993
    %5510 = vmatprep.mubr.bf16.mxu0 %v2757
    %5511 = vmatmul.mubr.bf16.gmra.mrb[0].mxu0 %v2756
    %v5512 = vpop.f32.mrb[0].mxu0
    %v5513 = vadd.f32 %v5416, %v5512
    %v5514 = vpop.f32.mrb[0].mxu0
    %v5515 = vpop.f32.mrb[0].mxu0
    %v5516 = vadd.f32 %v5419, %v5515
    %v5517 = vpop.f32.mrb[0].mxu0
    %5518 = vmatprep.mubr.bf16.mxu0 %v2768
    %5519 = vmatmul.mubr.bf16.gmra.mrb[0].mxu0 %v2767
    %v5520 = vpop.f32.mrb[0].mxu0
    %v5521 = vadd.f32 %v5424, %v5520
    %v5522 = vpop.f32.mrb[0].mxu0
    %v5523 = vpop.f32.mrb[0].mxu0
    %v5524 = vadd.f32 %v5427, %v5523
    %v5525 = vpop.f32.mrb[0].mxu0
    %5526 = vmatprep.mubr.bf16.mxu0 %v2779
    %5527 = vmatmul.mubr.bf16.gmra.mrb[0].mxu0 %v2778
    %v5528 = vpop.f32.mrb[0].mxu0
    %v5529 = vadd.f32 %v5432, %v5528
    %v5530 = vpop.f32.mrb[0].mxu0
    %v5531 = vpop.f32.mrb[0].mxu0
    %v5532 = vadd.f32 %v5435, %v5531
    %v5533 = vpop.f32.mrb[0].mxu0
    %5534 = vmatprep.mubr.bf16.mxu0 %v2790
    %5535 = vmatmul.mubr.bf16.gmra.mrb[0].mxu0 %v2789
    %v5536 = vpop.f32.mrb[0].mxu0
    %v5537 = vadd.f32 %v5440, %v5536
    %v5538 = vpop.f32.mrb[0].mxu0
    %v5539 = vpop.f32.mrb[0].mxu0
    %v5540 = vadd.f32 %v5443, %v5539
    %v5541 = vpop.f32.mrb[0].mxu0
    %5542 = vmatprep.mubr.bf16.mxu0 %v2801
    %5543 = vmatmul.mubr.bf16.gmra.mrb[0].mxu0 %v2800
    %v5544 = vpop.f32.mrb[0].mxu0
    %v5545 = vadd.f32 %v5448, %v5544
    %v5546 = vpop.f32.mrb[0].mxu0
    %v5547 = vpop.f32.mrb[0].mxu0
    %v5548 = vadd.f32 %v5451, %v5547
    %v5549 = vpop.f32.mrb[0].mxu0
    %5550 = vmatprep.mubr.bf16.mxu0 %v2812
    %5551 = vmatmul.mubr.bf16.gmra.mrb[0].mxu0 %v2811
    %v5552 = vpop.f32.mrb[0].mxu0
    %v5553 = vadd.f32 %v5456, %v5552
    %v5554 = vpop.f32.mrb[0].mxu0
    %v5555 = vpop.f32.mrb[0].mxu0
    %v5556 = vadd.f32 %v5459, %v5555
    %v5557 = vpop.f32.mrb[0].mxu0
    %5558 = vmatprep.mubr.bf16.mxu0 %v2823
    %5559 = vmatmul.mubr.bf16.gmra.mrb[0].mxu0 %v2822
    %v5560 = vpop.f32.mrb[0].mxu0
    %v5561 = vadd.f32 %v5464, %v5560
    %v5562 = vpop.f32.mrb[0].mxu0
    %v5563 = vpop.f32.mrb[0].mxu0
    %v5564 = vadd.f32 %v5467, %v5563
    %v5565 = vpop.f32.mrb[0].mxu0
    %5566 = vmatprep.mubr.bf16.mxu0 %v2834
    %5567 = vmatmul.mubr.bf16.gmra.mrb[0].mxu0 %v2833
    %v5568 = vpop.f32.mrb[0].mxu0
    %v5569 = vadd.f32 %v5472, %v5568
    %v5570 = vpop.f32.mrb[0].mxu0
    %v5571 = vpop.f32.mrb[0].mxu0
    %v5572 = vadd.f32 %v5475, %v5571
    %v5573 = vpop.f32.mrb[0].mxu0
    %5574 = vdwg.mxu0
    %5575 = vmatprep.subr.bf16.mxu0 0
    %5576 = vmatpush1.bf16.msra.mxu0 %v4994
    %5577 = vmatprep.subr.bf16.mxu0 0
    %5578 = vmatpush1.bf16.msra.mxu0 %v4995
    %5579 = vmatprep.subr.bf16.mxu0 0
    %5580 = vmatpush1.bf16.msra.mxu0 %v4996
    %5581 = vmatprep.subr.bf16.mxu0 0
    %5582 = vmatpush1.bf16.msra.mxu0 %v4997
    %5583 = vmatprep.subr.bf16.mxu0 0
    %5584 = vmatpush1.bf16.msra.mxu0 %v4998
    %5585 = vmatprep.subr.bf16.mxu0 0
    %5586 = vmatpush1.bf16.msra.mxu0 %v4999
    %5587 = vmatprep.subr.bf16.mxu0 0
    %5588 = vmatpush1.bf16.msra.mxu0 %v5000
    %5589 = vmatprep.subr.bf16.mxu0 0
    %5590 = vmatpush1.bf16.msra.mxu0 %v5001
    %5591 = vmatprep.subr.bf16.mxu0 0
    %5592 = vmatpush1.bf16.msra.mxu0 0
    %5593 = vmatprep.subr.bf16.mxu0 0
    %5594 = vmatpush1.bf16.msra.mxu0 0
    %5595 = vmatprep.subr.bf16.mxu0 0
    %5596 = vmatpush1.bf16.msra.mxu0 0
    %5597 = vmatprep.subr.bf16.mxu0 0
    %5598 = vmatpush1.bf16.msra.mxu0 0
    %5599 = vmatprep.subr.bf16.mxu0 0
    %5600 = vmatpush1.bf16.msra.mxu0 0
    %5601 = vmatprep.subr.bf16.mxu0 0
    %5602 = vmatpush1.bf16.msra.mxu0 0
    %5603 = vmatprep.subr.bf16.mxu0 0
    %5604 = vmatpush1.bf16.msra.mxu0 0
    %5605 = vmatprep.subr.bf16.mxu0 0
    %5606 = vmatpush1.bf16.msra.mxu0 0
    %5607 = vmatprep.mubr.bf16.mxu0 0
    %5608 = vmatmul.mubr.bf16.gmra.mrb[0].mxu0 %v2758
    %v5609 = vpop.f32.mrb[0].mxu0
    %v5610 = vadd.f32 %v5513, %v5609
    %v5611 = vpop.f32.mrb[0].mxu0
    %v5612 = vpop.f32.mrb[0].mxu0
    %v5613 = vadd.f32 %v5516, %v5612
    %v5614 = vpop.f32.mrb[0].mxu0
    %5615 = vmatprep.mubr.bf16.mxu0 0
    %5616 = vmatmul.mubr.bf16.gmra.mrb[0].mxu0 %v2769
    %v5617 = vpop.f32.mrb[0].mxu0
    %v5618 = vadd.f32 %v5521, %v5617
    %v5619 = vpop.f32.mrb[0].mxu0
    %v5620 = vpop.f32.mrb[0].mxu0
    %v5621 = vadd.f32 %v5524, %v5620
    %v5622 = vpop.f32.mrb[0].mxu0
    %5623 = vmatprep.mubr.bf16.mxu0 0
    %5624 = vmatmul.mubr.bf16.gmra.mrb[0].mxu0 %v2780
    %v5625 = vpop.f32.mrb[0].mxu0
    %v5626 = vadd.f32 %v5529, %v5625
    %v5627 = vpop.f32.mrb[0].mxu0
    %v5628 = vpop.f32.mrb[0].mxu0
    %v5629 = vadd.f32 %v5532, %v5628
    %v5630 = vpop.f32.mrb[0].mxu0
    %5631 = vmatprep.mubr.bf16.mxu0 0
    %5632 = vmatmul.mubr.bf16.gmra.mrb[0].mxu0 %v2791
    %v5633 = vpop.f32.mrb[0].mxu0
    %v5634 = vadd.f32 %v5537, %v5633
    %v5635 = vpop.f32.mrb[0].mxu0
    %v5636 = vpop.f32.mrb[0].mxu0
    %v5637 = vadd.f32 %v5540, %v5636
    %v5638 = vpop.f32.mrb[0].mxu0
    %5639 = vmatprep.mubr.bf16.mxu0 0
    %5640 = vmatmul.mubr.bf16.gmra.mrb[0].mxu0 %v2802
    %v5641 = vpop.f32.mrb[0].mxu0
    %v5642 = vadd.f32 %v5545, %v5641
    %v5643 = vpop.f32.mrb[0].mxu0
    %v5644 = vpop.f32.mrb[0].mxu0
    %v5645 = vadd.f32 %v5548, %v5644
    %v5646 = vpop.f32.mrb[0].mxu0
    %5647 = vmatprep.mubr.bf16.mxu0 0
    %5648 = vmatmul.mubr.bf16.gmra.mrb[0].mxu0 %v2813
    %v5649 = vpop.f32.mrb[0].mxu0
    %v5650 = vadd.f32 %v5553, %v5649
    %v5651 = vpop.f32.mrb[0].mxu0
    %v5652 = vpop.f32.mrb[0].mxu0
    %v5653 = vadd.f32 %v5556, %v5652
    %v5654 = vpop.f32.mrb[0].mxu0
    %5655 = vmatprep.mubr.bf16.mxu0 0
    %5656 = vmatmul.mubr.bf16.gmra.mrb[0].mxu0 %v2824
    %v5657 = vpop.f32.mrb[0].mxu0
    %v5658 = vadd.f32 %v5561, %v5657
    %v5659 = vpop.f32.mrb[0].mxu0
    %v5660 = vpop.f32.mrb[0].mxu0
    %v5661 = vadd.f32 %v5564, %v5660
    %v5662 = vpop.f32.mrb[0].mxu0
    %5663 = vmatprep.mubr.bf16.mxu0 0
    %5664 = vmatmul.mubr.bf16.gmra.mrb[0].mxu0 %v2835
    %v5665 = vpop.f32.mrb[0].mxu0
    %v5666 = vadd.f32 %v5569, %v5665
    %v5667 = vpop.f32.mrb[0].mxu0
    %v5668 = vpop.f32.mrb[0].mxu0
    %v5669 = vadd.f32 %v5572, %v5668
    %v5670 = vpop.f32.mrb[0].mxu0
    %5671 = vdwg.mxu0
    %v5672 = vld [vmem:[%s11] sm:$0xff]
    %v5673 = vld [vmem:[%s11 + $0x8] sm:$0x7]
    %vm5674 = vcmask 89088
    %v5675 = vsel %vm5674, %v172, 0
    %v5677 = vsel %vm5674, %v173, 0
    %v5679 = vsel %vm5674, %v174, 0
    %v5681 = vsel %vm5674, %v175, 0
    %v5683 = vsel %vm5674, %v176, 0
    %v5685 = vsel %vm5674, %v177, 0
    %v5687 = vsel %vm5674, %v178, 0
    %v5689 = vsel %vm5674, %v179, 0
    %v5691 = vsel %vm5674, %v180, 0
    %v5693 = vsel %vm5674, %v181, 0
    %v5695 = vsel %vm5674, %v182, 0
    %v5697 = vsel %vm5674, %v183, 0
    %v5699 = vsel %vm5674, %v184, 0
    %v5701 = vsel %vm5674, %v185, 0
    %v5703 = vsel %vm5674, %v186, 0
    %v5705 = vsel %vm5674, %v187, 0
    %v5708 = vsel %vm261, %v5673, 0
    %5710 = vmatprep.subr.mxu0 0.0
    %5711 = vmatpush1.msra.mxu0 %v5672
    %5712 = vmatprep.subr.mxu0 0.0
    %5713 = vmatpush1.msra.mxu0 %v5708
    %5714 = vmatprep.subr.mxu0 0.0
    %5715 = vmatpush1.msra.mxu0 0.0
    %5716 = vmatprep.subr.mxu0 0.0
    %5717 = vmatpush1.msra.mxu0 0.0
    %5718 = vmatprep.subr.mxu0 0.0
    %5719 = vmatpush1.msra.mxu0 0.0
    %5720 = vmatprep.subr.mxu0 0.0
    %5721 = vmatpush1.msra.mxu0 0.0
    %5722 = vmatprep.subr.mxu0 0.0
    %5723 = vmatpush1.msra.mxu0 0.0
    %5724 = vmatprep.subr.mxu0 0.0
    %5725 = vmatpush1.msra.mxu0 0.0
    %5726 = vmatprep.subr.mxu0 0.0
    %5727 = vmatpush1.msra.mxu0 0.0
    %5728 = vmatprep.subr.mxu0 0.0
    %5729 = vmatpush1.msra.mxu0 0.0
    %5730 = vmatprep.subr.mxu0 0.0
    %5731 = vmatpush1.msra.mxu0 0.0
    %5732 = vmatprep.subr.mxu0 0.0
    %5733 = vmatpush1.msra.mxu0 0.0
    %5734 = vmatprep.subr.mxu0 0.0
    %5735 = vmatpush1.msra.mxu0 0.0
    %5736 = vmatprep.subr.mxu0 0.0
    %5737 = vmatpush1.msra.mxu0 0.0
    %5738 = vmatprep.subr.mxu0 0.0
    %5739 = vmatpush1.msra.mxu0 0.0
    %5740 = vmatprep.subr.mxu0 0.0
    %5741 = vmatpush1.msra.mxu0 0.0
    %5742 = vmatprep.subr.mxu0 0.0
    %5743 = vmatpush1.msra.mxu0 0.0
    %5744 = vmatprep.subr.mxu0 0.0
    %5745 = vmatpush1.msra.mxu0 0.0
    %5746 = vmatprep.subr.mxu0 0.0
    %5747 = vmatpush1.msra.mxu0 0.0
    %5748 = vmatprep.subr.mxu0 0.0
    %5749 = vmatpush1.msra.mxu0 0.0
    %5750 = vmatprep.subr.mxu0 0.0
    %5751 = vmatpush1.msra.mxu0 0.0
    %5752 = vmatprep.subr.mxu0 0.0
    %5753 = vmatpush1.msra.mxu0 0.0
    %5754 = vmatprep.subr.mxu0 0.0
    %5755 = vmatpush1.msra.mxu0 0.0
    %5756 = vmatprep.subr.mxu0 0.0
    %5757 = vmatpush1.msra.mxu0 0.0
    %5758 = vmatprep.subr.mxu0 0.0
    %5759 = vmatpush1.msra.mxu0 0.0
    %5760 = vmatprep.subr.mxu0 0.0
    %5761 = vmatpush1.msra.mxu0 0.0
    %5762 = vmatprep.subr.mxu0 0.0
    %5763 = vmatpush1.msra.mxu0 0.0
    %5764 = vmatprep.subr.mxu0 0.0
    %5765 = vmatpush1.msra.mxu0 0.0
    %5766 = vmatprep.subr.mxu0 0.0
    %5767 = vmatpush1.msra.mxu0 0.0
    %5768 = vmatprep.subr.mxu0 0.0
    %5769 = vmatpush1.msra.mxu0 0.0
    %5770 = vmatprep.subr.mxu0 0.0
    %5771 = vmatpush1.msra.mxu0 0.0
    %5772 = vmatprep.subr.mxu0 0.0
    %5773 = vmatpush1.msra.mxu0 0.0
    %5774 = vmatprep.mubr.f32.mxu0 0.0
    %5775 = vmatmul.mubr.f32.gmra.mrb[0].mxu0 %v5675
    %v5776 = vpop.f32.mrb[0].mxu0
    %v5777 = vadd.f32 0.0, %v5776
    %v5778 = vpop.f32.mrb[0].mxu0
    %5779 = vmatprep.mubr.f32.mxu0 0.0
    %5780 = vmatmul.mubr.f32.gmra.mrb[0].mxu0 %v5677
    %v5781 = vpop.f32.mrb[0].mxu0
    %v5782 = vadd.f32 0.0, %v5781
    %v5783 = vpop.f32.mrb[0].mxu0
    %5784 = vmatprep.mubr.f32.mxu0 0.0
    %5785 = vmatmul.mubr.f32.gmra.mrb[0].mxu0 %v5679
    %v5786 = vpop.f32.mrb[0].mxu0
    %v5787 = vadd.f32 0.0, %v5786
    %v5788 = vpop.f32.mrb[0].mxu0
    %5789 = vmatprep.mubr.f32.mxu0 0.0
    %5790 = vmatmul.mubr.f32.gmra.mrb[0].mxu0 %v5681
    %v5791 = vpop.f32.mrb[0].mxu0
    %v5792 = vadd.f32 0.0, %v5791
    %v5793 = vpop.f32.mrb[0].mxu0
    %5794 = vmatprep.mubr.f32.mxu0 0.0
    %5795 = vmatmul.mubr.f32.gmra.mrb[0].mxu0 %v5683
    %v5796 = vpop.f32.mrb[0].mxu0
    %v5797 = vadd.f32 0.0, %v5796
    %v5798 = vpop.f32.mrb[0].mxu0
    %5799 = vmatprep.mubr.f32.mxu0 0.0
    %5800 = vmatmul.mubr.f32.gmra.mrb[0].mxu0 %v5685
    %v5801 = vpop.f32.mrb[0].mxu0
    %v5802 = vadd.f32 0.0, %v5801
    %v5803 = vpop.f32.mrb[0].mxu0
    %5804 = vmatprep.mubr.f32.mxu0 0.0
    %5805 = vmatmul.mubr.f32.gmra.mrb[0].mxu0 %v5687
    %v5806 = vpop.f32.mrb[0].mxu0
    %v5807 = vadd.f32 0.0, %v5806
    %v5808 = vpop.f32.mrb[0].mxu0
    %5809 = vmatprep.mubr.f32.mxu0 0.0
    %5810 = vmatmul.mubr.f32.gmra.mrb[0].mxu0 %v5689
    %v5811 = vpop.f32.mrb[0].mxu0
    %v5812 = vadd.f32 0.0, %v5811
    %v5813 = vpop.f32.mrb[0].mxu0
    %5814 = vmatprep.mubr.f32.mxu0 0.0
    %5815 = vmatmul.mubr.f32.gmra.mrb[0].mxu0 %v5691
    %v5816 = vpop.f32.mrb[0].mxu0
    %v5817 = vadd.f32 0.0, %v5816
    %v5818 = vpop.f32.mrb[0].mxu0
    %5819 = vmatprep.mubr.f32.mxu0 0.0
    %5820 = vmatmul.mubr.f32.gmra.mrb[0].mxu0 %v5693
    %v5821 = vpop.f32.mrb[0].mxu0
    %v5822 = vadd.f32 0.0, %v5821
    %v5823 = vpop.f32.mrb[0].mxu0
    %5824 = vmatprep.mubr.f32.mxu0 0.0
    %5825 = vmatmul.mubr.f32.gmra.mrb[0].mxu0 %v5695
    %v5826 = vpop.f32.mrb[0].mxu0
    %v5827 = vadd.f32 0.0, %v5826
    %v5828 = vpop.f32.mrb[0].mxu0
    %5829 = vmatprep.mubr.f32.mxu0 0.0
    %5830 = vmatmul.mubr.f32.gmra.mrb[0].mxu0 %v5697
    %v5831 = vpop.f32.mrb[0].mxu0
    %v5832 = vadd.f32 0.0, %v5831
    %v5833 = vpop.f32.mrb[0].mxu0
    %5834 = vmatprep.mubr.f32.mxu0 0.0
    %5835 = vmatmul.mubr.f32.gmra.mrb[0].mxu0 %v5699
    %v5836 = vpop.f32.mrb[0].mxu0
    %v5837 = vadd.f32 0.0, %v5836
    %v5838 = vpop.f32.mrb[0].mxu0
    %5839 = vmatprep.mubr.f32.mxu0 0.0
    %5840 = vmatmul.mubr.f32.gmra.mrb[0].mxu0 %v5701
    %v5841 = vpop.f32.mrb[0].mxu0
    %v5842 = vadd.f32 0.0, %v5841
    %v5843 = vpop.f32.mrb[0].mxu0
    %5844 = vmatprep.mubr.f32.mxu0 0.0
    %5845 = vmatmul.mubr.f32.gmra.mrb[0].mxu0 %v5703
    %v5846 = vpop.f32.mrb[0].mxu0
    %v5847 = vadd.f32 0.0, %v5846
    %v5848 = vpop.f32.mrb[0].mxu0
    %5849 = vmatprep.mubr.f32.mxu0 0.0
    %5850 = vmatmul.mubr.f32.gmra.mrb[0].mxu0 %v5705
    %v5851 = vpop.f32.mrb[0].mxu0
    %v5852 = vadd.f32 0.0, %v5851
    %v5853 = vpop.f32.mrb[0].mxu0
    %5854 = vdwg.mxu0
    %v5855 = vadd.f32 %v5610, %v5777
    %v5856 = vadd.f32 %v5613, %v5782
    %v5857 = vadd.f32 %v5618, %v5787
    %v5858 = vadd.f32 %v5621, %v5792
    %v5859 = vadd.f32 %v5626, %v5797
    %v5860 = vadd.f32 %v5629, %v5802
    %v5861 = vadd.f32 %v5634, %v5807
    %v5862 = vadd.f32 %v5637, %v5812
    %v5863 = vadd.f32 %v5642, %v5817
    %v5864 = vadd.f32 %v5645, %v5822
    %v5865 = vadd.f32 %v5650, %v5827
    %v5866 = vadd.f32 %v5653, %v5832
    %v5867 = vadd.f32 %v5658, %v5837
    %v5868 = vadd.f32 %v5661, %v5842
    %v5869 = vadd.f32 %v5666, %v5847
    %v5870 = vadd.f32 %v5669, %v5852
    %v5871 = vmax.f32 %v5855, 0.0
    %v5872 = vmax.f32 %v5856, 0.0
    %v5873 = vmax.f32 %v5857, 0.0
    %v5874 = vmax.f32 %v5858, 0.0
    %v5875 = vmax.f32 %v5859, 0.0
    %v5876 = vmax.f32 %v5860, 0.0
    %v5877 = vmax.f32 %v5861, 0.0
    %v5878 = vmax.f32 %v5862, 0.0
    %v5879 = vmax.f32 %v5863, 0.0
    %v5880 = vmax.f32 %v5864, 0.0
    %v5881 = vmax.f32 %v5865, 0.0
    %v5882 = vmax.f32 %v5866, 0.0
    %v5883 = vmax.f32 %v5867, 0.0
    %v5884 = vmax.f32 %v5868, 0.0
    %v5885 = vmax.f32 %v5869, 0.0
    %v5886 = vmax.f32 %v5870, 0.0
    %v5887 = vpack.c.bf16 %v5872, %v5871
    %v5888 = vpack.c.bf16 %v5874, %v5873
    %v5889 = vpack.c.bf16 %v5876, %v5875
    %v5890 = vpack.c.bf16 %v5878, %v5877
    %v5891 = vpack.c.bf16 %v5880, %v5879
    %v5892 = vpack.c.bf16 %v5882, %v5881
    %v5893 = vpack.c.bf16 %v5884, %v5883
    %v5894 = vpack.c.bf16 %v5886, %v5885
    %5895 = vmatprep.subr.bf16.mxu0 0
    %5896 = vmatpush1.bf16.msra.mxu0 %v5887
    %5897 = vmatprep.subr.bf16.mxu0 0
    %5898 = vmatpush1.bf16.msra.mxu0 %v5888
    %5899 = vmatprep.subr.bf16.mxu0 0
    %5900 = vmatpush1.bf16.msra.mxu0 %v5889
    %5901 = vmatprep.subr.bf16.mxu0 0
    %5902 = vmatpush1.bf16.msra.mxu0 %v5890
    %5903 = vmatprep.subr.bf16.mxu0 0
    %5904 = vmatpush1.bf16.msra.mxu0 %v5891
    %5905 = vmatprep.subr.bf16.mxu0 0
    %5906 = vmatpush1.bf16.msra.mxu0 %v5892
    %5907 = vmatprep.subr.bf16.mxu0 0
    %5908 = vmatpush1.bf16.msra.mxu0 %v5893
    %5909 = vmatprep.subr.bf16.mxu0 0
    %5910 = vmatpush1.bf16.msra.mxu0 %v5894
    %5911 = vmatprep.subr.bf16.mxu0 0
    %5912 = vmatpush1.bf16.msra.mxu0 0
    %5913 = vmatprep.subr.bf16.mxu0 0
    %5914 = vmatpush1.bf16.msra.mxu0 0
    %5915 = vmatprep.subr.bf16.mxu0 0
    %5916 = vmatpush1.bf16.msra.mxu0 0
    %5917 = vmatprep.subr.bf16.mxu0 0
    %5918 = vmatpush1.bf16.msra.mxu0 0
    %5919 = vmatprep.subr.bf16.mxu0 0
    %5920 = vmatpush1.bf16.msra.mxu0 0
    %5921 = vmatprep.subr.bf16.mxu0 0
    %5922 = vmatpush1.bf16.msra.mxu0 0
    %5923 = vmatprep.subr.bf16.mxu0 0
    %5924 = vmatpush1.bf16.msra.mxu0 0
    %5925 = vmatprep.subr.bf16.mxu0 0
    %5926 = vmatpush1.bf16.msra.mxu0 0
    %5927 = vmatprep.mubr.bf16.mxu0 0
    %5928 = vmatmul.mubr.bf16.gmra.mrb[0].mxu0 %v418
    %v5929 = vpop.f32.mrb[0].mxu0
    %v5930 = vadd.f32 0.0, %v5929
    %v5931 = vpop.f32.mrb[0].mxu0
    %v5932 = vpop.f32.mrb[0].mxu0
    %v5933 = vadd.f32 0.0, %v5932
    %v5934 = vpop.f32.mrb[0].mxu0
    %5935 = vmatprep.mubr.bf16.mxu0 0
    %5936 = vmatmul.mubr.bf16.gmra.mrb[0].mxu0 %v419
    %v5937 = vpop.f32.mrb[0].mxu0
    %v5938 = vadd.f32 0.0, %v5937
    %v5939 = vpop.f32.mrb[0].mxu0
    %v5940 = vpop.f32.mrb[0].mxu0
    %v5941 = vadd.f32 0.0, %v5940
    %v5942 = vpop.f32.mrb[0].mxu0
    %5943 = vmatprep.mubr.bf16.mxu0 0
    %5944 = vmatmul.mubr.bf16.gmra.mrb[0].mxu0 %v420
    %v5945 = vpop.f32.mrb[0].mxu0
    %v5946 = vadd.f32 0.0, %v5945
    %v5947 = vpop.f32.mrb[0].mxu0
    %v5948 = vpop.f32.mrb[0].mxu0
    %v5949 = vadd.f32 0.0, %v5948
    %v5950 = vpop.f32.mrb[0].mxu0
    %5951 = vmatprep.mubr.bf16.mxu0 0
    %5952 = vmatmul.mubr.bf16.gmra.mrb[0].mxu0 %v421
    %v5953 = vpop.f32.mrb[0].mxu0
    %v5954 = vadd.f32 0.0, %v5953
    %v5955 = vpop.f32.mrb[0].mxu0
    %v5956 = vpop.f32.mrb[0].mxu0
    %v5957 = vadd.f32 0.0, %v5956
    %v5958 = vpop.f32.mrb[0].mxu0
    %5959 = vmatprep.mubr.bf16.mxu0 0
    %5960 = vmatmul.mubr.bf16.gmra.mrb[0].mxu0 %v422
    %v5961 = vpop.f32.mrb[0].mxu0
    %v5962 = vadd.f32 0.0, %v5961
    %v5963 = vpop.f32.mrb[0].mxu0
    %v5964 = vpop.f32.mrb[0].mxu0
    %v5965 = vadd.f32 0.0, %v5964
    %v5966 = vpop.f32.mrb[0].mxu0
    %5967 = vmatprep.mubr.bf16.mxu0 0
    %5968 = vmatmul.mubr.bf16.gmra.mrb[0].mxu0 %v423
    %v5969 = vpop.f32.mrb[0].mxu0
    %v5970 = vadd.f32 0.0, %v5969
    %v5971 = vpop.f32.mrb[0].mxu0
    %v5972 = vpop.f32.mrb[0].mxu0
    %v5973 = vadd.f32 0.0, %v5972
    %v5974 = vpop.f32.mrb[0].mxu0
    %5975 = vmatprep.mubr.bf16.mxu0 0
    %5976 = vmatmul.mubr.bf16.gmra.mrb[0].mxu0 %v424
    %v5977 = vpop.f32.mrb[0].mxu0
    %v5978 = vadd.f32 0.0, %v5977
    %v5979 = vpop.f32.mrb[0].mxu0
    %v5980 = vpop.f32.mrb[0].mxu0
    %v5981 = vadd.f32 0.0, %v5980
    %v5982 = vpop.f32.mrb[0].mxu0
    %5983 = vmatprep.mubr.bf16.mxu0 0
    %5984 = vmatmul.mubr.bf16.gmra.mrb[0].mxu0 %v425
    %v5985 = vpop.f32.mrb[0].mxu0
    %v5986 = vadd.f32 0.0, %v5985
    %v5987 = vpop.f32.mrb[0].mxu0
    %v5988 = vpop.f32.mrb[0].mxu0
    %v5989 = vadd.f32 0.0, %v5988
    %v5990 = vpop.f32.mrb[0].mxu0
    %5991 = vdwg.mxu0
    %5992 = vmatprep.subr.bf16.mxu0 0
    %5993 = vmatpush1.bf16.msra.mxu0 %v5887
    %5994 = vmatprep.subr.bf16.mxu0 0
    %5995 = vmatpush1.bf16.msra.mxu0 %v5888
    %5996 = vmatprep.subr.bf16.mxu0 0
    %5997 = vmatpush1.bf16.msra.mxu0 %v5889
    %5998 = vmatprep.subr.bf16.mxu0 0
    %5999 = vmatpush1.bf16.msra.mxu0 %v5890
    %6000 = vmatprep.subr.bf16.mxu0 0
    %6001 = vmatpush1.bf16.msra.mxu0 %v5891
    %6002 = vmatprep.subr.bf16.mxu0 0
    %6003 = vmatpush1.bf16.msra.mxu0 %v5892
    %6004 = vmatprep.subr.bf16.mxu0 0
    %6005 = vmatpush1.bf16.msra.mxu0 %v5893
    %6006 = vmatprep.subr.bf16.mxu0 0
    %6007 = vmatpush1.bf16.msra.mxu0 %v5894
    %6008 = vmatprep.subr.bf16.mxu0 0
    %6009 = vmatpush1.bf16.msra.mxu0 0
    %6010 = vmatprep.subr.bf16.mxu0 0
    %6011 = vmatpush1.bf16.msra.mxu0 0
    %6012 = vmatprep.subr.bf16.mxu0 0
    %6013 = vmatpush1.bf16.msra.mxu0 0
    %6014 = vmatprep.subr.bf16.mxu0 0
    %6015 = vmatpush1.bf16.msra.mxu0 0
    %6016 = vmatprep.subr.bf16.mxu0 0
    %6017 = vmatpush1.bf16.msra.mxu0 0
    %6018 = vmatprep.subr.bf16.mxu0 0
    %6019 = vmatpush1.bf16.msra.mxu0 0
    %6020 = vmatprep.subr.bf16.mxu0 0
    %6021 = vmatpush1.bf16.msra.mxu0 0
    %6022 = vmatprep.subr.bf16.mxu0 0
    %6023 = vmatpush1.bf16.msra.mxu0 0
    %6024 = vmatprep.mubr.bf16.mxu0 0
    %6025 = vmatmul.mubr.bf16.gmra.mrb[0].mxu0 %v580
    %v6026 = vpop.f32.mrb[0].mxu0
    %v6027 = vadd.f32 0.0, %v6026
    %v6028 = vpop.f32.mrb[0].mxu0
    %v6029 = vpop.f32.mrb[0].mxu0
    %v6030 = vadd.f32 0.0, %v6029
    %v6031 = vpop.f32.mrb[0].mxu0
    %6032 = vmatprep.mubr.bf16.mxu0 0
    %6033 = vmatmul.mubr.bf16.gmra.mrb[0].mxu0 %v581
    %v6034 = vpop.f32.mrb[0].mxu0
    %v6035 = vadd.f32 0.0, %v6034
    %v6036 = vpop.f32.mrb[0].mxu0
    %v6037 = vpop.f32.mrb[0].mxu0
    %v6038 = vadd.f32 0.0, %v6037
    %v6039 = vpop.f32.mrb[0].mxu0
    %6040 = vmatprep.mubr.bf16.mxu0 0
    %6041 = vmatmul.mubr.bf16.gmra.mrb[0].mxu0 %v582
    %v6042 = vpop.f32.mrb[0].mxu0
    %v6043 = vadd.f32 0.0, %v6042
    %v6044 = vpop.f32.mrb[0].mxu0
    %v6045 = vpop.f32.mrb[0].mxu0
    %v6046 = vadd.f32 0.0, %v6045
    %v6047 = vpop.f32.mrb[0].mxu0
    %6048 = vmatprep.mubr.bf16.mxu0 0
    %6049 = vmatmul.mubr.bf16.gmra.mrb[0].mxu0 %v583
    %v6050 = vpop.f32.mrb[0].mxu0
    %v6051 = vadd.f32 0.0, %v6050
    %v6052 = vpop.f32.mrb[0].mxu0
    %v6053 = vpop.f32.mrb[0].mxu0
    %v6054 = vadd.f32 0.0, %v6053
    %v6055 = vpop.f32.mrb[0].mxu0
    %6056 = vmatprep.mubr.bf16.mxu0 0
    %6057 = vmatmul.mubr.bf16.gmra.mrb[0].mxu0 %v584
    %v6058 = vpop.f32.mrb[0].mxu0
    %v6059 = vadd.f32 0.0, %v6058
    %v6060 = vpop.f32.mrb[0].mxu0
    %v6061 = vpop.f32.mrb[0].mxu0
    %v6062 = vadd.f32 0.0, %v6061
    %v6063 = vpop.f32.mrb[0].mxu0
    %6064 = vmatprep.mubr.bf16.mxu0 0
    %6065 = vmatmul.mubr.bf16.gmra.mrb[0].mxu0 %v585
    %v6066 = vpop.f32.mrb[0].mxu0
    %v6067 = vadd.f32 0.0, %v6066
    %v6068 = vpop.f32.mrb[0].mxu0
    %v6069 = vpop.f32.mrb[0].mxu0
    %v6070 = vadd.f32 0.0, %v6069
    %v6071 = vpop.f32.mrb[0].mxu0
    %6072 = vmatprep.mubr.bf16.mxu0 0
    %6073 = vmatmul.mubr.bf16.gmra.mrb[0].mxu0 %v586
    %v6074 = vpop.f32.mrb[0].mxu0
    %v6075 = vadd.f32 0.0, %v6074
    %v6076 = vpop.f32.mrb[0].mxu0
    %v6077 = vpop.f32.mrb[0].mxu0
    %v6078 = vadd.f32 0.0, %v6077
    %v6079 = vpop.f32.mrb[0].mxu0
    %6080 = vmatprep.mubr.bf16.mxu0 0
    %6081 = vmatmul.mubr.bf16.gmra.mrb[0].mxu0 %v587
    %v6082 = vpop.f32.mrb[0].mxu0
    %v6083 = vadd.f32 0.0, %v6082
    %v6084 = vpop.f32.mrb[0].mxu0
    %v6085 = vpop.f32.mrb[0].mxu0
    %v6086 = vadd.f32 0.0, %v6085
    %v6087 = vpop.f32.mrb[0].mxu0
    %6088 = vdwg.mxu0
    %6089 = vmatprep.subr.bf16.mxu0 0
    %6090 = vmatpush1.bf16.msra.mxu0 %v5887
    %6091 = vmatprep.subr.bf16.mxu0 0
    %6092 = vmatpush1.bf16.msra.mxu0 %v5888
    %6093 = vmatprep.subr.bf16.mxu0 0
    %6094 = vmatpush1.bf16.msra.mxu0 %v5889
    %6095 = vmatprep.subr.bf16.mxu0 0
    %6096 = vmatpush1.bf16.msra.mxu0 %v5890
    %6097 = vmatprep.subr.bf16.mxu0 0
    %6098 = vmatpush1.bf16.msra.mxu0 %v5891
    %6099 = vmatprep.subr.bf16.mxu0 0
    %6100 = vmatpush1.bf16.msra.mxu0 %v5892
    %6101 = vmatprep.subr.bf16.mxu0 0
    %6102 = vmatpush1.bf16.msra.mxu0 %v5893
    %6103 = vmatprep.subr.bf16.mxu0 0
    %6104 = vmatpush1.bf16.msra.mxu0 %v5894
    %6105 = vmatprep.subr.bf16.mxu0 0
    %6106 = vmatpush1.bf16.msra.mxu0 0
    %6107 = vmatprep.subr.bf16.mxu0 0
    %6108 = vmatpush1.bf16.msra.mxu0 0
    %6109 = vmatprep.subr.bf16.mxu0 0
    %6110 = vmatpush1.bf16.msra.mxu0 0
    %6111 = vmatprep.subr.bf16.mxu0 0
    %6112 = vmatpush1.bf16.msra.mxu0 0
    %6113 = vmatprep.subr.bf16.mxu0 0
    %6114 = vmatpush1.bf16.msra.mxu0 0
    %6115 = vmatprep.subr.bf16.mxu0 0
    %6116 = vmatpush1.bf16.msra.mxu0 0
    %6117 = vmatprep.subr.bf16.mxu0 0
    %6118 = vmatpush1.bf16.msra.mxu0 0
    %6119 = vmatprep.subr.bf16.mxu0 0
    %6120 = vmatpush1.bf16.msra.mxu0 0
    %6121 = vmatprep.mubr.bf16.mxu0 0
    %6122 = vmatmul.mubr.bf16.gmra.mrb[0].mxu0 %v742
    %v6123 = vpop.f32.mrb[0].mxu0
    %v6124 = vadd.f32 0.0, %v6123
    %v6125 = vpop.f32.mrb[0].mxu0
    %v6126 = vpop.f32.mrb[0].mxu0
    %v6127 = vadd.f32 0.0, %v6126
    %v6128 = vpop.f32.mrb[0].mxu0
    %6129 = vmatprep.mubr.bf16.mxu0 0
    %6130 = vmatmul.mubr.bf16.gmra.mrb[0].mxu0 %v743
    %v6131 = vpop.f32.mrb[0].mxu0
    %v6132 = vadd.f32 0.0, %v6131
    %v6133 = vpop.f32.mrb[0].mxu0
    %v6134 = vpop.f32.mrb[0].mxu0
    %v6135 = vadd.f32 0.0, %v6134
    %v6136 = vpop.f32.mrb[0].mxu0
    %6137 = vmatprep.mubr.bf16.mxu0 0
    %6138 = vmatmul.mubr.bf16.gmra.mrb[0].mxu0 %v744
    %v6139 = vpop.f32.mrb[0].mxu0
    %v6140 = vadd.f32 0.0, %v6139
    %v6141 = vpop.f32.mrb[0].mxu0
    %v6142 = vpop.f32.mrb[0].mxu0
    %v6143 = vadd.f32 0.0, %v6142
    %v6144 = vpop.f32.mrb[0].mxu0
    %6145 = vmatprep.mubr.bf16.mxu0 0
    %6146 = vmatmul.mubr.bf16.gmra.mrb[0].mxu0 %v745
    %v6147 = vpop.f32.mrb[0].mxu0
    %v6148 = vadd.f32 0.0, %v6147
    %v6149 = vpop.f32.mrb[0].mxu0
    %v6150 = vpop.f32.mrb[0].mxu0
    %v6151 = vadd.f32 0.0, %v6150
    %v6152 = vpop.f32.mrb[0].mxu0
    %6153 = vmatprep.mubr.bf16.mxu0 0
    %6154 = vmatmul.mubr.bf16.gmra.mrb[0].mxu0 %v746
    %v6155 = vpop.f32.mrb[0].mxu0
    %v6156 = vadd.f32 0.0, %v6155
    %v6157 = vpop.f32.mrb[0].mxu0
    %v6158 = vpop.f32.mrb[0].mxu0
    %v6159 = vadd.f32 0.0, %v6158
    %v6160 = vpop.f32.mrb[0].mxu0
    %6161 = vmatprep.mubr.bf16.mxu0 0
    %6162 = vmatmul.mubr.bf16.gmra.mrb[0].mxu0 %v747
    %v6163 = vpop.f32.mrb[0].mxu0
    %v6164 = vadd.f32 0.0, %v6163
    %v6165 = vpop.f32.mrb[0].mxu0
    %v6166 = vpop.f32.mrb[0].mxu0
    %v6167 = vadd.f32 0.0, %v6166
    %v6168 = vpop.f32.mrb[0].mxu0
    %6169 = vmatprep.mubr.bf16.mxu0 0
    %6170 = vmatmul.mubr.bf16.gmra.mrb[0].mxu0 %v748
    %v6171 = vpop.f32.mrb[0].mxu0
    %v6172 = vadd.f32 0.0, %v6171
    %v6173 = vpop.f32.mrb[0].mxu0
    %v6174 = vpop.f32.mrb[0].mxu0
    %v6175 = vadd.f32 0.0, %v6174
    %v6176 = vpop.f32.mrb[0].mxu0
    %6177 = vmatprep.mubr.bf16.mxu0 0
    %6178 = vmatmul.mubr.bf16.gmra.mrb[0].mxu0 %v749
    %v6179 = vpop.f32.mrb[0].mxu0
    %v6180 = vadd.f32 0.0, %v6179
    %v6181 = vpop.f32.mrb[0].mxu0
    %v6182 = vpop.f32.mrb[0].mxu0
    %v6183 = vadd.f32 0.0, %v6182
    %v6184 = vpop.f32.mrb[0].mxu0
    %6185 = vdwg.mxu0
    %6186 = vmatprep.subr.bf16.mxu0 0
    %6187 = vmatpush1.bf16.msra.mxu0 %v5887
    %6188 = vmatprep.subr.bf16.mxu0 0
    %6189 = vmatpush1.bf16.msra.mxu0 %v5888
    %6190 = vmatprep.subr.bf16.mxu0 0
    %6191 = vmatpush1.bf16.msra.mxu0 %v5889
    %6192 = vmatprep.subr.bf16.mxu0 0
    %6193 = vmatpush1.bf16.msra.mxu0 %v5890
    %6194 = vmatprep.subr.bf16.mxu0 0
    %6195 = vmatpush1.bf16.msra.mxu0 %v5891
    %6196 = vmatprep.subr.bf16.mxu0 0
    %6197 = vmatpush1.bf16.msra.mxu0 %v5892
    %6198 = vmatprep.subr.bf16.mxu0 0
    %6199 = vmatpush1.bf16.msra.mxu0 %v5893
    %6200 = vmatprep.subr.bf16.mxu0 0
    %6201 = vmatpush1.bf16.msra.mxu0 %v5894
    %6202 = vmatprep.subr.bf16.mxu0 0
    %6203 = vmatpush1.bf16.msra.mxu0 0
    %6204 = vmatprep.subr.bf16.mxu0 0
    %6205 = vmatpush1.bf16.msra.mxu0 0
    %6206 = vmatprep.subr.bf16.mxu0 0
    %6207 = vmatpush1.bf16.msra.mxu0 0
    %6208 = vmatprep.subr.bf16.mxu0 0
    %6209 = vmatpush1.bf16.msra.mxu0 0
    %6210 = vmatprep.subr.bf16.mxu0 0
    %6211 = vmatpush1.bf16.msra.mxu0 0
    %6212 = vmatprep.subr.bf16.mxu0 0
    %6213 = vmatpush1.bf16.msra.mxu0 0
    %6214 = vmatprep.subr.bf16.mxu0 0
    %6215 = vmatpush1.bf16.msra.mxu0 0
    %6216 = vmatprep.subr.bf16.mxu0 0
    %6217 = vmatpush1.bf16.msra.mxu0 0
    %6218 = vmatprep.mubr.bf16.mxu0 0
    %6219 = vmatmul.mubr.bf16.gmra.mrb[0].mxu0 %v904
    %v6220 = vpop.f32.mrb[0].mxu0
    %v6221 = vadd.f32 0.0, %v6220
    %v6222 = vpop.f32.mrb[0].mxu0
    %v6223 = vpop.f32.mrb[0].mxu0
    %v6224 = vadd.f32 0.0, %v6223
    %v6225 = vpop.f32.mrb[0].mxu0
    %6226 = vmatprep.mubr.bf16.mxu0 0
    %6227 = vmatmul.mubr.bf16.gmra.mrb[0].mxu0 %v905
    %v6228 = vpop.f32.mrb[0].mxu0
    %v6229 = vadd.f32 0.0, %v6228
    %v6230 = vpop.f32.mrb[0].mxu0
    %v6231 = vpop.f32.mrb[0].mxu0
    %v6232 = vadd.f32 0.0, %v6231
    %v6233 = vpop.f32.mrb[0].mxu0
    %6234 = vmatprep.mubr.bf16.mxu0 0
    %6235 = vmatmul.mubr.bf16.gmra.mrb[0].mxu0 %v906
    %v6236 = vpop.f32.mrb[0].mxu0
    %v6237 = vadd.f32 0.0, %v6236
    %v6238 = vpop.f32.mrb[0].mxu0
    %v6239 = vpop.f32.mrb[0].mxu0
    %v6240 = vadd.f32 0.0, %v6239
    %v6241 = vpop.f32.mrb[0].mxu0
    %6242 = vmatprep.mubr.bf16.mxu0 0
    %6243 = vmatmul.mubr.bf16.gmra.mrb[0].mxu0 %v907
    %v6244 = vpop.f32.mrb[0].mxu0
    %v6245 = vadd.f32 0.0, %v6244
    %v6246 = vpop.f32.mrb[0].mxu0
    %v6247 = vpop.f32.mrb[0].mxu0
    %v6248 = vadd.f32 0.0, %v6247
    %v6249 = vpop.f32.mrb[0].mxu0
    %6250 = vmatprep.mubr.bf16.mxu0 0
    %6251 = vmatmul.mubr.bf16.gmra.mrb[0].mxu0 %v908
    %v6252 = vpop.f32.mrb[0].mxu0
    %v6253 = vadd.f32 0.0, %v6252
    %v6254 = vpop.f32.mrb[0].mxu0
    %v6255 = vpop.f32.mrb[0].mxu0
    %v6256 = vadd.f32 0.0, %v6255
    %v6257 = vpop.f32.mrb[0].mxu0
    %6258 = vmatprep.mubr.bf16.mxu0 0
    %6259 = vmatmul.mubr.bf16.gmra.mrb[0].mxu0 %v909
    %v6260 = vpop.f32.mrb[0].mxu0
    %v6261 = vadd.f32 0.0, %v6260
    %v6262 = vpop.f32.mrb[0].mxu0
    %v6263 = vpop.f32.mrb[0].mxu0
    %v6264 = vadd.f32 0.0, %v6263
    %v6265 = vpop.f32.mrb[0].mxu0
    %6266 = vmatprep.mubr.bf16.mxu0 0
    %6267 = vmatmul.mubr.bf16.gmra.mrb[0].mxu0 %v910
    %v6268 = vpop.f32.mrb[0].mxu0
    %v6269 = vadd.f32 0.0, %v6268
    %v6270 = vpop.f32.mrb[0].mxu0
    %v6271 = vpop.f32.mrb[0].mxu0
    %v6272 = vadd.f32 0.0, %v6271
    %v6273 = vpop.f32.mrb[0].mxu0
    %6274 = vmatprep.mubr.bf16.mxu0 0
    %6275 = vmatmul.mubr.bf16.gmra.mrb[0].mxu0 %v911
    %v6276 = vpop.f32.mrb[0].mxu0
    %v6277 = vadd.f32 0.0, %v6276
    %v6278 = vpop.f32.mrb[0].mxu0
    %v6279 = vpop.f32.mrb[0].mxu0
    %v6280 = vadd.f32 0.0, %v6279
    %v6281 = vpop.f32.mrb[0].mxu0
    %6282 = vdwg.mxu0
    %v6283 = vpack.c.bf16 %v5933, %v5930
    %v6284 = vpack.c.bf16 %v6030, %v6027
    %v6285 = vpack.c.bf16 %v6127, %v6124
    %v6286 = vpack.c.bf16 %v6224, %v6221
    %v6287 = vpack.c.bf16 %v5941, %v5938
    %v6288 = vpack.c.bf16 %v6038, %v6035
    %v6289 = vpack.c.bf16 %v6135, %v6132
    %v6290 = vpack.c.bf16 %v6232, %v6229
    %v6291 = vpack.c.bf16 %v5949, %v5946
    %v6292 = vpack.c.bf16 %v6046, %v6043
    %v6293 = vpack.c.bf16 %v6143, %v6140
    %v6294 = vpack.c.bf16 %v6240, %v6237
    %v6295 = vpack.c.bf16 %v5957, %v5954
    %v6296 = vpack.c.bf16 %v6054, %v6051
    %v6297 = vpack.c.bf16 %v6151, %v6148
    %v6298 = vpack.c.bf16 %v6248, %v6245
    %v6299 = vpack.c.bf16 %v5965, %v5962
    %v6300 = vpack.c.bf16 %v6062, %v6059
    %v6301 = vpack.c.bf16 %v6159, %v6156
    %v6302 = vpack.c.bf16 %v6256, %v6253
    %v6303 = vpack.c.bf16 %v5973, %v5970
    %v6304 = vpack.c.bf16 %v6070, %v6067
    %v6305 = vpack.c.bf16 %v6167, %v6164
    %v6306 = vpack.c.bf16 %v6264, %v6261
    %v6307 = vpack.c.bf16 %v5981, %v5978
    %v6308 = vpack.c.bf16 %v6078, %v6075
    %v6309 = vpack.c.bf16 %v6175, %v6172
    %v6310 = vpack.c.bf16 %v6272, %v6269
    %v6311 = vpack.c.bf16 %v5989, %v5986
    %v6312 = vpack.c.bf16 %v6086, %v6083
    %v6313 = vpack.c.bf16 %v6183, %v6180
    %v6314 = vpack.c.bf16 %v6280, %v6277
    %s6315 = scalar_lea.vmem [#allocation10], 64
    %v6316 = vld [vmem:[%s6315] sm:$0xf]
    %v6317 = vld [vmem:[%s6315 + $0x4] sm:$0xf]
    %v6318 = vld [vmem:[%s6315 + $0x8] sm:$0xf]
    %v6319 = vld [vmem:[%s6315 + $0xc] sm:$0xf]
    %v6320 = vld [vmem:[%s6315 + $0x10] sm:$0xf]
    %v6321 = vld [vmem:[%s6315 + $0x14] sm:$0xf]
    %v6322 = vld [vmem:[%s6315 + $0x18] sm:$0xf]
    %v6323 = vld [vmem:[%s6315 + $0x1c] sm:$0xf]
    %v6324 = vld [vmem:[%s6315 + $0x20] sm:$0xf]
    %v6325 = vld [vmem:[%s6315 + $0x24] sm:$0xf]
    %v6326 = vld [vmem:[%s6315 + $0x28] sm:$0xf]
    %v6327 = vld [vmem:[%s6315 + $0x2c] sm:$0xf]
    %v6328 = vld [vmem:[%s6315 + $0x30] sm:$0xf]
    %v6329 = vld [vmem:[%s6315 + $0x34] sm:$0xf]
    %v6330 = vld [vmem:[%s6315 + $0x38] sm:$0xf]
    %v6331 = vld [vmem:[%s6315 + $0x3c] sm:$0xf]
    %s6332 = scalar_lea.vmem [#allocation8], 256
    %v6333 = vld [vmem:[%s6332] sm:$0xf]
    %v6334 = vld [vmem:[%s6332 + $0x4] sm:$0xf]
    %v6335 = vld [vmem:[%s6332 + $0x8] sm:$0xf]
    %v6336 = vld [vmem:[%s6332 + $0xc] sm:$0xf]
    %v6337 = vld [vmem:[%s6332 + $0x10] sm:$0xf]
    %v6338 = vld [vmem:[%s6332 + $0x14] sm:$0xf]
    %v6339 = vld [vmem:[%s6332 + $0x18] sm:$0xf]
    %v6340 = vld [vmem:[%s6332 + $0x1c] sm:$0xf]
    %v6341 = vld [vmem:[%s6332 + $0x20] sm:$0xf]
    %v6342 = vld [vmem:[%s6332 + $0x24] sm:$0xf]
    %v6343 = vld [vmem:[%s6332 + $0x28] sm:$0xf]
    %v6344 = vld [vmem:[%s6332 + $0x2c] sm:$0xf]
    %v6345 = vld [vmem:[%s6332 + $0x30] sm:$0xf]
    %v6346 = vld [vmem:[%s6332 + $0x34] sm:$0xf]
    %v6347 = vld [vmem:[%s6332 + $0x38] sm:$0xf]
    %v6348 = vld [vmem:[%s6332 + $0x3c] sm:$0xf]
    %v6349 = vld [vmem:[%s6332 + $0x40] sm:$0xf]
    %v6350 = vld [vmem:[%s6332 + $0x44] sm:$0xf]
    %v6351 = vld [vmem:[%s6332 + $0x48] sm:$0xf]
    %v6352 = vld [vmem:[%s6332 + $0x4c] sm:$0xf]
    %v6353 = vld [vmem:[%s6332 + $0x50] sm:$0xf]
    %v6354 = vld [vmem:[%s6332 + $0x54] sm:$0xf]
    %v6355 = vld [vmem:[%s6332 + $0x58] sm:$0xf]
    %v6356 = vld [vmem:[%s6332 + $0x5c] sm:$0xf]
    %v6357 = vld [vmem:[%s6332 + $0x60] sm:$0xf]
    %v6358 = vld [vmem:[%s6332 + $0x64] sm:$0xf]
    %v6359 = vld [vmem:[%s6332 + $0x68] sm:$0xf]
    %v6360 = vld [vmem:[%s6332 + $0x6c] sm:$0xf]
    %v6361 = vld [vmem:[%s6332 + $0x70] sm:$0xf]
    %v6362 = vld [vmem:[%s6332 + $0x74] sm:$0xf]
    %v6363 = vld [vmem:[%s6332 + $0x78] sm:$0xf]
    %v6364 = vld [vmem:[%s6332 + $0x7c] sm:$0xf]
    %v6365 = vld [vmem:[%s6332 + $0x80] sm:$0xf]
    %v6366 = vld [vmem:[%s6332 + $0x84] sm:$0xf]
    %v6367 = vld [vmem:[%s6332 + $0x88] sm:$0xf]
    %v6368 = vld [vmem:[%s6332 + $0x8c] sm:$0xf]
    %v6369 = vld [vmem:[%s6332 + $0x90] sm:$0xf]
    %v6370 = vld [vmem:[%s6332 + $0x94] sm:$0xf]
    %v6371 = vld [vmem:[%s6332 + $0x98] sm:$0xf]
    %v6372 = vld [vmem:[%s6332 + $0x9c] sm:$0xf]
    %v6373 = vld [vmem:[%s6332 + $0xa0] sm:$0xf]
    %v6374 = vld [vmem:[%s6332 + $0xa4] sm:$0xf]
    %v6375 = vld [vmem:[%s6332 + $0xa8] sm:$0xf]
    %v6376 = vld [vmem:[%s6332 + $0xac] sm:$0xf]
    %v6377 = vld [vmem:[%s6332 + $0xb0] sm:$0xf]
    %v6378 = vld [vmem:[%s6332 + $0xb4] sm:$0xf]
    %v6379 = vld [vmem:[%s6332 + $0xb8] sm:$0xf]
    %v6380 = vld [vmem:[%s6332 + $0xbc] sm:$0xf]
    %v6381 = vld [vmem:[%s6332 + $0xc0] sm:$0xf]
    %v6382 = vld [vmem:[%s6332 + $0xc4] sm:$0xf]
    %v6383 = vld [vmem:[%s6332 + $0xc8] sm:$0xf]
    %v6384 = vld [vmem:[%s6332 + $0xcc] sm:$0xf]
    %v6385 = vld [vmem:[%s6332 + $0xd0] sm:$0xf]
    %v6386 = vld [vmem:[%s6332 + $0xd4] sm:$0xf]
    %v6387 = vld [vmem:[%s6332 + $0xd8] sm:$0xf]
    %v6388 = vld [vmem:[%s6332 + $0xdc] sm:$0xf]
    %v6389 = vld [vmem:[%s6332 + $0xe0] sm:$0xf]
    %v6390 = vld [vmem:[%s6332 + $0xe4] sm:$0xf]
    %v6391 = vld [vmem:[%s6332 + $0xe8] sm:$0xf]
    %v6392 = vld [vmem:[%s6332 + $0xec] sm:$0xf]
    %v6393 = vld [vmem:[%s6332 + $0xf0] sm:$0xf]
    %v6394 = vld [vmem:[%s6332 + $0xf4] sm:$0xf]
    %v6395 = vld [vmem:[%s6332 + $0xf8] sm:$0xf]
    %v6396 = vld [vmem:[%s6332 + $0xfc] sm:$0xf]
    %v6461 = vunpack.c.l.b16 %v6333
    %v6462 = vunpack.c.l.b16 %v6334
    %v6463 = vunpack.c.l.b16 %v6335
    %v6464 = vunpack.c.l.b16 %v6336
    %v6465 = vunpack.c.l.b16 %v6337
    %v6466 = vunpack.c.l.b16 %v6338
    %v6467 = vunpack.c.l.b16 %v6339
    %v6468 = vunpack.c.l.b16 %v6340
    %v6469 = vunpack.c.l.b16 %v6341
    %v6470 = vunpack.c.l.b16 %v6342
    %v6471 = vunpack.c.l.b16 %v6343
    %v6472 = vunpack.c.l.b16 %v6344
    %v6473 = vunpack.c.l.b16 %v6345
    %v6474 = vunpack.c.l.b16 %v6346
    %v6475 = vunpack.c.l.b16 %v6347
    %v6476 = vunpack.c.l.b16 %v6348
    %v6477 = vunpack.c.l.b16 %v6349
    %v6478 = vunpack.c.l.b16 %v6350
    %v6479 = vunpack.c.l.b16 %v6351
    %v6480 = vunpack.c.l.b16 %v6352
    %v6481 = vunpack.c.l.b16 %v6353
    %v6482 = vunpack.c.l.b16 %v6354
    %v6483 = vunpack.c.l.b16 %v6355
    %v6484 = vunpack.c.l.b16 %v6356
    %v6485 = vunpack.c.l.b16 %v6357
    %v6486 = vunpack.c.l.b16 %v6358
    %v6487 = vunpack.c.l.b16 %v6359
    %v6488 = vunpack.c.l.b16 %v6360
    %v6489 = vunpack.c.l.b16 %v6361
    %v6490 = vunpack.c.l.b16 %v6362
    %v6491 = vunpack.c.l.b16 %v6363
    %v6492 = vunpack.c.l.b16 %v6364
    %v6493 = vunpack.c.l.b16 %v6365
    %v6494 = vunpack.c.l.b16 %v6366
    %v6495 = vunpack.c.l.b16 %v6367
    %v6496 = vunpack.c.l.b16 %v6368
    %v6497 = vunpack.c.l.b16 %v6369
    %v6498 = vunpack.c.l.b16 %v6370
    %v6499 = vunpack.c.l.b16 %v6371
    %v6500 = vunpack.c.l.b16 %v6372
    %v6501 = vunpack.c.l.b16 %v6373
    %v6502 = vunpack.c.l.b16 %v6374
    %v6503 = vunpack.c.l.b16 %v6375
    %v6504 = vunpack.c.l.b16 %v6376
    %v6505 = vunpack.c.l.b16 %v6377
    %v6506 = vunpack.c.l.b16 %v6378
    %v6507 = vunpack.c.l.b16 %v6379
    %v6508 = vunpack.c.l.b16 %v6380
    %v6509 = vunpack.c.l.b16 %v6381
    %v6510 = vunpack.c.l.b16 %v6382
    %v6511 = vunpack.c.l.b16 %v6383
    %v6512 = vunpack.c.l.b16 %v6384
    %v6513 = vunpack.c.l.b16 %v6385
    %v6514 = vunpack.c.l.b16 %v6386
    %v6515 = vunpack.c.l.b16 %v6387
    %v6516 = vunpack.c.l.b16 %v6388
    %v6517 = vunpack.c.l.b16 %v6389
    %v6518 = vunpack.c.l.b16 %v6390
    %v6519 = vunpack.c.l.b16 %v6391
    %v6520 = vunpack.c.l.b16 %v6392
    %v6521 = vunpack.c.l.b16 %v6393
    %v6522 = vunpack.c.l.b16 %v6394
    %v6523 = vunpack.c.l.b16 %v6395
    %v6524 = vunpack.c.l.b16 %v6396
    %v6525 = vpack.c.b16 %v6462, %v6461
    %v6526 = vpack.c.b16 %v6464, %v6463
    %v6527 = vpack.c.b16 %v6466, %v6465
    %v6528 = vpack.c.b16 %v6468, %v6467
    %v6529 = vpack.c.b16 %v6470, %v6469
    %v6530 = vpack.c.b16 %v6472, %v6471
    %v6531 = vpack.c.b16 %v6474, %v6473
    %v6532 = vpack.c.b16 %v6476, %v6475
    %v6533 = vpack.c.b16 %v6478, %v6477
    %v6534 = vpack.c.b16 %v6480, %v6479
    %v6535 = vpack.c.b16 %v6482, %v6481
    %v6536 = vpack.c.b16 %v6484, %v6483
    %v6537 = vpack.c.b16 %v6486, %v6485
    %v6538 = vpack.c.b16 %v6488, %v6487
    %v6539 = vpack.c.b16 %v6490, %v6489
    %v6540 = vpack.c.b16 %v6492, %v6491
    %v6541 = vpack.c.b16 %v6494, %v6493
    %v6542 = vpack.c.b16 %v6496, %v6495
    %v6543 = vpack.c.b16 %v6498, %v6497
    %v6544 = vpack.c.b16 %v6500, %v6499
    %v6545 = vpack.c.b16 %v6502, %v6501
    %v6546 = vpack.c.b16 %v6504, %v6503
    %v6547 = vpack.c.b16 %v6506, %v6505
    %v6548 = vpack.c.b16 %v6508, %v6507
    %v6549 = vpack.c.b16 %v6510, %v6509
    %v6550 = vpack.c.b16 %v6512, %v6511
    %v6551 = vpack.c.b16 %v6514, %v6513
    %v6552 = vpack.c.b16 %v6516, %v6515
    %v6553 = vpack.c.b16 %v6518, %v6517
    %v6554 = vpack.c.b16 %v6520, %v6519
    %v6555 = vpack.c.b16 %v6522, %v6521
    %v6556 = vpack.c.b16 %v6524, %v6523
    %6589 = vmatprep.subr.bf16.mxu0 0
    %6590 = vmatpush1.bf16.msra.mxu0 %v6525
    %6591 = vmatprep.subr.bf16.mxu0 0
    %6592 = vmatpush1.bf16.msra.mxu0 %v6526
    %6593 = vmatprep.subr.bf16.mxu0 0
    %6594 = vmatpush1.bf16.msra.mxu0 %v6527
    %6595 = vmatprep.subr.bf16.mxu0 0
    %6596 = vmatpush1.bf16.msra.mxu0 %v6528
    %6597 = vmatprep.subr.bf16.mxu0 0
    %6598 = vmatpush1.bf16.msra.mxu0 %v6529
    %6599 = vmatprep.subr.bf16.mxu0 0
    %6600 = vmatpush1.bf16.msra.mxu0 %v6530
    %6601 = vmatprep.subr.bf16.mxu0 0
    %6602 = vmatpush1.bf16.msra.mxu0 %v6531
    %6603 = vmatprep.subr.bf16.mxu0 0
    %6604 = vmatpush1.bf16.msra.mxu0 %v6532
    %6605 = vmatprep.subr.bf16.mxu0 0
    %6606 = vmatpush1.bf16.msra.mxu0 %v6533
    %6607 = vmatprep.subr.bf16.mxu0 0
    %6608 = vmatpush1.bf16.msra.mxu0 %v6534
    %6609 = vmatprep.subr.bf16.mxu0 0
    %6610 = vmatpush1.bf16.msra.mxu0 %v6535
    %6611 = vmatprep.subr.bf16.mxu0 0
    %6612 = vmatpush1.bf16.msra.mxu0 %v6536
    %6613 = vmatprep.subr.bf16.mxu0 0
    %6614 = vmatpush1.bf16.msra.mxu0 %v6537
    %6615 = vmatprep.subr.bf16.mxu0 0
    %6616 = vmatpush1.bf16.msra.mxu0 %v6538
    %6617 = vmatprep.subr.bf16.mxu0 0
    %6618 = vmatpush1.bf16.msra.mxu0 %v6539
    %6619 = vmatprep.subr.bf16.mxu0 0
    %6620 = vmatpush1.bf16.msra.mxu0 %v6540
    %6621 = vmatprep.mubr.bf16.mxu0 %v6284
    %6622 = vmatmul.mubr.bf16.gmra.mrb[0].mxu0 %v6283
    %v6623 = vpop.f32.mrb[0].mxu0
    %v6624 = vadd.f32 0.0, %v6623
    %v6625 = vpop.f32.mrb[0].mxu0
    %v6626 = vpop.f32.mrb[0].mxu0
    %v6627 = vadd.f32 0.0, %v6626
    %v6628 = vpop.f32.mrb[0].mxu0
    %6629 = vmatprep.mubr.bf16.mxu0 %v6288
    %6630 = vmatmul.mubr.bf16.gmra.mrb[0].mxu0 %v6287
    %v6631 = vpop.f32.mrb[0].mxu0
    %v6632 = vadd.f32 0.0, %v6631
    %v6633 = vpop.f32.mrb[0].mxu0
    %v6634 = vpop.f32.mrb[0].mxu0
    %v6635 = vadd.f32 0.0, %v6634
    %v6636 = vpop.f32.mrb[0].mxu0
    %6637 = vmatprep.mubr.bf16.mxu0 %v6292
    %6638 = vmatmul.mubr.bf16.gmra.mrb[0].mxu0 %v6291
    %v6639 = vpop.f32.mrb[0].mxu0
    %v6640 = vadd.f32 0.0, %v6639
    %v6641 = vpop.f32.mrb[0].mxu0
    %v6642 = vpop.f32.mrb[0].mxu0
    %v6643 = vadd.f32 0.0, %v6642
    %v6644 = vpop.f32.mrb[0].mxu0
    %6645 = vmatprep.mubr.bf16.mxu0 %v6296
    %6646 = vmatmul.mubr.bf16.gmra.mrb[0].mxu0 %v6295
    %v6647 = vpop.f32.mrb[0].mxu0
    %v6648 = vadd.f32 0.0, %v6647
    %v6649 = vpop.f32.mrb[0].mxu0
    %v6650 = vpop.f32.mrb[0].mxu0
    %v6651 = vadd.f32 0.0, %v6650
    %v6652 = vpop.f32.mrb[0].mxu0
    %6653 = vmatprep.mubr.bf16.mxu0 %v6300
    %6654 = vmatmul.mubr.bf16.gmra.mrb[0].mxu0 %v6299
    %v6655 = vpop.f32.mrb[0].mxu0
    %v6656 = vadd.f32 0.0, %v6655
    %v6657 = vpop.f32.mrb[0].mxu0
    %v6658 = vpop.f32.mrb[0].mxu0
    %v6659 = vadd.f32 0.0, %v6658
    %v6660 = vpop.f32.mrb[0].mxu0
    %6661 = vmatprep.mubr.bf16.mxu0 %v6304
    %6662 = vmatmul.mubr.bf16.gmra.mrb[0].mxu0 %v6303
    %v6663 = vpop.f32.mrb[0].mxu0
    %v6664 = vadd.f32 0.0, %v6663
    %v6665 = vpop.f32.mrb[0].mxu0
    %v6666 = vpop.f32.mrb[0].mxu0
    %v6667 = vadd.f32 0.0, %v6666
    %v6668 = vpop.f32.mrb[0].mxu0
    %6669 = vmatprep.mubr.bf16.mxu0 %v6308
    %6670 = vmatmul.mubr.bf16.gmra.mrb[0].mxu0 %v6307
    %v6671 = vpop.f32.mrb[0].mxu0
    %v6672 = vadd.f32 0.0, %v6671
    %v6673 = vpop.f32.mrb[0].mxu0
    %v6674 = vpop.f32.mrb[0].mxu0
    %v6675 = vadd.f32 0.0, %v6674
    %v6676 = vpop.f32.mrb[0].mxu0
    %6677 = vmatprep.mubr.bf16.mxu0 %v6312
    %6678 = vmatmul.mubr.bf16.gmra.mrb[0].mxu0 %v6311
    %v6679 = vpop.f32.mrb[0].mxu0
    %v6680 = vadd.f32 0.0, %v6679
    %v6681 = vpop.f32.mrb[0].mxu0
    %v6682 = vpop.f32.mrb[0].mxu0
    %v6683 = vadd.f32 0.0, %v6682
    %v6684 = vpop.f32.mrb[0].mxu0
    %6685 = vdwg.mxu0
    %6686 = vmatprep.subr.bf16.mxu0 0
    %6687 = vmatpush1.bf16.msra.mxu0 %v6541
    %6688 = vmatprep.subr.bf16.mxu0 0
    %6689 = vmatpush1.bf16.msra.mxu0 %v6542
    %6690 = vmatprep.subr.bf16.mxu0 0
    %6691 = vmatpush1.bf16.msra.mxu0 %v6543
    %6692 = vmatprep.subr.bf16.mxu0 0
    %6693 = vmatpush1.bf16.msra.mxu0 %v6544
    %6694 = vmatprep.subr.bf16.mxu0 0
    %6695 = vmatpush1.bf16.msra.mxu0 %v6545
    %6696 = vmatprep.subr.bf16.mxu0 0
    %6697 = vmatpush1.bf16.msra.mxu0 %v6546
    %6698 = vmatprep.subr.bf16.mxu0 0
    %6699 = vmatpush1.bf16.msra.mxu0 %v6547
    %6700 = vmatprep.subr.bf16.mxu0 0
    %6701 = vmatpush1.bf16.msra.mxu0 %v6548
    %6702 = vmatprep.subr.bf16.mxu0 0
    %6703 = vmatpush1.bf16.msra.mxu0 %v6549
    %6704 = vmatprep.subr.bf16.mxu0 0
    %6705 = vmatpush1.bf16.msra.mxu0 %v6550
    %6706 = vmatprep.subr.bf16.mxu0 0
    %6707 = vmatpush1.bf16.msra.mxu0 %v6551
    %6708 = vmatprep.subr.bf16.mxu0 0
    %6709 = vmatpush1.bf16.msra.mxu0 %v6552
    %6710 = vmatprep.subr.bf16.mxu0 0
    %6711 = vmatpush1.bf16.msra.mxu0 %v6553
    %6712 = vmatprep.subr.bf16.mxu0 0
    %6713 = vmatpush1.bf16.msra.mxu0 %v6554
    %6714 = vmatprep.subr.bf16.mxu0 0
    %6715 = vmatpush1.bf16.msra.mxu0 %v6555
    %6716 = vmatprep.subr.bf16.mxu0 0
    %6717 = vmatpush1.bf16.msra.mxu0 %v6556
    %6718 = vmatprep.mubr.bf16.mxu0 %v6286
    %6719 = vmatmul.mubr.bf16.gmra.mrb[0].mxu0 %v6285
    %v6720 = vpop.f32.mrb[0].mxu0
    %v6721 = vadd.f32 %v6624, %v6720
    %v6722 = vpop.f32.mrb[0].mxu0
    %v6723 = vpop.f32.mrb[0].mxu0
    %v6724 = vadd.f32 %v6627, %v6723
    %v6725 = vpop.f32.mrb[0].mxu0
    %6726 = vmatprep.mubr.bf16.mxu0 %v6290
    %6727 = vmatmul.mubr.bf16.gmra.mrb[0].mxu0 %v6289
    %v6728 = vpop.f32.mrb[0].mxu0
    %v6729 = vadd.f32 %v6632, %v6728
    %v6730 = vpop.f32.mrb[0].mxu0
    %v6731 = vpop.f32.mrb[0].mxu0
    %v6732 = vadd.f32 %v6635, %v6731
    %v6733 = vpop.f32.mrb[0].mxu0
    %6734 = vmatprep.mubr.bf16.mxu0 %v6294
    %6735 = vmatmul.mubr.bf16.gmra.mrb[0].mxu0 %v6293
    %v6736 = vpop.f32.mrb[0].mxu0
    %v6737 = vadd.f32 %v6640, %v6736
    %v6738 = vpop.f32.mrb[0].mxu0
    %v6739 = vpop.f32.mrb[0].mxu0
    %v6740 = vadd.f32 %v6643, %v6739
    %v6741 = vpop.f32.mrb[0].mxu0
    %6742 = vmatprep.mubr.bf16.mxu0 %v6298
    %6743 = vmatmul.mubr.bf16.gmra.mrb[0].mxu0 %v6297
    %v6744 = vpop.f32.mrb[0].mxu0
    %v6745 = vadd.f32 %v6648, %v6744
    %v6746 = vpop.f32.mrb[0].mxu0
    %v6747 = vpop.f32.mrb[0].mxu0
    %v6748 = vadd.f32 %v6651, %v6747
    %v6749 = vpop.f32.mrb[0].mxu0
    %6750 = vmatprep.mubr.bf16.mxu0 %v6302
    %6751 = vmatmul.mubr.bf16.gmra.mrb[0].mxu0 %v6301
    %v6752 = vpop.f32.mrb[0].mxu0
    %v6753 = vadd.f32 %v6656, %v6752
    %v6754 = vpop.f32.mrb[0].mxu0
    %v6755 = vpop.f32.mrb[0].mxu0
    %v6756 = vadd.f32 %v6659, %v6755
    %v6757 = vpop.f32.mrb[0].mxu0
    %6758 = vmatprep.mubr.bf16.mxu0 %v6306
    %6759 = vmatmul.mubr.bf16.gmra.mrb[0].mxu0 %v6305
    %v6760 = vpop.f32.mrb[0].mxu0
    %v6761 = vadd.f32 %v6664, %v6760
    %v6762 = vpop.f32.mrb[0].mxu0
    %v6763 = vpop.f32.mrb[0].mxu0
    %v6764 = vadd.f32 %v6667, %v6763
    %v6765 = vpop.f32.mrb[0].mxu0
    %6766 = vmatprep.mubr.bf16.mxu0 %v6310
    %6767 = vmatmul.mubr.bf16.gmra.mrb[0].mxu0 %v6309
    %v6768 = vpop.f32.mrb[0].mxu0
    %v6769 = vadd.f32 %v6672, %v6768
    %v6770 = vpop.f32.mrb[0].mxu0
    %v6771 = vpop.f32.mrb[0].mxu0
    %v6772 = vadd.f32 %v6675, %v6771
    %v6773 = vpop.f32.mrb[0].mxu0
    %6774 = vmatprep.mubr.bf16.mxu0 %v6314
    %6775 = vmatmul.mubr.bf16.gmra.mrb[0].mxu0 %v6313
    %v6776 = vpop.f32.mrb[0].mxu0
    %v6777 = vadd.f32 %v6680, %v6776
    %v6778 = vpop.f32.mrb[0].mxu0
    %v6779 = vpop.f32.mrb[0].mxu0
    %v6780 = vadd.f32 %v6683, %v6779
    %v6781 = vpop.f32.mrb[0].mxu0
    %6782 = vdwg.mxu0
    %v6799 = vunpack.c.l.b16 %v6316
    %v6800 = vunpack.c.l.b16 %v6317
    %v6801 = vunpack.c.l.b16 %v6318
    %v6802 = vunpack.c.l.b16 %v6319
    %v6803 = vunpack.c.l.b16 %v6320
    %v6804 = vunpack.c.l.b16 %v6321
    %v6805 = vunpack.c.l.b16 %v6322
    %v6806 = vunpack.c.l.b16 %v6323
    %v6807 = vunpack.c.l.b16 %v6324
    %v6808 = vunpack.c.l.b16 %v6325
    %v6809 = vunpack.c.l.b16 %v6326
    %v6810 = vunpack.c.l.b16 %v6327
    %v6811 = vunpack.c.l.b16 %v6328
    %v6812 = vunpack.c.l.b16 %v6329
    %v6813 = vunpack.c.l.b16 %v6330
    %v6814 = vunpack.c.l.b16 %v6331
    %v6815 = vpack.c.b16 %v6800, %v6799
    %v6816 = vpack.c.b16 %v6802, %v6801
    %v6817 = vpack.c.b16 %v6804, %v6803
    %v6818 = vpack.c.b16 %v6806, %v6805
    %v6819 = vpack.c.b16 %v6808, %v6807
    %v6820 = vpack.c.b16 %v6810, %v6809
    %v6821 = vpack.c.b16 %v6812, %v6811
    %v6822 = vpack.c.b16 %v6814, %v6813
    %6831 = vmatprep.subr.bf16.mxu0 0
    %6832 = vmatpush1.bf16.msra.mxu0 %v6815
    %6833 = vmatprep.subr.bf16.mxu0 0
    %6834 = vmatpush1.bf16.msra.mxu0 %v6816
    %6835 = vmatprep.subr.bf16.mxu0 0
    %6836 = vmatpush1.bf16.msra.mxu0 %v6817
    %6837 = vmatprep.subr.bf16.mxu0 0
    %6838 = vmatpush1.bf16.msra.mxu0 %v6818
    %6839 = vmatprep.subr.bf16.mxu0 0
    %6840 = vmatpush1.bf16.msra.mxu0 %v6819
    %6841 = vmatprep.subr.bf16.mxu0 0
    %6842 = vmatpush1.bf16.msra.mxu0 %v6820
    %6843 = vmatprep.subr.bf16.mxu0 0
    %6844 = vmatpush1.bf16.msra.mxu0 %v6821
    %6845 = vmatprep.subr.bf16.mxu0 0
    %6846 = vmatpush1.bf16.msra.mxu0 %v6822
    %6847 = vmatprep.subr.bf16.mxu0 0
    %6848 = vmatpush1.bf16.msra.mxu0 0
    %6849 = vmatprep.subr.bf16.mxu0 0
    %6850 = vmatpush1.bf16.msra.mxu0 0
    %6851 = vmatprep.subr.bf16.mxu0 0
    %6852 = vmatpush1.bf16.msra.mxu0 0
    %6853 = vmatprep.subr.bf16.mxu0 0
    %6854 = vmatpush1.bf16.msra.mxu0 0
    %6855 = vmatprep.subr.bf16.mxu0 0
    %6856 = vmatpush1.bf16.msra.mxu0 0
    %6857 = vmatprep.subr.bf16.mxu0 0
    %6858 = vmatpush1.bf16.msra.mxu0 0
    %6859 = vmatprep.subr.bf16.mxu0 0
    %6860 = vmatpush1.bf16.msra.mxu0 0
    %6861 = vmatprep.subr.bf16.mxu0 0
    %6862 = vmatpush1.bf16.msra.mxu0 0
    %6863 = vmatprep.mubr.bf16.mxu0 0
    %6864 = vmatmul.mubr.bf16.gmra.mrb[0].mxu0 %v5887
    %v6865 = vpop.f32.mrb[0].mxu0
    %v6866 = vadd.f32 %v6721, %v6865
    %v6867 = vpop.f32.mrb[0].mxu0
    %v6868 = vpop.f32.mrb[0].mxu0
    %v6869 = vadd.f32 %v6724, %v6868
    %v6870 = vpop.f32.mrb[0].mxu0
    %6871 = vmatprep.mubr.bf16.mxu0 0
    %6872 = vmatmul.mubr.bf16.gmra.mrb[0].mxu0 %v5888
    %v6873 = vpop.f32.mrb[0].mxu0
    %v6874 = vadd.f32 %v6729, %v6873
    %v6875 = vpop.f32.mrb[0].mxu0
    %v6876 = vpop.f32.mrb[0].mxu0
    %v6877 = vadd.f32 %v6732, %v6876
    %v6878 = vpop.f32.mrb[0].mxu0
    %6879 = vmatprep.mubr.bf16.mxu0 0
    %6880 = vmatmul.mubr.bf16.gmra.mrb[0].mxu0 %v5889
    %v6881 = vpop.f32.mrb[0].mxu0
    %v6882 = vadd.f32 %v6737, %v6881
    %v6883 = vpop.f32.mrb[0].mxu0
    %v6884 = vpop.f32.mrb[0].mxu0
    %v6885 = vadd.f32 %v6740, %v6884
    %v6886 = vpop.f32.mrb[0].mxu0
    %6887 = vmatprep.mubr.bf16.mxu0 0
    %6888 = vmatmul.mubr.bf16.gmra.mrb[0].mxu0 %v5890
    %v6889 = vpop.f32.mrb[0].mxu0
    %v6890 = vadd.f32 %v6745, %v6889
    %v6891 = vpop.f32.mrb[0].mxu0
    %v6892 = vpop.f32.mrb[0].mxu0
    %v6893 = vadd.f32 %v6748, %v6892
    %v6894 = vpop.f32.mrb[0].mxu0
    %6895 = vmatprep.mubr.bf16.mxu0 0
    %6896 = vmatmul.mubr.bf16.gmra.mrb[0].mxu0 %v5891
    %v6897 = vpop.f32.mrb[0].mxu0
    %v6898 = vadd.f32 %v6753, %v6897
    %v6899 = vpop.f32.mrb[0].mxu0
    %v6900 = vpop.f32.mrb[0].mxu0
    %v6901 = vadd.f32 %v6756, %v6900
    %v6902 = vpop.f32.mrb[0].mxu0
    %6903 = vmatprep.mubr.bf16.mxu0 0
    %6904 = vmatmul.mubr.bf16.gmra.mrb[0].mxu0 %v5892
    %v6905 = vpop.f32.mrb[0].mxu0
    %v6906 = vadd.f32 %v6761, %v6905
    %v6907 = vpop.f32.mrb[0].mxu0
    %v6908 = vpop.f32.mrb[0].mxu0
    %v6909 = vadd.f32 %v6764, %v6908
    %v6910 = vpop.f32.mrb[0].mxu0
    %6911 = vmatprep.mubr.bf16.mxu0 0
    %6912 = vmatmul.mubr.bf16.gmra.mrb[0].mxu0 %v5893
    %v6913 = vpop.f32.mrb[0].mxu0
    %v6914 = vadd.f32 %v6769, %v6913
    %v6915 = vpop.f32.mrb[0].mxu0
    %v6916 = vpop.f32.mrb[0].mxu0
    %v6917 = vadd.f32 %v6772, %v6916
    %v6918 = vpop.f32.mrb[0].mxu0
    %6919 = vmatprep.mubr.bf16.mxu0 0
    %6920 = vmatmul.mubr.bf16.gmra.mrb[0].mxu0 %v5894
    %v6921 = vpop.f32.mrb[0].mxu0
    %v6922 = vadd.f32 %v6777, %v6921
    %v6923 = vpop.f32.mrb[0].mxu0
    %v6924 = vpop.f32.mrb[0].mxu0
    %v6925 = vadd.f32 %v6780, %v6924
    %v6926 = vpop.f32.mrb[0].mxu0
    %6927 = vdwg.mxu0
    %s6928 = scalar_lea.vmem %s9, 1
    %v6929 = vld [vmem:[%s6928] sm:$0x1]
    %v6931 = vlaneseq
    %v6932 = vshrl.u32 %v6931, 7
    %v6933 = vsub.s32 0, %v6932
    %v6934 = vrot.slane %v6929, %v6933
    %v6936 = vadd.f32 %v6866, %v6934
    %v6937 = vadd.f32 %v6869, %v6934
    %v6938 = vadd.f32 %v6874, %v6934
    %v6939 = vadd.f32 %v6877, %v6934
    %v6940 = vadd.f32 %v6882, %v6934
    %v6941 = vadd.f32 %v6885, %v6934
    %v6942 = vadd.f32 %v6890, %v6934
    %v6943 = vadd.f32 %v6893, %v6934
    %v6944 = vadd.f32 %v6898, %v6934
    %v6945 = vadd.f32 %v6901, %v6934
    %v6946 = vadd.f32 %v6906, %v6934
    %v6947 = vadd.f32 %v6909, %v6934
    %v6948 = vadd.f32 %v6914, %v6934
    %v6949 = vadd.f32 %v6917, %v6934
    %v6950 = vadd.f32 %v6922, %v6934
    %v6951 = vadd.f32 %v6925, %v6934
    %v6952 = vmax.f32 %v6936, 0.0
    %v6953 = vmax.f32 %v6937, 0.0
    %v6954 = vmax.f32 %v6938, 0.0
    %v6955 = vmax.f32 %v6939, 0.0
    %v6956 = vmax.f32 %v6940, 0.0
    %v6957 = vmax.f32 %v6941, 0.0
    %v6958 = vmax.f32 %v6942, 0.0
    %v6959 = vmax.f32 %v6943, 0.0
    %v6960 = vmax.f32 %v6944, 0.0
    %v6961 = vmax.f32 %v6945, 0.0
    %v6962 = vmax.f32 %v6946, 0.0
    %v6963 = vmax.f32 %v6947, 0.0
    %v6964 = vmax.f32 %v6948, 0.0
    %v6965 = vmax.f32 %v6949, 0.0
    %v6966 = vmax.f32 %v6950, 0.0
    %v6967 = vmax.f32 %v6951, 0.0
    %v6968 = vpack.c.bf16 %v6953, %v6952
    %v6969 = vpack.c.bf16 %v6955, %v6954
    %v6970 = vpack.c.bf16 %v6957, %v6956
    %v6971 = vpack.c.bf16 %v6959, %v6958
    %v6972 = vpack.c.bf16 %v6961, %v6960
    %v6973 = vpack.c.bf16 %v6963, %v6962
    %v6974 = vpack.c.bf16 %v6965, %v6964
    %v6975 = vpack.c.bf16 %v6967, %v6966
    %6976 = vmatprep.subr.bf16.mxu0 0
    %6977 = vmatpush1.bf16.msra.mxu0 %v6968
    %6978 = vmatprep.subr.bf16.mxu0 0
    %6979 = vmatpush1.bf16.msra.mxu0 %v6969
    %6980 = vmatprep.subr.bf16.mxu0 0
    %6981 = vmatpush1.bf16.msra.mxu0 %v6970
    %6982 = vmatprep.subr.bf16.mxu0 0
    %6983 = vmatpush1.bf16.msra.mxu0 %v6971
    %6984 = vmatprep.subr.bf16.mxu0 0
    %6985 = vmatpush1.bf16.msra.mxu0 %v6972
    %6986 = vmatprep.subr.bf16.mxu0 0
    %6987 = vmatpush1.bf16.msra.mxu0 %v6973
    %6988 = vmatprep.subr.bf16.mxu0 0
    %6989 = vmatpush1.bf16.msra.mxu0 %v6974
    %6990 = vmatprep.subr.bf16.mxu0 0
    %6991 = vmatpush1.bf16.msra.mxu0 %v6975
    %6992 = vmatprep.subr.bf16.mxu0 0
    %6993 = vmatpush1.bf16.msra.mxu0 0
    %6994 = vmatprep.subr.bf16.mxu0 0
    %6995 = vmatpush1.bf16.msra.mxu0 0
    %6996 = vmatprep.subr.bf16.mxu0 0
    %6997 = vmatpush1.bf16.msra.mxu0 0
    %6998 = vmatprep.subr.bf16.mxu0 0
    %6999 = vmatpush1.bf16.msra.mxu0 0
    %7000 = vmatprep.subr.bf16.mxu0 0
    %7001 = vmatpush1.bf16.msra.mxu0 0
    %7002 = vmatprep.subr.bf16.mxu0 0
    %7003 = vmatpush1.bf16.msra.mxu0 0
    %7004 = vmatprep.subr.bf16.mxu0 0
    %7005 = vmatpush1.bf16.msra.mxu0 0
    %7006 = vmatprep.subr.bf16.mxu0 0
    %7007 = vmatpush1.bf16.msra.mxu0 0
    %7008 = vmatprep.mubr.bf16.mxu0 0
    %7009 = vmatmul.mubr.bf16.gmra.mrb[0].mxu0 %v1739
    %v7010 = vpop.f32.mrb[0].mxu0
    %v7011 = vadd.f32 0.0, %v7010
    %v7012 = vpop.f32.mrb[0].mxu0
    %v7013 = vpop.f32.mrb[0].mxu0
    %v7014 = vadd.f32 0.0, %v7013
    %v7015 = vpop.f32.mrb[0].mxu0
    %7016 = vmatprep.mubr.bf16.mxu0 0
    %7017 = vmatmul.mubr.bf16.gmra.mrb[0].mxu0 %v1740
    %v7018 = vpop.f32.mrb[0].mxu0
    %v7019 = vadd.f32 0.0, %v7018
    %v7020 = vpop.f32.mrb[0].mxu0
    %v7021 = vpop.f32.mrb[0].mxu0
    %v7022 = vadd.f32 0.0, %v7021
    %v7023 = vpop.f32.mrb[0].mxu0
    %7024 = vmatprep.mubr.bf16.mxu0 0
    %7025 = vmatmul.mubr.bf16.gmra.mrb[0].mxu0 %v1741
    %v7026 = vpop.f32.mrb[0].mxu0
    %v7027 = vadd.f32 0.0, %v7026
    %v7028 = vpop.f32.mrb[0].mxu0
    %v7029 = vpop.f32.mrb[0].mxu0
    %v7030 = vadd.f32 0.0, %v7029
    %v7031 = vpop.f32.mrb[0].mxu0
    %7032 = vmatprep.mubr.bf16.mxu0 0
    %7033 = vmatmul.mubr.bf16.gmra.mrb[0].mxu0 %v1742
    %v7034 = vpop.f32.mrb[0].mxu0
    %v7035 = vadd.f32 0.0, %v7034
    %v7036 = vpop.f32.mrb[0].mxu0
    %v7037 = vpop.f32.mrb[0].mxu0
    %v7038 = vadd.f32 0.0, %v7037
    %v7039 = vpop.f32.mrb[0].mxu0
    %7040 = vmatprep.mubr.bf16.mxu0 0
    %7041 = vmatmul.mubr.bf16.gmra.mrb[0].mxu0 %v1743
    %v7042 = vpop.f32.mrb[0].mxu0
    %v7043 = vadd.f32 0.0, %v7042
    %v7044 = vpop.f32.mrb[0].mxu0
    %v7045 = vpop.f32.mrb[0].mxu0
    %v7046 = vadd.f32 0.0, %v7045
    %v7047 = vpop.f32.mrb[0].mxu0
    %7048 = vmatprep.mubr.bf16.mxu0 0
    %7049 = vmatmul.mubr.bf16.gmra.mrb[0].mxu0 %v1744
    %v7050 = vpop.f32.mrb[0].mxu0
    %v7051 = vadd.f32 0.0, %v7050
    %v7052 = vpop.f32.mrb[0].mxu0
    %v7053 = vpop.f32.mrb[0].mxu0
    %v7054 = vadd.f32 0.0, %v7053
    %v7055 = vpop.f32.mrb[0].mxu0
    %7056 = vmatprep.mubr.bf16.mxu0 0
    %7057 = vmatmul.mubr.bf16.gmra.mrb[0].mxu0 %v1745
    %v7058 = vpop.f32.mrb[0].mxu0
    %v7059 = vadd.f32 0.0, %v7058
    %v7060 = vpop.f32.mrb[0].mxu0
    %v7061 = vpop.f32.mrb[0].mxu0
    %v7062 = vadd.f32 0.0, %v7061
    %v7063 = vpop.f32.mrb[0].mxu0
    %7064 = vmatprep.mubr.bf16.mxu0 0
    %7065 = vmatmul.mubr.bf16.gmra.mrb[0].mxu0 %v1746
    %v7066 = vpop.f32.mrb[0].mxu0
    %v7067 = vadd.f32 0.0, %v7066
    %v7068 = vpop.f32.mrb[0].mxu0
    %v7069 = vpop.f32.mrb[0].mxu0
    %v7070 = vadd.f32 0.0, %v7069
    %v7071 = vpop.f32.mrb[0].mxu0
    %7072 = vdwg.mxu0
    %v7073 = vmul.f32 %v1855, %v7011
    %v7074 = vmul.f32 %v1860, %v7014
    %v7075 = vmul.f32 %v1865, %v7019
    %v7076 = vmul.f32 %v1870, %v7022
    %v7077 = vmul.f32 %v1875, %v7027
    %v7078 = vmul.f32 %v1880, %v7030
    %v7079 = vmul.f32 %v1885, %v7035
    %v7080 = vmul.f32 %v1890, %v7038
    %v7081 = vmul.f32 %v1895, %v7043
    %v7082 = vmul.f32 %v1900, %v7046
    %v7083 = vmul.f32 %v1905, %v7051
    %v7084 = vmul.f32 %v1910, %v7054
    %v7085 = vmul.f32 %v1915, %v7059
    %v7086 = vmul.f32 %v1920, %v7062
    %v7087 = vmul.f32 %v1925, %v7067
    %v7088 = vmul.f32 %v1930, %v7070
    %v7089 = vmul.f32 %v1950, %v7011
    %v7090 = vmul.f32 %v1954, %v7014
    %v7091 = vmul.f32 %v1958, %v7019
    %v7092 = vmul.f32 %v1962, %v7022
    %v7093 = vmul.f32 %v1966, %v7027
    %v7094 = vmul.f32 %v1970, %v7030
    %v7095 = vmul.f32 %v1974, %v7035
    %v7096 = vmul.f32 %v1978, %v7038
    %v7097 = vmul.f32 %v1982, %v7043
    %v7098 = vmul.f32 %v1986, %v7046
    %v7099 = vmul.f32 %v1990, %v7051
    %v7100 = vmul.f32 %v1994, %v7054
    %v7101 = vmul.f32 %v1998, %v7059
    %v7102 = vmul.f32 %v2002, %v7062
    %v7103 = vmul.f32 %v2006, %v7067
    %v7104 = vmul.f32 %v2010, %v7070
    %v7105 = vmul.f32 %v2030, %v7011
    %v7106 = vmul.f32 %v2034, %v7014
    %v7107 = vmul.f32 %v2038, %v7019
    %v7108 = vmul.f32 %v2042, %v7022
    %v7109 = vmul.f32 %v2046, %v7027
    %v7110 = vmul.f32 %v2050, %v7030
    %v7111 = vmul.f32 %v2054, %v7035
    %v7112 = vmul.f32 %v2058, %v7038
    %v7113 = vmul.f32 %v2062, %v7043
    %v7114 = vmul.f32 %v2066, %v7046
    %v7115 = vmul.f32 %v2070, %v7051
    %v7116 = vmul.f32 %v2074, %v7054
    %v7117 = vmul.f32 %v2078, %v7059
    %v7118 = vmul.f32 %v2082, %v7062
    %v7119 = vmul.f32 %v2086, %v7067
    %v7120 = vmul.f32 %v2090, %v7070
    %v7121 = vmul.f32 %v2110, %v7011
    %v7122 = vmul.f32 %v2114, %v7014
    %v7123 = vmul.f32 %v2118, %v7019
    %v7124 = vmul.f32 %v2122, %v7022
    %v7125 = vmul.f32 %v2126, %v7027
    %v7126 = vmul.f32 %v2130, %v7030
    %v7127 = vmul.f32 %v2134, %v7035
    %v7128 = vmul.f32 %v2138, %v7038
    %v7129 = vmul.f32 %v2142, %v7043
    %v7130 = vmul.f32 %v2146, %v7046
    %v7131 = vmul.f32 %v2150, %v7051
    %v7132 = vmul.f32 %v2154, %v7054
    %v7133 = vmul.f32 %v2158, %v7059
    %v7134 = vmul.f32 %v2162, %v7062
    %v7135 = vmul.f32 %v2166, %v7067
    %v7136 = vmul.f32 %v2170, %v7070
    %v7137 = vmul.f32 %v2190, %v7011
    %v7138 = vmul.f32 %v2194, %v7014
    %v7139 = vmul.f32 %v2198, %v7019
    %v7140 = vmul.f32 %v2202, %v7022
    %v7141 = vmul.f32 %v2206, %v7027
    %v7142 = vmul.f32 %v2210, %v7030
    %v7143 = vmul.f32 %v2214, %v7035
    %v7144 = vmul.f32 %v2218, %v7038
    %v7145 = vmul.f32 %v2222, %v7043
    %v7146 = vmul.f32 %v2226, %v7046
    %v7147 = vmul.f32 %v2230, %v7051
    %v7148 = vmul.f32 %v2234, %v7054
    %v7149 = vmul.f32 %v2238, %v7059
    %v7150 = vmul.f32 %v2242, %v7062
    %v7151 = vmul.f32 %v2246, %v7067
    %v7152 = vmul.f32 %v2250, %v7070
    %v7153 = vmul.f32 %v2270, %v7011
    %v7154 = vmul.f32 %v2274, %v7014
    %v7155 = vmul.f32 %v2278, %v7019
    %v7156 = vmul.f32 %v2282, %v7022
    %v7157 = vmul.f32 %v2286, %v7027
    %v7158 = vmul.f32 %v2290, %v7030
    %v7159 = vmul.f32 %v2294, %v7035
    %v7160 = vmul.f32 %v2298, %v7038
    %v7161 = vmul.f32 %v2302, %v7043
    %v7162 = vmul.f32 %v2306, %v7046
    %v7163 = vmul.f32 %v2310, %v7051
    %v7164 = vmul.f32 %v2314, %v7054
    %v7165 = vmul.f32 %v2318, %v7059
    %v7166 = vmul.f32 %v2322, %v7062
    %v7167 = vmul.f32 %v2326, %v7067
    %v7168 = vmul.f32 %v2330, %v7070
    %v7169 = vmul.f32 %v2350, %v7011
    %v7170 = vmul.f32 %v2354, %v7014
    %v7171 = vmul.f32 %v2358, %v7019
    %v7172 = vmul.f32 %v2362, %v7022
    %v7173 = vmul.f32 %v2366, %v7027
    %v7174 = vmul.f32 %v2370, %v7030
    %v7175 = vmul.f32 %v2374, %v7035
    %v7176 = vmul.f32 %v2378, %v7038
    %v7177 = vmul.f32 %v2382, %v7043
    %v7178 = vmul.f32 %v2386, %v7046
    %v7179 = vmul.f32 %v2390, %v7051
    %v7180 = vmul.f32 %v2394, %v7054
    %v7181 = vmul.f32 %v2398, %v7059
    %v7182 = vmul.f32 %v2402, %v7062
    %v7183 = vmul.f32 %v2406, %v7067
    %v7184 = vmul.f32 %v2410, %v7070
    %v7185 = vmul.f32 %v2430, %v7011
    %v7186 = vmul.f32 %v2434, %v7014
    %v7187 = vmul.f32 %v2438, %v7019
    %v7188 = vmul.f32 %v2442, %v7022
    %v7189 = vmul.f32 %v2446, %v7027
    %v7190 = vmul.f32 %v2450, %v7030
    %v7191 = vmul.f32 %v2454, %v7035
    %v7192 = vmul.f32 %v2458, %v7038
    %v7193 = vmul.f32 %v2462, %v7043
    %v7194 = vmul.f32 %v2466, %v7046
    %v7195 = vmul.f32 %v2470, %v7051
    %v7196 = vmul.f32 %v2474, %v7054
    %v7197 = vmul.f32 %v2478, %v7059
    %v7198 = vmul.f32 %v2482, %v7062
    %v7199 = vmul.f32 %v2486, %v7067
    %v7200 = vmul.f32 %v2490, %v7070
    %v7201 = vmul.f32 %v2510, %v7011
    %v7202 = vmul.f32 %v2514, %v7014
    %v7203 = vmul.f32 %v2518, %v7019
    %v7204 = vmul.f32 %v2522, %v7022
    %v7205 = vmul.f32 %v2526, %v7027
    %v7206 = vmul.f32 %v2530, %v7030
    %v7207 = vmul.f32 %v2534, %v7035
    %v7208 = vmul.f32 %v2538, %v7038
    %v7209 = vmul.f32 %v2542, %v7043
    %v7210 = vmul.f32 %v2546, %v7046
    %v7211 = vmul.f32 %v2550, %v7051
    %v7212 = vmul.f32 %v2554, %v7054
    %v7213 = vmul.f32 %v2558, %v7059
    %v7214 = vmul.f32 %v2562, %v7062
    %v7215 = vmul.f32 %v2566, %v7067
    %v7216 = vmul.f32 %v2570, %v7070
    %v7217 = vmul.f32 %v2590, %v7011
    %v7218 = vmul.f32 %v2594, %v7014
    %v7219 = vmul.f32 %v2598, %v7019
    %v7220 = vmul.f32 %v2602, %v7022
    %v7221 = vmul.f32 %v2606, %v7027
    %v7222 = vmul.f32 %v2610, %v7030
    %v7223 = vmul.f32 %v2614, %v7035
    %v7224 = vmul.f32 %v2618, %v7038
    %v7225 = vmul.f32 %v2622, %v7043
    %v7226 = vmul.f32 %v2626, %v7046
    %v7227 = vmul.f32 %v2630, %v7051
    %v7228 = vmul.f32 %v2634, %v7054
    %v7229 = vmul.f32 %v2638, %v7059
    %v7230 = vmul.f32 %v2642, %v7062
    %v7231 = vmul.f32 %v2646, %v7067
    %v7232 = vmul.f32 %v2650, %v7070
    %v7233 = vmul.f32 %v2670, %v7011
    %v7234 = vmul.f32 %v2674, %v7014
    %v7235 = vmul.f32 %v2678, %v7019
    %v7236 = vmul.f32 %v2682, %v7022
    %v7237 = vmul.f32 %v2686, %v7027
    %v7238 = vmul.f32 %v2690, %v7030
    %v7239 = vmul.f32 %v2694, %v7035
    %v7240 = vmul.f32 %v2698, %v7038
    %v7241 = vmul.f32 %v2702, %v7043
    %v7242 = vmul.f32 %v2706, %v7046
    %v7243 = vmul.f32 %v2710, %v7051
    %v7244 = vmul.f32 %v2714, %v7054
    %v7245 = vmul.f32 %v2718, %v7059
    %v7246 = vmul.f32 %v2722, %v7062
    %v7247 = vmul.f32 %v2726, %v7067
    %v7248 = vmul.f32 %v2730, %v7070
    %v7249 = vpack.c.bf16 %v7074, %v7073
    %v7250 = vpack.c.bf16 %v7090, %v7089
    %v7251 = vpack.c.bf16 %v7106, %v7105
    %v7252 = vpack.c.bf16 %v7122, %v7121
    %v7253 = vpack.c.bf16 %v7138, %v7137
    %v7254 = vpack.c.bf16 %v7154, %v7153
    %v7255 = vpack.c.bf16 %v7170, %v7169
    %v7256 = vpack.c.bf16 %v7186, %v7185
    %v7257 = vpack.c.bf16 %v7202, %v7201
    %v7258 = vpack.c.bf16 %v7218, %v7217
    %v7259 = vpack.c.bf16 %v7234, %v7233
    %v7260 = vpack.c.bf16 %v7076, %v7075
    %v7261 = vpack.c.bf16 %v7092, %v7091
    %v7262 = vpack.c.bf16 %v7108, %v7107
    %v7263 = vpack.c.bf16 %v7124, %v7123
    %v7264 = vpack.c.bf16 %v7140, %v7139
    %v7265 = vpack.c.bf16 %v7156, %v7155
    %v7266 = vpack.c.bf16 %v7172, %v7171
    %v7267 = vpack.c.bf16 %v7188, %v7187
    %v7268 = vpack.c.bf16 %v7204, %v7203
    %v7269 = vpack.c.bf16 %v7220, %v7219
    %v7270 = vpack.c.bf16 %v7236, %v7235
    %v7271 = vpack.c.bf16 %v7078, %v7077
    %v7272 = vpack.c.bf16 %v7094, %v7093
    %v7273 = vpack.c.bf16 %v7110, %v7109
    %v7274 = vpack.c.bf16 %v7126, %v7125
    %v7275 = vpack.c.bf16 %v7142, %v7141
    %v7276 = vpack.c.bf16 %v7158, %v7157
    %v7277 = vpack.c.bf16 %v7174, %v7173
    %v7278 = vpack.c.bf16 %v7190, %v7189
    %v7279 = vpack.c.bf16 %v7206, %v7205
    %v7280 = vpack.c.bf16 %v7222, %v7221
    %v7281 = vpack.c.bf16 %v7238, %v7237
    %v7282 = vpack.c.bf16 %v7080, %v7079
    %v7283 = vpack.c.bf16 %v7096, %v7095
    %v7284 = vpack.c.bf16 %v7112, %v7111
    %v7285 = vpack.c.bf16 %v7128, %v7127
    %v7286 = vpack.c.bf16 %v7144, %v7143
    %v7287 = vpack.c.bf16 %v7160, %v7159
    %v7288 = vpack.c.bf16 %v7176, %v7175
    %v7289 = vpack.c.bf16 %v7192, %v7191
    %v7290 = vpack.c.bf16 %v7208, %v7207
    %v7291 = vpack.c.bf16 %v7224, %v7223
    %v7292 = vpack.c.bf16 %v7240, %v7239
    %v7293 = vpack.c.bf16 %v7082, %v7081
    %v7294 = vpack.c.bf16 %v7098, %v7097
    %v7295 = vpack.c.bf16 %v7114, %v7113
    %v7296 = vpack.c.bf16 %v7130, %v7129
    %v7297 = vpack.c.bf16 %v7146, %v7145
    %v7298 = vpack.c.bf16 %v7162, %v7161
    %v7299 = vpack.c.bf16 %v7178, %v7177
    %v7300 = vpack.c.bf16 %v7194, %v7193
    %v7301 = vpack.c.bf16 %v7210, %v7209
    %v7302 = vpack.c.bf16 %v7226, %v7225
    %v7303 = vpack.c.bf16 %v7242, %v7241
    %v7304 = vpack.c.bf16 %v7084, %v7083
    %v7305 = vpack.c.bf16 %v7100, %v7099
    %v7306 = vpack.c.bf16 %v7116, %v7115
    %v7307 = vpack.c.bf16 %v7132, %v7131
    %v7308 = vpack.c.bf16 %v7148, %v7147
    %v7309 = vpack.c.bf16 %v7164, %v7163
    %v7310 = vpack.c.bf16 %v7180, %v7179
    %v7311 = vpack.c.bf16 %v7196, %v7195
    %v7312 = vpack.c.bf16 %v7212, %v7211
    %v7313 = vpack.c.bf16 %v7228, %v7227
    %v7314 = vpack.c.bf16 %v7244, %v7243
    %v7315 = vpack.c.bf16 %v7086, %v7085
    %v7316 = vpack.c.bf16 %v7102, %v7101
    %v7317 = vpack.c.bf16 %v7118, %v7117
    %v7318 = vpack.c.bf16 %v7134, %v7133
    %v7319 = vpack.c.bf16 %v7150, %v7149
    %v7320 = vpack.c.bf16 %v7166, %v7165
    %v7321 = vpack.c.bf16 %v7182, %v7181
    %v7322 = vpack.c.bf16 %v7198, %v7197
    %v7323 = vpack.c.bf16 %v7214, %v7213
    %v7324 = vpack.c.bf16 %v7230, %v7229
    %v7325 = vpack.c.bf16 %v7246, %v7245
    %v7326 = vpack.c.bf16 %v7088, %v7087
    %v7327 = vpack.c.bf16 %v7104, %v7103
    %v7328 = vpack.c.bf16 %v7120, %v7119
    %v7329 = vpack.c.bf16 %v7136, %v7135
    %v7330 = vpack.c.bf16 %v7152, %v7151
    %v7331 = vpack.c.bf16 %v7168, %v7167
    %v7332 = vpack.c.bf16 %v7184, %v7183
    %v7333 = vpack.c.bf16 %v7200, %v7199
    %v7334 = vpack.c.bf16 %v7216, %v7215
    %v7335 = vpack.c.bf16 %v7232, %v7231
    %v7336 = vpack.c.bf16 %v7248, %v7247
    %v7337 = vmul.f32 %v1855, %v6952
    %v7338 = vmul.f32 %v1860, %v6953
    %v7339 = vmul.f32 %v1865, %v6954
    %v7340 = vmul.f32 %v1870, %v6955
    %v7341 = vmul.f32 %v1875, %v6956
    %v7342 = vmul.f32 %v1880, %v6957
    %v7343 = vmul.f32 %v1885, %v6958
    %v7344 = vmul.f32 %v1890, %v6959
    %v7345 = vmul.f32 %v1895, %v6960
    %v7346 = vmul.f32 %v1900, %v6961
    %v7347 = vmul.f32 %v1905, %v6962
    %v7348 = vmul.f32 %v1910, %v6963
    %v7349 = vmul.f32 %v1915, %v6964
    %v7350 = vmul.f32 %v1920, %v6965
    %v7351 = vmul.f32 %v1925, %v6966
    %v7352 = vmul.f32 %v1930, %v6967
    %v7353 = vmul.f32 %v1950, %v6952
    %v7354 = vmul.f32 %v1954, %v6953
    %v7355 = vmul.f32 %v1958, %v6954
    %v7356 = vmul.f32 %v1962, %v6955
    %v7357 = vmul.f32 %v1966, %v6956
    %v7358 = vmul.f32 %v1970, %v6957
    %v7359 = vmul.f32 %v1974, %v6958
    %v7360 = vmul.f32 %v1978, %v6959
    %v7361 = vmul.f32 %v1982, %v6960
    %v7362 = vmul.f32 %v1986, %v6961
    %v7363 = vmul.f32 %v1990, %v6962
    %v7364 = vmul.f32 %v1994, %v6963
    %v7365 = vmul.f32 %v1998, %v6964
    %v7366 = vmul.f32 %v2002, %v6965
    %v7367 = vmul.f32 %v2006, %v6966
    %v7368 = vmul.f32 %v2010, %v6967
    %v7369 = vmul.f32 %v2030, %v6952
    %v7370 = vmul.f32 %v2034, %v6953
    %v7371 = vmul.f32 %v2038, %v6954
    %v7372 = vmul.f32 %v2042, %v6955
    %v7373 = vmul.f32 %v2046, %v6956
    %v7374 = vmul.f32 %v2050, %v6957
    %v7375 = vmul.f32 %v2054, %v6958
    %v7376 = vmul.f32 %v2058, %v6959
    %v7377 = vmul.f32 %v2062, %v6960
    %v7378 = vmul.f32 %v2066, %v6961
    %v7379 = vmul.f32 %v2070, %v6962
    %v7380 = vmul.f32 %v2074, %v6963
    %v7381 = vmul.f32 %v2078, %v6964
    %v7382 = vmul.f32 %v2082, %v6965
    %v7383 = vmul.f32 %v2086, %v6966
    %v7384 = vmul.f32 %v2090, %v6967
    %v7385 = vmul.f32 %v2110, %v6952
    %v7386 = vmul.f32 %v2114, %v6953
    %v7387 = vmul.f32 %v2118, %v6954
    %v7388 = vmul.f32 %v2122, %v6955
    %v7389 = vmul.f32 %v2126, %v6956
    %v7390 = vmul.f32 %v2130, %v6957
    %v7391 = vmul.f32 %v2134, %v6958
    %v7392 = vmul.f32 %v2138, %v6959
    %v7393 = vmul.f32 %v2142, %v6960
    %v7394 = vmul.f32 %v2146, %v6961
    %v7395 = vmul.f32 %v2150, %v6962
    %v7396 = vmul.f32 %v2154, %v6963
    %v7397 = vmul.f32 %v2158, %v6964
    %v7398 = vmul.f32 %v2162, %v6965
    %v7399 = vmul.f32 %v2166, %v6966
    %v7400 = vmul.f32 %v2170, %v6967
    %v7401 = vmul.f32 %v2190, %v6952
    %v7402 = vmul.f32 %v2194, %v6953
    %v7403 = vmul.f32 %v2198, %v6954
    %v7404 = vmul.f32 %v2202, %v6955
    %v7405 = vmul.f32 %v2206, %v6956
    %v7406 = vmul.f32 %v2210, %v6957
    %v7407 = vmul.f32 %v2214, %v6958
    %v7408 = vmul.f32 %v2218, %v6959
    %v7409 = vmul.f32 %v2222, %v6960
    %v7410 = vmul.f32 %v2226, %v6961
    %v7411 = vmul.f32 %v2230, %v6962
    %v7412 = vmul.f32 %v2234, %v6963
    %v7413 = vmul.f32 %v2238, %v6964
    %v7414 = vmul.f32 %v2242, %v6965
    %v7415 = vmul.f32 %v2246, %v6966
    %v7416 = vmul.f32 %v2250, %v6967
    %v7417 = vmul.f32 %v2270, %v6952
    %v7418 = vmul.f32 %v2274, %v6953
    %v7419 = vmul.f32 %v2278, %v6954
    %v7420 = vmul.f32 %v2282, %v6955
    %v7421 = vmul.f32 %v2286, %v6956
    %v7422 = vmul.f32 %v2290, %v6957
    %v7423 = vmul.f32 %v2294, %v6958
    %v7424 = vmul.f32 %v2298, %v6959
    %v7425 = vmul.f32 %v2302, %v6960
    %v7426 = vmul.f32 %v2306, %v6961
    %v7427 = vmul.f32 %v2310, %v6962
    %v7428 = vmul.f32 %v2314, %v6963
    %v7429 = vmul.f32 %v2318, %v6964
    %v7430 = vmul.f32 %v2322, %v6965
    %v7431 = vmul.f32 %v2326, %v6966
    %v7432 = vmul.f32 %v2330, %v6967
    %v7433 = vmul.f32 %v2350, %v6952
    %v7434 = vmul.f32 %v2354, %v6953
    %v7435 = vmul.f32 %v2358, %v6954
    %v7436 = vmul.f32 %v2362, %v6955
    %v7437 = vmul.f32 %v2366, %v6956
    %v7438 = vmul.f32 %v2370, %v6957
    %v7439 = vmul.f32 %v2374, %v6958
    %v7440 = vmul.f32 %v2378, %v6959
    %v7441 = vmul.f32 %v2382, %v6960
    %v7442 = vmul.f32 %v2386, %v6961
    %v7443 = vmul.f32 %v2390, %v6962
    %v7444 = vmul.f32 %v2394, %v6963
    %v7445 = vmul.f32 %v2398, %v6964
    %v7446 = vmul.f32 %v2402, %v6965
    %v7447 = vmul.f32 %v2406, %v6966
    %v7448 = vmul.f32 %v2410, %v6967
    %v7449 = vmul.f32 %v2430, %v6952
    %v7450 = vmul.f32 %v2434, %v6953
    %v7451 = vmul.f32 %v2438, %v6954
    %v7452 = vmul.f32 %v2442, %v6955
    %v7453 = vmul.f32 %v2446, %v6956
    %v7454 = vmul.f32 %v2450, %v6957
    %v7455 = vmul.f32 %v2454, %v6958
    %v7456 = vmul.f32 %v2458, %v6959
    %v7457 = vmul.f32 %v2462, %v6960
    %v7458 = vmul.f32 %v2466, %v6961
    %v7459 = vmul.f32 %v2470, %v6962
    %v7460 = vmul.f32 %v2474, %v6963
    %v7461 = vmul.f32 %v2478, %v6964
    %v7462 = vmul.f32 %v2482, %v6965
    %v7463 = vmul.f32 %v2486, %v6966
    %v7464 = vmul.f32 %v2490, %v6967
    %v7465 = vmul.f32 %v2510, %v6952
    %v7466 = vmul.f32 %v2514, %v6953
    %v7467 = vmul.f32 %v2518, %v6954
    %v7468 = vmul.f32 %v2522, %v6955
    %v7469 = vmul.f32 %v2526, %v6956
    %v7470 = vmul.f32 %v2530, %v6957
    %v7471 = vmul.f32 %v2534, %v6958
    %v7472 = vmul.f32 %v2538, %v6959
    %v7473 = vmul.f32 %v2542, %v6960
    %v7474 = vmul.f32 %v2546, %v6961
    %v7475 = vmul.f32 %v2550, %v6962
    %v7476 = vmul.f32 %v2554, %v6963
    %v7477 = vmul.f32 %v2558, %v6964
    %v7478 = vmul.f32 %v2562, %v6965
    %v7479 = vmul.f32 %v2566, %v6966
    %v7480 = vmul.f32 %v2570, %v6967
    %v7481 = vmul.f32 %v2590, %v6952
    %v7482 = vmul.f32 %v2594, %v6953
    %v7483 = vmul.f32 %v2598, %v6954
    %v7484 = vmul.f32 %v2602, %v6955
    %v7485 = vmul.f32 %v2606, %v6956
    %v7486 = vmul.f32 %v2610, %v6957
    %v7487 = vmul.f32 %v2614, %v6958
    %v7488 = vmul.f32 %v2618, %v6959
    %v7489 = vmul.f32 %v2622, %v6960
    %v7490 = vmul.f32 %v2626, %v6961
    %v7491 = vmul.f32 %v2630, %v6962
    %v7492 = vmul.f32 %v2634, %v6963
    %v7493 = vmul.f32 %v2638, %v6964
    %v7494 = vmul.f32 %v2642, %v6965
    %v7495 = vmul.f32 %v2646, %v6966
    %v7496 = vmul.f32 %v2650, %v6967
    %v7497 = vmul.f32 %v2670, %v6952
    %v7498 = vmul.f32 %v2674, %v6953
    %v7499 = vmul.f32 %v2678, %v6954
    %v7500 = vmul.f32 %v2682, %v6955
    %v7501 = vmul.f32 %v2686, %v6956
    %v7502 = vmul.f32 %v2690, %v6957
    %v7503 = vmul.f32 %v2694, %v6958
    %v7504 = vmul.f32 %v2698, %v6959
    %v7505 = vmul.f32 %v2702, %v6960
    %v7506 = vmul.f32 %v2706, %v6961
    %v7507 = vmul.f32 %v2710, %v6962
    %v7508 = vmul.f32 %v2714, %v6963
    %v7509 = vmul.f32 %v2718, %v6964
    %v7510 = vmul.f32 %v2722, %v6965
    %v7511 = vmul.f32 %v2726, %v6966
    %v7512 = vmul.f32 %v2730, %v6967
    %v7513 = vpack.c.bf16 %v7338, %v7337
    %v7514 = vpack.c.bf16 %v7354, %v7353
    %v7515 = vpack.c.bf16 %v7370, %v7369
    %v7516 = vpack.c.bf16 %v7386, %v7385
    %v7517 = vpack.c.bf16 %v7402, %v7401
    %v7518 = vpack.c.bf16 %v7418, %v7417
    %v7519 = vpack.c.bf16 %v7434, %v7433
    %v7520 = vpack.c.bf16 %v7450, %v7449
    %v7521 = vpack.c.bf16 %v7466, %v7465
    %v7522 = vpack.c.bf16 %v7482, %v7481
    %v7523 = vpack.c.bf16 %v7498, %v7497
    %v7524 = vpack.c.bf16 %v7340, %v7339
    %v7525 = vpack.c.bf16 %v7356, %v7355
    %v7526 = vpack.c.bf16 %v7372, %v7371
    %v7527 = vpack.c.bf16 %v7388, %v7387
    %v7528 = vpack.c.bf16 %v7404, %v7403
    %v7529 = vpack.c.bf16 %v7420, %v7419
    %v7530 = vpack.c.bf16 %v7436, %v7435
    %v7531 = vpack.c.bf16 %v7452, %v7451
    %v7532 = vpack.c.bf16 %v7468, %v7467
    %v7533 = vpack.c.bf16 %v7484, %v7483
    %v7534 = vpack.c.bf16 %v7500, %v7499
    %v7535 = vpack.c.bf16 %v7342, %v7341
    %v7536 = vpack.c.bf16 %v7358, %v7357
    %v7537 = vpack.c.bf16 %v7374, %v7373
    %v7538 = vpack.c.bf16 %v7390, %v7389
    %v7539 = vpack.c.bf16 %v7406, %v7405
    %v7540 = vpack.c.bf16 %v7422, %v7421
    %v7541 = vpack.c.bf16 %v7438, %v7437
    %v7542 = vpack.c.bf16 %v7454, %v7453
    %v7543 = vpack.c.bf16 %v7470, %v7469
    %v7544 = vpack.c.bf16 %v7486, %v7485
    %v7545 = vpack.c.bf16 %v7502, %v7501
    %v7546 = vpack.c.bf16 %v7344, %v7343
    %v7547 = vpack.c.bf16 %v7360, %v7359
    %v7548 = vpack.c.bf16 %v7376, %v7375
    %v7549 = vpack.c.bf16 %v7392, %v7391
    %v7550 = vpack.c.bf16 %v7408, %v7407
    %v7551 = vpack.c.bf16 %v7424, %v7423
    %v7552 = vpack.c.bf16 %v7440, %v7439
    %v7553 = vpack.c.bf16 %v7456, %v7455
    %v7554 = vpack.c.bf16 %v7472, %v7471
    %v7555 = vpack.c.bf16 %v7488, %v7487
    %v7556 = vpack.c.bf16 %v7504, %v7503
    %v7557 = vpack.c.bf16 %v7346, %v7345
    %v7558 = vpack.c.bf16 %v7362, %v7361
    %v7559 = vpack.c.bf16 %v7378, %v7377
    %v7560 = vpack.c.bf16 %v7394, %v7393
    %v7561 = vpack.c.bf16 %v7410, %v7409
    %v7562 = vpack.c.bf16 %v7426, %v7425
    %v7563 = vpack.c.bf16 %v7442, %v7441
    %v7564 = vpack.c.bf16 %v7458, %v7457
    %v7565 = vpack.c.bf16 %v7474, %v7473
    %v7566 = vpack.c.bf16 %v7490, %v7489
    %v7567 = vpack.c.bf16 %v7506, %v7505
    %v7568 = vpack.c.bf16 %v7348, %v7347
    %v7569 = vpack.c.bf16 %v7364, %v7363
    %v7570 = vpack.c.bf16 %v7380, %v7379
    %v7571 = vpack.c.bf16 %v7396, %v7395
    %v7572 = vpack.c.bf16 %v7412, %v7411
    %v7573 = vpack.c.bf16 %v7428, %v7427
    %v7574 = vpack.c.bf16 %v7444, %v7443
    %v7575 = vpack.c.bf16 %v7460, %v7459
    %v7576 = vpack.c.bf16 %v7476, %v7475
    %v7577 = vpack.c.bf16 %v7492, %v7491
    %v7578 = vpack.c.bf16 %v7508, %v7507
    %v7579 = vpack.c.bf16 %v7350, %v7349
    %v7580 = vpack.c.bf16 %v7366, %v7365
    %v7581 = vpack.c.bf16 %v7382, %v7381
    %v7582 = vpack.c.bf16 %v7398, %v7397
    %v7583 = vpack.c.bf16 %v7414, %v7413
    %v7584 = vpack.c.bf16 %v7430, %v7429
    %v7585 = vpack.c.bf16 %v7446, %v7445
    %v7586 = vpack.c.bf16 %v7462, %v7461
    %v7587 = vpack.c.bf16 %v7478, %v7477
    %v7588 = vpack.c.bf16 %v7494, %v7493
    %v7589 = vpack.c.bf16 %v7510, %v7509
    %v7590 = vpack.c.bf16 %v7352, %v7351
    %v7591 = vpack.c.bf16 %v7368, %v7367
    %v7592 = vpack.c.bf16 %v7384, %v7383
    %v7593 = vpack.c.bf16 %v7400, %v7399
    %v7594 = vpack.c.bf16 %v7416, %v7415
    %v7595 = vpack.c.bf16 %v7432, %v7431
    %v7596 = vpack.c.bf16 %v7448, %v7447
    %v7597 = vpack.c.bf16 %v7464, %v7463
    %v7598 = vpack.c.bf16 %v7480, %v7479
    %v7599 = vpack.c.bf16 %v7496, %v7495
    %v7600 = vpack.c.bf16 %v7512, %v7511
    %s7601 = scalar_lea.vmem [#allocation11], 704
    %v7602 = vld [vmem:[%s7601] sm:$0xf]
    %v7603 = vld [vmem:[%s7601 + $0x4] sm:$0xf]
    %v7604 = vld [vmem:[%s7601 + $0x8] sm:$0xf]
    %v7605 = vld [vmem:[%s7601 + $0xc] sm:$0xf]
    %v7606 = vld [vmem:[%s7601 + $0x10] sm:$0xf]
    %v7607 = vld [vmem:[%s7601 + $0x14] sm:$0xf]
    %v7608 = vld [vmem:[%s7601 + $0x18] sm:$0xf]
    %v7609 = vld [vmem:[%s7601 + $0x1c] sm:$0xf]
    %v7610 = vld [vmem:[%s7601 + $0x20] sm:$0xf]
    %v7611 = vld [vmem:[%s7601 + $0x24] sm:$0xf]
    %v7612 = vld [vmem:[%s7601 + $0x28] sm:$0xf]
    %v7613 = vld [vmem:[%s7601 + $0x2c] sm:$0xf]
    %v7614 = vld [vmem:[%s7601 + $0x30] sm:$0xf]
    %v7615 = vld [vmem:[%s7601 + $0x34] sm:$0xf]
    %v7616 = vld [vmem:[%s7601 + $0x38] sm:$0xf]
    %v7617 = vld [vmem:[%s7601 + $0x3c] sm:$0xf]
    %v7618 = vld [vmem:[%s7601 + $0x40] sm:$0xf]
    %v7619 = vld [vmem:[%s7601 + $0x44] sm:$0xf]
    %v7620 = vld [vmem:[%s7601 + $0x48] sm:$0xf]
    %v7621 = vld [vmem:[%s7601 + $0x4c] sm:$0xf]
    %v7622 = vld [vmem:[%s7601 + $0x50] sm:$0xf]
    %v7623 = vld [vmem:[%s7601 + $0x54] sm:$0xf]
    %v7624 = vld [vmem:[%s7601 + $0x58] sm:$0xf]
    %v7625 = vld [vmem:[%s7601 + $0x5c] sm:$0xf]
    %v7626 = vld [vmem:[%s7601 + $0x60] sm:$0xf]
    %v7627 = vld [vmem:[%s7601 + $0x64] sm:$0xf]
    %v7628 = vld [vmem:[%s7601 + $0x68] sm:$0xf]
    %v7629 = vld [vmem:[%s7601 + $0x6c] sm:$0xf]
    %v7630 = vld [vmem:[%s7601 + $0x70] sm:$0xf]
    %v7631 = vld [vmem:[%s7601 + $0x74] sm:$0xf]
    %v7632 = vld [vmem:[%s7601 + $0x78] sm:$0xf]
    %v7633 = vld [vmem:[%s7601 + $0x7c] sm:$0xf]
    %v7634 = vld [vmem:[%s7601 + $0x80] sm:$0xf]
    %v7635 = vld [vmem:[%s7601 + $0x84] sm:$0xf]
    %v7636 = vld [vmem:[%s7601 + $0x88] sm:$0xf]
    %v7637 = vld [vmem:[%s7601 + $0x8c] sm:$0xf]
    %v7638 = vld [vmem:[%s7601 + $0x90] sm:$0xf]
    %v7639 = vld [vmem:[%s7601 + $0x94] sm:$0xf]
    %v7640 = vld [vmem:[%s7601 + $0x98] sm:$0xf]
    %v7641 = vld [vmem:[%s7601 + $0x9c] sm:$0xf]
    %v7642 = vld [vmem:[%s7601 + $0xa0] sm:$0xf]
    %v7643 = vld [vmem:[%s7601 + $0xa4] sm:$0xf]
    %v7644 = vld [vmem:[%s7601 + $0xa8] sm:$0xf]
    %v7645 = vld [vmem:[%s7601 + $0xac] sm:$0xf]
    %v7646 = vld [vmem:[%s7601 + $0xb0] sm:$0xf]
    %v7647 = vld [vmem:[%s7601 + $0xb4] sm:$0xf]
    %v7648 = vld [vmem:[%s7601 + $0xb8] sm:$0xf]
    %v7649 = vld [vmem:[%s7601 + $0xbc] sm:$0xf]
    %v7650 = vld [vmem:[%s7601 + $0xc0] sm:$0xf]
    %v7651 = vld [vmem:[%s7601 + $0xc4] sm:$0xf]
    %v7652 = vld [vmem:[%s7601 + $0xc8] sm:$0xf]
    %v7653 = vld [vmem:[%s7601 + $0xcc] sm:$0xf]
    %v7654 = vld [vmem:[%s7601 + $0xd0] sm:$0xf]
    %v7655 = vld [vmem:[%s7601 + $0xd4] sm:$0xf]
    %v7656 = vld [vmem:[%s7601 + $0xd8] sm:$0xf]
    %v7657 = vld [vmem:[%s7601 + $0xdc] sm:$0xf]
    %v7658 = vld [vmem:[%s7601 + $0xe0] sm:$0xf]
    %v7659 = vld [vmem:[%s7601 + $0xe4] sm:$0xf]
    %v7660 = vld [vmem:[%s7601 + $0xe8] sm:$0xf]
    %v7661 = vld [vmem:[%s7601 + $0xec] sm:$0xf]
    %v7662 = vld [vmem:[%s7601 + $0xf0] sm:$0xf]
    %v7663 = vld [vmem:[%s7601 + $0xf4] sm:$0xf]
    %v7664 = vld [vmem:[%s7601 + $0xf8] sm:$0xf]
    %v7665 = vld [vmem:[%s7601 + $0xfc] sm:$0xf]
    %v7666 = vld [vmem:[%s7601 + $0x100] sm:$0xf]
    %v7667 = vld [vmem:[%s7601 + $0x104] sm:$0xf]
    %v7668 = vld [vmem:[%s7601 + $0x108] sm:$0xf]
    %v7669 = vld [vmem:[%s7601 + $0x10c] sm:$0xf]
    %v7670 = vld [vmem:[%s7601 + $0x110] sm:$0xf]
    %v7671 = vld [vmem:[%s7601 + $0x114] sm:$0xf]
    %v7672 = vld [vmem:[%s7601 + $0x118] sm:$0xf]
    %v7673 = vld [vmem:[%s7601 + $0x11c] sm:$0xf]
    %v7674 = vld [vmem:[%s7601 + $0x120] sm:$0xf]
    %v7675 = vld [vmem:[%s7601 + $0x124] sm:$0xf]
    %v7676 = vld [vmem:[%s7601 + $0x128] sm:$0xf]
    %v7677 = vld [vmem:[%s7601 + $0x12c] sm:$0xf]
    %v7678 = vld [vmem:[%s7601 + $0x130] sm:$0xf]
    %v7679 = vld [vmem:[%s7601 + $0x134] sm:$0xf]
    %v7680 = vld [vmem:[%s7601 + $0x138] sm:$0xf]
    %v7681 = vld [vmem:[%s7601 + $0x13c] sm:$0xf]
    %v7682 = vld [vmem:[%s7601 + $0x140] sm:$0xf]
    %v7683 = vld [vmem:[%s7601 + $0x144] sm:$0xf]
    %v7684 = vld [vmem:[%s7601 + $0x148] sm:$0xf]
    %v7685 = vld [vmem:[%s7601 + $0x14c] sm:$0xf]
    %v7686 = vld [vmem:[%s7601 + $0x150] sm:$0xf]
    %v7687 = vld [vmem:[%s7601 + $0x154] sm:$0xf]
    %v7688 = vld [vmem:[%s7601 + $0x158] sm:$0xf]
    %v7689 = vld [vmem:[%s7601 + $0x15c] sm:$0xf]
    %v7690 = vld [vmem:[%s7601 + $0x160] sm:$0xf]
    %v7691 = vld [vmem:[%s7601 + $0x164] sm:$0xf]
    %v7692 = vld [vmem:[%s7601 + $0x168] sm:$0xf]
    %v7693 = vld [vmem:[%s7601 + $0x16c] sm:$0xf]
    %v7694 = vld [vmem:[%s7601 + $0x170] sm:$0xf]
    %v7695 = vld [vmem:[%s7601 + $0x174] sm:$0xf]
    %v7696 = vld [vmem:[%s7601 + $0x178] sm:$0xf]
    %v7697 = vld [vmem:[%s7601 + $0x17c] sm:$0xf]
    %v7698 = vld [vmem:[%s7601 + $0x180] sm:$0xf]
    %v7699 = vld [vmem:[%s7601 + $0x184] sm:$0xf]
    %v7700 = vld [vmem:[%s7601 + $0x188] sm:$0xf]
    %v7701 = vld [vmem:[%s7601 + $0x18c] sm:$0xf]
    %v7702 = vld [vmem:[%s7601 + $0x190] sm:$0xf]
    %v7703 = vld [vmem:[%s7601 + $0x194] sm:$0xf]
    %v7704 = vld [vmem:[%s7601 + $0x198] sm:$0xf]
    %v7705 = vld [vmem:[%s7601 + $0x19c] sm:$0xf]
    %v7706 = vld [vmem:[%s7601 + $0x1a0] sm:$0xf]
    %v7707 = vld [vmem:[%s7601 + $0x1a4] sm:$0xf]
    %v7708 = vld [vmem:[%s7601 + $0x1a8] sm:$0xf]
    %v7709 = vld [vmem:[%s7601 + $0x1ac] sm:$0xf]
    %v7710 = vld [vmem:[%s7601 + $0x1b0] sm:$0xf]
    %v7711 = vld [vmem:[%s7601 + $0x1b4] sm:$0xf]
    %v7712 = vld [vmem:[%s7601 + $0x1b8] sm:$0xf]
    %v7713 = vld [vmem:[%s7601 + $0x1bc] sm:$0xf]
    %v7714 = vld [vmem:[%s7601 + $0x1c0] sm:$0xf]
    %v7715 = vld [vmem:[%s7601 + $0x1c4] sm:$0xf]
    %v7716 = vld [vmem:[%s7601 + $0x1c8] sm:$0xf]
    %v7717 = vld [vmem:[%s7601 + $0x1cc] sm:$0xf]
    %v7718 = vld [vmem:[%s7601 + $0x1d0] sm:$0xf]
    %v7719 = vld [vmem:[%s7601 + $0x1d4] sm:$0xf]
    %v7720 = vld [vmem:[%s7601 + $0x1d8] sm:$0xf]
    %v7721 = vld [vmem:[%s7601 + $0x1dc] sm:$0xf]
    %v7722 = vld [vmem:[%s7601 + $0x1e0] sm:$0xf]
    %v7723 = vld [vmem:[%s7601 + $0x1e4] sm:$0xf]
    %v7724 = vld [vmem:[%s7601 + $0x1e8] sm:$0xf]
    %v7725 = vld [vmem:[%s7601 + $0x1ec] sm:$0xf]
    %v7726 = vld [vmem:[%s7601 + $0x1f0] sm:$0xf]
    %v7727 = vld [vmem:[%s7601 + $0x1f4] sm:$0xf]
    %v7728 = vld [vmem:[%s7601 + $0x1f8] sm:$0xf]
    %v7729 = vld [vmem:[%s7601 + $0x1fc] sm:$0xf]
    %v7730 = vld [vmem:[%s7601 + $0x200] sm:$0xf]
    %v7731 = vld [vmem:[%s7601 + $0x204] sm:$0xf]
    %v7732 = vld [vmem:[%s7601 + $0x208] sm:$0xf]
    %v7733 = vld [vmem:[%s7601 + $0x20c] sm:$0xf]
    %v7734 = vld [vmem:[%s7601 + $0x210] sm:$0xf]
    %v7735 = vld [vmem:[%s7601 + $0x214] sm:$0xf]
    %v7736 = vld [vmem:[%s7601 + $0x218] sm:$0xf]
    %v7737 = vld [vmem:[%s7601 + $0x21c] sm:$0xf]
    %v7738 = vld [vmem:[%s7601 + $0x220] sm:$0xf]
    %v7739 = vld [vmem:[%s7601 + $0x224] sm:$0xf]
    %v7740 = vld [vmem:[%s7601 + $0x228] sm:$0xf]
    %v7741 = vld [vmem:[%s7601 + $0x22c] sm:$0xf]
    %v7742 = vld [vmem:[%s7601 + $0x230] sm:$0xf]
    %v7743 = vld [vmem:[%s7601 + $0x234] sm:$0xf]
    %v7744 = vld [vmem:[%s7601 + $0x238] sm:$0xf]
    %v7745 = vld [vmem:[%s7601 + $0x23c] sm:$0xf]
    %v7746 = vld [vmem:[%s7601 + $0x240] sm:$0xf]
    %v7747 = vld [vmem:[%s7601 + $0x244] sm:$0xf]
    %v7748 = vld [vmem:[%s7601 + $0x248] sm:$0xf]
    %v7749 = vld [vmem:[%s7601 + $0x24c] sm:$0xf]
    %v7750 = vld [vmem:[%s7601 + $0x250] sm:$0xf]
    %v7751 = vld [vmem:[%s7601 + $0x254] sm:$0xf]
    %v7752 = vld [vmem:[%s7601 + $0x258] sm:$0xf]
    %v7753 = vld [vmem:[%s7601 + $0x25c] sm:$0xf]
    %v7754 = vld [vmem:[%s7601 + $0x260] sm:$0xf]
    %v7755 = vld [vmem:[%s7601 + $0x264] sm:$0xf]
    %v7756 = vld [vmem:[%s7601 + $0x268] sm:$0xf]
    %v7757 = vld [vmem:[%s7601 + $0x26c] sm:$0xf]
    %v7758 = vld [vmem:[%s7601 + $0x270] sm:$0xf]
    %v7759 = vld [vmem:[%s7601 + $0x274] sm:$0xf]
    %v7760 = vld [vmem:[%s7601 + $0x278] sm:$0xf]
    %v7761 = vld [vmem:[%s7601 + $0x27c] sm:$0xf]
    %v7762 = vld [vmem:[%s7601 + $0x280] sm:$0xf]
    %v7763 = vld [vmem:[%s7601 + $0x284] sm:$0xf]
    %v7764 = vld [vmem:[%s7601 + $0x288] sm:$0xf]
    %v7765 = vld [vmem:[%s7601 + $0x28c] sm:$0xf]
    %v7766 = vld [vmem:[%s7601 + $0x290] sm:$0xf]
    %v7767 = vld [vmem:[%s7601 + $0x294] sm:$0xf]
    %v7768 = vld [vmem:[%s7601 + $0x298] sm:$0xf]
    %v7769 = vld [vmem:[%s7601 + $0x29c] sm:$0xf]
    %v7770 = vld [vmem:[%s7601 + $0x2a0] sm:$0xf]
    %v7771 = vld [vmem:[%s7601 + $0x2a4] sm:$0xf]
    %v7772 = vld [vmem:[%s7601 + $0x2a8] sm:$0xf]
    %v7773 = vld [vmem:[%s7601 + $0x2ac] sm:$0xf]
    %v7774 = vld [vmem:[%s7601 + $0x2b0] sm:$0xf]
    %v7775 = vld [vmem:[%s7601 + $0x2b4] sm:$0xf]
    %v7776 = vld [vmem:[%s7601 + $0x2b8] sm:$0xf]
    %v7777 = vld [vmem:[%s7601 + $0x2bc] sm:$0xf]
    %s7778 = scalar_lea.vmem [#allocation13], 704
    %v7779 = vld [vmem:[%s7778] sm:$0xf]
    %v7780 = vld [vmem:[%s7778 + $0x4] sm:$0xf]
    %v7781 = vld [vmem:[%s7778 + $0x8] sm:$0xf]
    %v7782 = vld [vmem:[%s7778 + $0xc] sm:$0xf]
    %v7783 = vld [vmem:[%s7778 + $0x10] sm:$0xf]
    %v7784 = vld [vmem:[%s7778 + $0x14] sm:$0xf]
    %v7785 = vld [vmem:[%s7778 + $0x18] sm:$0xf]
    %v7786 = vld [vmem:[%s7778 + $0x1c] sm:$0xf]
    %v7787 = vld [vmem:[%s7778 + $0x20] sm:$0xf]
    %v7788 = vld [vmem:[%s7778 + $0x24] sm:$0xf]
    %v7789 = vld [vmem:[%s7778 + $0x28] sm:$0xf]
    %v7790 = vld [vmem:[%s7778 + $0x2c] sm:$0xf]
    %v7791 = vld [vmem:[%s7778 + $0x30] sm:$0xf]
    %v7792 = vld [vmem:[%s7778 + $0x34] sm:$0xf]
    %v7793 = vld [vmem:[%s7778 + $0x38] sm:$0xf]
    %v7794 = vld [vmem:[%s7778 + $0x3c] sm:$0xf]
    %v7795 = vld [vmem:[%s7778 + $0x40] sm:$0xf]
    %v7796 = vld [vmem:[%s7778 + $0x44] sm:$0xf]
    %v7797 = vld [vmem:[%s7778 + $0x48] sm:$0xf]
    %v7798 = vld [vmem:[%s7778 + $0x4c] sm:$0xf]
    %v7799 = vld [vmem:[%s7778 + $0x50] sm:$0xf]
    %v7800 = vld [vmem:[%s7778 + $0x54] sm:$0xf]
    %v7801 = vld [vmem:[%s7778 + $0x58] sm:$0xf]
    %v7802 = vld [vmem:[%s7778 + $0x5c] sm:$0xf]
    %v7803 = vld [vmem:[%s7778 + $0x60] sm:$0xf]
    %v7804 = vld [vmem:[%s7778 + $0x64] sm:$0xf]
    %v7805 = vld [vmem:[%s7778 + $0x68] sm:$0xf]
    %v7806 = vld [vmem:[%s7778 + $0x6c] sm:$0xf]
    %v7807 = vld [vmem:[%s7778 + $0x70] sm:$0xf]
    %v7808 = vld [vmem:[%s7778 + $0x74] sm:$0xf]
    %v7809 = vld [vmem:[%s7778 + $0x78] sm:$0xf]
    %v7810 = vld [vmem:[%s7778 + $0x7c] sm:$0xf]
    %v7811 = vld [vmem:[%s7778 + $0x80] sm:$0xf]
    %v7812 = vld [vmem:[%s7778 + $0x84] sm:$0xf]
    %v7813 = vld [vmem:[%s7778 + $0x88] sm:$0xf]
    %v7814 = vld [vmem:[%s7778 + $0x8c] sm:$0xf]
    %v7815 = vld [vmem:[%s7778 + $0x90] sm:$0xf]
    %v7816 = vld [vmem:[%s7778 + $0x94] sm:$0xf]
    %v7817 = vld [vmem:[%s7778 + $0x98] sm:$0xf]
    %v7818 = vld [vmem:[%s7778 + $0x9c] sm:$0xf]
    %v7819 = vld [vmem:[%s7778 + $0xa0] sm:$0xf]
    %v7820 = vld [vmem:[%s7778 + $0xa4] sm:$0xf]
    %v7821 = vld [vmem:[%s7778 + $0xa8] sm:$0xf]
    %v7822 = vld [vmem:[%s7778 + $0xac] sm:$0xf]
    %v7823 = vld [vmem:[%s7778 + $0xb0] sm:$0xf]
    %v7824 = vld [vmem:[%s7778 + $0xb4] sm:$0xf]
    %v7825 = vld [vmem:[%s7778 + $0xb8] sm:$0xf]
    %v7826 = vld [vmem:[%s7778 + $0xbc] sm:$0xf]
    %v7827 = vld [vmem:[%s7778 + $0xc0] sm:$0xf]
    %v7828 = vld [vmem:[%s7778 + $0xc4] sm:$0xf]
    %v7829 = vld [vmem:[%s7778 + $0xc8] sm:$0xf]
    %v7830 = vld [vmem:[%s7778 + $0xcc] sm:$0xf]
    %v7831 = vld [vmem:[%s7778 + $0xd0] sm:$0xf]
    %v7832 = vld [vmem:[%s7778 + $0xd4] sm:$0xf]
    %v7833 = vld [vmem:[%s7778 + $0xd8] sm:$0xf]
    %v7834 = vld [vmem:[%s7778 + $0xdc] sm:$0xf]
    %v7835 = vld [vmem:[%s7778 + $0xe0] sm:$0xf]
    %v7836 = vld [vmem:[%s7778 + $0xe4] sm:$0xf]
    %v7837 = vld [vmem:[%s7778 + $0xe8] sm:$0xf]
    %v7838 = vld [vmem:[%s7778 + $0xec] sm:$0xf]
    %v7839 = vld [vmem:[%s7778 + $0xf0] sm:$0xf]
    %v7840 = vld [vmem:[%s7778 + $0xf4] sm:$0xf]
    %v7841 = vld [vmem:[%s7778 + $0xf8] sm:$0xf]
    %v7842 = vld [vmem:[%s7778 + $0xfc] sm:$0xf]
    %v7843 = vld [vmem:[%s7778 + $0x100] sm:$0xf]
    %v7844 = vld [vmem:[%s7778 + $0x104] sm:$0xf]
    %v7845 = vld [vmem:[%s7778 + $0x108] sm:$0xf]
    %v7846 = vld [vmem:[%s7778 + $0x10c] sm:$0xf]
    %v7847 = vld [vmem:[%s7778 + $0x110] sm:$0xf]
    %v7848 = vld [vmem:[%s7778 + $0x114] sm:$0xf]
    %v7849 = vld [vmem:[%s7778 + $0x118] sm:$0xf]
    %v7850 = vld [vmem:[%s7778 + $0x11c] sm:$0xf]
    %v7851 = vld [vmem:[%s7778 + $0x120] sm:$0xf]
    %v7852 = vld [vmem:[%s7778 + $0x124] sm:$0xf]
    %v7853 = vld [vmem:[%s7778 + $0x128] sm:$0xf]
    %v7854 = vld [vmem:[%s7778 + $0x12c] sm:$0xf]
    %v7855 = vld [vmem:[%s7778 + $0x130] sm:$0xf]
    %v7856 = vld [vmem:[%s7778 + $0x134] sm:$0xf]
    %v7857 = vld [vmem:[%s7778 + $0x138] sm:$0xf]
    %v7858 = vld [vmem:[%s7778 + $0x13c] sm:$0xf]
    %v7859 = vld [vmem:[%s7778 + $0x140] sm:$0xf]
    %v7860 = vld [vmem:[%s7778 + $0x144] sm:$0xf]
    %v7861 = vld [vmem:[%s7778 + $0x148] sm:$0xf]
    %v7862 = vld [vmem:[%s7778 + $0x14c] sm:$0xf]
    %v7863 = vld [vmem:[%s7778 + $0x150] sm:$0xf]
    %v7864 = vld [vmem:[%s7778 + $0x154] sm:$0xf]
    %v7865 = vld [vmem:[%s7778 + $0x158] sm:$0xf]
    %v7866 = vld [vmem:[%s7778 + $0x15c] sm:$0xf]
    %v7867 = vld [vmem:[%s7778 + $0x160] sm:$0xf]
    %v7868 = vld [vmem:[%s7778 + $0x164] sm:$0xf]
    %v7869 = vld [vmem:[%s7778 + $0x168] sm:$0xf]
    %v7870 = vld [vmem:[%s7778 + $0x16c] sm:$0xf]
    %v7871 = vld [vmem:[%s7778 + $0x170] sm:$0xf]
    %v7872 = vld [vmem:[%s7778 + $0x174] sm:$0xf]
    %v7873 = vld [vmem:[%s7778 + $0x178] sm:$0xf]
    %v7874 = vld [vmem:[%s7778 + $0x17c] sm:$0xf]
    %v7875 = vld [vmem:[%s7778 + $0x180] sm:$0xf]
    %v7876 = vld [vmem:[%s7778 + $0x184] sm:$0xf]
    %v7877 = vld [vmem:[%s7778 + $0x188] sm:$0xf]
    %v7878 = vld [vmem:[%s7778 + $0x18c] sm:$0xf]
    %v7879 = vld [vmem:[%s7778 + $0x190] sm:$0xf]
    %v7880 = vld [vmem:[%s7778 + $0x194] sm:$0xf]
    %v7881 = vld [vmem:[%s7778 + $0x198] sm:$0xf]
    %v7882 = vld [vmem:[%s7778 + $0x19c] sm:$0xf]
    %v7883 = vld [vmem:[%s7778 + $0x1a0] sm:$0xf]
    %v7884 = vld [vmem:[%s7778 + $0x1a4] sm:$0xf]
    %v7885 = vld [vmem:[%s7778 + $0x1a8] sm:$0xf]
    %v7886 = vld [vmem:[%s7778 + $0x1ac] sm:$0xf]
    %v7887 = vld [vmem:[%s7778 + $0x1b0] sm:$0xf]
    %v7888 = vld [vmem:[%s7778 + $0x1b4] sm:$0xf]
    %v7889 = vld [vmem:[%s7778 + $0x1b8] sm:$0xf]
    %v7890 = vld [vmem:[%s7778 + $0x1bc] sm:$0xf]
    %v7891 = vld [vmem:[%s7778 + $0x1c0] sm:$0xf]
    %v7892 = vld [vmem:[%s7778 + $0x1c4] sm:$0xf]
    %v7893 = vld [vmem:[%s7778 + $0x1c8] sm:$0xf]
    %v7894 = vld [vmem:[%s7778 + $0x1cc] sm:$0xf]
    %v7895 = vld [vmem:[%s7778 + $0x1d0] sm:$0xf]
    %v7896 = vld [vmem:[%s7778 + $0x1d4] sm:$0xf]
    %v7897 = vld [vmem:[%s7778 + $0x1d8] sm:$0xf]
    %v7898 = vld [vmem:[%s7778 + $0x1dc] sm:$0xf]
    %v7899 = vld [vmem:[%s7778 + $0x1e0] sm:$0xf]
    %v7900 = vld [vmem:[%s7778 + $0x1e4] sm:$0xf]
    %v7901 = vld [vmem:[%s7778 + $0x1e8] sm:$0xf]
    %v7902 = vld [vmem:[%s7778 + $0x1ec] sm:$0xf]
    %v7903 = vld [vmem:[%s7778 + $0x1f0] sm:$0xf]
    %v7904 = vld [vmem:[%s7778 + $0x1f4] sm:$0xf]
    %v7905 = vld [vmem:[%s7778 + $0x1f8] sm:$0xf]
    %v7906 = vld [vmem:[%s7778 + $0x1fc] sm:$0xf]
    %v7907 = vld [vmem:[%s7778 + $0x200] sm:$0xf]
    %v7908 = vld [vmem:[%s7778 + $0x204] sm:$0xf]
    %v7909 = vld [vmem:[%s7778 + $0x208] sm:$0xf]
    %v7910 = vld [vmem:[%s7778 + $0x20c] sm:$0xf]
    %v7911 = vld [vmem:[%s7778 + $0x210] sm:$0xf]
    %v7912 = vld [vmem:[%s7778 + $0x214] sm:$0xf]
    %v7913 = vld [vmem:[%s7778 + $0x218] sm:$0xf]
    %v7914 = vld [vmem:[%s7778 + $0x21c] sm:$0xf]
    %v7915 = vld [vmem:[%s7778 + $0x220] sm:$0xf]
    %v7916 = vld [vmem:[%s7778 + $0x224] sm:$0xf]
    %v7917 = vld [vmem:[%s7778 + $0x228] sm:$0xf]
    %v7918 = vld [vmem:[%s7778 + $0x22c] sm:$0xf]
    %v7919 = vld [vmem:[%s7778 + $0x230] sm:$0xf]
    %v7920 = vld [vmem:[%s7778 + $0x234] sm:$0xf]
    %v7921 = vld [vmem:[%s7778 + $0x238] sm:$0xf]
    %v7922 = vld [vmem:[%s7778 + $0x23c] sm:$0xf]
    %v7923 = vld [vmem:[%s7778 + $0x240] sm:$0xf]
    %v7924 = vld [vmem:[%s7778 + $0x244] sm:$0xf]
    %v7925 = vld [vmem:[%s7778 + $0x248] sm:$0xf]
    %v7926 = vld [vmem:[%s7778 + $0x24c] sm:$0xf]
    %v7927 = vld [vmem:[%s7778 + $0x250] sm:$0xf]
    %v7928 = vld [vmem:[%s7778 + $0x254] sm:$0xf]
    %v7929 = vld [vmem:[%s7778 + $0x258] sm:$0xf]
    %v7930 = vld [vmem:[%s7778 + $0x25c] sm:$0xf]
    %v7931 = vld [vmem:[%s7778 + $0x260] sm:$0xf]
    %v7932 = vld [vmem:[%s7778 + $0x264] sm:$0xf]
    %v7933 = vld [vmem:[%s7778 + $0x268] sm:$0xf]
    %v7934 = vld [vmem:[%s7778 + $0x26c] sm:$0xf]
    %v7935 = vld [vmem:[%s7778 + $0x270] sm:$0xf]
    %v7936 = vld [vmem:[%s7778 + $0x274] sm:$0xf]
    %v7937 = vld [vmem:[%s7778 + $0x278] sm:$0xf]
    %v7938 = vld [vmem:[%s7778 + $0x27c] sm:$0xf]
    %v7939 = vld [vmem:[%s7778 + $0x280] sm:$0xf]
    %v7940 = vld [vmem:[%s7778 + $0x284] sm:$0xf]
    %v7941 = vld [vmem:[%s7778 + $0x288] sm:$0xf]
    %v7942 = vld [vmem:[%s7778 + $0x28c] sm:$0xf]
    %v7943 = vld [vmem:[%s7778 + $0x290] sm:$0xf]
    %v7944 = vld [vmem:[%s7778 + $0x294] sm:$0xf]
    %v7945 = vld [vmem:[%s7778 + $0x298] sm:$0xf]
    %v7946 = vld [vmem:[%s7778 + $0x29c] sm:$0xf]
    %v7947 = vld [vmem:[%s7778 + $0x2a0] sm:$0xf]
    %v7948 = vld [vmem:[%s7778 + $0x2a4] sm:$0xf]
    %v7949 = vld [vmem:[%s7778 + $0x2a8] sm:$0xf]
    %v7950 = vld [vmem:[%s7778 + $0x2ac] sm:$0xf]
    %v7951 = vld [vmem:[%s7778 + $0x2b0] sm:$0xf]
    %v7952 = vld [vmem:[%s7778 + $0x2b4] sm:$0xf]
    %v7953 = vld [vmem:[%s7778 + $0x2b8] sm:$0xf]
    %v7954 = vld [vmem:[%s7778 + $0x2bc] sm:$0xf]
    %v8131 = vunpack.c.l.b16 %v7779
    %v8132 = vunpack.c.l.b16 %v7780
    %v8133 = vunpack.c.l.b16 %v7781
    %v8134 = vunpack.c.l.b16 %v7782
    %v8135 = vunpack.c.l.b16 %v7783
    %v8136 = vunpack.c.l.b16 %v7784
    %v8137 = vunpack.c.l.b16 %v7785
    %v8138 = vunpack.c.l.b16 %v7786
    %v8139 = vunpack.c.l.b16 %v7787
    %v8140 = vunpack.c.l.b16 %v7788
    %v8141 = vunpack.c.l.b16 %v7789
    %v8142 = vunpack.c.l.b16 %v7790
    %v8143 = vunpack.c.l.b16 %v7791
    %v8144 = vunpack.c.l.b16 %v7792
    %v8145 = vunpack.c.l.b16 %v7793
    %v8146 = vunpack.c.l.b16 %v7794
    %v8147 = vunpack.c.l.b16 %v7795
    %v8148 = vunpack.c.l.b16 %v7796
    %v8149 = vunpack.c.l.b16 %v7797
    %v8150 = vunpack.c.l.b16 %v7798
    %v8151 = vunpack.c.l.b16 %v7799
    %v8152 = vunpack.c.l.b16 %v7800
    %v8153 = vunpack.c.l.b16 %v7801
    %v8154 = vunpack.c.l.b16 %v7802
    %v8155 = vunpack.c.l.b16 %v7803
    %v8156 = vunpack.c.l.b16 %v7804
    %v8157 = vunpack.c.l.b16 %v7805
    %v8158 = vunpack.c.l.b16 %v7806
    %v8159 = vunpack.c.l.b16 %v7807
    %v8160 = vunpack.c.l.b16 %v7808
    %v8161 = vunpack.c.l.b16 %v7809
    %v8162 = vunpack.c.l.b16 %v7810
    %v8163 = vunpack.c.l.b16 %v7811
    %v8164 = vunpack.c.l.b16 %v7812
    %v8165 = vunpack.c.l.b16 %v7813
    %v8166 = vunpack.c.l.b16 %v7814
    %v8167 = vunpack.c.l.b16 %v7815
    %v8168 = vunpack.c.l.b16 %v7816
    %v8169 = vunpack.c.l.b16 %v7817
    %v8170 = vunpack.c.l.b16 %v7818
    %v8171 = vunpack.c.l.b16 %v7819
    %v8172 = vunpack.c.l.b16 %v7820
    %v8173 = vunpack.c.l.b16 %v7821
    %v8174 = vunpack.c.l.b16 %v7822
    %v8175 = vunpack.c.l.b16 %v7823
    %v8176 = vunpack.c.l.b16 %v7824
    %v8177 = vunpack.c.l.b16 %v7825
    %v8178 = vunpack.c.l.b16 %v7826
    %v8179 = vunpack.c.l.b16 %v7827
    %v8180 = vunpack.c.l.b16 %v7828
    %v8181 = vunpack.c.l.b16 %v7829
    %v8182 = vunpack.c.l.b16 %v7830
    %v8183 = vunpack.c.l.b16 %v7831
    %v8184 = vunpack.c.l.b16 %v7832
    %v8185 = vunpack.c.l.b16 %v7833
    %v8186 = vunpack.c.l.b16 %v7834
    %v8187 = vunpack.c.l.b16 %v7835
    %v8188 = vunpack.c.l.b16 %v7836
    %v8189 = vunpack.c.l.b16 %v7837
    %v8190 = vunpack.c.l.b16 %v7838
    %v8191 = vunpack.c.l.b16 %v7839
    %v8192 = vunpack.c.l.b16 %v7840
    %v8193 = vunpack.c.l.b16 %v7841
    %v8194 = vunpack.c.l.b16 %v7842
    %v8195 = vunpack.c.l.b16 %v7843
    %v8196 = vunpack.c.l.b16 %v7844
    %v8197 = vunpack.c.l.b16 %v7845
    %v8198 = vunpack.c.l.b16 %v7846
    %v8199 = vunpack.c.l.b16 %v7847
    %v8200 = vunpack.c.l.b16 %v7848
    %v8201 = vunpack.c.l.b16 %v7849
    %v8202 = vunpack.c.l.b16 %v7850
    %v8203 = vunpack.c.l.b16 %v7851
    %v8204 = vunpack.c.l.b16 %v7852
    %v8205 = vunpack.c.l.b16 %v7853
    %v8206 = vunpack.c.l.b16 %v7854
    %v8207 = vunpack.c.l.b16 %v7855
    %v8208 = vunpack.c.l.b16 %v7856
    %v8209 = vunpack.c.l.b16 %v7857
    %v8210 = vunpack.c.l.b16 %v7858
    %v8211 = vunpack.c.l.b16 %v7859
    %v8212 = vunpack.c.l.b16 %v7860
    %v8213 = vunpack.c.l.b16 %v7861
    %v8214 = vunpack.c.l.b16 %v7862
    %v8215 = vunpack.c.l.b16 %v7863
    %v8216 = vunpack.c.l.b16 %v7864
    %v8217 = vunpack.c.l.b16 %v7865
    %v8218 = vunpack.c.l.b16 %v7866
    %v8219 = vunpack.c.l.b16 %v7867
    %v8220 = vunpack.c.l.b16 %v7868
    %v8221 = vunpack.c.l.b16 %v7869
    %v8222 = vunpack.c.l.b16 %v7870
    %v8223 = vunpack.c.l.b16 %v7871
    %v8224 = vunpack.c.l.b16 %v7872
    %v8225 = vunpack.c.l.b16 %v7873
    %v8226 = vunpack.c.l.b16 %v7874
    %v8227 = vunpack.c.l.b16 %v7875
    %v8228 = vunpack.c.l.b16 %v7876
    %v8229 = vunpack.c.l.b16 %v7877
    %v8230 = vunpack.c.l.b16 %v7878
    %v8231 = vunpack.c.l.b16 %v7879
    %v8232 = vunpack.c.l.b16 %v7880
    %v8233 = vunpack.c.l.b16 %v7881
    %v8234 = vunpack.c.l.b16 %v7882
    %v8235 = vunpack.c.l.b16 %v7883
    %v8236 = vunpack.c.l.b16 %v7884
    %v8237 = vunpack.c.l.b16 %v7885
    %v8238 = vunpack.c.l.b16 %v7886
    %v8239 = vunpack.c.l.b16 %v7887
    %v8240 = vunpack.c.l.b16 %v7888
    %v8241 = vunpack.c.l.b16 %v7889
    %v8242 = vunpack.c.l.b16 %v7890
    %v8243 = vunpack.c.l.b16 %v7891
    %v8244 = vunpack.c.l.b16 %v7892
    %v8245 = vunpack.c.l.b16 %v7893
    %v8246 = vunpack.c.l.b16 %v7894
    %v8247 = vunpack.c.l.b16 %v7895
    %v8248 = vunpack.c.l.b16 %v7896
    %v8249 = vunpack.c.l.b16 %v7897
    %v8250 = vunpack.c.l.b16 %v7898
    %v8251 = vunpack.c.l.b16 %v7899
    %v8252 = vunpack.c.l.b16 %v7900
    %v8253 = vunpack.c.l.b16 %v7901
    %v8254 = vunpack.c.l.b16 %v7902
    %v8255 = vunpack.c.l.b16 %v7903
    %v8256 = vunpack.c.l.b16 %v7904
    %v8257 = vunpack.c.l.b16 %v7905
    %v8258 = vunpack.c.l.b16 %v7906
    %v8259 = vunpack.c.l.b16 %v7907
    %v8260 = vunpack.c.l.b16 %v7908
    %v8261 = vunpack.c.l.b16 %v7909
    %v8262 = vunpack.c.l.b16 %v7910
    %v8263 = vunpack.c.l.b16 %v7911
    %v8264 = vunpack.c.l.b16 %v7912
    %v8265 = vunpack.c.l.b16 %v7913
    %v8266 = vunpack.c.l.b16 %v7914
    %v8267 = vunpack.c.l.b16 %v7915
    %v8268 = vunpack.c.l.b16 %v7916
    %v8269 = vunpack.c.l.b16 %v7917
    %v8270 = vunpack.c.l.b16 %v7918
    %v8271 = vunpack.c.l.b16 %v7919
    %v8272 = vunpack.c.l.b16 %v7920
    %v8273 = vunpack.c.l.b16 %v7921
    %v8274 = vunpack.c.l.b16 %v7922
    %v8275 = vunpack.c.l.b16 %v7923
    %v8276 = vunpack.c.l.b16 %v7924
    %v8277 = vunpack.c.l.b16 %v7925
    %v8278 = vunpack.c.l.b16 %v7926
    %v8279 = vunpack.c.l.b16 %v7927
    %v8280 = vunpack.c.l.b16 %v7928
    %v8281 = vunpack.c.l.b16 %v7929
    %v8282 = vunpack.c.l.b16 %v7930
    %v8283 = vunpack.c.l.b16 %v7931
    %v8284 = vunpack.c.l.b16 %v7932
    %v8285 = vunpack.c.l.b16 %v7933
    %v8286 = vunpack.c.l.b16 %v7934
    %v8287 = vunpack.c.l.b16 %v7935
    %v8288 = vunpack.c.l.b16 %v7936
    %v8289 = vunpack.c.l.b16 %v7937
    %v8290 = vunpack.c.l.b16 %v7938
    %v8291 = vunpack.c.l.b16 %v7939
    %v8292 = vunpack.c.l.b16 %v7940
    %v8293 = vunpack.c.l.b16 %v7941
    %v8294 = vunpack.c.l.b16 %v7942
    %v8295 = vunpack.c.l.b16 %v7943
    %v8296 = vunpack.c.l.b16 %v7944
    %v8297 = vunpack.c.l.b16 %v7945
    %v8298 = vunpack.c.l.b16 %v7946
    %v8299 = vunpack.c.l.b16 %v7947
    %v8300 = vunpack.c.l.b16 %v7948
    %v8301 = vunpack.c.l.b16 %v7949
    %v8302 = vunpack.c.l.b16 %v7950
    %v8303 = vunpack.c.l.b16 %v7951
    %v8304 = vunpack.c.l.b16 %v7952
    %v8305 = vunpack.c.l.b16 %v7953
    %v8306 = vunpack.c.l.b16 %v7954
    %v8307 = vpack.c.b16 %v8132, %v8131
    %v8308 = vpack.c.b16 %v8134, %v8133
    %v8309 = vpack.c.b16 %v8136, %v8135
    %v8310 = vpack.c.b16 %v8138, %v8137
    %v8311 = vpack.c.b16 %v8140, %v8139
    %v8312 = vpack.c.b16 %v8142, %v8141
    %v8313 = vpack.c.b16 %v8144, %v8143
    %v8314 = vpack.c.b16 %v8146, %v8145
    %v8315 = vpack.c.b16 %v8148, %v8147
    %v8316 = vpack.c.b16 %v8150, %v8149
    %v8317 = vpack.c.b16 %v8152, %v8151
    %v8318 = vpack.c.b16 %v8154, %v8153
    %v8319 = vpack.c.b16 %v8156, %v8155
    %v8320 = vpack.c.b16 %v8158, %v8157
    %v8321 = vpack.c.b16 %v8160, %v8159
    %v8322 = vpack.c.b16 %v8162, %v8161
    %v8323 = vpack.c.b16 %v8164, %v8163
    %v8324 = vpack.c.b16 %v8166, %v8165
    %v8325 = vpack.c.b16 %v8168, %v8167
    %v8326 = vpack.c.b16 %v8170, %v8169
    %v8327 = vpack.c.b16 %v8172, %v8171
    %v8328 = vpack.c.b16 %v8174, %v8173
    %v8329 = vpack.c.b16 %v8176, %v8175
    %v8330 = vpack.c.b16 %v8178, %v8177
    %v8331 = vpack.c.b16 %v8180, %v8179
    %v8332 = vpack.c.b16 %v8182, %v8181
    %v8333 = vpack.c.b16 %v8184, %v8183
    %v8334 = vpack.c.b16 %v8186, %v8185
    %v8335 = vpack.c.b16 %v8188, %v8187
    %v8336 = vpack.c.b16 %v8190, %v8189
    %v8337 = vpack.c.b16 %v8192, %v8191
    %v8338 = vpack.c.b16 %v8194, %v8193
    %v8339 = vpack.c.b16 %v8196, %v8195
    %v8340 = vpack.c.b16 %v8198, %v8197
    %v8341 = vpack.c.b16 %v8200, %v8199
    %v8342 = vpack.c.b16 %v8202, %v8201
    %v8343 = vpack.c.b16 %v8204, %v8203
    %v8344 = vpack.c.b16 %v8206, %v8205
    %v8345 = vpack.c.b16 %v8208, %v8207
    %v8346 = vpack.c.b16 %v8210, %v8209
    %v8347 = vpack.c.b16 %v8212, %v8211
    %v8348 = vpack.c.b16 %v8214, %v8213
    %v8349 = vpack.c.b16 %v8216, %v8215
    %v8350 = vpack.c.b16 %v8218, %v8217
    %v8351 = vpack.c.b16 %v8220, %v8219
    %v8352 = vpack.c.b16 %v8222, %v8221
    %v8353 = vpack.c.b16 %v8224, %v8223
    %v8354 = vpack.c.b16 %v8226, %v8225
    %v8355 = vpack.c.b16 %v8228, %v8227
    %v8356 = vpack.c.b16 %v8230, %v8229
    %v8357 = vpack.c.b16 %v8232, %v8231
    %v8358 = vpack.c.b16 %v8234, %v8233
    %v8359 = vpack.c.b16 %v8236, %v8235
    %v8360 = vpack.c.b16 %v8238, %v8237
    %v8361 = vpack.c.b16 %v8240, %v8239
    %v8362 = vpack.c.b16 %v8242, %v8241
    %v8363 = vpack.c.b16 %v8244, %v8243
    %v8364 = vpack.c.b16 %v8246, %v8245
    %v8365 = vpack.c.b16 %v8248, %v8247
    %v8366 = vpack.c.b16 %v8250, %v8249
    %v8367 = vpack.c.b16 %v8252, %v8251
    %v8368 = vpack.c.b16 %v8254, %v8253
    %v8369 = vpack.c.b16 %v8256, %v8255
    %v8370 = vpack.c.b16 %v8258, %v8257
    %v8371 = vpack.c.b16 %v8260, %v8259
    %v8372 = vpack.c.b16 %v8262, %v8261
    %v8373 = vpack.c.b16 %v8264, %v8263
    %v8374 = vpack.c.b16 %v8266, %v8265
    %v8375 = vpack.c.b16 %v8268, %v8267
    %v8376 = vpack.c.b16 %v8270, %v8269
    %v8377 = vpack.c.b16 %v8272, %v8271
    %v8378 = vpack.c.b16 %v8274, %v8273
    %v8379 = vpack.c.b16 %v8276, %v8275
    %v8380 = vpack.c.b16 %v8278, %v8277
    %v8381 = vpack.c.b16 %v8280, %v8279
    %v8382 = vpack.c.b16 %v8282, %v8281
    %v8383 = vpack.c.b16 %v8284, %v8283
    %v8384 = vpack.c.b16 %v8286, %v8285
    %v8385 = vpack.c.b16 %v8288, %v8287
    %v8386 = vpack.c.b16 %v8290, %v8289
    %v8387 = vpack.c.b16 %v8292, %v8291
    %v8388 = vpack.c.b16 %v8294, %v8293
    %v8389 = vpack.c.b16 %v8296, %v8295
    %v8390 = vpack.c.b16 %v8298, %v8297
    %v8391 = vpack.c.b16 %v8300, %v8299
    %v8392 = vpack.c.b16 %v8302, %v8301
    %v8393 = vpack.c.b16 %v8304, %v8303
    %v8394 = vpack.c.b16 %v8306, %v8305
    %8483 = vmatprep.subr.bf16.mxu0 0
    %8484 = vmatpush1.bf16.msra.mxu0 %v8307
    %8485 = vmatprep.subr.bf16.mxu0 0
    %8486 = vmatpush1.bf16.msra.mxu0 %v8308
    %8487 = vmatprep.subr.bf16.mxu0 0
    %8488 = vmatpush1.bf16.msra.mxu0 %v8309
    %8489 = vmatprep.subr.bf16.mxu0 0
    %8490 = vmatpush1.bf16.msra.mxu0 %v8310
    %8491 = vmatprep.subr.bf16.mxu0 0
    %8492 = vmatpush1.bf16.msra.mxu0 %v8311
    %8493 = vmatprep.subr.bf16.mxu0 0
    %8494 = vmatpush1.bf16.msra.mxu0 %v8312
    %8495 = vmatprep.subr.bf16.mxu0 0
    %8496 = vmatpush1.bf16.msra.mxu0 %v8313
    %8497 = vmatprep.subr.bf16.mxu0 0
    %8498 = vmatpush1.bf16.msra.mxu0 %v8314
    %8499 = vmatprep.subr.bf16.mxu0 0
    %8500 = vmatpush1.bf16.msra.mxu0 %v8315
    %8501 = vmatprep.subr.bf16.mxu0 0
    %8502 = vmatpush1.bf16.msra.mxu0 %v8316
    %8503 = vmatprep.subr.bf16.mxu0 0
    %8504 = vmatpush1.bf16.msra.mxu0 %v8317
    %8505 = vmatprep.subr.bf16.mxu0 0
    %8506 = vmatpush1.bf16.msra.mxu0 %v8318
    %8507 = vmatprep.subr.bf16.mxu0 0
    %8508 = vmatpush1.bf16.msra.mxu0 %v8319
    %8509 = vmatprep.subr.bf16.mxu0 0
    %8510 = vmatpush1.bf16.msra.mxu0 %v8320
    %8511 = vmatprep.subr.bf16.mxu0 0
    %8512 = vmatpush1.bf16.msra.mxu0 %v8321
    %8513 = vmatprep.subr.bf16.mxu0 0
    %8514 = vmatpush1.bf16.msra.mxu0 %v8322
    %8515 = vmatprep.mubr.bf16.mxu0 %v7514
    %8516 = vmatmul.mubr.bf16.gmra.mrb[0].mxu0 %v7513
    %v8517 = vpop.f32.mrb[0].mxu0
    %v8518 = vadd.f32 0.0, %v8517
    %v8519 = vpop.f32.mrb[0].mxu0
    %v8520 = vpop.f32.mrb[0].mxu0
    %v8521 = vadd.f32 0.0, %v8520
    %v8522 = vpop.f32.mrb[0].mxu0
    %8523 = vmatprep.mubr.bf16.mxu0 %v7525
    %8524 = vmatmul.mubr.bf16.gmra.mrb[0].mxu0 %v7524
    %v8525 = vpop.f32.mrb[0].mxu0
    %v8526 = vadd.f32 0.0, %v8525
    %v8527 = vpop.f32.mrb[0].mxu0
    %v8528 = vpop.f32.mrb[0].mxu0
    %v8529 = vadd.f32 0.0, %v8528
    %v8530 = vpop.f32.mrb[0].mxu0
    %8531 = vmatprep.mubr.bf16.mxu0 %v7536
    %8532 = vmatmul.mubr.bf16.gmra.mrb[0].mxu0 %v7535
    %v8533 = vpop.f32.mrb[0].mxu0
    %v8534 = vadd.f32 0.0, %v8533
    %v8535 = vpop.f32.mrb[0].mxu0
    %v8536 = vpop.f32.mrb[0].mxu0
    %v8537 = vadd.f32 0.0, %v8536
    %v8538 = vpop.f32.mrb[0].mxu0
    %8539 = vmatprep.mubr.bf16.mxu0 %v7547
    %8540 = vmatmul.mubr.bf16.gmra.mrb[0].mxu0 %v7546
    %v8541 = vpop.f32.mrb[0].mxu0
    %v8542 = vadd.f32 0.0, %v8541
    %v8543 = vpop.f32.mrb[0].mxu0
    %v8544 = vpop.f32.mrb[0].mxu0
    %v8545 = vadd.f32 0.0, %v8544
    %v8546 = vpop.f32.mrb[0].mxu0
    %8547 = vmatprep.mubr.bf16.mxu0 %v7558
    %8548 = vmatmul.mubr.bf16.gmra.mrb[0].mxu0 %v7557
    %v8549 = vpop.f32.mrb[0].mxu0
    %v8550 = vadd.f32 0.0, %v8549
    %v8551 = vpop.f32.mrb[0].mxu0
    %v8552 = vpop.f32.mrb[0].mxu0
    %v8553 = vadd.f32 0.0, %v8552
    %v8554 = vpop.f32.mrb[0].mxu0
    %8555 = vmatprep.mubr.bf16.mxu0 %v7569
    %8556 = vmatmul.mubr.bf16.gmra.mrb[0].mxu0 %v7568
    %v8557 = vpop.f32.mrb[0].mxu0
    %v8558 = vadd.f32 0.0, %v8557
    %v8559 = vpop.f32.mrb[0].mxu0
    %v8560 = vpop.f32.mrb[0].mxu0
    %v8561 = vadd.f32 0.0, %v8560
    %v8562 = vpop.f32.mrb[0].mxu0
    %8563 = vmatprep.mubr.bf16.mxu0 %v7580
    %8564 = vmatmul.mubr.bf16.gmra.mrb[0].mxu0 %v7579
    %v8565 = vpop.f32.mrb[0].mxu0
    %v8566 = vadd.f32 0.0, %v8565
    %v8567 = vpop.f32.mrb[0].mxu0
    %v8568 = vpop.f32.mrb[0].mxu0
    %v8569 = vadd.f32 0.0, %v8568
    %v8570 = vpop.f32.mrb[0].mxu0
    %8571 = vmatprep.mubr.bf16.mxu0 %v7591
    %8572 = vmatmul.mubr.bf16.gmra.mrb[0].mxu0 %v7590
    %v8573 = vpop.f32.mrb[0].mxu0
    %v8574 = vadd.f32 0.0, %v8573
    %v8575 = vpop.f32.mrb[0].mxu0
    %v8576 = vpop.f32.mrb[0].mxu0
    %v8577 = vadd.f32 0.0, %v8576
    %v8578 = vpop.f32.mrb[0].mxu0
    %8579 = vdwg.mxu0
    %8580 = vmatprep.subr.bf16.mxu0 0
    %8581 = vmatpush1.bf16.msra.mxu0 %v8323
    %8582 = vmatprep.subr.bf16.mxu0 0
    %8583 = vmatpush1.bf16.msra.mxu0 %v8324
    %8584 = vmatprep.subr.bf16.mxu0 0
    %8585 = vmatpush1.bf16.msra.mxu0 %v8325
    %8586 = vmatprep.subr.bf16.mxu0 0
    %8587 = vmatpush1.bf16.msra.mxu0 %v8326
    %8588 = vmatprep.subr.bf16.mxu0 0
    %8589 = vmatpush1.bf16.msra.mxu0 %v8327
    %8590 = vmatprep.subr.bf16.mxu0 0
    %8591 = vmatpush1.bf16.msra.mxu0 %v8328
    %8592 = vmatprep.subr.bf16.mxu0 0
    %8593 = vmatpush1.bf16.msra.mxu0 %v8329
    %8594 = vmatprep.subr.bf16.mxu0 0
    %8595 = vmatpush1.bf16.msra.mxu0 %v8330
    %8596 = vmatprep.subr.bf16.mxu0 0
    %8597 = vmatpush1.bf16.msra.mxu0 %v8331
    %8598 = vmatprep.subr.bf16.mxu0 0
    %8599 = vmatpush1.bf16.msra.mxu0 %v8332
    %8600 = vmatprep.subr.bf16.mxu0 0
    %8601 = vmatpush1.bf16.msra.mxu0 %v8333
    %8602 = vmatprep.subr.bf16.mxu0 0
    %8603 = vmatpush1.bf16.msra.mxu0 %v8334
    %8604 = vmatprep.subr.bf16.mxu0 0
    %8605 = vmatpush1.bf16.msra.mxu0 %v8335
    %8606 = vmatprep.subr.bf16.mxu0 0
    %8607 = vmatpush1.bf16.msra.mxu0 %v8336
    %8608 = vmatprep.subr.bf16.mxu0 0
    %8609 = vmatpush1.bf16.msra.mxu0 %v8337
    %8610 = vmatprep.subr.bf16.mxu0 0
    %8611 = vmatpush1.bf16.msra.mxu0 %v8338
    %8612 = vmatprep.mubr.bf16.mxu0 %v7516
    %8613 = vmatmul.mubr.bf16.gmra.mrb[0].mxu0 %v7515
    %v8614 = vpop.f32.mrb[0].mxu0
    %v8615 = vadd.f32 %v8518, %v8614
    %v8616 = vpop.f32.mrb[0].mxu0
    %v8617 = vpop.f32.mrb[0].mxu0
    %v8618 = vadd.f32 %v8521, %v8617
    %v8619 = vpop.f32.mrb[0].mxu0
    %8620 = vmatprep.mubr.bf16.mxu0 %v7527
    %8621 = vmatmul.mubr.bf16.gmra.mrb[0].mxu0 %v7526
    %v8622 = vpop.f32.mrb[0].mxu0
    %v8623 = vadd.f32 %v8526, %v8622
    %v8624 = vpop.f32.mrb[0].mxu0
    %v8625 = vpop.f32.mrb[0].mxu0
    %v8626 = vadd.f32 %v8529, %v8625
    %v8627 = vpop.f32.mrb[0].mxu0
    %8628 = vmatprep.mubr.bf16.mxu0 %v7538
    %8629 = vmatmul.mubr.bf16.gmra.mrb[0].mxu0 %v7537
    %v8630 = vpop.f32.mrb[0].mxu0
    %v8631 = vadd.f32 %v8534, %v8630
    %v8632 = vpop.f32.mrb[0].mxu0
    %v8633 = vpop.f32.mrb[0].mxu0
    %v8634 = vadd.f32 %v8537, %v8633
    %v8635 = vpop.f32.mrb[0].mxu0
    %8636 = vmatprep.mubr.bf16.mxu0 %v7549
    %8637 = vmatmul.mubr.bf16.gmra.mrb[0].mxu0 %v7548
    %v8638 = vpop.f32.mrb[0].mxu0
    %v8639 = vadd.f32 %v8542, %v8638
    %v8640 = vpop.f32.mrb[0].mxu0
    %v8641 = vpop.f32.mrb[0].mxu0
    %v8642 = vadd.f32 %v8545, %v8641
    %v8643 = vpop.f32.mrb[0].mxu0
    %8644 = vmatprep.mubr.bf16.mxu0 %v7560
    %8645 = vmatmul.mubr.bf16.gmra.mrb[0].mxu0 %v7559
    %v8646 = vpop.f32.mrb[0].mxu0
    %v8647 = vadd.f32 %v8550, %v8646
    %v8648 = vpop.f32.mrb[0].mxu0
    %v8649 = vpop.f32.mrb[0].mxu0
    %v8650 = vadd.f32 %v8553, %v8649
    %v8651 = vpop.f32.mrb[0].mxu0
    %8652 = vmatprep.mubr.bf16.mxu0 %v7571
    %8653 = vmatmul.mubr.bf16.gmra.mrb[0].mxu0 %v7570
    %v8654 = vpop.f32.mrb[0].mxu0
    %v8655 = vadd.f32 %v8558, %v8654
    %v8656 = vpop.f32.mrb[0].mxu0
    %v8657 = vpop.f32.mrb[0].mxu0
    %v8658 = vadd.f32 %v8561, %v8657
    %v8659 = vpop.f32.mrb[0].mxu0
    %8660 = vmatprep.mubr.bf16.mxu0 %v7582
    %8661 = vmatmul.mubr.bf16.gmra.mrb[0].mxu0 %v7581
    %v8662 = vpop.f32.mrb[0].mxu0
    %v8663 = vadd.f32 %v8566, %v8662
    %v8664 = vpop.f32.mrb[0].mxu0
    %v8665 = vpop.f32.mrb[0].mxu0
    %v8666 = vadd.f32 %v8569, %v8665
    %v8667 = vpop.f32.mrb[0].mxu0
    %8668 = vmatprep.mubr.bf16.mxu0 %v7593
    %8669 = vmatmul.mubr.bf16.gmra.mrb[0].mxu0 %v7592
    %v8670 = vpop.f32.mrb[0].mxu0
    %v8671 = vadd.f32 %v8574, %v8670
    %v8672 = vpop.f32.mrb[0].mxu0
    %v8673 = vpop.f32.mrb[0].mxu0
    %v8674 = vadd.f32 %v8577, %v8673
    %v8675 = vpop.f32.mrb[0].mxu0
    %8676 = vdwg.mxu0
    %8677 = vmatprep.subr.bf16.mxu0 0
    %8678 = vmatpush1.bf16.msra.mxu0 %v8339
    %8679 = vmatprep.subr.bf16.mxu0 0
    %8680 = vmatpush1.bf16.msra.mxu0 %v8340
    %8681 = vmatprep.subr.bf16.mxu0 0
    %8682 = vmatpush1.bf16.msra.mxu0 %v8341
    %8683 = vmatprep.subr.bf16.mxu0 0
    %8684 = vmatpush1.bf16.msra.mxu0 %v8342
    %8685 = vmatprep.subr.bf16.mxu0 0
    %8686 = vmatpush1.bf16.msra.mxu0 %v8343
    %8687 = vmatprep.subr.bf16.mxu0 0
    %8688 = vmatpush1.bf16.msra.mxu0 %v8344
    %8689 = vmatprep.subr.bf16.mxu0 0
    %8690 = vmatpush1.bf16.msra.mxu0 %v8345
    %8691 = vmatprep.subr.bf16.mxu0 0
    %8692 = vmatpush1.bf16.msra.mxu0 %v8346
    %8693 = vmatprep.subr.bf16.mxu0 0
    %8694 = vmatpush1.bf16.msra.mxu0 %v8347
    %8695 = vmatprep.subr.bf16.mxu0 0
    %8696 = vmatpush1.bf16.msra.mxu0 %v8348
    %8697 = vmatprep.subr.bf16.mxu0 0
    %8698 = vmatpush1.bf16.msra.mxu0 %v8349
    %8699 = vmatprep.subr.bf16.mxu0 0
    %8700 = vmatpush1.bf16.msra.mxu0 %v8350
    %8701 = vmatprep.subr.bf16.mxu0 0
    %8702 = vmatpush1.bf16.msra.mxu0 %v8351
    %8703 = vmatprep.subr.bf16.mxu0 0
    %8704 = vmatpush1.bf16.msra.mxu0 %v8352
    %8705 = vmatprep.subr.bf16.mxu0 0
    %8706 = vmatpush1.bf16.msra.mxu0 %v8353
    %8707 = vmatprep.subr.bf16.mxu0 0
    %8708 = vmatpush1.bf16.msra.mxu0 %v8354
    %8709 = vmatprep.mubr.bf16.mxu0 %v7518
    %8710 = vmatmul.mubr.bf16.gmra.mrb[0].mxu0 %v7517
    %v8711 = vpop.f32.mrb[0].mxu0
    %v8712 = vadd.f32 %v8615, %v8711
    %v8713 = vpop.f32.mrb[0].mxu0
    %v8714 = vpop.f32.mrb[0].mxu0
    %v8715 = vadd.f32 %v8618, %v8714
    %v8716 = vpop.f32.mrb[0].mxu0
    %8717 = vmatprep.mubr.bf16.mxu0 %v7529
    %8718 = vmatmul.mubr.bf16.gmra.mrb[0].mxu0 %v7528
    %v8719 = vpop.f32.mrb[0].mxu0
    %v8720 = vadd.f32 %v8623, %v8719
    %v8721 = vpop.f32.mrb[0].mxu0
    %v8722 = vpop.f32.mrb[0].mxu0
    %v8723 = vadd.f32 %v8626, %v8722
    %v8724 = vpop.f32.mrb[0].mxu0
    %8725 = vmatprep.mubr.bf16.mxu0 %v7540
    %8726 = vmatmul.mubr.bf16.gmra.mrb[0].mxu0 %v7539
    %v8727 = vpop.f32.mrb[0].mxu0
    %v8728 = vadd.f32 %v8631, %v8727
    %v8729 = vpop.f32.mrb[0].mxu0
    %v8730 = vpop.f32.mrb[0].mxu0
    %v8731 = vadd.f32 %v8634, %v8730
    %v8732 = vpop.f32.mrb[0].mxu0
    %8733 = vmatprep.mubr.bf16.mxu0 %v7551
    %8734 = vmatmul.mubr.bf16.gmra.mrb[0].mxu0 %v7550
    %v8735 = vpop.f32.mrb[0].mxu0
    %v8736 = vadd.f32 %v8639, %v8735
    %v8737 = vpop.f32.mrb[0].mxu0
    %v8738 = vpop.f32.mrb[0].mxu0
    %v8739 = vadd.f32 %v8642, %v8738
    %v8740 = vpop.f32.mrb[0].mxu0
    %8741 = vmatprep.mubr.bf16.mxu0 %v7562
    %8742 = vmatmul.mubr.bf16.gmra.mrb[0].mxu0 %v7561
    %v8743 = vpop.f32.mrb[0].mxu0
    %v8744 = vadd.f32 %v8647, %v8743
    %v8745 = vpop.f32.mrb[0].mxu0
    %v8746 = vpop.f32.mrb[0].mxu0
    %v8747 = vadd.f32 %v8650, %v8746
    %v8748 = vpop.f32.mrb[0].mxu0
    %8749 = vmatprep.mubr.bf16.mxu0 %v7573
    %8750 = vmatmul.mubr.bf16.gmra.mrb[0].mxu0 %v7572
    %v8751 = vpop.f32.mrb[0].mxu0
    %v8752 = vadd.f32 %v8655, %v8751
    %v8753 = vpop.f32.mrb[0].mxu0
    %v8754 = vpop.f32.mrb[0].mxu0
    %v8755 = vadd.f32 %v8658, %v8754
    %v8756 = vpop.f32.mrb[0].mxu0
    %8757 = vmatprep.mubr.bf16.mxu0 %v7584
    %8758 = vmatmul.mubr.bf16.gmra.mrb[0].mxu0 %v7583
    %v8759 = vpop.f32.mrb[0].mxu0
    %v8760 = vadd.f32 %v8663, %v8759
    %v8761 = vpop.f32.mrb[0].mxu0
    %v8762 = vpop.f32.mrb[0].mxu0
    %v8763 = vadd.f32 %v8666, %v8762
    %v8764 = vpop.f32.mrb[0].mxu0
    %8765 = vmatprep.mubr.bf16.mxu0 %v7595
    %8766 = vmatmul.mubr.bf16.gmra.mrb[0].mxu0 %v7594
    %v8767 = vpop.f32.mrb[0].mxu0
    %v8768 = vadd.f32 %v8671, %v8767
    %v8769 = vpop.f32.mrb[0].mxu0
    %v8770 = vpop.f32.mrb[0].mxu0
    %v8771 = vadd.f32 %v8674, %v8770
    %v8772 = vpop.f32.mrb[0].mxu0
    %8773 = vdwg.mxu0
    %8774 = vmatprep.subr.bf16.mxu0 0
    %8775 = vmatpush1.bf16.msra.mxu0 %v8355
    %8776 = vmatprep.subr.bf16.mxu0 0
    %8777 = vmatpush1.bf16.msra.mxu0 %v8356
    %8778 = vmatprep.subr.bf16.mxu0 0
    %8779 = vmatpush1.bf16.msra.mxu0 %v8357
    %8780 = vmatprep.subr.bf16.mxu0 0
    %8781 = vmatpush1.bf16.msra.mxu0 %v8358
    %8782 = vmatprep.subr.bf16.mxu0 0
    %8783 = vmatpush1.bf16.msra.mxu0 %v8359
    %8784 = vmatprep.subr.bf16.mxu0 0
    %8785 = vmatpush1.bf16.msra.mxu0 %v8360
    %8786 = vmatprep.subr.bf16.mxu0 0
    %8787 = vmatpush1.bf16.msra.mxu0 %v8361
    %8788 = vmatprep.subr.bf16.mxu0 0
    %8789 = vmatpush1.bf16.msra.mxu0 %v8362
    %8790 = vmatprep.subr.bf16.mxu0 0
    %8791 = vmatpush1.bf16.msra.mxu0 %v8363
    %8792 = vmatprep.subr.bf16.mxu0 0
    %8793 = vmatpush1.bf16.msra.mxu0 %v8364
    %8794 = vmatprep.subr.bf16.mxu0 0
    %8795 = vmatpush1.bf16.msra.mxu0 %v8365
    %8796 = vmatprep.subr.bf16.mxu0 0
    %8797 = vmatpush1.bf16.msra.mxu0 %v8366
    %8798 = vmatprep.subr.bf16.mxu0 0
    %8799 = vmatpush1.bf16.msra.mxu0 %v8367
    %8800 = vmatprep.subr.bf16.mxu0 0
    %8801 = vmatpush1.bf16.msra.mxu0 %v8368
    %8802 = vmatprep.subr.bf16.mxu0 0
    %8803 = vmatpush1.bf16.msra.mxu0 %v8369
    %8804 = vmatprep.subr.bf16.mxu0 0
    %8805 = vmatpush1.bf16.msra.mxu0 %v8370
    %8806 = vmatprep.mubr.bf16.mxu0 %v7520
    %8807 = vmatmul.mubr.bf16.gmra.mrb[0].mxu0 %v7519
    %v8808 = vpop.f32.mrb[0].mxu0
    %v8809 = vadd.f32 %v8712, %v8808
    %v8810 = vpop.f32.mrb[0].mxu0
    %v8811 = vpop.f32.mrb[0].mxu0
    %v8812 = vadd.f32 %v8715, %v8811
    %v8813 = vpop.f32.mrb[0].mxu0
    %8814 = vmatprep.mubr.bf16.mxu0 %v7531
    %8815 = vmatmul.mubr.bf16.gmra.mrb[0].mxu0 %v7530
    %v8816 = vpop.f32.mrb[0].mxu0
    %v8817 = vadd.f32 %v8720, %v8816
    %v8818 = vpop.f32.mrb[0].mxu0
    %v8819 = vpop.f32.mrb[0].mxu0
    %v8820 = vadd.f32 %v8723, %v8819
    %v8821 = vpop.f32.mrb[0].mxu0
    %8822 = vmatprep.mubr.bf16.mxu0 %v7542
    %8823 = vmatmul.mubr.bf16.gmra.mrb[0].mxu0 %v7541
    %v8824 = vpop.f32.mrb[0].mxu0
    %v8825 = vadd.f32 %v8728, %v8824
    %v8826 = vpop.f32.mrb[0].mxu0
    %v8827 = vpop.f32.mrb[0].mxu0
    %v8828 = vadd.f32 %v8731, %v8827
    %v8829 = vpop.f32.mrb[0].mxu0
    %8830 = vmatprep.mubr.bf16.mxu0 %v7553
    %8831 = vmatmul.mubr.bf16.gmra.mrb[0].mxu0 %v7552
    %v8832 = vpop.f32.mrb[0].mxu0
    %v8833 = vadd.f32 %v8736, %v8832
    %v8834 = vpop.f32.mrb[0].mxu0
    %v8835 = vpop.f32.mrb[0].mxu0
    %v8836 = vadd.f32 %v8739, %v8835
    %v8837 = vpop.f32.mrb[0].mxu0
    %8838 = vmatprep.mubr.bf16.mxu0 %v7564
    %8839 = vmatmul.mubr.bf16.gmra.mrb[0].mxu0 %v7563
    %v8840 = vpop.f32.mrb[0].mxu0
    %v8841 = vadd.f32 %v8744, %v8840
    %v8842 = vpop.f32.mrb[0].mxu0
    %v8843 = vpop.f32.mrb[0].mxu0
    %v8844 = vadd.f32 %v8747, %v8843
    %v8845 = vpop.f32.mrb[0].mxu0
    %8846 = vmatprep.mubr.bf16.mxu0 %v7575
    %8847 = vmatmul.mubr.bf16.gmra.mrb[0].mxu0 %v7574
    %v8848 = vpop.f32.mrb[0].mxu0
    %v8849 = vadd.f32 %v8752, %v8848
    %v8850 = vpop.f32.mrb[0].mxu0
    %v8851 = vpop.f32.mrb[0].mxu0
    %v8852 = vadd.f32 %v8755, %v8851
    %v8853 = vpop.f32.mrb[0].mxu0
    %8854 = vmatprep.mubr.bf16.mxu0 %v7586
    %8855 = vmatmul.mubr.bf16.gmra.mrb[0].mxu0 %v7585
    %v8856 = vpop.f32.mrb[0].mxu0
    %v8857 = vadd.f32 %v8760, %v8856
    %v8858 = vpop.f32.mrb[0].mxu0
    %v8859 = vpop.f32.mrb[0].mxu0
    %v8860 = vadd.f32 %v8763, %v8859
    %v8861 = vpop.f32.mrb[0].mxu0
    %8862 = vmatprep.mubr.bf16.mxu0 %v7597
    %8863 = vmatmul.mubr.bf16.gmra.mrb[0].mxu0 %v7596
    %v8864 = vpop.f32.mrb[0].mxu0
    %v8865 = vadd.f32 %v8768, %v8864
    %v8866 = vpop.f32.mrb[0].mxu0
    %v8867 = vpop.f32.mrb[0].mxu0
    %v8868 = vadd.f32 %v8771, %v8867
    %v8869 = vpop.f32.mrb[0].mxu0
    %8870 = vdwg.mxu0
    %8871 = vmatprep.subr.bf16.mxu0 0
    %8872 = vmatpush1.bf16.msra.mxu0 %v8371
    %8873 = vmatprep.subr.bf16.mxu0 0
    %8874 = vmatpush1.bf16.msra.mxu0 %v8372
    %8875 = vmatprep.subr.bf16.mxu0 0
    %8876 = vmatpush1.bf16.msra.mxu0 %v8373
    %8877 = vmatprep.subr.bf16.mxu0 0
    %8878 = vmatpush1.bf16.msra.mxu0 %v8374
    %8879 = vmatprep.subr.bf16.mxu0 0
    %8880 = vmatpush1.bf16.msra.mxu0 %v8375
    %8881 = vmatprep.subr.bf16.mxu0 0
    %8882 = vmatpush1.bf16.msra.mxu0 %v8376
    %8883 = vmatprep.subr.bf16.mxu0 0
    %8884 = vmatpush1.bf16.msra.mxu0 %v8377
    %8885 = vmatprep.subr.bf16.mxu0 0
    %8886 = vmatpush1.bf16.msra.mxu0 %v8378
    %8887 = vmatprep.subr.bf16.mxu0 0
    %8888 = vmatpush1.bf16.msra.mxu0 %v8379
    %8889 = vmatprep.subr.bf16.mxu0 0
    %8890 = vmatpush1.bf16.msra.mxu0 %v8380
    %8891 = vmatprep.subr.bf16.mxu0 0
    %8892 = vmatpush1.bf16.msra.mxu0 %v8381
    %8893 = vmatprep.subr.bf16.mxu0 0
    %8894 = vmatpush1.bf16.msra.mxu0 %v8382
    %8895 = vmatprep.subr.bf16.mxu0 0
    %8896 = vmatpush1.bf16.msra.mxu0 %v8383
    %8897 = vmatprep.subr.bf16.mxu0 0
    %8898 = vmatpush1.bf16.msra.mxu0 %v8384
    %8899 = vmatprep.subr.bf16.mxu0 0
    %8900 = vmatpush1.bf16.msra.mxu0 %v8385
    %8901 = vmatprep.subr.bf16.mxu0 0
    %8902 = vmatpush1.bf16.msra.mxu0 %v8386
    %8903 = vmatprep.mubr.bf16.mxu0 %v7522
    %8904 = vmatmul.mubr.bf16.gmra.mrb[0].mxu0 %v7521
    %v8905 = vpop.f32.mrb[0].mxu0
    %v8906 = vadd.f32 %v8809, %v8905
    %v8907 = vpop.f32.mrb[0].mxu0
    %v8908 = vpop.f32.mrb[0].mxu0
    %v8909 = vadd.f32 %v8812, %v8908
    %v8910 = vpop.f32.mrb[0].mxu0
    %8911 = vmatprep.mubr.bf16.mxu0 %v7533
    %8912 = vmatmul.mubr.bf16.gmra.mrb[0].mxu0 %v7532
    %v8913 = vpop.f32.mrb[0].mxu0
    %v8914 = vadd.f32 %v8817, %v8913
    %v8915 = vpop.f32.mrb[0].mxu0
    %v8916 = vpop.f32.mrb[0].mxu0
    %v8917 = vadd.f32 %v8820, %v8916
    %v8918 = vpop.f32.mrb[0].mxu0
    %8919 = vmatprep.mubr.bf16.mxu0 %v7544
    %8920 = vmatmul.mubr.bf16.gmra.mrb[0].mxu0 %v7543
    %v8921 = vpop.f32.mrb[0].mxu0
    %v8922 = vadd.f32 %v8825, %v8921
    %v8923 = vpop.f32.mrb[0].mxu0
    %v8924 = vpop.f32.mrb[0].mxu0
    %v8925 = vadd.f32 %v8828, %v8924
    %v8926 = vpop.f32.mrb[0].mxu0
    %8927 = vmatprep.mubr.bf16.mxu0 %v7555
    %8928 = vmatmul.mubr.bf16.gmra.mrb[0].mxu0 %v7554
    %v8929 = vpop.f32.mrb[0].mxu0
    %v8930 = vadd.f32 %v8833, %v8929
    %v8931 = vpop.f32.mrb[0].mxu0
    %v8932 = vpop.f32.mrb[0].mxu0
    %v8933 = vadd.f32 %v8836, %v8932
    %v8934 = vpop.f32.mrb[0].mxu0
    %8935 = vmatprep.mubr.bf16.mxu0 %v7566
    %8936 = vmatmul.mubr.bf16.gmra.mrb[0].mxu0 %v7565
    %v8937 = vpop.f32.mrb[0].mxu0
    %v8938 = vadd.f32 %v8841, %v8937
    %v8939 = vpop.f32.mrb[0].mxu0
    %v8940 = vpop.f32.mrb[0].mxu0
    %v8941 = vadd.f32 %v8844, %v8940
    %v8942 = vpop.f32.mrb[0].mxu0
    %8943 = vmatprep.mubr.bf16.mxu0 %v7577
    %8944 = vmatmul.mubr.bf16.gmra.mrb[0].mxu0 %v7576
    %v8945 = vpop.f32.mrb[0].mxu0
    %v8946 = vadd.f32 %v8849, %v8945
    %v8947 = vpop.f32.mrb[0].mxu0
    %v8948 = vpop.f32.mrb[0].mxu0
    %v8949 = vadd.f32 %v8852, %v8948
    %v8950 = vpop.f32.mrb[0].mxu0
    %8951 = vmatprep.mubr.bf16.mxu0 %v7588
    %8952 = vmatmul.mubr.bf16.gmra.mrb[0].mxu0 %v7587
    %v8953 = vpop.f32.mrb[0].mxu0
    %v8954 = vadd.f32 %v8857, %v8953
    %v8955 = vpop.f32.mrb[0].mxu0
    %v8956 = vpop.f32.mrb[0].mxu0
    %v8957 = vadd.f32 %v8860, %v8956
    %v8958 = vpop.f32.mrb[0].mxu0
    %8959 = vmatprep.mubr.bf16.mxu0 %v7599
    %8960 = vmatmul.mubr.bf16.gmra.mrb[0].mxu0 %v7598
    %v8961 = vpop.f32.mrb[0].mxu0
    %v8962 = vadd.f32 %v8865, %v8961
    %v8963 = vpop.f32.mrb[0].mxu0
    %v8964 = vpop.f32.mrb[0].mxu0
    %v8965 = vadd.f32 %v8868, %v8964
    %v8966 = vpop.f32.mrb[0].mxu0
    %8967 = vdwg.mxu0
    %8968 = vmatprep.subr.bf16.mxu0 0
    %8969 = vmatpush1.bf16.msra.mxu0 %v8387
    %8970 = vmatprep.subr.bf16.mxu0 0
    %8971 = vmatpush1.bf16.msra.mxu0 %v8388
    %8972 = vmatprep.subr.bf16.mxu0 0
    %8973 = vmatpush1.bf16.msra.mxu0 %v8389
    %8974 = vmatprep.subr.bf16.mxu0 0
    %8975 = vmatpush1.bf16.msra.mxu0 %v8390
    %8976 = vmatprep.subr.bf16.mxu0 0
    %8977 = vmatpush1.bf16.msra.mxu0 %v8391
    %8978 = vmatprep.subr.bf16.mxu0 0
    %8979 = vmatpush1.bf16.msra.mxu0 %v8392
    %8980 = vmatprep.subr.bf16.mxu0 0
    %8981 = vmatpush1.bf16.msra.mxu0 %v8393
    %8982 = vmatprep.subr.bf16.mxu0 0
    %8983 = vmatpush1.bf16.msra.mxu0 %v8394
    %8984 = vmatprep.subr.bf16.mxu0 0
    %8985 = vmatpush1.bf16.msra.mxu0 0
    %8986 = vmatprep.subr.bf16.mxu0 0
    %8987 = vmatpush1.bf16.msra.mxu0 0
    %8988 = vmatprep.subr.bf16.mxu0 0
    %8989 = vmatpush1.bf16.msra.mxu0 0
    %8990 = vmatprep.subr.bf16.mxu0 0
    %8991 = vmatpush1.bf16.msra.mxu0 0
    %8992 = vmatprep.subr.bf16.mxu0 0
    %8993 = vmatpush1.bf16.msra.mxu0 0
    %8994 = vmatprep.subr.bf16.mxu0 0
    %8995 = vmatpush1.bf16.msra.mxu0 0
    %8996 = vmatprep.subr.bf16.mxu0 0
    %8997 = vmatpush1.bf16.msra.mxu0 0
    %8998 = vmatprep.subr.bf16.mxu0 0
    %8999 = vmatpush1.bf16.msra.mxu0 0
    %9000 = vmatprep.mubr.bf16.mxu0 0
    %9001 = vmatmul.mubr.bf16.gmra.mrb[0].mxu0 %v7523
    %v9002 = vpop.f32.mrb[0].mxu0
    %v9003 = vadd.f32 %v8906, %v9002
    %v9004 = vpop.f32.mrb[0].mxu0
    %v9005 = vpop.f32.mrb[0].mxu0
    %v9006 = vadd.f32 %v8909, %v9005
    %v9007 = vpop.f32.mrb[0].mxu0
    %9008 = vmatprep.mubr.bf16.mxu0 0
    %9009 = vmatmul.mubr.bf16.gmra.mrb[0].mxu0 %v7534
    %v9010 = vpop.f32.mrb[0].mxu0
    %v9011 = vadd.f32 %v8914, %v9010
    %v9012 = vpop.f32.mrb[0].mxu0
    %v9013 = vpop.f32.mrb[0].mxu0
    %v9014 = vadd.f32 %v8917, %v9013
    %v9015 = vpop.f32.mrb[0].mxu0
    %9016 = vmatprep.mubr.bf16.mxu0 0
    %9017 = vmatmul.mubr.bf16.gmra.mrb[0].mxu0 %v7545
    %v9018 = vpop.f32.mrb[0].mxu0
    %v9019 = vadd.f32 %v8922, %v9018
    %v9020 = vpop.f32.mrb[0].mxu0
    %v9021 = vpop.f32.mrb[0].mxu0
    %v9022 = vadd.f32 %v8925, %v9021
    %v9023 = vpop.f32.mrb[0].mxu0
    %9024 = vmatprep.mubr.bf16.mxu0 0
    %9025 = vmatmul.mubr.bf16.gmra.mrb[0].mxu0 %v7556
    %v9026 = vpop.f32.mrb[0].mxu0
    %v9027 = vadd.f32 %v8930, %v9026
    %v9028 = vpop.f32.mrb[0].mxu0
    %v9029 = vpop.f32.mrb[0].mxu0
    %v9030 = vadd.f32 %v8933, %v9029
    %v9031 = vpop.f32.mrb[0].mxu0
    %9032 = vmatprep.mubr.bf16.mxu0 0
    %9033 = vmatmul.mubr.bf16.gmra.mrb[0].mxu0 %v7567
    %v9034 = vpop.f32.mrb[0].mxu0
    %v9035 = vadd.f32 %v8938, %v9034
    %v9036 = vpop.f32.mrb[0].mxu0
    %v9037 = vpop.f32.mrb[0].mxu0
    %v9038 = vadd.f32 %v8941, %v9037
    %v9039 = vpop.f32.mrb[0].mxu0
    %9040 = vmatprep.mubr.bf16.mxu0 0
    %9041 = vmatmul.mubr.bf16.gmra.mrb[0].mxu0 %v7578
    %v9042 = vpop.f32.mrb[0].mxu0
    %v9043 = vadd.f32 %v8946, %v9042
    %v9044 = vpop.f32.mrb[0].mxu0
    %v9045 = vpop.f32.mrb[0].mxu0
    %v9046 = vadd.f32 %v8949, %v9045
    %v9047 = vpop.f32.mrb[0].mxu0
    %9048 = vmatprep.mubr.bf16.mxu0 0
    %9049 = vmatmul.mubr.bf16.gmra.mrb[0].mxu0 %v7589
    %v9050 = vpop.f32.mrb[0].mxu0
    %v9051 = vadd.f32 %v8954, %v9050
    %v9052 = vpop.f32.mrb[0].mxu0
    %v9053 = vpop.f32.mrb[0].mxu0
    %v9054 = vadd.f32 %v8957, %v9053
    %v9055 = vpop.f32.mrb[0].mxu0
    %9056 = vmatprep.mubr.bf16.mxu0 0
    %9057 = vmatmul.mubr.bf16.gmra.mrb[0].mxu0 %v7600
    %v9058 = vpop.f32.mrb[0].mxu0
    %v9059 = vadd.f32 %v8962, %v9058
    %v9060 = vpop.f32.mrb[0].mxu0
    %v9061 = vpop.f32.mrb[0].mxu0
    %v9062 = vadd.f32 %v8965, %v9061
    %v9063 = vpop.f32.mrb[0].mxu0
    %9064 = vdwg.mxu0
    %v9241 = vunpack.c.l.b16 %v7602
    %v9242 = vunpack.c.l.b16 %v7603
    %v9243 = vunpack.c.l.b16 %v7604
    %v9244 = vunpack.c.l.b16 %v7605
    %v9245 = vunpack.c.l.b16 %v7606
    %v9246 = vunpack.c.l.b16 %v7607
    %v9247 = vunpack.c.l.b16 %v7608
    %v9248 = vunpack.c.l.b16 %v7609
    %v9249 = vunpack.c.l.b16 %v7610
    %v9250 = vunpack.c.l.b16 %v7611
    %v9251 = vunpack.c.l.b16 %v7612
    %v9252 = vunpack.c.l.b16 %v7613
    %v9253 = vunpack.c.l.b16 %v7614
    %v9254 = vunpack.c.l.b16 %v7615
    %v9255 = vunpack.c.l.b16 %v7616
    %v9256 = vunpack.c.l.b16 %v7617
    %v9257 = vunpack.c.l.b16 %v7618
    %v9258 = vunpack.c.l.b16 %v7619
    %v9259 = vunpack.c.l.b16 %v7620
    %v9260 = vunpack.c.l.b16 %v7621
    %v9261 = vunpack.c.l.b16 %v7622
    %v9262 = vunpack.c.l.b16 %v7623
    %v9263 = vunpack.c.l.b16 %v7624
    %v9264 = vunpack.c.l.b16 %v7625
    %v9265 = vunpack.c.l.b16 %v7626
    %v9266 = vunpack.c.l.b16 %v7627
    %v9267 = vunpack.c.l.b16 %v7628
    %v9268 = vunpack.c.l.b16 %v7629
    %v9269 = vunpack.c.l.b16 %v7630
    %v9270 = vunpack.c.l.b16 %v7631
    %v9271 = vunpack.c.l.b16 %v7632
    %v9272 = vunpack.c.l.b16 %v7633
    %v9273 = vunpack.c.l.b16 %v7634
    %v9274 = vunpack.c.l.b16 %v7635
    %v9275 = vunpack.c.l.b16 %v7636
    %v9276 = vunpack.c.l.b16 %v7637
    %v9277 = vunpack.c.l.b16 %v7638
    %v9278 = vunpack.c.l.b16 %v7639
    %v9279 = vunpack.c.l.b16 %v7640
    %v9280 = vunpack.c.l.b16 %v7641
    %v9281 = vunpack.c.l.b16 %v7642
    %v9282 = vunpack.c.l.b16 %v7643
    %v9283 = vunpack.c.l.b16 %v7644
    %v9284 = vunpack.c.l.b16 %v7645
    %v9285 = vunpack.c.l.b16 %v7646
    %v9286 = vunpack.c.l.b16 %v7647
    %v9287 = vunpack.c.l.b16 %v7648
    %v9288 = vunpack.c.l.b16 %v7649
    %v9289 = vunpack.c.l.b16 %v7650
    %v9290 = vunpack.c.l.b16 %v7651
    %v9291 = vunpack.c.l.b16 %v7652
    %v9292 = vunpack.c.l.b16 %v7653
    %v9293 = vunpack.c.l.b16 %v7654
    %v9294 = vunpack.c.l.b16 %v7655
    %v9295 = vunpack.c.l.b16 %v7656
    %v9296 = vunpack.c.l.b16 %v7657
    %v9297 = vunpack.c.l.b16 %v7658
    %v9298 = vunpack.c.l.b16 %v7659
    %v9299 = vunpack.c.l.b16 %v7660
    %v9300 = vunpack.c.l.b16 %v7661
    %v9301 = vunpack.c.l.b16 %v7662
    %v9302 = vunpack.c.l.b16 %v7663
    %v9303 = vunpack.c.l.b16 %v7664
    %v9304 = vunpack.c.l.b16 %v7665
    %v9305 = vunpack.c.l.b16 %v7666
    %v9306 = vunpack.c.l.b16 %v7667
    %v9307 = vunpack.c.l.b16 %v7668
    %v9308 = vunpack.c.l.b16 %v7669
    %v9309 = vunpack.c.l.b16 %v7670
    %v9310 = vunpack.c.l.b16 %v7671
    %v9311 = vunpack.c.l.b16 %v7672
    %v9312 = vunpack.c.l.b16 %v7673
    %v9313 = vunpack.c.l.b16 %v7674
    %v9314 = vunpack.c.l.b16 %v7675
    %v9315 = vunpack.c.l.b16 %v7676
    %v9316 = vunpack.c.l.b16 %v7677
    %v9317 = vunpack.c.l.b16 %v7678
    %v9318 = vunpack.c.l.b16 %v7679
    %v9319 = vunpack.c.l.b16 %v7680
    %v9320 = vunpack.c.l.b16 %v7681
    %v9321 = vunpack.c.l.b16 %v7682
    %v9322 = vunpack.c.l.b16 %v7683
    %v9323 = vunpack.c.l.b16 %v7684
    %v9324 = vunpack.c.l.b16 %v7685
    %v9325 = vunpack.c.l.b16 %v7686
    %v9326 = vunpack.c.l.b16 %v7687
    %v9327 = vunpack.c.l.b16 %v7688
    %v9328 = vunpack.c.l.b16 %v7689
    %v9329 = vunpack.c.l.b16 %v7690
    %v9330 = vunpack.c.l.b16 %v7691
    %v9331 = vunpack.c.l.b16 %v7692
    %v9332 = vunpack.c.l.b16 %v7693
    %v9333 = vunpack.c.l.b16 %v7694
    %v9334 = vunpack.c.l.b16 %v7695
    %v9335 = vunpack.c.l.b16 %v7696
    %v9336 = vunpack.c.l.b16 %v7697
    %v9337 = vunpack.c.l.b16 %v7698
    %v9338 = vunpack.c.l.b16 %v7699
    %v9339 = vunpack.c.l.b16 %v7700
    %v9340 = vunpack.c.l.b16 %v7701
    %v9341 = vunpack.c.l.b16 %v7702
    %v9342 = vunpack.c.l.b16 %v7703
    %v9343 = vunpack.c.l.b16 %v7704
    %v9344 = vunpack.c.l.b16 %v7705
    %v9345 = vunpack.c.l.b16 %v7706
    %v9346 = vunpack.c.l.b16 %v7707
    %v9347 = vunpack.c.l.b16 %v7708
    %v9348 = vunpack.c.l.b16 %v7709
    %v9349 = vunpack.c.l.b16 %v7710
    %v9350 = vunpack.c.l.b16 %v7711
    %v9351 = vunpack.c.l.b16 %v7712
    %v9352 = vunpack.c.l.b16 %v7713
    %v9353 = vunpack.c.l.b16 %v7714
    %v9354 = vunpack.c.l.b16 %v7715
    %v9355 = vunpack.c.l.b16 %v7716
    %v9356 = vunpack.c.l.b16 %v7717
    %v9357 = vunpack.c.l.b16 %v7718
    %v9358 = vunpack.c.l.b16 %v7719
    %v9359 = vunpack.c.l.b16 %v7720
    %v9360 = vunpack.c.l.b16 %v7721
    %v9361 = vunpack.c.l.b16 %v7722
    %v9362 = vunpack.c.l.b16 %v7723
    %v9363 = vunpack.c.l.b16 %v7724
    %v9364 = vunpack.c.l.b16 %v7725
    %v9365 = vunpack.c.l.b16 %v7726
    %v9366 = vunpack.c.l.b16 %v7727
    %v9367 = vunpack.c.l.b16 %v7728
    %v9368 = vunpack.c.l.b16 %v7729
    %v9369 = vunpack.c.l.b16 %v7730
    %v9370 = vunpack.c.l.b16 %v7731
    %v9371 = vunpack.c.l.b16 %v7732
    %v9372 = vunpack.c.l.b16 %v7733
    %v9373 = vunpack.c.l.b16 %v7734
    %v9374 = vunpack.c.l.b16 %v7735
    %v9375 = vunpack.c.l.b16 %v7736
    %v9376 = vunpack.c.l.b16 %v7737
    %v9377 = vunpack.c.l.b16 %v7738
    %v9378 = vunpack.c.l.b16 %v7739
    %v9379 = vunpack.c.l.b16 %v7740
    %v9380 = vunpack.c.l.b16 %v7741
    %v9381 = vunpack.c.l.b16 %v7742
    %v9382 = vunpack.c.l.b16 %v7743
    %v9383 = vunpack.c.l.b16 %v7744
    %v9384 = vunpack.c.l.b16 %v7745
    %v9385 = vunpack.c.l.b16 %v7746
    %v9386 = vunpack.c.l.b16 %v7747
    %v9387 = vunpack.c.l.b16 %v7748
    %v9388 = vunpack.c.l.b16 %v7749
    %v9389 = vunpack.c.l.b16 %v7750
    %v9390 = vunpack.c.l.b16 %v7751
    %v9391 = vunpack.c.l.b16 %v7752
    %v9392 = vunpack.c.l.b16 %v7753
    %v9393 = vunpack.c.l.b16 %v7754
    %v9394 = vunpack.c.l.b16 %v7755
    %v9395 = vunpack.c.l.b16 %v7756
    %v9396 = vunpack.c.l.b16 %v7757
    %v9397 = vunpack.c.l.b16 %v7758
    %v9398 = vunpack.c.l.b16 %v7759
    %v9399 = vunpack.c.l.b16 %v7760
    %v9400 = vunpack.c.l.b16 %v7761
    %v9401 = vunpack.c.l.b16 %v7762
    %v9402 = vunpack.c.l.b16 %v7763
    %v9403 = vunpack.c.l.b16 %v7764
    %v9404 = vunpack.c.l.b16 %v7765
    %v9405 = vunpack.c.l.b16 %v7766
    %v9406 = vunpack.c.l.b16 %v7767
    %v9407 = vunpack.c.l.b16 %v7768
    %v9408 = vunpack.c.l.b16 %v7769
    %v9409 = vunpack.c.l.b16 %v7770
    %v9410 = vunpack.c.l.b16 %v7771
    %v9411 = vunpack.c.l.b16 %v7772
    %v9412 = vunpack.c.l.b16 %v7773
    %v9413 = vunpack.c.l.b16 %v7774
    %v9414 = vunpack.c.l.b16 %v7775
    %v9415 = vunpack.c.l.b16 %v7776
    %v9416 = vunpack.c.l.b16 %v7777
    %v9417 = vpack.c.b16 %v9242, %v9241
    %v9418 = vpack.c.b16 %v9244, %v9243
    %v9419 = vpack.c.b16 %v9246, %v9245
    %v9420 = vpack.c.b16 %v9248, %v9247
    %v9421 = vpack.c.b16 %v9250, %v9249
    %v9422 = vpack.c.b16 %v9252, %v9251
    %v9423 = vpack.c.b16 %v9254, %v9253
    %v9424 = vpack.c.b16 %v9256, %v9255
    %v9425 = vpack.c.b16 %v9258, %v9257
    %v9426 = vpack.c.b16 %v9260, %v9259
    %v9427 = vpack.c.b16 %v9262, %v9261
    %v9428 = vpack.c.b16 %v9264, %v9263
    %v9429 = vpack.c.b16 %v9266, %v9265
    %v9430 = vpack.c.b16 %v9268, %v9267
    %v9431 = vpack.c.b16 %v9270, %v9269
    %v9432 = vpack.c.b16 %v9272, %v9271
    %v9433 = vpack.c.b16 %v9274, %v9273
    %v9434 = vpack.c.b16 %v9276, %v9275
    %v9435 = vpack.c.b16 %v9278, %v9277
    %v9436 = vpack.c.b16 %v9280, %v9279
    %v9437 = vpack.c.b16 %v9282, %v9281
    %v9438 = vpack.c.b16 %v9284, %v9283
    %v9439 = vpack.c.b16 %v9286, %v9285
    %v9440 = vpack.c.b16 %v9288, %v9287
    %v9441 = vpack.c.b16 %v9290, %v9289
    %v9442 = vpack.c.b16 %v9292, %v9291
    %v9443 = vpack.c.b16 %v9294, %v9293
    %v9444 = vpack.c.b16 %v9296, %v9295
    %v9445 = vpack.c.b16 %v9298, %v9297
    %v9446 = vpack.c.b16 %v9300, %v9299
    %v9447 = vpack.c.b16 %v9302, %v9301
    %v9448 = vpack.c.b16 %v9304, %v9303
    %v9449 = vpack.c.b16 %v9306, %v9305
    %v9450 = vpack.c.b16 %v9308, %v9307
    %v9451 = vpack.c.b16 %v9310, %v9309
    %v9452 = vpack.c.b16 %v9312, %v9311
    %v9453 = vpack.c.b16 %v9314, %v9313
    %v9454 = vpack.c.b16 %v9316, %v9315
    %v9455 = vpack.c.b16 %v9318, %v9317
    %v9456 = vpack.c.b16 %v9320, %v9319
    %v9457 = vpack.c.b16 %v9322, %v9321
    %v9458 = vpack.c.b16 %v9324, %v9323
    %v9459 = vpack.c.b16 %v9326, %v9325
    %v9460 = vpack.c.b16 %v9328, %v9327
    %v9461 = vpack.c.b16 %v9330, %v9329
    %v9462 = vpack.c.b16 %v9332, %v9331
    %v9463 = vpack.c.b16 %v9334, %v9333
    %v9464 = vpack.c.b16 %v9336, %v9335
    %v9465 = vpack.c.b16 %v9338, %v9337
    %v9466 = vpack.c.b16 %v9340, %v9339
    %v9467 = vpack.c.b16 %v9342, %v9341
    %v9468 = vpack.c.b16 %v9344, %v9343
    %v9469 = vpack.c.b16 %v9346, %v9345
    %v9470 = vpack.c.b16 %v9348, %v9347
    %v9471 = vpack.c.b16 %v9350, %v9349
    %v9472 = vpack.c.b16 %v9352, %v9351
    %v9473 = vpack.c.b16 %v9354, %v9353
    %v9474 = vpack.c.b16 %v9356, %v9355
    %v9475 = vpack.c.b16 %v9358, %v9357
    %v9476 = vpack.c.b16 %v9360, %v9359
    %v9477 = vpack.c.b16 %v9362, %v9361
    %v9478 = vpack.c.b16 %v9364, %v9363
    %v9479 = vpack.c.b16 %v9366, %v9365
    %v9480 = vpack.c.b16 %v9368, %v9367
    %v9481 = vpack.c.b16 %v9370, %v9369
    %v9482 = vpack.c.b16 %v9372, %v9371
    %v9483 = vpack.c.b16 %v9374, %v9373
    %v9484 = vpack.c.b16 %v9376, %v9375
    %v9485 = vpack.c.b16 %v9378, %v9377
    %v9486 = vpack.c.b16 %v9380, %v9379
    %v9487 = vpack.c.b16 %v9382, %v9381
    %v9488 = vpack.c.b16 %v9384, %v9383
    %v9489 = vpack.c.b16 %v9386, %v9385
    %v9490 = vpack.c.b16 %v9388, %v9387
    %v9491 = vpack.c.b16 %v9390, %v9389
    %v9492 = vpack.c.b16 %v9392, %v9391
    %v9493 = vpack.c.b16 %v9394, %v9393
    %v9494 = vpack.c.b16 %v9396, %v9395
    %v9495 = vpack.c.b16 %v9398, %v9397
    %v9496 = vpack.c.b16 %v9400, %v9399
    %v9497 = vpack.c.b16 %v9402, %v9401
    %v9498 = vpack.c.b16 %v9404, %v9403
    %v9499 = vpack.c.b16 %v9406, %v9405
    %v9500 = vpack.c.b16 %v9408, %v9407
    %v9501 = vpack.c.b16 %v9410, %v9409
    %v9502 = vpack.c.b16 %v9412, %v9411
    %v9503 = vpack.c.b16 %v9414, %v9413
    %v9504 = vpack.c.b16 %v9416, %v9415
    %9593 = vmatprep.subr.bf16.mxu0 0
    %9594 = vmatpush1.bf16.msra.mxu0 %v9417
    %9595 = vmatprep.subr.bf16.mxu0 0
    %9596 = vmatpush1.bf16.msra.mxu0 %v9418
    %9597 = vmatprep.subr.bf16.mxu0 0
    %9598 = vmatpush1.bf16.msra.mxu0 %v9419
    %9599 = vmatprep.subr.bf16.mxu0 0
    %9600 = vmatpush1.bf16.msra.mxu0 %v9420
    %9601 = vmatprep.subr.bf16.mxu0 0
    %9602 = vmatpush1.bf16.msra.mxu0 %v9421
    %9603 = vmatprep.subr.bf16.mxu0 0
    %9604 = vmatpush1.bf16.msra.mxu0 %v9422
    %9605 = vmatprep.subr.bf16.mxu0 0
    %9606 = vmatpush1.bf16.msra.mxu0 %v9423
    %9607 = vmatprep.subr.bf16.mxu0 0
    %9608 = vmatpush1.bf16.msra.mxu0 %v9424
    %9609 = vmatprep.subr.bf16.mxu0 0
    %9610 = vmatpush1.bf16.msra.mxu0 %v9425
    %9611 = vmatprep.subr.bf16.mxu0 0
    %9612 = vmatpush1.bf16.msra.mxu0 %v9426
    %9613 = vmatprep.subr.bf16.mxu0 0
    %9614 = vmatpush1.bf16.msra.mxu0 %v9427
    %9615 = vmatprep.subr.bf16.mxu0 0
    %9616 = vmatpush1.bf16.msra.mxu0 %v9428
    %9617 = vmatprep.subr.bf16.mxu0 0
    %9618 = vmatpush1.bf16.msra.mxu0 %v9429
    %9619 = vmatprep.subr.bf16.mxu0 0
    %9620 = vmatpush1.bf16.msra.mxu0 %v9430
    %9621 = vmatprep.subr.bf16.mxu0 0
    %9622 = vmatpush1.bf16.msra.mxu0 %v9431
    %9623 = vmatprep.subr.bf16.mxu0 0
    %9624 = vmatpush1.bf16.msra.mxu0 %v9432
    %9625 = vmatprep.mubr.bf16.mxu0 %v7250
    %9626 = vmatmul.mubr.bf16.gmra.mrb[0].mxu0 %v7249
    %v9627 = vpop.f32.mrb[0].mxu0
    %v9628 = vadd.f32 %v9003, %v9627
    %v9629 = vpop.f32.mrb[0].mxu0
    %v9630 = vpop.f32.mrb[0].mxu0
    %v9631 = vadd.f32 %v9006, %v9630
    %v9632 = vpop.f32.mrb[0].mxu0
    %9633 = vmatprep.mubr.bf16.mxu0 %v7261
    %9634 = vmatmul.mubr.bf16.gmra.mrb[0].mxu0 %v7260
    %v9635 = vpop.f32.mrb[0].mxu0
    %v9636 = vadd.f32 %v9011, %v9635
    %v9637 = vpop.f32.mrb[0].mxu0
    %v9638 = vpop.f32.mrb[0].mxu0
    %v9639 = vadd.f32 %v9014, %v9638
    %v9640 = vpop.f32.mrb[0].mxu0
    %9641 = vmatprep.mubr.bf16.mxu0 %v7272
    %9642 = vmatmul.mubr.bf16.gmra.mrb[0].mxu0 %v7271
    %v9643 = vpop.f32.mrb[0].mxu0
    %v9644 = vadd.f32 %v9019, %v9643
    %v9645 = vpop.f32.mrb[0].mxu0
    %v9646 = vpop.f32.mrb[0].mxu0
    %v9647 = vadd.f32 %v9022, %v9646
    %v9648 = vpop.f32.mrb[0].mxu0
    %9649 = vmatprep.mubr.bf16.mxu0 %v7283
    %9650 = vmatmul.mubr.bf16.gmra.mrb[0].mxu0 %v7282
    %v9651 = vpop.f32.mrb[0].mxu0
    %v9652 = vadd.f32 %v9027, %v9651
    %v9653 = vpop.f32.mrb[0].mxu0
    %v9654 = vpop.f32.mrb[0].mxu0
    %v9655 = vadd.f32 %v9030, %v9654
    %v9656 = vpop.f32.mrb[0].mxu0
    %9657 = vmatprep.mubr.bf16.mxu0 %v7294
    %9658 = vmatmul.mubr.bf16.gmra.mrb[0].mxu0 %v7293
    %v9659 = vpop.f32.mrb[0].mxu0
    %v9660 = vadd.f32 %v9035, %v9659
    %v9661 = vpop.f32.mrb[0].mxu0
    %v9662 = vpop.f32.mrb[0].mxu0
    %v9663 = vadd.f32 %v9038, %v9662
    %v9664 = vpop.f32.mrb[0].mxu0
    %9665 = vmatprep.mubr.bf16.mxu0 %v7305
    %9666 = vmatmul.mubr.bf16.gmra.mrb[0].mxu0 %v7304
    %v9667 = vpop.f32.mrb[0].mxu0
    %v9668 = vadd.f32 %v9043, %v9667
    %v9669 = vpop.f32.mrb[0].mxu0
    %v9670 = vpop.f32.mrb[0].mxu0
    %v9671 = vadd.f32 %v9046, %v9670
    %v9672 = vpop.f32.mrb[0].mxu0
    %9673 = vmatprep.mubr.bf16.mxu0 %v7316
    %9674 = vmatmul.mubr.bf16.gmra.mrb[0].mxu0 %v7315
    %v9675 = vpop.f32.mrb[0].mxu0
    %v9676 = vadd.f32 %v9051, %v9675
    %v9677 = vpop.f32.mrb[0].mxu0
    %v9678 = vpop.f32.mrb[0].mxu0
    %v9679 = vadd.f32 %v9054, %v9678
    %v9680 = vpop.f32.mrb[0].mxu0
    %9681 = vmatprep.mubr.bf16.mxu0 %v7327
    %9682 = vmatmul.mubr.bf16.gmra.mrb[0].mxu0 %v7326
    %v9683 = vpop.f32.mrb[0].mxu0
    %v9684 = vadd.f32 %v9059, %v9683
    %v9685 = vpop.f32.mrb[0].mxu0
    %v9686 = vpop.f32.mrb[0].mxu0
    %v9687 = vadd.f32 %v9062, %v9686
    %v9688 = vpop.f32.mrb[0].mxu0
    %9689 = vdwg.mxu0
    %9690 = vmatprep.subr.bf16.mxu0 0
    %9691 = vmatpush1.bf16.msra.mxu0 %v9433
    %9692 = vmatprep.subr.bf16.mxu0 0
    %9693 = vmatpush1.bf16.msra.mxu0 %v9434
    %9694 = vmatprep.subr.bf16.mxu0 0
    %9695 = vmatpush1.bf16.msra.mxu0 %v9435
    %9696 = vmatprep.subr.bf16.mxu0 0
    %9697 = vmatpush1.bf16.msra.mxu0 %v9436
    %9698 = vmatprep.subr.bf16.mxu0 0
    %9699 = vmatpush1.bf16.msra.mxu0 %v9437
    %9700 = vmatprep.subr.bf16.mxu0 0
    %9701 = vmatpush1.bf16.msra.mxu0 %v9438
    %9702 = vmatprep.subr.bf16.mxu0 0
    %9703 = vmatpush1.bf16.msra.mxu0 %v9439
    %9704 = vmatprep.subr.bf16.mxu0 0
    %9705 = vmatpush1.bf16.msra.mxu0 %v9440
    %9706 = vmatprep.subr.bf16.mxu0 0
    %9707 = vmatpush1.bf16.msra.mxu0 %v9441
    %9708 = vmatprep.subr.bf16.mxu0 0
    %9709 = vmatpush1.bf16.msra.mxu0 %v9442
    %9710 = vmatprep.subr.bf16.mxu0 0
    %9711 = vmatpush1.bf16.msra.mxu0 %v9443
    %9712 = vmatprep.subr.bf16.mxu0 0
    %9713 = vmatpush1.bf16.msra.mxu0 %v9444
    %9714 = vmatprep.subr.bf16.mxu0 0
    %9715 = vmatpush1.bf16.msra.mxu0 %v9445
    %9716 = vmatprep.subr.bf16.mxu0 0
    %9717 = vmatpush1.bf16.msra.mxu0 %v9446
    %9718 = vmatprep.subr.bf16.mxu0 0
    %9719 = vmatpush1.bf16.msra.mxu0 %v9447
    %9720 = vmatprep.subr.bf16.mxu0 0
    %9721 = vmatpush1.bf16.msra.mxu0 %v9448
    %9722 = vmatprep.mubr.bf16.mxu0 %v7252
    %9723 = vmatmul.mubr.bf16.gmra.mrb[0].mxu0 %v7251
    %v9724 = vpop.f32.mrb[0].mxu0
    %v9725 = vadd.f32 %v9628, %v9724
    %v9726 = vpop.f32.mrb[0].mxu0
    %v9727 = vpop.f32.mrb[0].mxu0
    %v9728 = vadd.f32 %v9631, %v9727
    %v9729 = vpop.f32.mrb[0].mxu0
    %9730 = vmatprep.mubr.bf16.mxu0 %v7263
    %9731 = vmatmul.mubr.bf16.gmra.mrb[0].mxu0 %v7262
    %v9732 = vpop.f32.mrb[0].mxu0
    %v9733 = vadd.f32 %v9636, %v9732
    %v9734 = vpop.f32.mrb[0].mxu0
    %v9735 = vpop.f32.mrb[0].mxu0
    %v9736 = vadd.f32 %v9639, %v9735
    %v9737 = vpop.f32.mrb[0].mxu0
    %9738 = vmatprep.mubr.bf16.mxu0 %v7274
    %9739 = vmatmul.mubr.bf16.gmra.mrb[0].mxu0 %v7273
    %v9740 = vpop.f32.mrb[0].mxu0
    %v9741 = vadd.f32 %v9644, %v9740
    %v9742 = vpop.f32.mrb[0].mxu0
    %v9743 = vpop.f32.mrb[0].mxu0
    %v9744 = vadd.f32 %v9647, %v9743
    %v9745 = vpop.f32.mrb[0].mxu0
    %9746 = vmatprep.mubr.bf16.mxu0 %v7285
    %9747 = vmatmul.mubr.bf16.gmra.mrb[0].mxu0 %v7284
    %v9748 = vpop.f32.mrb[0].mxu0
    %v9749 = vadd.f32 %v9652, %v9748
    %v9750 = vpop.f32.mrb[0].mxu0
    %v9751 = vpop.f32.mrb[0].mxu0
    %v9752 = vadd.f32 %v9655, %v9751
    %v9753 = vpop.f32.mrb[0].mxu0
    %9754 = vmatprep.mubr.bf16.mxu0 %v7296
    %9755 = vmatmul.mubr.bf16.gmra.mrb[0].mxu0 %v7295
    %v9756 = vpop.f32.mrb[0].mxu0
    %v9757 = vadd.f32 %v9660, %v9756
    %v9758 = vpop.f32.mrb[0].mxu0
    %v9759 = vpop.f32.mrb[0].mxu0
    %v9760 = vadd.f32 %v9663, %v9759
    %v9761 = vpop.f32.mrb[0].mxu0
    %9762 = vmatprep.mubr.bf16.mxu0 %v7307
    %9763 = vmatmul.mubr.bf16.gmra.mrb[0].mxu0 %v7306
    %v9764 = vpop.f32.mrb[0].mxu0
    %v9765 = vadd.f32 %v9668, %v9764
    %v9766 = vpop.f32.mrb[0].mxu0
    %v9767 = vpop.f32.mrb[0].mxu0
    %v9768 = vadd.f32 %v9671, %v9767
    %v9769 = vpop.f32.mrb[0].mxu0
    %9770 = vmatprep.mubr.bf16.mxu0 %v7318
    %9771 = vmatmul.mubr.bf16.gmra.mrb[0].mxu0 %v7317
    %v9772 = vpop.f32.mrb[0].mxu0
    %v9773 = vadd.f32 %v9676, %v9772
    %v9774 = vpop.f32.mrb[0].mxu0
    %v9775 = vpop.f32.mrb[0].mxu0
    %v9776 = vadd.f32 %v9679, %v9775
    %v9777 = vpop.f32.mrb[0].mxu0
    %9778 = vmatprep.mubr.bf16.mxu0 %v7329
    %9779 = vmatmul.mubr.bf16.gmra.mrb[0].mxu0 %v7328
    %v9780 = vpop.f32.mrb[0].mxu0
    %v9781 = vadd.f32 %v9684, %v9780
    %v9782 = vpop.f32.mrb[0].mxu0
    %v9783 = vpop.f32.mrb[0].mxu0
    %v9784 = vadd.f32 %v9687, %v9783
    %v9785 = vpop.f32.mrb[0].mxu0
    %9786 = vdwg.mxu0
    %9787 = vmatprep.subr.bf16.mxu0 0
    %9788 = vmatpush1.bf16.msra.mxu0 %v9449
    %9789 = vmatprep.subr.bf16.mxu0 0
    %9790 = vmatpush1.bf16.msra.mxu0 %v9450
    %9791 = vmatprep.subr.bf16.mxu0 0
    %9792 = vmatpush1.bf16.msra.mxu0 %v9451
    %9793 = vmatprep.subr.bf16.mxu0 0
    %9794 = vmatpush1.bf16.msra.mxu0 %v9452
    %9795 = vmatprep.subr.bf16.mxu0 0
    %9796 = vmatpush1.bf16.msra.mxu0 %v9453
    %9797 = vmatprep.subr.bf16.mxu0 0
    %9798 = vmatpush1.bf16.msra.mxu0 %v9454
    %9799 = vmatprep.subr.bf16.mxu0 0
    %9800 = vmatpush1.bf16.msra.mxu0 %v9455
    %9801 = vmatprep.subr.bf16.mxu0 0
    %9802 = vmatpush1.bf16.msra.mxu0 %v9456
    %9803 = vmatprep.subr.bf16.mxu0 0
    %9804 = vmatpush1.bf16.msra.mxu0 %v9457
    %9805 = vmatprep.subr.bf16.mxu0 0
    %9806 = vmatpush1.bf16.msra.mxu0 %v9458
    %9807 = vmatprep.subr.bf16.mxu0 0
    %9808 = vmatpush1.bf16.msra.mxu0 %v9459
    %9809 = vmatprep.subr.bf16.mxu0 0
    %9810 = vmatpush1.bf16.msra.mxu0 %v9460
    %9811 = vmatprep.subr.bf16.mxu0 0
    %9812 = vmatpush1.bf16.msra.mxu0 %v9461
    %9813 = vmatprep.subr.bf16.mxu0 0
    %9814 = vmatpush1.bf16.msra.mxu0 %v9462
    %9815 = vmatprep.subr.bf16.mxu0 0
    %9816 = vmatpush1.bf16.msra.mxu0 %v9463
    %9817 = vmatprep.subr.bf16.mxu0 0
    %9818 = vmatpush1.bf16.msra.mxu0 %v9464
    %9819 = vmatprep.mubr.bf16.mxu0 %v7254
    %9820 = vmatmul.mubr.bf16.gmra.mrb[0].mxu0 %v7253
    %v9821 = vpop.f32.mrb[0].mxu0
    %v9822 = vadd.f32 %v9725, %v9821
    %v9823 = vpop.f32.mrb[0].mxu0
    %v9824 = vpop.f32.mrb[0].mxu0
    %v9825 = vadd.f32 %v9728, %v9824
    %v9826 = vpop.f32.mrb[0].mxu0
    %9827 = vmatprep.mubr.bf16.mxu0 %v7265
    %9828 = vmatmul.mubr.bf16.gmra.mrb[0].mxu0 %v7264
    %v9829 = vpop.f32.mrb[0].mxu0
    %v9830 = vadd.f32 %v9733, %v9829
    %v9831 = vpop.f32.mrb[0].mxu0
    %v9832 = vpop.f32.mrb[0].mxu0
    %v9833 = vadd.f32 %v9736, %v9832
    %v9834 = vpop.f32.mrb[0].mxu0
    %9835 = vmatprep.mubr.bf16.mxu0 %v7276
    %9836 = vmatmul.mubr.bf16.gmra.mrb[0].mxu0 %v7275
    %v9837 = vpop.f32.mrb[0].mxu0
    %v9838 = vadd.f32 %v9741, %v9837
    %v9839 = vpop.f32.mrb[0].mxu0
    %v9840 = vpop.f32.mrb[0].mxu0
    %v9841 = vadd.f32 %v9744, %v9840
    %v9842 = vpop.f32.mrb[0].mxu0
    %9843 = vmatprep.mubr.bf16.mxu0 %v7287
    %9844 = vmatmul.mubr.bf16.gmra.mrb[0].mxu0 %v7286
    %v9845 = vpop.f32.mrb[0].mxu0
    %v9846 = vadd.f32 %v9749, %v9845
    %v9847 = vpop.f32.mrb[0].mxu0
    %v9848 = vpop.f32.mrb[0].mxu0
    %v9849 = vadd.f32 %v9752, %v9848
    %v9850 = vpop.f32.mrb[0].mxu0
    %9851 = vmatprep.mubr.bf16.mxu0 %v7298
    %9852 = vmatmul.mubr.bf16.gmra.mrb[0].mxu0 %v7297
    %v9853 = vpop.f32.mrb[0].mxu0
    %v9854 = vadd.f32 %v9757, %v9853
    %v9855 = vpop.f32.mrb[0].mxu0
    %v9856 = vpop.f32.mrb[0].mxu0
    %v9857 = vadd.f32 %v9760, %v9856
    %v9858 = vpop.f32.mrb[0].mxu0
    %9859 = vmatprep.mubr.bf16.mxu0 %v7309
    %9860 = vmatmul.mubr.bf16.gmra.mrb[0].mxu0 %v7308
    %v9861 = vpop.f32.mrb[0].mxu0
    %v9862 = vadd.f32 %v9765, %v9861
    %v9863 = vpop.f32.mrb[0].mxu0
    %v9864 = vpop.f32.mrb[0].mxu0
    %v9865 = vadd.f32 %v9768, %v9864
    %v9866 = vpop.f32.mrb[0].mxu0
    %9867 = vmatprep.mubr.bf16.mxu0 %v7320
    %9868 = vmatmul.mubr.bf16.gmra.mrb[0].mxu0 %v7319
    %v9869 = vpop.f32.mrb[0].mxu0
    %v9870 = vadd.f32 %v9773, %v9869
    %v9871 = vpop.f32.mrb[0].mxu0
    %v9872 = vpop.f32.mrb[0].mxu0
    %v9873 = vadd.f32 %v9776, %v9872
    %v9874 = vpop.f32.mrb[0].mxu0
    %9875 = vmatprep.mubr.bf16.mxu0 %v7331
    %9876 = vmatmul.mubr.bf16.gmra.mrb[0].mxu0 %v7330
    %v9877 = vpop.f32.mrb[0].mxu0
    %v9878 = vadd.f32 %v9781, %v9877
    %v9879 = vpop.f32.mrb[0].mxu0
    %v9880 = vpop.f32.mrb[0].mxu0
    %v9881 = vadd.f32 %v9784, %v9880
    %v9882 = vpop.f32.mrb[0].mxu0
    %9883 = vdwg.mxu0
    %9884 = vmatprep.subr.bf16.mxu0 0
    %9885 = vmatpush1.bf16.msra.mxu0 %v9465
    %9886 = vmatprep.subr.bf16.mxu0 0
    %9887 = vmatpush1.bf16.msra.mxu0 %v9466
    %9888 = vmatprep.subr.bf16.mxu0 0
    %9889 = vmatpush1.bf16.msra.mxu0 %v9467
    %9890 = vmatprep.subr.bf16.mxu0 0
    %9891 = vmatpush1.bf16.msra.mxu0 %v9468
    %9892 = vmatprep.subr.bf16.mxu0 0
    %9893 = vmatpush1.bf16.msra.mxu0 %v9469
    %9894 = vmatprep.subr.bf16.mxu0 0
    %9895 = vmatpush1.bf16.msra.mxu0 %v9470
    %9896 = vmatprep.subr.bf16.mxu0 0
    %9897 = vmatpush1.bf16.msra.mxu0 %v9471
    %9898 = vmatprep.subr.bf16.mxu0 0
    %9899 = vmatpush1.bf16.msra.mxu0 %v9472
    %9900 = vmatprep.subr.bf16.mxu0 0
    %9901 = vmatpush1.bf16.msra.mxu0 %v9473
    %9902 = vmatprep.subr.bf16.mxu0 0
    %9903 = vmatpush1.bf16.msra.mxu0 %v9474
    %9904 = vmatprep.subr.bf16.mxu0 0
    %9905 = vmatpush1.bf16.msra.mxu0 %v9475
    %9906 = vmatprep.subr.bf16.mxu0 0
    %9907 = vmatpush1.bf16.msra.mxu0 %v9476
    %9908 = vmatprep.subr.bf16.mxu0 0
    %9909 = vmatpush1.bf16.msra.mxu0 %v9477
    %9910 = vmatprep.subr.bf16.mxu0 0
    %9911 = vmatpush1.bf16.msra.mxu0 %v9478
    %9912 = vmatprep.subr.bf16.mxu0 0
    %9913 = vmatpush1.bf16.msra.mxu0 %v9479
    %9914 = vmatprep.subr.bf16.mxu0 0
    %9915 = vmatpush1.bf16.msra.mxu0 %v9480
    %9916 = vmatprep.mubr.bf16.mxu0 %v7256
    %9917 = vmatmul.mubr.bf16.gmra.mrb[0].mxu0 %v7255
    %v9918 = vpop.f32.mrb[0].mxu0
    %v9919 = vadd.f32 %v9822, %v9918
    %v9920 = vpop.f32.mrb[0].mxu0
    %v9921 = vpop.f32.mrb[0].mxu0
    %v9922 = vadd.f32 %v9825, %v9921
    %v9923 = vpop.f32.mrb[0].mxu0
    %9924 = vmatprep.mubr.bf16.mxu0 %v7267
    %9925 = vmatmul.mubr.bf16.gmra.mrb[0].mxu0 %v7266
    %v9926 = vpop.f32.mrb[0].mxu0
    %v9927 = vadd.f32 %v9830, %v9926
    %v9928 = vpop.f32.mrb[0].mxu0
    %v9929 = vpop.f32.mrb[0].mxu0
    %v9930 = vadd.f32 %v9833, %v9929
    %v9931 = vpop.f32.mrb[0].mxu0
    %9932 = vmatprep.mubr.bf16.mxu0 %v7278
    %9933 = vmatmul.mubr.bf16.gmra.mrb[0].mxu0 %v7277
    %v9934 = vpop.f32.mrb[0].mxu0
    %v9935 = vadd.f32 %v9838, %v9934
    %v9936 = vpop.f32.mrb[0].mxu0
    %v9937 = vpop.f32.mrb[0].mxu0
    %v9938 = vadd.f32 %v9841, %v9937
    %v9939 = vpop.f32.mrb[0].mxu0
    %9940 = vmatprep.mubr.bf16.mxu0 %v7289
    %9941 = vmatmul.mubr.bf16.gmra.mrb[0].mxu0 %v7288
    %v9942 = vpop.f32.mrb[0].mxu0
    %v9943 = vadd.f32 %v9846, %v9942
    %v9944 = vpop.f32.mrb[0].mxu0
    %v9945 = vpop.f32.mrb[0].mxu0
    %v9946 = vadd.f32 %v9849, %v9945
    %v9947 = vpop.f32.mrb[0].mxu0
    %9948 = vmatprep.mubr.bf16.mxu0 %v7300
    %9949 = vmatmul.mubr.bf16.gmra.mrb[0].mxu0 %v7299
    %v9950 = vpop.f32.mrb[0].mxu0
    %v9951 = vadd.f32 %v9854, %v9950
    %v9952 = vpop.f32.mrb[0].mxu0
    %v9953 = vpop.f32.mrb[0].mxu0
    %v9954 = vadd.f32 %v9857, %v9953
    %v9955 = vpop.f32.mrb[0].mxu0
    %9956 = vmatprep.mubr.bf16.mxu0 %v7311
    %9957 = vmatmul.mubr.bf16.gmra.mrb[0].mxu0 %v7310
    %v9958 = vpop.f32.mrb[0].mxu0
    %v9959 = vadd.f32 %v9862, %v9958
    %v9960 = vpop.f32.mrb[0].mxu0
    %v9961 = vpop.f32.mrb[0].mxu0
    %v9962 = vadd.f32 %v9865, %v9961
    %v9963 = vpop.f32.mrb[0].mxu0
    %9964 = vmatprep.mubr.bf16.mxu0 %v7322
    %9965 = vmatmul.mubr.bf16.gmra.mrb[0].mxu0 %v7321
    %v9966 = vpop.f32.mrb[0].mxu0
    %v9967 = vadd.f32 %v9870, %v9966
    %v9968 = vpop.f32.mrb[0].mxu0
    %v9969 = vpop.f32.mrb[0].mxu0
    %v9970 = vadd.f32 %v9873, %v9969
    %v9971 = vpop.f32.mrb[0].mxu0
    %9972 = vmatprep.mubr.bf16.mxu0 %v7333
    %9973 = vmatmul.mubr.bf16.gmra.mrb[0].mxu0 %v7332
    %v9974 = vpop.f32.mrb[0].mxu0
    %v9975 = vadd.f32 %v9878, %v9974
    %v9976 = vpop.f32.mrb[0].mxu0
    %v9977 = vpop.f32.mrb[0].mxu0
    %v9978 = vadd.f32 %v9881, %v9977
    %v9979 = vpop.f32.mrb[0].mxu0
    %9980 = vdwg.mxu0
    %9981 = vmatprep.subr.bf16.mxu0 0
    %9982 = vmatpush1.bf16.msra.mxu0 %v9481
    %9983 = vmatprep.subr.bf16.mxu0 0
    %9984 = vmatpush1.bf16.msra.mxu0 %v9482
    %9985 = vmatprep.subr.bf16.mxu0 0
    %9986 = vmatpush1.bf16.msra.mxu0 %v9483
    %9987 = vmatprep.subr.bf16.mxu0 0
    %9988 = vmatpush1.bf16.msra.mxu0 %v9484
    %9989 = vmatprep.subr.bf16.mxu0 0
    %9990 = vmatpush1.bf16.msra.mxu0 %v9485
    %9991 = vmatprep.subr.bf16.mxu0 0
    %9992 = vmatpush1.bf16.msra.mxu0 %v9486
    %9993 = vmatprep.subr.bf16.mxu0 0
    %9994 = vmatpush1.bf16.msra.mxu0 %v9487
    %9995 = vmatprep.subr.bf16.mxu0 0
    %9996 = vmatpush1.bf16.msra.mxu0 %v9488
    %9997 = vmatprep.subr.bf16.mxu0 0
    %9998 = vmatpush1.bf16.msra.mxu0 %v9489
    %9999 = vmatprep.subr.bf16.mxu0 0
    %10000 = vmatpush1.bf16.msra.mxu0 %v9490
    %10001 = vmatprep.subr.bf16.mxu0 0
    %10002 = vmatpush1.bf16.msra.mxu0 %v9491
    %10003 = vmatprep.subr.bf16.mxu0 0
    %10004 = vmatpush1.bf16.msra.mxu0 %v9492
    %10005 = vmatprep.subr.bf16.mxu0 0
    %10006 = vmatpush1.bf16.msra.mxu0 %v9493
    %10007 = vmatprep.subr.bf16.mxu0 0
    %10008 = vmatpush1.bf16.msra.mxu0 %v9494
    %10009 = vmatprep.subr.bf16.mxu0 0
    %10010 = vmatpush1.bf16.msra.mxu0 %v9495
    %10011 = vmatprep.subr.bf16.mxu0 0
    %10012 = vmatpush1.bf16.msra.mxu0 %v9496
    %10013 = vmatprep.mubr.bf16.mxu0 %v7258
    %10014 = vmatmul.mubr.bf16.gmra.mrb[0].mxu0 %v7257
    %v10015 = vpop.f32.mrb[0].mxu0
    %v10016 = vadd.f32 %v9919, %v10015
    %v10017 = vpop.f32.mrb[0].mxu0
    %v10018 = vpop.f32.mrb[0].mxu0
    %v10019 = vadd.f32 %v9922, %v10018
    %v10020 = vpop.f32.mrb[0].mxu0
    %10021 = vmatprep.mubr.bf16.mxu0 %v7269
    %10022 = vmatmul.mubr.bf16.gmra.mrb[0].mxu0 %v7268
    %v10023 = vpop.f32.mrb[0].mxu0
    %v10024 = vadd.f32 %v9927, %v10023
    %v10025 = vpop.f32.mrb[0].mxu0
    %v10026 = vpop.f32.mrb[0].mxu0
    %v10027 = vadd.f32 %v9930, %v10026
    %v10028 = vpop.f32.mrb[0].mxu0
    %10029 = vmatprep.mubr.bf16.mxu0 %v7280
    %10030 = vmatmul.mubr.bf16.gmra.mrb[0].mxu0 %v7279
    %v10031 = vpop.f32.mrb[0].mxu0
    %v10032 = vadd.f32 %v9935, %v10031
    %v10033 = vpop.f32.mrb[0].mxu0
    %v10034 = vpop.f32.mrb[0].mxu0
    %v10035 = vadd.f32 %v9938, %v10034
    %v10036 = vpop.f32.mrb[0].mxu0
    %10037 = vmatprep.mubr.bf16.mxu0 %v7291
    %10038 = vmatmul.mubr.bf16.gmra.mrb[0].mxu0 %v7290
    %v10039 = vpop.f32.mrb[0].mxu0
    %v10040 = vadd.f32 %v9943, %v10039
    %v10041 = vpop.f32.mrb[0].mxu0
    %v10042 = vpop.f32.mrb[0].mxu0
    %v10043 = vadd.f32 %v9946, %v10042
    %v10044 = vpop.f32.mrb[0].mxu0
    %10045 = vmatprep.mubr.bf16.mxu0 %v7302
    %10046 = vmatmul.mubr.bf16.gmra.mrb[0].mxu0 %v7301
    %v10047 = vpop.f32.mrb[0].mxu0
    %v10048 = vadd.f32 %v9951, %v10047
    %v10049 = vpop.f32.mrb[0].mxu0
    %v10050 = vpop.f32.mrb[0].mxu0
    %v10051 = vadd.f32 %v9954, %v10050
    %v10052 = vpop.f32.mrb[0].mxu0
    %10053 = vmatprep.mubr.bf16.mxu0 %v7313
    %10054 = vmatmul.mubr.bf16.gmra.mrb[0].mxu0 %v7312
    %v10055 = vpop.f32.mrb[0].mxu0
    %v10056 = vadd.f32 %v9959, %v10055
    %v10057 = vpop.f32.mrb[0].mxu0
    %v10058 = vpop.f32.mrb[0].mxu0
    %v10059 = vadd.f32 %v9962, %v10058
    %v10060 = vpop.f32.mrb[0].mxu0
    %10061 = vmatprep.mubr.bf16.mxu0 %v7324
    %10062 = vmatmul.mubr.bf16.gmra.mrb[0].mxu0 %v7323
    %v10063 = vpop.f32.mrb[0].mxu0
    %v10064 = vadd.f32 %v9967, %v10063
    %v10065 = vpop.f32.mrb[0].mxu0
    %v10066 = vpop.f32.mrb[0].mxu0
    %v10067 = vadd.f32 %v9970, %v10066
    %v10068 = vpop.f32.mrb[0].mxu0
    %10069 = vmatprep.mubr.bf16.mxu0 %v7335
    %10070 = vmatmul.mubr.bf16.gmra.mrb[0].mxu0 %v7334
    %v10071 = vpop.f32.mrb[0].mxu0
    %v10072 = vadd.f32 %v9975, %v10071
    %v10073 = vpop.f32.mrb[0].mxu0
    %v10074 = vpop.f32.mrb[0].mxu0
    %v10075 = vadd.f32 %v9978, %v10074
    %v10076 = vpop.f32.mrb[0].mxu0
    %10077 = vdwg.mxu0
    %10078 = vmatprep.subr.bf16.mxu0 0
    %10079 = vmatpush1.bf16.msra.mxu0 %v9497
    %10080 = vmatprep.subr.bf16.mxu0 0
    %10081 = vmatpush1.bf16.msra.mxu0 %v9498
    %10082 = vmatprep.subr.bf16.mxu0 0
    %10083 = vmatpush1.bf16.msra.mxu0 %v9499
    %10084 = vmatprep.subr.bf16.mxu0 0
    %10085 = vmatpush1.bf16.msra.mxu0 %v9500
    %10086 = vmatprep.subr.bf16.mxu0 0
    %10087 = vmatpush1.bf16.msra.mxu0 %v9501
    %10088 = vmatprep.subr.bf16.mxu0 0
    %10089 = vmatpush1.bf16.msra.mxu0 %v9502
    %10090 = vmatprep.subr.bf16.mxu0 0
    %10091 = vmatpush1.bf16.msra.mxu0 %v9503
    %10092 = vmatprep.subr.bf16.mxu0 0
    %10093 = vmatpush1.bf16.msra.mxu0 %v9504
    %10094 = vmatprep.subr.bf16.mxu0 0
    %10095 = vmatpush1.bf16.msra.mxu0 0
    %10096 = vmatprep.subr.bf16.mxu0 0
    %10097 = vmatpush1.bf16.msra.mxu0 0
    %10098 = vmatprep.subr.bf16.mxu0 0
    %10099 = vmatpush1.bf16.msra.mxu0 0
    %10100 = vmatprep.subr.bf16.mxu0 0
    %10101 = vmatpush1.bf16.msra.mxu0 0
    %10102 = vmatprep.subr.bf16.mxu0 0
    %10103 = vmatpush1.bf16.msra.mxu0 0
    %10104 = vmatprep.subr.bf16.mxu0 0
    %10105 = vmatpush1.bf16.msra.mxu0 0
    %10106 = vmatprep.subr.bf16.mxu0 0
    %10107 = vmatpush1.bf16.msra.mxu0 0
    %10108 = vmatprep.subr.bf16.mxu0 0
    %10109 = vmatpush1.bf16.msra.mxu0 0
    %10110 = vmatprep.mubr.bf16.mxu0 0
    %10111 = vmatmul.mubr.bf16.gmra.mrb[0].mxu0 %v7259
    %v10112 = vpop.f32.mrb[0].mxu0
    %v10113 = vadd.f32 %v10016, %v10112
    %v10114 = vpop.f32.mrb[0].mxu0
    %v10115 = vpop.f32.mrb[0].mxu0
    %v10116 = vadd.f32 %v10019, %v10115
    %v10117 = vpop.f32.mrb[0].mxu0
    %10118 = vmatprep.mubr.bf16.mxu0 0
    %10119 = vmatmul.mubr.bf16.gmra.mrb[0].mxu0 %v7270
    %v10120 = vpop.f32.mrb[0].mxu0
    %v10121 = vadd.f32 %v10024, %v10120
    %v10122 = vpop.f32.mrb[0].mxu0
    %v10123 = vpop.f32.mrb[0].mxu0
    %v10124 = vadd.f32 %v10027, %v10123
    %v10125 = vpop.f32.mrb[0].mxu0
    %10126 = vmatprep.mubr.bf16.mxu0 0
    %10127 = vmatmul.mubr.bf16.gmra.mrb[0].mxu0 %v7281
    %v10128 = vpop.f32.mrb[0].mxu0
    %v10129 = vadd.f32 %v10032, %v10128
    %v10130 = vpop.f32.mrb[0].mxu0
    %v10131 = vpop.f32.mrb[0].mxu0
    %v10132 = vadd.f32 %v10035, %v10131
    %v10133 = vpop.f32.mrb[0].mxu0
    %10134 = vmatprep.mubr.bf16.mxu0 0
    %10135 = vmatmul.mubr.bf16.gmra.mrb[0].mxu0 %v7292
    %v10136 = vpop.f32.mrb[0].mxu0
    %v10137 = vadd.f32 %v10040, %v10136
    %v10138 = vpop.f32.mrb[0].mxu0
    %v10139 = vpop.f32.mrb[0].mxu0
    %v10140 = vadd.f32 %v10043, %v10139
    %v10141 = vpop.f32.mrb[0].mxu0
    %10142 = vmatprep.mubr.bf16.mxu0 0
    %10143 = vmatmul.mubr.bf16.gmra.mrb[0].mxu0 %v7303
    %v10144 = vpop.f32.mrb[0].mxu0
    %v10145 = vadd.f32 %v10048, %v10144
    %v10146 = vpop.f32.mrb[0].mxu0
    %v10147 = vpop.f32.mrb[0].mxu0
    %v10148 = vadd.f32 %v10051, %v10147
    %v10149 = vpop.f32.mrb[0].mxu0
    %10150 = vmatprep.mubr.bf16.mxu0 0
    %10151 = vmatmul.mubr.bf16.gmra.mrb[0].mxu0 %v7314
    %v10152 = vpop.f32.mrb[0].mxu0
    %v10153 = vadd.f32 %v10056, %v10152
    %v10154 = vpop.f32.mrb[0].mxu0
    %v10155 = vpop.f32.mrb[0].mxu0
    %v10156 = vadd.f32 %v10059, %v10155
    %v10157 = vpop.f32.mrb[0].mxu0
    %10158 = vmatprep.mubr.bf16.mxu0 0
    %10159 = vmatmul.mubr.bf16.gmra.mrb[0].mxu0 %v7325
    %v10160 = vpop.f32.mrb[0].mxu0
    %v10161 = vadd.f32 %v10064, %v10160
    %v10162 = vpop.f32.mrb[0].mxu0
    %v10163 = vpop.f32.mrb[0].mxu0
    %v10164 = vadd.f32 %v10067, %v10163
    %v10165 = vpop.f32.mrb[0].mxu0
    %10166 = vmatprep.mubr.bf16.mxu0 0
    %10167 = vmatmul.mubr.bf16.gmra.mrb[0].mxu0 %v7336
    %v10168 = vpop.f32.mrb[0].mxu0
    %v10169 = vadd.f32 %v10072, %v10168
    %v10170 = vpop.f32.mrb[0].mxu0
    %v10171 = vpop.f32.mrb[0].mxu0
    %v10172 = vadd.f32 %v10075, %v10171
    %v10173 = vpop.f32.mrb[0].mxu0
    %10174 = vdwg.mxu0
    %s10175 = scalar_lea.vmem %s11, 16
    %v10176 = vld [vmem:[%s10175] sm:$0xff]
    %v10177 = vld [vmem:[%s10175 + $0x8] sm:$0x7]
    %v10179 = vsel %vm261, %v10177, 0
    %10181 = vmatprep.subr.mxu0 0.0
    %10182 = vmatpush1.msra.mxu0 %v10176
    %10183 = vmatprep.subr.mxu0 0.0
    %10184 = vmatpush1.msra.mxu0 %v10179
    %10185 = vmatprep.subr.mxu0 0.0
    %10186 = vmatpush1.msra.mxu0 0.0
    %10187 = vmatprep.subr.mxu0 0.0
    %10188 = vmatpush1.msra.mxu0 0.0
    %10189 = vmatprep.subr.mxu0 0.0
    %10190 = vmatpush1.msra.mxu0 0.0
    %10191 = vmatprep.subr.mxu0 0.0
    %10192 = vmatpush1.msra.mxu0 0.0
    %10193 = vmatprep.subr.mxu0 0.0
    %10194 = vmatpush1.msra.mxu0 0.0
    %10195 = vmatprep.subr.mxu0 0.0
    %10196 = vmatpush1.msra.mxu0 0.0
    %10197 = vmatprep.subr.mxu0 0.0
    %10198 = vmatpush1.msra.mxu0 0.0
    %10199 = vmatprep.subr.mxu0 0.0
    %10200 = vmatpush1.msra.mxu0 0.0
    %10201 = vmatprep.subr.mxu0 0.0
    %10202 = vmatpush1.msra.mxu0 0.0
    %10203 = vmatprep.subr.mxu0 0.0
    %10204 = vmatpush1.msra.mxu0 0.0
    %10205 = vmatprep.subr.mxu0 0.0
    %10206 = vmatpush1.msra.mxu0 0.0
    %10207 = vmatprep.subr.mxu0 0.0
    %10208 = vmatpush1.msra.mxu0 0.0
    %10209 = vmatprep.subr.mxu0 0.0
    %10210 = vmatpush1.msra.mxu0 0.0
    %10211 = vmatprep.subr.mxu0 0.0
    %10212 = vmatpush1.msra.mxu0 0.0
    %10213 = vmatprep.subr.mxu0 0.0
    %10214 = vmatpush1.msra.mxu0 0.0
    %10215 = vmatprep.subr.mxu0 0.0
    %10216 = vmatpush1.msra.mxu0 0.0
    %10217 = vmatprep.subr.mxu0 0.0
    %10218 = vmatpush1.msra.mxu0 0.0
    %10219 = vmatprep.subr.mxu0 0.0
    %10220 = vmatpush1.msra.mxu0 0.0
    %10221 = vmatprep.subr.mxu0 0.0
    %10222 = vmatpush1.msra.mxu0 0.0
    %10223 = vmatprep.subr.mxu0 0.0
    %10224 = vmatpush1.msra.mxu0 0.0
    %10225 = vmatprep.subr.mxu0 0.0
    %10226 = vmatpush1.msra.mxu0 0.0
    %10227 = vmatprep.subr.mxu0 0.0
    %10228 = vmatpush1.msra.mxu0 0.0
    %10229 = vmatprep.subr.mxu0 0.0
    %10230 = vmatpush1.msra.mxu0 0.0
    %10231 = vmatprep.subr.mxu0 0.0
    %10232 = vmatpush1.msra.mxu0 0.0
    %10233 = vmatprep.subr.mxu0 0.0
    %10234 = vmatpush1.msra.mxu0 0.0
    %10235 = vmatprep.subr.mxu0 0.0
    %10236 = vmatpush1.msra.mxu0 0.0
    %10237 = vmatprep.subr.mxu0 0.0
    %10238 = vmatpush1.msra.mxu0 0.0
    %10239 = vmatprep.subr.mxu0 0.0
    %10240 = vmatpush1.msra.mxu0 0.0
    %10241 = vmatprep.subr.mxu0 0.0
    %10242 = vmatpush1.msra.mxu0 0.0
    %10243 = vmatprep.subr.mxu0 0.0
    %10244 = vmatpush1.msra.mxu0 0.0
    %10245 = vmatprep.mubr.f32.mxu0 0.0
    %10246 = vmatmul.mubr.f32.gmra.mrb[0].mxu0 %v5675
    %v10247 = vpop.f32.mrb[0].mxu0
    %v10248 = vadd.f32 0.0, %v10247
    %v10249 = vpop.f32.mrb[0].mxu0
    %10250 = vmatprep.mubr.f32.mxu0 0.0
    %10251 = vmatmul.mubr.f32.gmra.mrb[0].mxu0 %v5677
    %v10252 = vpop.f32.mrb[0].mxu0
    %v10253 = vadd.f32 0.0, %v10252
    %v10254 = vpop.f32.mrb[0].mxu0
    %10255 = vmatprep.mubr.f32.mxu0 0.0
    %10256 = vmatmul.mubr.f32.gmra.mrb[0].mxu0 %v5679
    %v10257 = vpop.f32.mrb[0].mxu0
    %v10258 = vadd.f32 0.0, %v10257
    %v10259 = vpop.f32.mrb[0].mxu0
    %10260 = vmatprep.mubr.f32.mxu0 0.0
    %10261 = vmatmul.mubr.f32.gmra.mrb[0].mxu0 %v5681
    %v10262 = vpop.f32.mrb[0].mxu0
    %v10263 = vadd.f32 0.0, %v10262
    %v10264 = vpop.f32.mrb[0].mxu0
    %10265 = vmatprep.mubr.f32.mxu0 0.0
    %10266 = vmatmul.mubr.f32.gmra.mrb[0].mxu0 %v5683
    %v10267 = vpop.f32.mrb[0].mxu0
    %v10268 = vadd.f32 0.0, %v10267
    %v10269 = vpop.f32.mrb[0].mxu0
    %10270 = vmatprep.mubr.f32.mxu0 0.0
    %10271 = vmatmul.mubr.f32.gmra.mrb[0].mxu0 %v5685
    %v10272 = vpop.f32.mrb[0].mxu0
    %v10273 = vadd.f32 0.0, %v10272
    %v10274 = vpop.f32.mrb[0].mxu0
    %10275 = vmatprep.mubr.f32.mxu0 0.0
    %10276 = vmatmul.mubr.f32.gmra.mrb[0].mxu0 %v5687
    %v10277 = vpop.f32.mrb[0].mxu0
    %v10278 = vadd.f32 0.0, %v10277
    %v10279 = vpop.f32.mrb[0].mxu0
    %10280 = vmatprep.mubr.f32.mxu0 0.0
    %10281 = vmatmul.mubr.f32.gmra.mrb[0].mxu0 %v5689
    %v10282 = vpop.f32.mrb[0].mxu0
    %v10283 = vadd.f32 0.0, %v10282
    %v10284 = vpop.f32.mrb[0].mxu0
    %10285 = vmatprep.mubr.f32.mxu0 0.0
    %10286 = vmatmul.mubr.f32.gmra.mrb[0].mxu0 %v5691
    %v10287 = vpop.f32.mrb[0].mxu0
    %v10288 = vadd.f32 0.0, %v10287
    %v10289 = vpop.f32.mrb[0].mxu0
    %10290 = vmatprep.mubr.f32.mxu0 0.0
    %10291 = vmatmul.mubr.f32.gmra.mrb[0].mxu0 %v5693
    %v10292 = vpop.f32.mrb[0].mxu0
    %v10293 = vadd.f32 0.0, %v10292
    %v10294 = vpop.f32.mrb[0].mxu0
    %10295 = vmatprep.mubr.f32.mxu0 0.0
    %10296 = vmatmul.mubr.f32.gmra.mrb[0].mxu0 %v5695
    %v10297 = vpop.f32.mrb[0].mxu0
    %v10298 = vadd.f32 0.0, %v10297
    %v10299 = vpop.f32.mrb[0].mxu0
    %10300 = vmatprep.mubr.f32.mxu0 0.0
    %10301 = vmatmul.mubr.f32.gmra.mrb[0].mxu0 %v5697
    %v10302 = vpop.f32.mrb[0].mxu0
    %v10303 = vadd.f32 0.0, %v10302
    %v10304 = vpop.f32.mrb[0].mxu0
    %10305 = vmatprep.mubr.f32.mxu0 0.0
    %10306 = vmatmul.mubr.f32.gmra.mrb[0].mxu0 %v5699
    %v10307 = vpop.f32.mrb[0].mxu0
    %v10308 = vadd.f32 0.0, %v10307
    %v10309 = vpop.f32.mrb[0].mxu0
    %10310 = vmatprep.mubr.f32.mxu0 0.0
    %10311 = vmatmul.mubr.f32.gmra.mrb[0].mxu0 %v5701
    %v10312 = vpop.f32.mrb[0].mxu0
    %v10313 = vadd.f32 0.0, %v10312
    %v10314 = vpop.f32.mrb[0].mxu0
    %10315 = vmatprep.mubr.f32.mxu0 0.0
    %10316 = vmatmul.mubr.f32.gmra.mrb[0].mxu0 %v5703
    %v10317 = vpop.f32.mrb[0].mxu0
    %v10318 = vadd.f32 0.0, %v10317
    %v10319 = vpop.f32.mrb[0].mxu0
    %10320 = vmatprep.mubr.f32.mxu0 0.0
    %10321 = vmatmul.mubr.f32.gmra.mrb[0].mxu0 %v5705
    %v10322 = vpop.f32.mrb[0].mxu0
    %v10323 = vadd.f32 0.0, %v10322
    %v10324 = vpop.f32.mrb[0].mxu0
    %10325 = vdwg.mxu0
    %v10326 = vadd.f32 %v10113, %v10248
    %v10327 = vadd.f32 %v10116, %v10253
    %v10328 = vadd.f32 %v10121, %v10258
    %v10329 = vadd.f32 %v10124, %v10263
    %v10330 = vadd.f32 %v10129, %v10268
    %v10331 = vadd.f32 %v10132, %v10273
    %v10332 = vadd.f32 %v10137, %v10278
    %v10333 = vadd.f32 %v10140, %v10283
    %v10334 = vadd.f32 %v10145, %v10288
    %v10335 = vadd.f32 %v10148, %v10293
    %v10336 = vadd.f32 %v10153, %v10298
    %v10337 = vadd.f32 %v10156, %v10303
    %v10338 = vadd.f32 %v10161, %v10308
    %v10339 = vadd.f32 %v10164, %v10313
    %v10340 = vadd.f32 %v10169, %v10318
    %v10341 = vadd.f32 %v10172, %v10323
    %v10342 = vld [vmem:[#allocation2] sm:$0xf]
    %v10343 = vpack.c.bf16 %v10327, %v10326
    %v10344 = vpack.c.bf16 %v10329, %v10328
    %v10345 = vpack.c.bf16 %v10331, %v10330
    %v10346 = vpack.c.bf16 %v10333, %v10332
    %v10347 = vpack.c.bf16 %v10335, %v10334
    %v10348 = vpack.c.bf16 %v10337, %v10336
    %v10349 = vpack.c.bf16 %v10339, %v10338
    %v10350 = vpack.c.bf16 %v10341, %v10340
    %10351 = vmatprep.subr.bf16.mxu0 0
    %10352 = vmatpush1.bf16.msra.mxu0 %v10343
    %10353 = vmatprep.subr.bf16.mxu0 0
    %10354 = vmatpush1.bf16.msra.mxu0 %v10344
    %10355 = vmatprep.subr.bf16.mxu0 0
    %10356 = vmatpush1.bf16.msra.mxu0 %v10345
    %10357 = vmatprep.subr.bf16.mxu0 0
    %10358 = vmatpush1.bf16.msra.mxu0 %v10346
    %10359 = vmatprep.subr.bf16.mxu0 0
    %10360 = vmatpush1.bf16.msra.mxu0 %v10347
    %10361 = vmatprep.subr.bf16.mxu0 0
    %10362 = vmatpush1.bf16.msra.mxu0 %v10348
    %10363 = vmatprep.subr.bf16.mxu0 0
    %10364 = vmatpush1.bf16.msra.mxu0 %v10349
    %10365 = vmatprep.subr.bf16.mxu0 0
    %10366 = vmatpush1.bf16.msra.mxu0 %v10350
    %10367 = vmatprep.subr.bf16.mxu0 0
    %10368 = vmatpush1.bf16.msra.mxu0 0
    %10369 = vmatprep.subr.bf16.mxu0 0
    %10370 = vmatpush1.bf16.msra.mxu0 0
    %10371 = vmatprep.subr.bf16.mxu0 0
    %10372 = vmatpush1.bf16.msra.mxu0 0
    %10373 = vmatprep.subr.bf16.mxu0 0
    %10374 = vmatpush1.bf16.msra.mxu0 0
    %10375 = vmatprep.subr.bf16.mxu0 0
    %10376 = vmatpush1.bf16.msra.mxu0 0
    %10377 = vmatprep.subr.bf16.mxu0 0
    %10378 = vmatpush1.bf16.msra.mxu0 0
    %10379 = vmatprep.subr.bf16.mxu0 0
    %10380 = vmatpush1.bf16.msra.mxu0 0
    %10381 = vmatprep.subr.bf16.mxu0 0
    %10382 = vmatpush1.bf16.msra.mxu0 0
    %10383 = vmatprep.mubr.bf16.mxu0 0
    %10384 = vmatmul.mubr.bf16.gmra.mrb[0].mxu0 %v10342
    %v10385 = vpop.f32.mrb[0].mxu0
    %v10386 = vadd.f32 0.0, %v10385
    %v10387 = vpop.f32.mrb[0].mxu0
    %v10388 = vpop.f32.mrb[0].mxu0
    %v10389 = vpop.f32.mrb[0].mxu0
    %10390 = vdwg.mxu0
    %v10391 = vpack.c.bf16 %v10386, %v10386
    %v10392 = vld [vmem:[#allocation14] sm:$0xf]
    %v10393 = vld [vmem:[#allocation14 + $0x4] sm:$0xf]
    %v10394 = vld [vmem:[#allocation14 + $0x8] sm:$0xf]
    %v10395 = vld [vmem:[#allocation14 + $0xc] sm:$0xf]
    %v10396 = vld [vmem:[#allocation14 + $0x10] sm:$0xf]
    %v10397 = vld [vmem:[#allocation14 + $0x14] sm:$0xf]
    %v10398 = vld [vmem:[#allocation14 + $0x18] sm:$0xf]
    %v10399 = vld [vmem:[#allocation14 + $0x1c] sm:$0xf]
    %v10400 = vld [vmem:[#allocation14 + $0x20] sm:$0xf]
    %v10401 = vld [vmem:[#allocation14 + $0x24] sm:$0xf]
    %v10402 = vld [vmem:[#allocation14 + $0x28] sm:$0xf]
    %v10403 = vld [vmem:[#allocation14 + $0x2c] sm:$0xf]
    %v10404 = vld [vmem:[#allocation14 + $0x30] sm:$0xf]
    %v10405 = vld [vmem:[#allocation14 + $0x34] sm:$0xf]
    %v10406 = vld [vmem:[#allocation14 + $0x38] sm:$0xf]
    %v10407 = vld [vmem:[#allocation14 + $0x3c] sm:$0xf]
    %v10408 = vld [vmem:[#allocation16] sm:$0x1]
    %v10410 = vlaneseq
    %v10411 = vshrl.u32 %v10410, 7
    %v10412 = vsub.s32 0, %v10411
    %v10413 = vrot.slane %v10408, %v10412
    %v10431 = vunpack.c.l.b16 %v10392
    %v10432 = vunpack.c.l.b16 %v10393
    %v10433 = vunpack.c.l.b16 %v10394
    %v10434 = vunpack.c.l.b16 %v10395
    %v10435 = vunpack.c.l.b16 %v10396
    %v10436 = vunpack.c.l.b16 %v10397
    %v10437 = vunpack.c.l.b16 %v10398
    %v10438 = vunpack.c.l.b16 %v10399
    %v10439 = vunpack.c.l.b16 %v10400
    %v10440 = vunpack.c.l.b16 %v10401
    %v10441 = vunpack.c.l.b16 %v10402
    %v10442 = vunpack.c.l.b16 %v10403
    %v10443 = vunpack.c.l.b16 %v10404
    %v10444 = vunpack.c.l.b16 %v10405
    %v10445 = vunpack.c.l.b16 %v10406
    %v10446 = vunpack.c.l.b16 %v10407
    %v10447 = vpack.c.b16 %v10432, %v10431
    %v10448 = vpack.c.b16 %v10434, %v10433
    %v10449 = vpack.c.b16 %v10436, %v10435
    %v10450 = vpack.c.b16 %v10438, %v10437
    %v10451 = vpack.c.b16 %v10440, %v10439
    %v10452 = vpack.c.b16 %v10442, %v10441
    %v10453 = vpack.c.b16 %v10444, %v10443
    %v10454 = vpack.c.b16 %v10446, %v10445
    %10463 = vmatprep.subr.bf16.mxu0 0
    %10464 = vmatpush1.bf16.msra.mxu0 %v10447
    %10465 = vmatprep.subr.bf16.mxu0 0
    %10466 = vmatpush1.bf16.msra.mxu0 %v10448
    %10467 = vmatprep.subr.bf16.mxu0 0
    %10468 = vmatpush1.bf16.msra.mxu0 %v10449
    %10469 = vmatprep.subr.bf16.mxu0 0
    %10470 = vmatpush1.bf16.msra.mxu0 %v10450
    %10471 = vmatprep.subr.bf16.mxu0 0
    %10472 = vmatpush1.bf16.msra.mxu0 %v10451
    %10473 = vmatprep.subr.bf16.mxu0 0
    %10474 = vmatpush1.bf16.msra.mxu0 %v10452
    %10475 = vmatprep.subr.bf16.mxu0 0
    %10476 = vmatpush1.bf16.msra.mxu0 %v10453
    %10477 = vmatprep.subr.bf16.mxu0 0
    %10478 = vmatpush1.bf16.msra.mxu0 %v10454
    %10479 = vmatprep.subr.bf16.mxu0 0
    %10480 = vmatpush1.bf16.msra.mxu0 0
    %10481 = vmatprep.subr.bf16.mxu0 0
    %10482 = vmatpush1.bf16.msra.mxu0 0
    %10483 = vmatprep.subr.bf16.mxu0 0
    %10484 = vmatpush1.bf16.msra.mxu0 0
    %10485 = vmatprep.subr.bf16.mxu0 0
    %10486 = vmatpush1.bf16.msra.mxu0 0
    %10487 = vmatprep.subr.bf16.mxu0 0
    %10488 = vmatpush1.bf16.msra.mxu0 0
    %10489 = vmatprep.subr.bf16.mxu0 0
    %10490 = vmatpush1.bf16.msra.mxu0 0
    %10491 = vmatprep.subr.bf16.mxu0 0
    %10492 = vmatpush1.bf16.msra.mxu0 0
    %10493 = vmatprep.subr.bf16.mxu0 0
    %10494 = vmatpush1.bf16.msra.mxu0 0
    %10495 = vmatprep.mubr.bf16.mxu0 0
    %10496 = vmatmul.mubr.bf16.gmra.mrb[0].mxu0 %v10391
    %v10497 = vpop.f32.mrb[0].mxu0
    %v10498 = vadd.f32 %v10413, %v10497
    %v10499 = vpop.f32.mrb[0].mxu0
    %v10500 = vpop.f32.mrb[0].mxu0
    %v10501 = vpop.f32.mrb[0].mxu0
    %10502 = vdwg.mxu0
    %v10503 = vmax.f32 %v10498, 0.0
    %v10504 = vpack.c.bf16 %v10503, %v10503
    %v10505 = vld [vmem:[%s15] sm:$0xf]
    %v10506 = vld [vmem:[%s15 + $0x4] sm:$0xf]
    %v10507 = vld [vmem:[%s15 + $0x8] sm:$0xf]
    %v10508 = vld [vmem:[%s15 + $0xc] sm:$0xf]
    %v10509 = vld [vmem:[%s15 + $0x10] sm:$0xf]
    %v10510 = vld [vmem:[%s15 + $0x14] sm:$0xf]
    %v10511 = vld [vmem:[%s15 + $0x18] sm:$0xf]
    %v10512 = vld [vmem:[%s15 + $0x1c] sm:$0xf]
    %v10513 = vld [vmem:[%s15 + $0x20] sm:$0xf]
    %v10514 = vld [vmem:[%s15 + $0x24] sm:$0xf]
    %v10515 = vld [vmem:[%s15 + $0x28] sm:$0xf]
    %v10516 = vld [vmem:[%s15 + $0x2c] sm:$0xf]
    %v10517 = vld [vmem:[%s15 + $0x30] sm:$0xf]
    %v10518 = vld [vmem:[%s15 + $0x34] sm:$0xf]
    %v10519 = vld [vmem:[%s15 + $0x38] sm:$0xf]
    %v10520 = vld [vmem:[%s15 + $0x3c] sm:$0xf]
    %v10521 = vld [vmem:[%s16] sm:$0x1]
    %v10523 = vlaneseq
    %v10524 = vshrl.u32 %v10523, 7
    %v10525 = vsub.s32 0, %v10524
    %v10526 = vrot.slane %v10521, %v10525
    %v10544 = vunpack.c.l.b16 %v10505
    %v10545 = vunpack.c.l.b16 %v10506
    %v10546 = vunpack.c.l.b16 %v10507
    %v10547 = vunpack.c.l.b16 %v10508
    %v10548 = vunpack.c.l.b16 %v10509
    %v10549 = vunpack.c.l.b16 %v10510
    %v10550 = vunpack.c.l.b16 %v10511
    %v10551 = vunpack.c.l.b16 %v10512
    %v10552 = vunpack.c.l.b16 %v10513
    %v10553 = vunpack.c.l.b16 %v10514
    %v10554 = vunpack.c.l.b16 %v10515
    %v10555 = vunpack.c.l.b16 %v10516
    %v10556 = vunpack.c.l.b16 %v10517
    %v10557 = vunpack.c.l.b16 %v10518
    %v10558 = vunpack.c.l.b16 %v10519
    %v10559 = vunpack.c.l.b16 %v10520
    %v10560 = vpack.c.b16 %v10545, %v10544
    %v10561 = vpack.c.b16 %v10547, %v10546
    %v10562 = vpack.c.b16 %v10549, %v10548
    %v10563 = vpack.c.b16 %v10551, %v10550
    %v10564 = vpack.c.b16 %v10553, %v10552
    %v10565 = vpack.c.b16 %v10555, %v10554
    %v10566 = vpack.c.b16 %v10557, %v10556
    %v10567 = vpack.c.b16 %v10559, %v10558
    %10576 = vmatprep.subr.bf16.mxu0 0
    %10577 = vmatpush1.bf16.msra.mxu0 %v10560
    %10578 = vmatprep.subr.bf16.mxu0 0
    %10579 = vmatpush1.bf16.msra.mxu0 %v10561
    %10580 = vmatprep.subr.bf16.mxu0 0
    %10581 = vmatpush1.bf16.msra.mxu0 %v10562
    %10582 = vmatprep.subr.bf16.mxu0 0
    %10583 = vmatpush1.bf16.msra.mxu0 %v10563
    %10584 = vmatprep.subr.bf16.mxu0 0
    %10585 = vmatpush1.bf16.msra.mxu0 %v10564
    %10586 = vmatprep.subr.bf16.mxu0 0
    %10587 = vmatpush1.bf16.msra.mxu0 %v10565
    %10588 = vmatprep.subr.bf16.mxu0 0
    %10589 = vmatpush1.bf16.msra.mxu0 %v10566
    %10590 = vmatprep.subr.bf16.mxu0 0
    %10591 = vmatpush1.bf16.msra.mxu0 %v10567
    %10592 = vmatprep.subr.bf16.mxu0 0
    %10593 = vmatpush1.bf16.msra.mxu0 0
    %10594 = vmatprep.subr.bf16.mxu0 0
    %10595 = vmatpush1.bf16.msra.mxu0 0
    %10596 = vmatprep.subr.bf16.mxu0 0
    %10597 = vmatpush1.bf16.msra.mxu0 0
    %10598 = vmatprep.subr.bf16.mxu0 0
    %10599 = vmatpush1.bf16.msra.mxu0 0
    %10600 = vmatprep.subr.bf16.mxu0 0
    %10601 = vmatpush1.bf16.msra.mxu0 0
    %10602 = vmatprep.subr.bf16.mxu0 0
    %10603 = vmatpush1.bf16.msra.mxu0 0
    %10604 = vmatprep.subr.bf16.mxu0 0
    %10605 = vmatpush1.bf16.msra.mxu0 0
    %10606 = vmatprep.subr.bf16.mxu0 0
    %10607 = vmatpush1.bf16.msra.mxu0 0
    %10608 = vmatprep.mubr.bf16.mxu0 0
    %10609 = vmatmul.mubr.bf16.gmra.mrb[0].mxu0 %v10504
    %v10610 = vpop.f32.mrb[0].mxu0
    %v10611 = vadd.f32 %v10526, %v10610
    %v10612 = vpop.f32.mrb[0].mxu0
    %v10613 = vpop.f32.mrb[0].mxu0
    %v10614 = vpop.f32.mrb[0].mxu0
    %10615 = vdwg.mxu0
    %10616 = vst [vmem:[#allocation17] sm:$0xff] %v10611
    // Predicated region
    $region106: #{tpu_custom_call.1} parent=1 // pred_check
      _
    $region107: #{tpu_custom_call.1} parent=1 // pred_check_branch
      %10618 = sbr.rel (0) target = $region109
    $region108: #{tpu_custom_call.1} parent=1 // pred_region
      %s10620 = ssub.s32 128, 128
      %10621 = vsyncadd [#allocation4], %s10620
      %s10623 = sshll.u32 [#allocation17], 4
      %s10624 = int_to_ptr.vmem [resolvable:$true] %s10623
      %10626 = dma.vmem_to_hbm [thread:$0]  %s10624, 128, %s17, [#allocation4]
    $region109: #{tpu_custom_call.1} parent=1 // pred_fallthru
      _
    // Predicated region
    $region110: #{tpu_custom_call.1} parent=1 // pred_check
      _
    $region111: #{tpu_custom_call.1} parent=1 // pred_check_branch
      %10628 = sbr.rel (0) target = $region113
    $region112: #{tpu_custom_call.1} parent=1 // pred_region
      %10629 = dma.done [#allocation4], 128
    $region113: #{tpu_custom_call.1} parent=1 // pred_fallthru
      _
    %10630 = vsyncpa [#allocation3], 1
    %10631 = vsyncpa [#allocation6], 1
    %10632 = vsyncpa [#allocation9], 1
    %10633 = vsyncpa [#allocation12], 1
    %10634 = vsyncpa [#allocation15], 1
    %10635 = vsyncpa [#allocation4], 1

</llo_original>
